<compile_context>
chip_gen: v5e
topology: v5e:2x2
jax: 0.10.0
libtpu: 0.0.40
codegen_flags: <defaults>
</compile_context>

<pallas_src>
import jax
import jax.numpy as jnp
from jax import lax
from jax.experimental import pallas as pl
from jax.experimental.pallas import tpu as pltpu


def basic_block_kernel(x_ref, w1_ref, b1_ref, w2_ref, b2_ref, o_ref, patch_ref):
    # x_ref    : (B, H, W, C)        f32   input block (also the residual)
    # w*_ref   : (3, 3*C, C)         bf16  weights grouped per dy: rows
    #                                      [dx*C:(dx+1)*C] are tap (dy, dx)
    # b*_ref   : (1, C)              f32
    # o_ref    : (B, H, W, C)        f32
    # patch_ref: (B, H+2, W, 3*C)    bf16  H-halo-padded im2col staging scratch
    B, H, W, C = x_ref.shape
    K = 3 * C

    # Zero the two H-halo rows once per grid step (cheap and megacore-safe;
    # the interior rows are fully overwritten below, so the halo stays zero
    # for both convs).
    halo = jnp.zeros((B, 1, W, K), jnp.bfloat16)
    patch_ref[:, 0:1] = halo
    patch_ref[:, H + 1:H + 2] = halo

    b1 = b1_ref[...]
    b2 = b2_ref[...]

    # Chunk the batch so each MXU call has ~128 rows and the f32 register
    # accumulator is ~16 vregs (no spills).  All shapes are static Python ints.
    rows_per_img = H * W
    imgs = max(1, min(B, max(1, 128 // rows_per_img)))
    while B % imgs:
        imgs -= 1
    Mc = imgs * rows_per_img

    # Hoisted zero column for the two W (sublane) shifts (JAX does not CSE
    # broadcasts inside the traced loop).
    zcol = jnp.zeros((imgs, H, 1, C), jnp.bfloat16)

    def stage(c0, src_bf16):
        # src_bf16: (imgs, H, W, C) bf16.  Write the three dx-shifted slabs
        # into the interior rows of the padded patch.  Channel offsets are
        # lane-tile aligned (0 / 128 / 256), so all stores are unmasked.
        left = jnp.concatenate([zcol, src_bf16[:, :, :W - 1, :]], axis=2)
        right = jnp.concatenate([src_bf16[:, :, 1:, :], zcol], axis=2)
        patch_ref[c0:c0 + imgs, 1:H + 1, :, 0:C] = left
        patch_ref[c0:c0 + imgs, 1:H + 1, :, C:2 * C] = src_bf16
        patch_ref[c0:c0 + imgs, 1:H + 1, :, 2 * C:3 * C] = right

    def conv(c0, w_ref):
        # 3 grouped (Mc, 3C) x (3C, C) bf16 MXU matmuls, f32 accumulation in
        # registers.  The dy shift is a free whole-row slice of the padded
        # scratch (halo rows supply the zero padding).
        acc = None
        for dy in range(3):
            p = patch_ref[c0:c0 + imgs, dy:dy + H].reshape(Mc, K)
            d = jnp.dot(p, w_ref[dy], preferred_element_type=jnp.float32)
            acc = d if acc is None else acc + d
        return acc

    for c0 in range(0, B, imgs):
        # ---- conv1 -> bias -> ReLU ----
        stage(c0, x_ref[c0:c0 + imgs].astype(jnp.bfloat16))
        h1 = jnp.maximum(conv(c0, w1_ref) + b1, 0.0)          # (Mc, C) f32

        # ---- conv2 -> bias -> residual add (identity stays f32) ----
        stage(c0, h1.astype(jnp.bfloat16).reshape(imgs, H, W, C))
        identity = x_ref[c0:c0 + imgs].reshape(Mc, C)
        out = conv(c0, w2_ref) + b2 + identity
        o_ref[c0:c0 + imgs] = out.reshape(imgs, H, W, C).astype(o_ref.dtype)


def basic_block_pallas(x_nchw, w1, b1, w2, b2, *, block_n=4):
    """x_nchw: (N, 128, H, W) f32; w*: (128, 128, 3, 3) OIHW; b*: (128,)."""
    N, C, H, W = x_nchw.shape
    assert C == 128, "kernel assumes 128 channels (one lane tile)"
    assert W % 8 == 0, "W must be a multiple of 8 for aligned sublane tiles"
    assert N % block_n == 0
    B = block_n

    # Glue: layout conversion only (no HBM padding round trip).
    x_nhwc = jnp.transpose(x_nchw, (0, 2, 3, 1))                     # (N,H,W,C)

    def to_grouped(w):
        # OIHW -> (dy, dx*Cin, Cout) bf16: one (3C, C) slab per weight row dy,
        # matching the (M, 3C) im2col patch for K=384 matmuls.
        return (jnp.transpose(w, (2, 3, 1, 0))
                .reshape(3, 3 * C, C)
                .astype(jnp.bfloat16))

    w1_g, w2_g = to_grouped(w1), to_grouped(w2)
    b1_r = b1.reshape(1, C).astype(jnp.float32)
    b2_r = b2.reshape(1, C).astype(jnp.float32)

    out_nhwc = pl.pallas_call(
        basic_block_kernel,
        out_shape=jax.ShapeDtypeStruct((N, H, W, C), x_nchw.dtype),
        grid_spec=pltpu.PrefetchScalarGridSpec(
            num_scalar_prefetch=0,
            grid=(N // B,),
            in_specs=[
                pl.BlockSpec((B, H, W, C), lambda n: (n, 0, 0, 0)),
                pl.BlockSpec((3, 3 * C, C), lambda n: (0, 0, 0)),
                pl.BlockSpec((1, C), lambda n: (0, 0)),
                pl.BlockSpec((3, 3 * C, C), lambda n: (0, 0, 0)),
                pl.BlockSpec((1, C), lambda n: (0, 0)),
            ],
            out_specs=pl.BlockSpec((B, H, W, C), lambda n: (n, 0, 0, 0)),
            scratch_shapes=[
                # H-halo-padded bf16 im2col staging buffer, shared by both convs.
                pltpu.VMEM((B, H + 2, W, 3 * C), jnp.bfloat16),
            ],
        ),
        compiler_params=pltpu.CompilerParams(
            dimension_semantics=("parallel",)),
    )(x_nhwc, w1_g, b1_r, w2_g, b2_r)

    return jnp.transpose(out_nhwc, (0, 3, 1, 2))                     # back to NCHW


def basic_block_ref(x_nchw, w1, b1, w2, b2):
    """Pure-JAX f32 reference (matches PyTorch Conv2d semantics)."""
    dn = ("NCHW", "OIHW", "NCHW")
    out = lax.conv_general_dilated(x_nchw, w1, (1, 1), ((1, 1), (1, 1)),
                                   dimension_numbers=dn)
    out = out + b1.reshape(1, -1, 1, 1)
    out = jnp.maximum(out, 0.0)
    out = lax.conv_general_dilated(out, w2, (1, 1), ((1, 1), (1, 1)),
                                   dimension_numbers=dn)
    out = out + b2.reshape(1, -1, 1, 1)
    return out + x_nchw


if __name__ == "__main__":
    key = jax.random.PRNGKey(0)
    k_x, k_w1, k_b1, k_w2, k_b2 = jax.random.split(key, 5)

    # N=16 with 4 images per grid step -> 4 "parallel" grid steps
    # (>= 2 per TensorCore so the pipeline is engaged on megacore parts).
    N, C, H, W = 16, 128, 8, 8
    x = jax.random.normal(k_x, (N, C, H, W), dtype=jnp.float32)

    scale = 0.05
    w1 = jax.random.normal(k_w1, (C, C, 3, 3), dtype=jnp.float32) * scale
    b1 = jax.random.normal(k_b1, (C,), dtype=jnp.float32) * scale
    w2 = jax.random.normal(k_w2, (C, C, 3, 3), dtype=jnp.float32) * scale
    b2 = jax.random.normal(k_b2, (C,), dtype=jnp.float32) * scale

    out = jax.block_until_ready(basic_block_pallas(x, w1, b1, w2, b2))
    ref = jax.block_until_ready(basic_block_ref(x, w1, b1, w2, b2))

    assert out.shape == (N, C, H, W)
    max_err = jnp.max(jnp.abs(out - ref))
    # bf16 MXU operands (f32 accumulation) -> looser tolerance than pure f32.
    assert jnp.allclose(out, ref, rtol=5e-2, atol=5e-2), \
        f"max abs err {max_err}"

    print("KERNEL_OK")
</pallas_src>

<mosaic_0001>
module attributes {stable_mosaic.version = 11 : i64} {
  func.func @basic_block_kernel(%arg0: i32, %arg1: memref<4x8x8x128xf32, #tpu.memory_space<vmem>>, %arg2: memref<3x384x128xbf16, #tpu.memory_space<vmem>>, %arg3: memref<1x128xf32, #tpu.memory_space<vmem>>, %arg4: memref<3x384x128xbf16, #tpu.memory_space<vmem>>, %arg5: memref<1x128xf32, #tpu.memory_space<vmem>>, %arg6: memref<4x8x8x128xf32, #tpu.memory_space<vmem>>, %arg7: memref<4x10x8x384xbf16, #tpu.memory_space<vmem>>) attributes {dimension_semantics = [#tpu.dimension_semantics<parallel>], iteration_bounds = array<i64: 4>, scalar_prefetch = 0 : i64, scratch_operands = 1 : i64, tpu.core_type = #tpu.core_type<tc>, window_params = [{transform_indices = @transform_0, window_bounds = array<i64: 4, 8, 8, 128>}, {pipeline_mode = #tpu.pipeline_mode<synchronous>, transform_indices = @transform_1, window_bounds = array<i64: 3, 384, 128>}, {pipeline_mode = #tpu.pipeline_mode<synchronous>, transform_indices = @transform_2, window_bounds = array<i64: 1, 128>}, {pipeline_mode = #tpu.pipeline_mode<synchronous>, transform_indices = @transform_3, window_bounds = array<i64: 3, 384, 128>}, {pipeline_mode = #tpu.pipeline_mode<synchronous>, transform_indices = @transform_4, window_bounds = array<i64: 1, 128>}, {transform_indices = @transform_5, window_bounds = array<i64: 4, 8, 8, 128>}]} {
    %cst = arith.constant 0.000000e+00 : bf16
    %0 = vector.broadcast %cst : bf16 to vector<4x1x8x384xbf16>
    %c0 = arith.constant 0 : index
    %c0_0 = arith.constant 0 : index
    %c0_1 = arith.constant 0 : index
    %c0_2 = arith.constant 0 : index
    %1 = vector.load %arg7[%c0, %c0_0, %c0_1, %c0_2] : memref<4x10x8x384xbf16, #tpu.memory_space<vmem>>, vector<4x1x8x384xbf16>
    tpu.vector_store %arg7[%c0, %c0_0, %c0_1, %c0_2], %0 {strides = array<i32>} : memref<4x10x8x384xbf16, #tpu.memory_space<vmem>>, vector<4x1x8x384xbf16>,
    %c0_3 = arith.constant 0 : index
    %c9 = arith.constant 9 : index
    %c0_4 = arith.constant 0 : index
    %c0_5 = arith.constant 0 : index
    %2 = vector.load %arg7[%c0_3, %c9, %c0_4, %c0_5] : memref<4x10x8x384xbf16, #tpu.memory_space<vmem>>, vector<4x1x8x384xbf16>
    tpu.vector_store %arg7[%c0_3, %c9, %c0_4, %c0_5], %0 {strides = array<i32>} : memref<4x10x8x384xbf16, #tpu.memory_space<vmem>>, vector<4x1x8x384xbf16>,
    %c0_6 = arith.constant 0 : index
    %c0_7 = arith.constant 0 : index
    %3 = vector.load %arg3[%c0_6, %c0_7] : memref<1x128xf32, #tpu.memory_space<vmem>>, vector<1x128xf32>
    %c0_8 = arith.constant 0 : index
    %c0_9 = arith.constant 0 : index
    %4 = vector.load %arg5[%c0_8, %c0_9] : memref<1x128xf32, #tpu.memory_space<vmem>>, vector<1x128xf32>
    %cst_10 = arith.constant 0.000000e+00 : bf16
    %5 = vector.broadcast %cst_10 : bf16 to vector<2x8x1x128xbf16>
    %c0_11 = arith.constant 0 : index
    %c0_12 = arith.constant 0 : index
    %c0_13 = arith.constant 0 : index
    %c0_14 = arith.constant 0 : index
    %6 = vector.load %arg1[%c0_11, %c0_12, %c0_13, %c0_14] : memref<4x8x8x128xf32, #tpu.memory_space<vmem>>, vector<2x8x8x128xf32>
    %7 = arith.truncf %6 : vector<2x8x8x128xf32> to vector<2x8x8x128xbf16>
    %8 = vector.extract_strided_slice %7 {offsets = [0, 0, 0, 0], sizes = [2, 8, 7, 128], strides = [1, 1, 1, 1]} : vector<2x8x8x128xbf16> to vector<2x8x7x128xbf16>
    %9 = tpu.concatenate %5, %8 in 2 : vector<2x8x1x128xbf16>, vector<2x8x7x128xbf16> -> vector<2x8x8x128xbf16>
    %10 = vector.extract_strided_slice %7 {offsets = [0, 0, 1, 0], sizes = [2, 8, 7, 128], strides = [1, 1, 1, 1]} : vector<2x8x8x128xbf16> to vector<2x8x7x128xbf16>
    %11 = tpu.concatenate %10, %5 in 2 : vector<2x8x7x128xbf16>, vector<2x8x1x128xbf16> -> vector<2x8x8x128xbf16>
    %c0_15 = arith.constant 0 : index
    %c1 = arith.constant 1 : index
    %c0_16 = arith.constant 0 : index
    %c0_17 = arith.constant 0 : index
    %12 = vector.load %arg7[%c0_15, %c1, %c0_16, %c0_17] : memref<4x10x8x384xbf16, #tpu.memory_space<vmem>>, vector<2x8x8x128xbf16>
    tpu.vector_store %arg7[%c0_15, %c1, %c0_16, %c0_17], %9 {strides = array<i32>} : memref<4x10x8x384xbf16, #tpu.memory_space<vmem>>, vector<2x8x8x128xbf16>,
    %c0_18 = arith.constant 0 : index
    %c1_19 = arith.constant 1 : index
    %c0_20 = arith.constant 0 : index
    %c128 = arith.constant 128 : index
    %13 = vector.load %arg7[%c0_18, %c1_19, %c0_20, %c128] : memref<4x10x8x384xbf16, #tpu.memory_space<vmem>>, vector<2x8x8x128xbf16>
    tpu.vector_store %arg7[%c0_18, %c1_19, %c0_20, %c128], %7 {strides = array<i32>} : memref<4x10x8x384xbf16, #tpu.memory_space<vmem>>, vector<2x8x8x128xbf16>,
    %c0_21 = arith.constant 0 : index
    %c1_22 = arith.constant 1 : index
    %c0_23 = arith.constant 0 : index
    %c256 = arith.constant 256 : index
    %14 = vector.load %arg7[%c0_21, %c1_22, %c0_23, %c256] : memref<4x10x8x384xbf16, #tpu.memory_space<vmem>>, vector<2x8x8x128xbf16>
    tpu.vector_store %arg7[%c0_21, %c1_22, %c0_23, %c256], %11 {strides = array<i32>} : memref<4x10x8x384xbf16, #tpu.memory_space<vmem>>, vector<2x8x8x128xbf16>,
    %c0_24 = arith.constant 0 : index
    %c0_25 = arith.constant 0 : index
    %c0_26 = arith.constant 0 : index
    %c0_27 = arith.constant 0 : index
    %15 = vector.load %arg7[%c0_24, %c0_25, %c0_26, %c0_27] : memref<4x10x8x384xbf16, #tpu.memory_space<vmem>>, vector<2x8x8x384xbf16>
    %16 = vector.shape_cast %15 : vector<2x8x8x384xbf16> to vector<128x384xbf16>
    %c0_28 = arith.constant 0 : index
    %c0_29 = arith.constant 0 : index
    %c0_30 = arith.constant 0 : index
    %17 = vector.load %arg2[%c0_28, %c0_29, %c0_30] : memref<3x384x128xbf16, #tpu.memory_space<vmem>>, vector<1x384x128xbf16>
    %18 = vector.shape_cast %17 : vector<1x384x128xbf16> to vector<384x128xbf16>
    %cst_31 = arith.constant dense<0.000000e+00> : vector<128x128xf32>
    %19 = tpu.matmul %16, %18, %cst_31 {dimension_numbers = #tpu.dot_dimension_numbers<[1], [0], [0], [1], [0, 0, 1, 1], [], []>} : vector<128x384xbf16>, vector<384x128xbf16>, vector<128x128xf32> -> vector<128x128xf32>
    %c0_32 = arith.constant 0 : index
    %c1_33 = arith.constant 1 : index
    %c0_34 = arith.constant 0 : index
    %c0_35 = arith.constant 0 : index
    %20 = vector.load %arg7[%c0_32, %c1_33, %c0_34, %c0_35] : memref<4x10x8x384xbf16, #tpu.memory_space<vmem>>, vector<2x8x8x384xbf16>
    %21 = vector.shape_cast %20 : vector<2x8x8x384xbf16> to vector<128x384xbf16>
    %c1_36 = arith.constant 1 : index
    %c0_37 = arith.constant 0 : index
    %c0_38 = arith.constant 0 : index
    %22 = vector.load %arg2[%c1_36, %c0_37, %c0_38] : memref<3x384x128xbf16, #tpu.memory_space<vmem>>, vector<1x384x128xbf16>
    %23 = vector.shape_cast %22 : vector<1x384x128xbf16> to vector<384x128xbf16>
    %cst_39 = arith.constant dense<0.000000e+00> : vector<128x128xf32>
    %24 = tpu.matmul %21, %23, %cst_39 {dimension_numbers = #tpu.dot_dimension_numbers<[1], [0], [0], [1], [0, 0, 1, 1], [], []>} : vector<128x384xbf16>, vector<384x128xbf16>, vector<128x128xf32> -> vector<128x128xf32>
    %25 = arith.addf %19, %24 : vector<128x128xf32>
    %c0_40 = arith.constant 0 : index
    %c2 = arith.constant 2 : index
    %c0_41 = arith.constant 0 : index
    %c0_42 = arith.constant 0 : index
    %26 = vector.load %arg7[%c0_40, %c2, %c0_41, %c0_42] : memref<4x10x8x384xbf16, #tpu.memory_space<vmem>>, vector<2x8x8x384xbf16>
    %27 = vector.shape_cast %26 : vector<2x8x8x384xbf16> to vector<128x384xbf16>
    %c2_43 = arith.constant 2 : index
    %c0_44 = arith.constant 0 : index
    %c0_45 = arith.constant 0 : index
    %28 = vector.load %arg2[%c2_43, %c0_44, %c0_45] : memref<3x384x128xbf16, #tpu.memory_space<vmem>>, vector<1x384x128xbf16>
    %29 = vector.shape_cast %28 : vector<1x384x128xbf16> to vector<384x128xbf16>
    %cst_46 = arith.constant dense<0.000000e+00> : vector<128x128xf32>
    %30 = tpu.matmul %27, %29, %cst_46 {dimension_numbers = #tpu.dot_dimension_numbers<[1], [0], [0], [1], [0, 0, 1, 1], [], []>} : vector<128x384xbf16>, vector<384x128xbf16>, vector<128x128xf32> -> vector<128x128xf32>
    %31 = arith.addf %25, %30 : vector<128x128xf32>
    %32 = vector.broadcast %3 : vector<1x128xf32> to vector<128x128xf32>
    %33 = arith.addf %31, %32 : vector<128x128xf32>
    %cst_47 = arith.constant 0.000000e+00 : f32
    %34 = vector.broadcast %cst_47 : f32 to vector<128x128xf32>
    %35 = arith.maximumf %33, %34 : vector<128x128xf32>
    %36 = arith.truncf %35 : vector<128x128xf32> to vector<128x128xbf16>
    %37 = vector.shape_cast %36 : vector<128x128xbf16> to vector<2x8x8x128xbf16>
    %38 = vector.extract_strided_slice %37 {offsets = [0, 0, 0, 0], sizes = [2, 8, 7, 128], strides = [1, 1, 1, 1]} : vector<2x8x8x128xbf16> to vector<2x8x7x128xbf16>
    %39 = tpu.concatenate %5, %38 in 2 : vector<2x8x1x128xbf16>, vector<2x8x7x128xbf16> -> vector<2x8x8x128xbf16>
    %40 = vector.extract_strided_slice %37 {offsets = [0, 0, 1, 0], sizes = [2, 8, 7, 128], strides = [1, 1, 1, 1]} : vector<2x8x8x128xbf16> to vector<2x8x7x128xbf16>
    %41 = tpu.concatenate %40, %5 in 2 : vector<2x8x7x128xbf16>, vector<2x8x1x128xbf16> -> vector<2x8x8x128xbf16>
    %c0_48 = arith.constant 0 : index
    %c1_49 = arith.constant 1 : index
    %c0_50 = arith.constant 0 : index
    %c0_51 = arith.constant 0 : index
    %42 = vector.load %arg7[%c0_48, %c1_49, %c0_50, %c0_51] : memref<4x10x8x384xbf16, #tpu.memory_space<vmem>>, vector<2x8x8x128xbf16>
    tpu.vector_store %arg7[%c0_48, %c1_49, %c0_50, %c0_51], %39 {strides = array<i32>} : memref<4x10x8x384xbf16, #tpu.memory_space<vmem>>, vector<2x8x8x128xbf16>,
    %c0_52 = arith.constant 0 : index
    %c1_53 = arith.constant 1 : index
    %c0_54 = arith.constant 0 : index
    %c128_55 = arith.constant 128 : index
    %43 = vector.load %arg7[%c0_52, %c1_53, %c0_54, %c128_55] : memref<4x10x8x384xbf16, #tpu.memory_space<vmem>>, vector<2x8x8x128xbf16>
    tpu.vector_store %arg7[%c0_52, %c1_53, %c0_54, %c128_55], %37 {strides = array<i32>} : memref<4x10x8x384xbf16, #tpu.memory_space<vmem>>, vector<2x8x8x128xbf16>,
    %c0_56 = arith.constant 0 : index
    %c1_57 = arith.constant 1 : index
    %c0_58 = arith.constant 0 : index
    %c256_59 = arith.constant 256 : index
    %44 = vector.load %arg7[%c0_56, %c1_57, %c0_58, %c256_59] : memref<4x10x8x384xbf16, #tpu.memory_space<vmem>>, vector<2x8x8x128xbf16>
    tpu.vector_store %arg7[%c0_56, %c1_57, %c0_58, %c256_59], %41 {strides = array<i32>} : memref<4x10x8x384xbf16, #tpu.memory_space<vmem>>, vector<2x8x8x128xbf16>,
    %c0_60 = arith.constant 0 : index
    %c0_61 = arith.constant 0 : index
    %c0_62 = arith.constant 0 : index
    %c0_63 = arith.constant 0 : index
    %45 = vector.load %arg1[%c0_60, %c0_61, %c0_62, %c0_63] : memref<4x8x8x128xf32, #tpu.memory_space<vmem>>, vector<2x8x8x128xf32>
    %46 = vector.shape_cast %45 : vector<2x8x8x128xf32> to vector<128x128xf32>
    %c0_64 = arith.constant 0 : index
    %c0_65 = arith.constant 0 : index
    %c0_66 = arith.constant 0 : index
    %c0_67 = arith.constant 0 : index
    %47 = vector.load %arg7[%c0_64, %c0_65, %c0_66, %c0_67] : memref<4x10x8x384xbf16, #tpu.memory_space<vmem>>, vector<2x8x8x384xbf16>
    %48 = vector.shape_cast %47 : vector<2x8x8x384xbf16> to vector<128x384xbf16>
    %c0_68 = arith.constant 0 : index
    %c0_69 = arith.constant 0 : index
    %c0_70 = arith.constant 0 : index
    %49 = vector.load %arg4[%c0_68, %c0_69, %c0_70] : memref<3x384x128xbf16, #tpu.memory_space<vmem>>, vector<1x384x128xbf16>
    %50 = vector.shape_cast %49 : vector<1x384x128xbf16> to vector<384x128xbf16>
    %cst_71 = arith.constant dense<0.000000e+00> : vector<128x128xf32>
    %51 = tpu.matmul %48, %50, %cst_71 {dimension_numbers = #tpu.dot_dimension_numbers<[1], [0], [0], [1], [0, 0, 1, 1], [], []>} : vector<128x384xbf16>, vector<384x128xbf16>, vector<128x128xf32> -> vector<128x128xf32>
    %c0_72 = arith.constant 0 : index
    %c1_73 = arith.constant 1 : index
    %c0_74 = arith.constant 0 : index
    %c0_75 = arith.constant 0 : index
    %52 = vector.load %arg7[%c0_72, %c1_73, %c0_74, %c0_75] : memref<4x10x8x384xbf16, #tpu.memory_space<vmem>>, vector<2x8x8x384xbf16>
    %53 = vector.shape_cast %52 : vector<2x8x8x384xbf16> to vector<128x384xbf16>
    %c1_76 = arith.constant 1 : index
    %c0_77 = arith.constant 0 : index
    %c0_78 = arith.constant 0 : index
    %54 = vector.load %arg4[%c1_76, %c0_77, %c0_78] : memref<3x384x128xbf16, #tpu.memory_space<vmem>>, vector<1x384x128xbf16>
    %55 = vector.shape_cast %54 : vector<1x384x128xbf16> to vector<384x128xbf16>
    %cst_79 = arith.constant dense<0.000000e+00> : vector<128x128xf32>
    %56 = tpu.matmul %53, %55, %cst_79 {dimension_numbers = #tpu.dot_dimension_numbers<[1], [0], [0], [1], [0, 0, 1, 1], [], []>} : vector<128x384xbf16>, vector<384x128xbf16>, vector<128x128xf32> -> vector<128x128xf32>
    %57 = arith.addf %51, %56 : vector<128x128xf32>
    %c0_80 = arith.constant 0 : index
    %c2_81 = arith.constant 2 : index
    %c0_82 = arith.constant 0 : index
    %c0_83 = arith.constant 0 : index
    %58 = vector.load %arg7[%c0_80, %c2_81, %c0_82, %c0_83] : memref<4x10x8x384xbf16, #tpu.memory_space<vmem>>, vector<2x8x8x384xbf16>
    %59 = vector.shape_cast %58 : vector<2x8x8x384xbf16> to vector<128x384xbf16>
    %c2_84 = arith.constant 2 : index
    %c0_85 = arith.constant 0 : index
    %c0_86 = arith.constant 0 : index
    %60 = vector.load %arg4[%c2_84, %c0_85, %c0_86] : memref<3x384x128xbf16, #tpu.memory_space<vmem>>, vector<1x384x128xbf16>
    %61 = vector.shape_cast %60 : vector<1x384x128xbf16> to vector<384x128xbf16>
    %cst_87 = arith.constant dense<0.000000e+00> : vector<128x128xf32>
    %62 = tpu.matmul %59, %61, %cst_87 {dimension_numbers = #tpu.dot_dimension_numbers<[1], [0], [0], [1], [0, 0, 1, 1], [], []>} : vector<128x384xbf16>, vector<384x128xbf16>, vector<128x128xf32> -> vector<128x128xf32>
    %63 = arith.addf %57, %62 : vector<128x128xf32>
    %64 = vector.broadcast %4 : vector<1x128xf32> to vector<128x128xf32>
    %65 = arith.addf %63, %64 : vector<128x128xf32>
    %66 = arith.addf %65, %46 : vector<128x128xf32>
    %67 = vector.shape_cast %66 : vector<128x128xf32> to vector<2x8x8x128xf32>
    %c0_88 = arith.constant 0 : index
    %c0_89 = arith.constant 0 : index
    %c0_90 = arith.constant 0 : index
    %c0_91 = arith.constant 0 : index
    %68 = vector.load %arg6[%c0_88, %c0_89, %c0_90, %c0_91] : memref<4x8x8x128xf32, #tpu.memory_space<vmem>>, vector<2x8x8x128xf32>
    tpu.vector_store %arg6[%c0_88, %c0_89, %c0_90, %c0_91], %67 {strides = array<i32>} : memref<4x8x8x128xf32, #tpu.memory_space<vmem>>, vector<2x8x8x128xf32>,
    %c2_92 = arith.constant 2 : index
    %c0_93 = arith.constant 0 : index
    %c0_94 = arith.constant 0 : index
    %c0_95 = arith.constant 0 : index
    %69 = vector.load %arg1[%c2_92, %c0_93, %c0_94, %c0_95] : memref<4x8x8x128xf32, #tpu.memory_space<vmem>>, vector<2x8x8x128xf32>
    %70 = arith.truncf %69 : vector<2x8x8x128xf32> to vector<2x8x8x128xbf16>
    %71 = vector.extract_strided_slice %70 {offsets = [0, 0, 0, 0], sizes = [2, 8, 7, 128], strides = [1, 1, 1, 1]} : vector<2x8x8x128xbf16> to vector<2x8x7x128xbf16>
    %72 = tpu.concatenate %5, %71 in 2 : vector<2x8x1x128xbf16>, vector<2x8x7x128xbf16> -> vector<2x8x8x128xbf16>
    %73 = vector.extract_strided_slice %70 {offsets = [0, 0, 1, 0], sizes = [2, 8, 7, 128], strides = [1, 1, 1, 1]} : vector<2x8x8x128xbf16> to vector<2x8x7x128xbf16>
    %74 = tpu.concatenate %73, %5 in 2 : vector<2x8x7x128xbf16>, vector<2x8x1x128xbf16> -> vector<2x8x8x128xbf16>
    %c2_96 = arith.constant 2 : index
    %c1_97 = arith.constant 1 : index
    %c0_98 = arith.constant 0 : index
    %c0_99 = arith.constant 0 : index
    %75 = vector.load %arg7[%c2_96, %c1_97, %c0_98, %c0_99] : memref<4x10x8x384xbf16, #tpu.memory_space<vmem>>, vector<2x8x8x128xbf16>
    tpu.vector_store %arg7[%c2_96, %c1_97, %c0_98, %c0_99], %72 {strides = array<i32>} : memref<4x10x8x384xbf16, #tpu.memory_space<vmem>>, vector<2x8x8x128xbf16>,
    %c2_100 = arith.constant 2 : index
    %c1_101 = arith.constant 1 : index
    %c0_102 = arith.constant 0 : index
    %c128_103 = arith.constant 128 : index
    %76 = vector.load %arg7[%c2_100, %c1_101, %c0_102, %c128_103] : memref<4x10x8x384xbf16, #tpu.memory_space<vmem>>, vector<2x8x8x128xbf16>
    tpu.vector_store %arg7[%c2_100, %c1_101, %c0_102, %c128_103], %70 {strides = array<i32>} : memref<4x10x8x384xbf16, #tpu.memory_space<vmem>>, vector<2x8x8x128xbf16>,
    %c2_104 = arith.constant 2 : index
    %c1_105 = arith.constant 1 : index
    %c0_106 = arith.constant 0 : index
    %c256_107 = arith.constant 256 : index
    %77 = vector.load %arg7[%c2_104, %c1_105, %c0_106, %c256_107] : memref<4x10x8x384xbf16, #tpu.memory_space<vmem>>, vector<2x8x8x128xbf16>
    tpu.vector_store %arg7[%c2_104, %c1_105, %c0_106, %c256_107], %74 {strides = array<i32>} : memref<4x10x8x384xbf16, #tpu.memory_space<vmem>>, vector<2x8x8x128xbf16>,
    %c2_108 = arith.constant 2 : index
    %c0_109 = arith.constant 0 : index
    %c0_110 = arith.constant 0 : index
    %c0_111 = arith.constant 0 : index
    %78 = vector.load %arg7[%c2_108, %c0_109, %c0_110, %c0_111] : memref<4x10x8x384xbf16, #tpu.memory_space<vmem>>, vector<2x8x8x384xbf16>
    %79 = vector.shape_cast %78 : vector<2x8x8x384xbf16> to vector<128x384xbf16>
    %c0_112 = arith.constant 0 : index
    %c0_113 = arith.constant 0 : index
    %c0_114 = arith.constant 0 : index
    %80 = vector.load %arg2[%c0_112, %c0_113, %c0_114] : memref<3x384x128xbf16, #tpu.memory_space<vmem>>, vector<1x384x128xbf16>
    %81 = vector.shape_cast %80 : vector<1x384x128xbf16> to vector<384x128xbf16>
    %cst_115 = arith.constant dense<0.000000e+00> : vector<128x128xf32>
    %82 = tpu.matmul %79, %81, %cst_115 {dimension_numbers = #tpu.dot_dimension_numbers<[1], [0], [0], [1], [0, 0, 1, 1], [], []>} : vector<128x384xbf16>, vector<384x128xbf16>, vector<128x128xf32> -> vector<128x128xf32>
    %c2_116 = arith.constant 2 : index
    %c1_117 = arith.constant 1 : index
    %c0_118 = arith.constant 0 : index
    %c0_119 = arith.constant 0 : index
    %83 = vector.load %arg7[%c2_116, %c1_117, %c0_118, %c0_119] : memref<4x10x8x384xbf16, #tpu.memory_space<vmem>>, vector<2x8x8x384xbf16>
    %84 = vector.shape_cast %83 : vector<2x8x8x384xbf16> to vector<128x384xbf16>
    %c1_120 = arith.constant 1 : index
    %c0_121 = arith.constant 0 : index
    %c0_122 = arith.constant 0 : index
    %85 = vector.load %arg2[%c1_120, %c0_121, %c0_122] : memref<3x384x128xbf16, #tpu.memory_space<vmem>>, vector<1x384x128xbf16>
    %86 = vector.shape_cast %85 : vector<1x384x128xbf16> to vector<384x128xbf16>
    %cst_123 = arith.constant dense<0.000000e+00> : vector<128x128xf32>
    %87 = tpu.matmul %84, %86, %cst_123 {dimension_numbers = #tpu.dot_dimension_numbers<[1], [0], [0], [1], [0, 0, 1, 1], [], []>} : vector<128x384xbf16>, vector<384x128xbf16>, vector<128x128xf32> -> vector<128x128xf32>
    %88 = arith.addf %82, %87 : vector<128x128xf32>
    %c2_124 = arith.constant 2 : index
    %c2_125 = arith.constant 2 : index
    %c0_126 = arith.constant 0 : index
    %c0_127 = arith.constant 0 : index
    %89 = vector.load %arg7[%c2_124, %c2_125, %c0_126, %c0_127] : memref<4x10x8x384xbf16, #tpu.memory_space<vmem>>, vector<2x8x8x384xbf16>
    %90 = vector.shape_cast %89 : vector<2x8x8x384xbf16> to vector<128x384xbf16>
    %c2_128 = arith.constant 2 : index
    %c0_129 = arith.constant 0 : index
    %c0_130 = arith.constant 0 : index
    %91 = vector.load %arg2[%c2_128, %c0_129, %c0_130] : memref<3x384x128xbf16, #tpu.memory_space<vmem>>, vector<1x384x128xbf16>
    %92 = vector.shape_cast %91 : vector<1x384x128xbf16> to vector<384x128xbf16>
    %cst_131 = arith.constant dense<0.000000e+00> : vector<128x128xf32>
    %93 = tpu.matmul %90, %92, %cst_131 {dimension_numbers = #tpu.dot_dimension_numbers<[1], [0], [0], [1], [0, 0, 1, 1], [], []>} : vector<128x384xbf16>, vector<384x128xbf16>, vector<128x128xf32> -> vector<128x128xf32>
    %94 = arith.addf %88, %93 : vector<128x128xf32>
    %95 = vector.broadcast %3 : vector<1x128xf32> to vector<128x128xf32>
    %96 = arith.addf %94, %95 : vector<128x128xf32>
    %cst_132 = arith.constant 0.000000e+00 : f32
    %97 = vector.broadcast %cst_132 : f32 to vector<128x128xf32>
    %98 = arith.maximumf %96, %97 : vector<128x128xf32>
    %99 = arith.truncf %98 : vector<128x128xf32> to vector<128x128xbf16>
    %100 = vector.shape_cast %99 : vector<128x128xbf16> to vector<2x8x8x128xbf16>
    %101 = vector.extract_strided_slice %100 {offsets = [0, 0, 0, 0], sizes = [2, 8, 7, 128], strides = [1, 1, 1, 1]} : vector<2x8x8x128xbf16> to vector<2x8x7x128xbf16>
    %102 = tpu.concatenate %5, %101 in 2 : vector<2x8x1x128xbf16>, vector<2x8x7x128xbf16> -> vector<2x8x8x128xbf16>
    %103 = vector.extract_strided_slice %100 {offsets = [0, 0, 1, 0], sizes = [2, 8, 7, 128], strides = [1, 1, 1, 1]} : vector<2x8x8x128xbf16> to vector<2x8x7x128xbf16>
    %104 = tpu.concatenate %103, %5 in 2 : vector<2x8x7x128xbf16>, vector<2x8x1x128xbf16> -> vector<2x8x8x128xbf16>
    %c2_133 = arith.constant 2 : index
    %c1_134 = arith.constant 1 : index
    %c0_135 = arith.constant 0 : index
    %c0_136 = arith.constant 0 : index
    %105 = vector.load %arg7[%c2_133, %c1_134, %c0_135, %c0_136] : memref<4x10x8x384xbf16, #tpu.memory_space<vmem>>, vector<2x8x8x128xbf16>
    tpu.vector_store %arg7[%c2_133, %c1_134, %c0_135, %c0_136], %102 {strides = array<i32>} : memref<4x10x8x384xbf16, #tpu.memory_space<vmem>>, vector<2x8x8x128xbf16>,
    %c2_137 = arith.constant 2 : index
    %c1_138 = arith.constant 1 : index
    %c0_139 = arith.constant 0 : index
    %c128_140 = arith.constant 128 : index
    %106 = vector.load %arg7[%c2_137, %c1_138, %c0_139, %c128_140] : memref<4x10x8x384xbf16, #tpu.memory_space<vmem>>, vector<2x8x8x128xbf16>
    tpu.vector_store %arg7[%c2_137, %c1_138, %c0_139, %c128_140], %100 {strides = array<i32>} : memref<4x10x8x384xbf16, #tpu.memory_space<vmem>>, vector<2x8x8x128xbf16>,
    %c2_141 = arith.constant 2 : index
    %c1_142 = arith.constant 1 : index
    %c0_143 = arith.constant 0 : index
    %c256_144 = arith.constant 256 : index
    %107 = vector.load %arg7[%c2_141, %c1_142, %c0_143, %c256_144] : memref<4x10x8x384xbf16, #tpu.memory_space<vmem>>, vector<2x8x8x128xbf16>
    tpu.vector_store %arg7[%c2_141, %c1_142, %c0_143, %c256_144], %104 {strides = array<i32>} : memref<4x10x8x384xbf16, #tpu.memory_space<vmem>>, vector<2x8x8x128xbf16>,
    %c2_145 = arith.constant 2 : index
    %c0_146 = arith.constant 0 : index
    %c0_147 = arith.constant 0 : index
    %c0_148 = arith.constant 0 : index
    %108 = vector.load %arg1[%c2_145, %c0_146, %c0_147, %c0_148] : memref<4x8x8x128xf32, #tpu.memory_space<vmem>>, vector<2x8x8x128xf32>
    %109 = vector.shape_cast %108 : vector<2x8x8x128xf32> to vector<128x128xf32>
    %c2_149 = arith.constant 2 : index
    %c0_150 = arith.constant 0 : index
    %c0_151 = arith.constant 0 : index
    %c0_152 = arith.constant 0 : index
    %110 = vector.load %arg7[%c2_149, %c0_150, %c0_151, %c0_152] : memref<4x10x8x384xbf16, #tpu.memory_space<vmem>>, vector<2x8x8x384xbf16>
    %111 = vector.shape_cast %110 : vector<2x8x8x384xbf16> to vector<128x384xbf16>
    %c0_153 = arith.constant 0 : index
    %c0_154 = arith.constant 0 : index
    %c0_155 = arith.constant 0 : index
    %112 = vector.load %arg4[%c0_153, %c0_154, %c0_155] : memref<3x384x128xbf16, #tpu.memory_space<vmem>>, vector<1x384x128xbf16>
    %113 = vector.shape_cast %112 : vector<1x384x128xbf16> to vector<384x128xbf16>
    %cst_156 = arith.constant dense<0.000000e+00> : vector<128x128xf32>
    %114 = tpu.matmul %111, %113, %cst_156 {dimension_numbers = #tpu.dot_dimension_numbers<[1], [0], [0], [1], [0, 0, 1, 1], [], []>} : vector<128x384xbf16>, vector<384x128xbf16>, vector<128x128xf32> -> vector<128x128xf32>
    %c2_157 = arith.constant 2 : index
    %c1_158 = arith.constant 1 : index
    %c0_159 = arith.constant 0 : index
    %c0_160 = arith.constant 0 : index
    %115 = vector.load %arg7[%c2_157, %c1_158, %c0_159, %c0_160] : memref<4x10x8x384xbf16, #tpu.memory_space<vmem>>, vector<2x8x8x384xbf16>
    %116 = vector.shape_cast %115 : vector<2x8x8x384xbf16> to vector<128x384xbf16>
    %c1_161 = arith.constant 1 : index
    %c0_162 = arith.constant 0 : index
    %c0_163 = arith.constant 0 : index
    %117 = vector.load %arg4[%c1_161, %c0_162, %c0_163] : memref<3x384x128xbf16, #tpu.memory_space<vmem>>, vector<1x384x128xbf16>
    %118 = vector.shape_cast %117 : vector<1x384x128xbf16> to vector<384x128xbf16>
    %cst_164 = arith.constant dense<0.000000e+00> : vector<128x128xf32>
    %119 = tpu.matmul %116, %118, %cst_164 {dimension_numbers = #tpu.dot_dimension_numbers<[1], [0], [0], [1], [0, 0, 1, 1], [], []>} : vector<128x384xbf16>, vector<384x128xbf16>, vector<128x128xf32> -> vector<128x128xf32>
    %120 = arith.addf %114, %119 : vector<128x128xf32>
    %c2_165 = arith.constant 2 : index
    %c2_166 = arith.constant 2 : index
    %c0_167 = arith.constant 0 : index
    %c0_168 = arith.constant 0 : index
    %121 = vector.load %arg7[%c2_165, %c2_166, %c0_167, %c0_168] : memref<4x10x8x384xbf16, #tpu.memory_space<vmem>>, vector<2x8x8x384xbf16>
    %122 = vector.shape_cast %121 : vector<2x8x8x384xbf16> to vector<128x384xbf16>
    %c2_169 = arith.constant 2 : index
    %c0_170 = arith.constant 0 : index
    %c0_171 = arith.constant 0 : index
    %123 = vector.load %arg4[%c2_169, %c0_170, %c0_171] : memref<3x384x128xbf16, #tpu.memory_space<vmem>>, vector<1x384x128xbf16>
    %124 = vector.shape_cast %123 : vector<1x384x128xbf16> to vector<384x128xbf16>
    %cst_172 = arith.constant dense<0.000000e+00> : vector<128x128xf32>
    %125 = tpu.matmul %122, %124, %cst_172 {dimension_numbers = #tpu.dot_dimension_numbers<[1], [0], [0], [1], [0, 0, 1, 1], [], []>} : vector<128x384xbf16>, vector<384x128xbf16>, vector<128x128xf32> -> vector<128x128xf32>
    %126 = arith.addf %120, %125 : vector<128x128xf32>
    %127 = vector.broadcast %4 : vector<1x128xf32> to vector<128x128xf32>
    %128 = arith.addf %126, %127 : vector<128x128xf32>
    %129 = arith.addf %128, %109 : vector<128x128xf32>
    %130 = vector.shape_cast %129 : vector<128x128xf32> to vector<2x8x8x128xf32>
    %c2_173 = arith.constant 2 : index
    %c0_174 = arith.constant 0 : index
    %c0_175 = arith.constant 0 : index
    %c0_176 = arith.constant 0 : index
    %131 = vector.load %arg6[%c2_173, %c0_174, %c0_175, %c0_176] : memref<4x8x8x128xf32, #tpu.memory_space<vmem>>, vector<2x8x8x128xf32>
    tpu.vector_store %arg6[%c2_173, %c0_174, %c0_175, %c0_176], %130 {strides = array<i32>} : memref<4x8x8x128xf32, #tpu.memory_space<vmem>>, vector<2x8x8x128xf32>,
    return
  }
  func.func @transform_0(%arg0: i32) -> (i32, i32, i32, i32) {
    %c0_i32 = arith.constant 0 : i32
    %c0_i32_0 = arith.constant 0 : i32
    %c0_i32_1 = arith.constant 0 : i32
    %c0_i32_2 = arith.constant 0 : i32
    return %arg0, %c0_i32, %c0_i32_0, %c0_i32_1 : i32, i32, i32, i32
  }
  func.func @transform_1(%arg0: i32) -> (i32, i32, i32) {
    %c0_i32 = arith.constant 0 : i32
    %c0_i32_0 = arith.constant 0 : i32
    %c0_i32_1 = arith.constant 0 : i32
    %c0_i32_2 = arith.constant 0 : i32
    return %c0_i32, %c0_i32_0, %c0_i32_1 : i32, i32, i32
  }
  func.func @transform_2(%arg0: i32) -> (i32, i32) {
    %c0_i32 = arith.constant 0 : i32
    %c0_i32_0 = arith.constant 0 : i32
    %c0_i32_1 = arith.constant 0 : i32
    return %c0_i32, %c0_i32_0 : i32, i32
  }
  func.func @transform_3(%arg0: i32) -> (i32, i32, i32) {
    %c0_i32 = arith.constant 0 : i32
    %c0_i32_0 = arith.constant 0 : i32
    %c0_i32_1 = arith.constant 0 : i32
    %c0_i32_2 = arith.constant 0 : i32
    return %c0_i32, %c0_i32_0, %c0_i32_1 : i32, i32, i32
  }
  func.func @transform_4(%arg0: i32) -> (i32, i32) {
    %c0_i32 = arith.constant 0 : i32
    %c0_i32_0 = arith.constant 0 : i32
    %c0_i32_1 = arith.constant 0 : i32
    return %c0_i32, %c0_i32_0 : i32, i32
  }
  func.func @transform_5(%arg0: i32) -> (i32, i32, i32, i32) {
    %c0_i32 = arith.constant 0 : i32
    %c0_i32_0 = arith.constant 0 : i32
    %c0_i32_1 = arith.constant 0 : i32
    %c0_i32_2 = arith.constant 0 : i32
    return %arg0, %c0_i32, %c0_i32_0, %c0_i32_1 : i32, i32, i32, i32
  }
}

</mosaic_0001>

<llo_original>
// kernel: tpu_custom_call.1
$region0: #{tpu_custom_call.1}
  #allocation0 [shape = 'u32[]', space=smem, size = 0x4, offset = 0x4, fixed_abs, tag = 'smem constant byte address 0x4 - core index']
  #allocation1 [shape = 'u32[72,128]{1,0:T(1,128)}', space=vmem, size = 0x9000, scoped, tag = 'internal scratch']
  #allocation2 [shape = 'bf16[4,10,8,384]{3,2,1,0:T(8,128)(2,1)}', space=vmem, size = 0x3c000, scoped, tag = 'scratch operand']
  %s0 = inlined_call_operand.hbm [shape: f32[16,8,8,128], index: 0, kind: input, shape index: {}]
  %s1 = inlined_call_operand.hbm [shape: bf16[3,384,128], index: 1, kind: input, shape index: {}]
  %s2 = inlined_call_operand.vmem [shape: f32[1,128], index: 2, kind: input, shape index: {}]
  %s3 = inlined_call_operand.hbm [shape: bf16[3,384,128], index: 3, kind: input, shape index: {}]
  %s4 = inlined_call_operand.vmem [shape: f32[1,128], index: 4, kind: input, shape index: {}]
  %s5 = inlined_call_operand.hbm [shape: f32[16,8,8,128], index: 5, kind: output, shape index: {}]
  %s6 = sld [smem:[#allocation0]]
  $region65: #{tpu_custom_call.1} parent=0
    _
  %s8 = ssub.s32 1, %s6
  %s9 = scalar_select 0, %s8, %s6
  $region1: #{tpu_custom_call.1} parent=0
    #allocation3 [shape = 'u8[262144]{0}', space=vmem, size = 0x40000, scoped, tag = 'input window, operand 0']
    #allocation4 [shape = 's32[2]{0}', space=sflag, size = 0x8, scoped, tag = 'scoped memory for tpu_custom_call.1']
    #allocation5 [shape = 's32[2]{0}', space=sflag, size = 0x8, scoped, tag = 'scoped memory for tpu_custom_call.1']
    #allocation6 [shape = 'u8[294912]{0}', space=vmem, size = 0x48000, scoped, tag = 'input window, operand 1, single buffered']
    #allocation7 [shape = 's32[1]{0}', space=sflag, size = 0x4, scoped, tag = 'scoped memory for tpu_custom_call.1']
    #allocation8 [shape = 'u8[294912]{0}', space=vmem, size = 0x48000, scoped, tag = 'input window, operand 3, single buffered']
    #allocation9 [shape = 'u8[262144]{0}', space=vmem, size = 0x40000, scoped, tag = 'output window, operand 0']
    %10 = vsyncpa [#allocation4], 0
    %s11 = scalar_lea.sflag [#allocation4], 1
    %12 = vsyncpa %s11, 0
    %13 = vsyncpa [#allocation7], 0
    %14 = vsyncpa [#allocation5], 0
    %s15 = scalar_lea.sflag [#allocation5], 1
    %16 = vsyncpa %s15, 0
    loop: start=0, step=1, limit=6
    $region2: #{tpu_custom_call.1} parent=1 // loop_pre_header
      _
    $region3: #{tpu_custom_call.1} parent=1 // loop_header
      %s18 = sphi 0, %s22
      %p19 = scmp.ge.s32.totalorder %s18, 6
      %s28 = sphi 0, %s30
      %s31 = sphi 0, %s28
      %s32 = sphi 0, %s31
      %s48 = sphi 0, %s32
      %s52 = sphi 0, %s52
      %s54 = sphi 0, %s52
      %s55 = sphi 0, %s54
      %s69 = sphi 0, %s55
      %s73 = sphi 0, %s73
      %s75 = sphi 0, %s73
      %s76 = sphi 0, %s75
      %s90 = sphi 0, %s76
      %s94 = sphi 0, %s94
      %s96 = sphi 0, %s94
      %s97 = sphi 0, %s96
      %s111 = sphi 0, %s97
      %s115 = sphi 0, %s115
      %s117 = sphi 0, %s115
      %s118 = sphi 0, %s117
      %s132 = sphi 0, %s118
      %s138 = sphi 0, %s140
      %s141 = sphi 0, %s138
      %s142 = sphi 0, %s141
      %s158 = sphi 0, %s142
    $region4: #{tpu_custom_call.1} parent=1 // loop_header_branch
      %21 = sbr.rel (%p19) target = $region8
    $region5: #{tpu_custom_call.1} parent=1 // loop_body
      %s23 = ssub.s32 %s18, 1
      %s24 = ssub.s32 %s18, 2
      %s25 = sadd.s32 %s18, 1
      %s26 = ssub.s32 %s18, %s25
      %p27 = scmp.eq.s32.totalorder %s26, 0
      %s29 = sadd.s32 %s28, 1
      %s30 = scalar_select %p27, %s28, %s29
      %p33 = pneg %p27
      %p34 = scmp.eq.s32.totalorder %s18, 3
      %p35 = por %p33, %p34
      %p36 = scmp.ne.s32.totalorder %s28, %s31
      %p37 = scmp.eq.s32.totalorder %s18, 0
      %p38 = por %p36, %p37
      %p39 = scmp.ne.s32.totalorder %s28, %s31
      %p40 = scmp.eq.s32.totalorder %s23, 3
      %p41 = por %p39, %p40
      %p42 = scmp.ne.s32.totalorder %s31, %s32
      %p43 = scmp.eq.s32.totalorder %s23, 0
      %p44 = por %p42, %p43
      %p45 = scmp.ne.s32.totalorder %s31, %s32
      %p46 = scmp.eq.s32.totalorder %s24, 3
      %p47 = por %p45, %p46
      %p49 = scmp.ne.s32.totalorder %s32, %s48
      %p50 = scmp.eq.s32.totalorder %s24, 0
      %p51 = por %p49, %p50
      %s53 = sadd.s32 %s52, 1
      %p56 = scmp.eq.s32.totalorder %s18, 3
      %p57 = scmp.ne.s32.totalorder %s52, %s54
      %p58 = scmp.eq.s32.totalorder %s18, 0
      %p59 = por %p57, %p58
      %p60 = scmp.ne.s32.totalorder %s52, %s54
      %p61 = scmp.eq.s32.totalorder %s23, 3
      %p62 = por %p60, %p61
      %p63 = scmp.ne.s32.totalorder %s54, %s55
      %p64 = scmp.eq.s32.totalorder %s23, 0
      %p65 = por %p63, %p64
      %p66 = scmp.ne.s32.totalorder %s54, %s55
      %p67 = scmp.eq.s32.totalorder %s24, 3
      %p68 = por %p66, %p67
      %p70 = scmp.ne.s32.totalorder %s55, %s69
      %p71 = scmp.eq.s32.totalorder %s24, 0
      %p72 = por %p70, %p71
      %s74 = sadd.s32 %s73, 1
      %p77 = scmp.eq.s32.totalorder %s18, 3
      %p78 = scmp.ne.s32.totalorder %s73, %s75
      %p79 = scmp.eq.s32.totalorder %s18, 0
      %p80 = por %p78, %p79
      %p81 = scmp.ne.s32.totalorder %s73, %s75
      %p82 = scmp.eq.s32.totalorder %s23, 3
      %p83 = por %p81, %p82
      %p84 = scmp.ne.s32.totalorder %s75, %s76
      %p85 = scmp.eq.s32.totalorder %s23, 0
      %p86 = por %p84, %p85
      %p87 = scmp.ne.s32.totalorder %s75, %s76
      %p88 = scmp.eq.s32.totalorder %s24, 3
      %p89 = por %p87, %p88
      %p91 = scmp.ne.s32.totalorder %s76, %s90
      %p92 = scmp.eq.s32.totalorder %s24, 0
      %p93 = por %p91, %p92
      %s95 = sadd.s32 %s94, 1
      %p98 = scmp.eq.s32.totalorder %s18, 3
      %p99 = scmp.ne.s32.totalorder %s94, %s96
      %p100 = scmp.eq.s32.totalorder %s18, 0
      %p101 = por %p99, %p100
      %p102 = scmp.ne.s32.totalorder %s94, %s96
      %p103 = scmp.eq.s32.totalorder %s23, 3
      %p104 = por %p102, %p103
      %p105 = scmp.ne.s32.totalorder %s96, %s97
      %p106 = scmp.eq.s32.totalorder %s23, 0
      %p107 = por %p105, %p106
      %p108 = scmp.ne.s32.totalorder %s96, %s97
      %p109 = scmp.eq.s32.totalorder %s24, 3
      %p110 = por %p108, %p109
      %p112 = scmp.ne.s32.totalorder %s97, %s111
      %p113 = scmp.eq.s32.totalorder %s24, 0
      %p114 = por %p112, %p113
      %s116 = sadd.s32 %s115, 1
      %p119 = scmp.eq.s32.totalorder %s18, 3
      %p120 = scmp.ne.s32.totalorder %s115, %s117
      %p121 = scmp.eq.s32.totalorder %s18, 0
      %p122 = por %p120, %p121
      %p123 = scmp.ne.s32.totalorder %s115, %s117
      %p124 = scmp.eq.s32.totalorder %s23, 3
      %p125 = por %p123, %p124
      %p126 = scmp.ne.s32.totalorder %s117, %s118
      %p127 = scmp.eq.s32.totalorder %s23, 0
      %p128 = por %p126, %p127
      %p129 = scmp.ne.s32.totalorder %s117, %s118
      %p130 = scmp.eq.s32.totalorder %s24, 3
      %p131 = por %p129, %p130
      %p133 = scmp.ne.s32.totalorder %s118, %s132
      %p134 = scmp.eq.s32.totalorder %s24, 0
      %p135 = por %p133, %p134
      %s136 = ssub.s32 %s18, %s25
      %p137 = scmp.eq.s32.totalorder %s136, 0
      %s139 = sadd.s32 %s138, 1
      %s140 = scalar_select %p137, %s138, %s139
      %p143 = pneg %p137
      %p144 = scmp.eq.s32.totalorder %s18, 3
      %p145 = por %p143, %p144
      %p146 = scmp.ne.s32.totalorder %s138, %s141
      %p147 = scmp.eq.s32.totalorder %s18, 0
      %p148 = por %p146, %p147
      %p149 = scmp.ne.s32.totalorder %s138, %s141
      %p150 = scmp.eq.s32.totalorder %s23, 3
      %p151 = por %p149, %p150
      %p152 = scmp.ne.s32.totalorder %s141, %s142
      %p153 = scmp.eq.s32.totalorder %s23, 0
      %p154 = por %p152, %p153
      %p155 = scmp.ne.s32.totalorder %s141, %s142
      %p156 = scmp.eq.s32.totalorder %s24, 3
      %p157 = por %p155, %p156
      %p159 = scmp.ne.s32.totalorder %s142, %s158
      %p160 = scmp.eq.s32.totalorder %s24, 0
      %p161 = por %p159, %p160
      %p162 = scmp.le.s32.totalorder 1, %s18
      %p163 = scmp.lt.s32.totalorder %s18, 5
      %p164 = pnand %p162, %p163
      %p165 = pneg %p164
      // Predicated region
      $region9: #{tpu_custom_call.1} parent=5 // pred_check
        _
      $region10: #{tpu_custom_call.1} parent=5 // pred_check_branch
        %167 = sbr.rel (%p164) target = $region12
      $region11: #{tpu_custom_call.1} parent=5 // pred_region
        %s168 = ssub.s32 %s18, 1
        // Predicated region
        $region13: #{tpu_custom_call.1} parent=11 // pred_check
          %p169 = pneg %p65
        $region14: #{tpu_custom_call.1} parent=11 // pred_check_branch
          %171 = sbr.rel (%p169) target = $region16
        $region15: #{tpu_custom_call.1} parent=11 // pred_region
          %173 = vsyncadd [#allocation7], 0
          %s174 = sshll.u32 %s1, 4
          %s175 = int_to_ptr.hbm [resolvable:$true] %s174
          %s176 = sshll.u32 [#allocation6], 4
          %s177 = int_to_ptr.vmem [resolvable:$true] %s176
          %182 = dma.hbm_to_vmem [thread:$0]  %s175, 9216, %s177, [#allocation7], 64, 64, 4
        $region16: #{tpu_custom_call.1} parent=11 // pred_fallthru
          _
        // Predicated region
        $region17: #{tpu_custom_call.1} parent=11 // pred_check
          %p183 = pneg %p86
        $region18: #{tpu_custom_call.1} parent=11 // pred_check_branch
          %185 = sbr.rel (%p183) target = $region20
        $region19: #{tpu_custom_call.1} parent=11 // pred_region
          _
        $region20: #{tpu_custom_call.1} parent=11 // pred_fallthru
          _
        // Predicated region
        $region21: #{tpu_custom_call.1} parent=11 // pred_check
          %p186 = pneg %p107
        $region22: #{tpu_custom_call.1} parent=11 // pred_check_branch
          %188 = sbr.rel (%p186) target = $region24
        $region23: #{tpu_custom_call.1} parent=11 // pred_region
          %190 = vsyncadd [#allocation7], 0
          %s191 = sshll.u32 %s3, 4
          %s192 = int_to_ptr.hbm [resolvable:$true] %s191
          %s193 = sshll.u32 [#allocation8], 4
          %s194 = int_to_ptr.vmem [resolvable:$true] %s193
          %199 = dma.hbm_to_vmem [thread:$0]  %s192, 9216, %s194, [#allocation7], 64, 64, 4
        $region24: #{tpu_custom_call.1} parent=11 // pred_fallthru
          _
        // Predicated region
        $region25: #{tpu_custom_call.1} parent=11 // pred_check
          %p200 = pneg %p128
        $region26: #{tpu_custom_call.1} parent=11 // pred_check_branch
          %202 = sbr.rel (%p200) target = $region28
        $region27: #{tpu_custom_call.1} parent=11 // pred_region
          _
        $region28: #{tpu_custom_call.1} parent=11 // pred_fallthru
          _
      $region12: #{tpu_custom_call.1} parent=5 // pred_fallthru
        _
      %p203 = scmp.lt.s32.totalorder %s18, 4
      // Predicated region
      $region29: #{tpu_custom_call.1} parent=5 // pred_check
        %p204 = pneg %p203
      $region30: #{tpu_custom_call.1} parent=5 // pred_check_branch
        %206 = sbr.rel (%p204) target = $region32
      $region31: #{tpu_custom_call.1} parent=5 // pred_region
        // Predicated region
        $region33: #{tpu_custom_call.1} parent=31 // pred_check
          %p207 = pneg %p38
        $region34: #{tpu_custom_call.1} parent=31 // pred_check_branch
          %209 = sbr.rel (%p207) target = $region36
        $region35: #{tpu_custom_call.1} parent=31 // pred_region
          %s210 = sand.u32 %s28, 1
          %s211 = scalar_lea.sflag [#allocation4], %s210
          %s212 = sand.u32 %s28, 1
          %s213 = smul.addr %s212, 256
          %s214 = scalar_lea.vmem [#allocation3], %s213
          %s215 = smul.u32 4, %s18
          %217 = vsyncadd %s211, 0
          %s218 = smul.addr %s215, 8
          %s219 = smul.addr %s218, 8
          %s220 = scalar_lea.hbm %s0, %s219
          %s221 = sshll.u32 %s220, 4
          %s222 = int_to_ptr.hbm [resolvable:$true] %s221
          %s223 = sshll.u32 %s214, 4
          %s224 = int_to_ptr.vmem [resolvable:$true] %s223
          %229 = dma.hbm_to_vmem [thread:$0]  %s222, 4096, %s224, %s211, 128, 128, 8
        $region36: #{tpu_custom_call.1} parent=31 // pred_fallthru
          _
      $region32: #{tpu_custom_call.1} parent=5 // pred_fallthru
        _
      %p230 = scmp.le.s32.totalorder 1, %s18
      %p231 = scmp.lt.s32.totalorder %s18, 5
      %p232 = pnand %p230, %p231
      %p233 = pneg %p232
      // Predicated region
      $region37: #{tpu_custom_call.1} parent=5 // pred_check
        _
      $region38: #{tpu_custom_call.1} parent=5 // pred_check_branch
        %235 = sbr.rel (%p232) target = $region40
      $region39: #{tpu_custom_call.1} parent=5 // pred_region
        %s236 = ssub.s32 %s18, 1
        %s237 = sand.u32 %s31, 1
        %s238 = scalar_lea.sflag [#allocation4], %s237
        %s239 = sand.u32 %s31, 1
        %s240 = smul.addr %s239, 256
        %s241 = scalar_lea.vmem [#allocation3], %s240
        // Predicated region
        $region41: #{tpu_custom_call.1} parent=39 // pred_check
          %p242 = pneg %p44
        $region42: #{tpu_custom_call.1} parent=39 // pred_check_branch
          %244 = sbr.rel (%p242) target = $region44
        $region43: #{tpu_custom_call.1} parent=39 // pred_region
          %246 = dma.done %s238, 4096
        $region44: #{tpu_custom_call.1} parent=39 // pred_fallthru
          _
        // Predicated region
        $region45: #{tpu_custom_call.1} parent=39 // pred_check
          %p247 = pneg %p65
        $region46: #{tpu_custom_call.1} parent=39 // pred_check_branch
          %249 = sbr.rel (%p247) target = $region48
        $region47: #{tpu_custom_call.1} parent=39 // pred_region
          %251 = dma.done [#allocation7], 9216
        $region48: #{tpu_custom_call.1} parent=39 // pred_fallthru
          _
        // Predicated region
        $region49: #{tpu_custom_call.1} parent=39 // pred_check
          %p252 = pneg %p107
        $region50: #{tpu_custom_call.1} parent=39 // pred_check_branch
          %254 = sbr.rel (%p252) target = $region52
        $region51: #{tpu_custom_call.1} parent=39 // pred_region
          %256 = dma.done [#allocation7], 9216
        $region52: #{tpu_custom_call.1} parent=39 // pred_fallthru
          _
        %s257 = sand.u32 %s31, 1
        %s258 = scalar_lea.sflag [#allocation4], %s257
        %s259 = sand.u32 %s31, 1
        %s260 = smul.addr %s259, 256
        %s261 = scalar_lea.vmem [#allocation3], %s260
        %p262 = pneg %p44
        %p263 = pneg %p41
        %p264 = pneg %p65
        %p265 = pneg %p62
        %p266 = pneg %p86
        %p267 = pneg %p83
        %p268 = pneg %p107
        %p269 = pneg %p104
        %p270 = pneg %p128
        %p271 = pneg %p125
        %p272 = pneg %p154
        %p273 = pneg %p151
        %s274 = sand.u32 %s141, 1
        %s275 = scalar_lea.sflag [#allocation5], %s274
        %s276 = sand.u32 %s141, 1
        %s277 = smul.addr %s276, 256
        %s278 = scalar_lea.vmem [#allocation9], %s277
        %s279 = smul.u32 4, %s23
        %s280 = smul.u32 4, %s23
        %282 = vst [vmem:[#allocation2] sm:$0xff] 0
        %283 = vst [vmem:[#allocation2 + $0x8] sm:$0xf] 0
        %284 = vst [vmem:[#allocation2 + $0x78] sm:$0xff] 0
        %285 = vst [vmem:[#allocation2 + $0x80] sm:$0xf] 0
        %286 = vst [vmem:[#allocation2 + $0xf0] sm:$0xff] 0
        %287 = vst [vmem:[#allocation2 + $0xf8] sm:$0xf] 0
        %288 = vst [vmem:[#allocation2 + $0x168] sm:$0xff] 0
        %289 = vst [vmem:[#allocation2 + $0x170] sm:$0xf] 0
        %s290 = scalar_lea.vmem [#allocation2], 108
        %291 = vst [vmem:[%s290] sm:$0xff] 0
        %292 = vst [vmem:[%s290 + $0x8] sm:$0xf] 0
        %293 = vst [vmem:[%s290 + $0x78] sm:$0xff] 0
        %294 = vst [vmem:[%s290 + $0x80] sm:$0xf] 0
        %295 = vst [vmem:[%s290 + $0xf0] sm:$0xff] 0
        %296 = vst [vmem:[%s290 + $0xf8] sm:$0xf] 0
        %297 = vst [vmem:[%s290 + $0x168] sm:$0xff] 0
        %298 = vst [vmem:[%s290 + $0x170] sm:$0xf] 0
        %v299 = vld [vmem:[%s2] sm:$0x1]
        %v300 = vld [vmem:[%s4] sm:$0x1]
        %v301 = vld [vmem:[%s241] sm:$0xff]
        %v302 = vld [vmem:[%s241 + $0x8] sm:$0xff]
        %v303 = vld [vmem:[%s241 + $0x10] sm:$0xff]
        %v304 = vld [vmem:[%s241 + $0x18] sm:$0xff]
        %v305 = vld [vmem:[%s241 + $0x20] sm:$0xff]
        %v306 = vld [vmem:[%s241 + $0x28] sm:$0xff]
        %v307 = vld [vmem:[%s241 + $0x30] sm:$0xff]
        %v308 = vld [vmem:[%s241 + $0x38] sm:$0xff]
        %v309 = vld [vmem:[%s241 + $0x40] sm:$0xff]
        %v310 = vld [vmem:[%s241 + $0x48] sm:$0xff]
        %v311 = vld [vmem:[%s241 + $0x50] sm:$0xff]
        %v312 = vld [vmem:[%s241 + $0x58] sm:$0xff]
        %v313 = vld [vmem:[%s241 + $0x60] sm:$0xff]
        %v314 = vld [vmem:[%s241 + $0x68] sm:$0xff]
        %v315 = vld [vmem:[%s241 + $0x70] sm:$0xff]
        %v316 = vld [vmem:[%s241 + $0x78] sm:$0xff]
        %v317 = vpack.c.bf16 %v301, %v301
        %v318 = vpack.c.bf16 %v302, %v302
        %v319 = vpack.c.bf16 %v303, %v303
        %v320 = vpack.c.bf16 %v304, %v304
        %v321 = vpack.c.bf16 %v305, %v305
        %v322 = vpack.c.bf16 %v306, %v306
        %v323 = vpack.c.bf16 %v307, %v307
        %v324 = vpack.c.bf16 %v308, %v308
        %v325 = vpack.c.bf16 %v309, %v309
        %v326 = vpack.c.bf16 %v310, %v310
        %v327 = vpack.c.bf16 %v311, %v311
        %v328 = vpack.c.bf16 %v312, %v312
        %v329 = vpack.c.bf16 %v313, %v313
        %v330 = vpack.c.bf16 %v314, %v314
        %v331 = vpack.c.bf16 %v315, %v315
        %v332 = vpack.c.bf16 %v316, %v316
        %v349 = vunpack.c.l.b16 %v317
        %v350 = vunpack.c.l.b16 %v318
        %v351 = vunpack.c.l.b16 %v319
        %v352 = vunpack.c.l.b16 %v320
        %v353 = vunpack.c.l.b16 %v321
        %v354 = vunpack.c.l.b16 %v322
        %v355 = vunpack.c.l.b16 %v323
        %v356 = vunpack.c.l.b16 %v324
        %v357 = vunpack.c.l.b16 %v325
        %v358 = vunpack.c.l.b16 %v326
        %v359 = vunpack.c.l.b16 %v327
        %v360 = vunpack.c.l.b16 %v328
        %v361 = vunpack.c.l.b16 %v329
        %v362 = vunpack.c.l.b16 %v330
        %v363 = vunpack.c.l.b16 %v331
        %v364 = vunpack.c.l.b16 %v332
        %v365 = vpack.c.b16 %v349, %v349
        %v366 = vpack.c.b16 %v350, %v350
        %v367 = vpack.c.b16 %v351, %v351
        %v368 = vpack.c.b16 %v352, %v352
        %v369 = vpack.c.b16 %v353, %v353
        %v370 = vpack.c.b16 %v354, %v354
        %v371 = vpack.c.b16 %v355, %v355
        %v372 = vpack.c.b16 %v356, %v356
        %v373 = vpack.c.b16 %v357, %v357
        %v374 = vpack.c.b16 %v358, %v358
        %v375 = vpack.c.b16 %v359, %v359
        %v376 = vpack.c.b16 %v360, %v360
        %v377 = vpack.c.b16 %v361, %v361
        %v378 = vpack.c.b16 %v362, %v362
        %v379 = vpack.c.b16 %v363, %v363
        %v380 = vpack.c.b16 %v364, %v364
        %v382 = vshrl.u32 %v365, 16
        %v384 = vrot.slane %v382, 7
        %v385 = vshll.u32 %v365, 16
        %v387 = vor.u32 %v384, %v385
        %v389 = vshrl.u32 %v366, 16
        %v391 = vrot.slane %v389, 7
        %v392 = vshll.u32 %v366, 16
        %v394 = vor.u32 %v391, %v392
        %v396 = vshrl.u32 %v367, 16
        %v398 = vrot.slane %v396, 7
        %v399 = vshll.u32 %v367, 16
        %v401 = vor.u32 %v398, %v399
        %v403 = vshrl.u32 %v368, 16
        %v405 = vrot.slane %v403, 7
        %v406 = vshll.u32 %v368, 16
        %v408 = vor.u32 %v405, %v406
        %v410 = vshrl.u32 %v369, 16
        %v412 = vrot.slane %v410, 7
        %v413 = vshll.u32 %v369, 16
        %v415 = vor.u32 %v412, %v413
        %v417 = vshrl.u32 %v370, 16
        %v419 = vrot.slane %v417, 7
        %v420 = vshll.u32 %v370, 16
        %v422 = vor.u32 %v419, %v420
        %v424 = vshrl.u32 %v371, 16
        %v426 = vrot.slane %v424, 7
        %v427 = vshll.u32 %v371, 16
        %v429 = vor.u32 %v426, %v427
        %v431 = vshrl.u32 %v372, 16
        %v433 = vrot.slane %v431, 7
        %v434 = vshll.u32 %v372, 16
        %v436 = vor.u32 %v433, %v434
        %v438 = vshrl.u32 %v373, 16
        %v440 = vrot.slane %v438, 7
        %v441 = vshll.u32 %v373, 16
        %v443 = vor.u32 %v440, %v441
        %v445 = vshrl.u32 %v374, 16
        %v447 = vrot.slane %v445, 7
        %v448 = vshll.u32 %v374, 16
        %v450 = vor.u32 %v447, %v448
        %v452 = vshrl.u32 %v375, 16
        %v454 = vrot.slane %v452, 7
        %v455 = vshll.u32 %v375, 16
        %v457 = vor.u32 %v454, %v455
        %v459 = vshrl.u32 %v376, 16
        %v461 = vrot.slane %v459, 7
        %v462 = vshll.u32 %v376, 16
        %v464 = vor.u32 %v461, %v462
        %v466 = vshrl.u32 %v377, 16
        %v468 = vrot.slane %v466, 7
        %v469 = vshll.u32 %v377, 16
        %v471 = vor.u32 %v468, %v469
        %v473 = vshrl.u32 %v378, 16
        %v475 = vrot.slane %v473, 7
        %v476 = vshll.u32 %v378, 16
        %v478 = vor.u32 %v475, %v476
        %v480 = vshrl.u32 %v379, 16
        %v482 = vrot.slane %v480, 7
        %v483 = vshll.u32 %v379, 16
        %v485 = vor.u32 %v482, %v483
        %v487 = vshrl.u32 %v380, 16
        %v489 = vrot.slane %v487, 7
        %v490 = vshll.u32 %v380, 16
        %v492 = vor.u32 %v489, %v490
        %vm509 = vcmask 1040384
        %vm510 = vsmask.f32 256
        %vm511 = vmand %vm509, %vm510
        %v512 = vsel %vm511, 0, %v387
        %v513 = vsel %vm511, 0, %v394
        %v514 = vsel %vm511, 0, %v401
        %v515 = vsel %vm511, 0, %v408
        %v516 = vsel %vm511, 0, %v415
        %v517 = vsel %vm511, 0, %v422
        %v518 = vsel %vm511, 0, %v429
        %v519 = vsel %vm511, 0, %v436
        %v520 = vsel %vm511, 0, %v443
        %v521 = vsel %vm511, 0, %v450
        %v522 = vsel %vm511, 0, %v457
        %v523 = vsel %vm511, 0, %v464
        %v524 = vsel %vm511, 0, %v471
        %v525 = vsel %vm511, 0, %v478
        %v526 = vsel %vm511, 0, %v485
        %v527 = vsel %vm511, 0, %v492
        %v528 = vrot.slane %v385, 1
        %v529 = vor.u32 %v382, %v528
        %v530 = vrot.slane %v392, 1
        %v531 = vor.u32 %v389, %v530
        %v532 = vrot.slane %v399, 1
        %v533 = vor.u32 %v396, %v532
        %v534 = vrot.slane %v406, 1
        %v535 = vor.u32 %v403, %v534
        %v536 = vrot.slane %v413, 1
        %v537 = vor.u32 %v410, %v536
        %v538 = vrot.slane %v420, 1
        %v539 = vor.u32 %v417, %v538
        %v540 = vrot.slane %v427, 1
        %v541 = vor.u32 %v424, %v540
        %v542 = vrot.slane %v434, 1
        %v543 = vor.u32 %v431, %v542
        %v544 = vrot.slane %v441, 1
        %v545 = vor.u32 %v438, %v544
        %v546 = vrot.slane %v448, 1
        %v547 = vor.u32 %v445, %v546
        %v548 = vrot.slane %v455, 1
        %v549 = vor.u32 %v452, %v548
        %v550 = vrot.slane %v462, 1
        %v551 = vor.u32 %v459, %v550
        %v552 = vrot.slane %v469, 1
        %v553 = vor.u32 %v466, %v552
        %v554 = vrot.slane %v476, 1
        %v555 = vor.u32 %v473, %v554
        %v556 = vrot.slane %v483, 1
        %v557 = vor.u32 %v480, %v556
        %v558 = vrot.slane %v490, 1
        %v559 = vor.u32 %v487, %v558
        %vm576 = vcmask 1043456
        %vm577 = vsmask.f32 3328
        %vm578 = vmand %vm576, %vm577
        %v579 = vsel %vm578, %v529, 0
        %v580 = vsel %vm578, %v531, 0
        %v581 = vsel %vm578, %v533, 0
        %v582 = vsel %vm578, %v535, 0
        %v583 = vsel %vm578, %v537, 0
        %v584 = vsel %vm578, %v539, 0
        %v585 = vsel %vm578, %v541, 0
        %v586 = vsel %vm578, %v543, 0
        %v587 = vsel %vm578, %v545, 0
        %v588 = vsel %vm578, %v547, 0
        %v589 = vsel %vm578, %v549, 0
        %v590 = vsel %vm578, %v551, 0
        %v591 = vsel %vm578, %v553, 0
        %v592 = vsel %vm578, %v555, 0
        %v593 = vsel %vm578, %v557, 0
        %v594 = vsel %vm578, %v559, 0
        %s595 = scalar_lea.vmem [#allocation2], 12
        %596 = vst [vmem:[%s595] sm:$0xf] %v512
        %597 = vst [vmem:[%s595 + $0xc] sm:$0xf] %v513
        %598 = vst [vmem:[%s595 + $0x18] sm:$0xf] %v514
        %599 = vst [vmem:[%s595 + $0x24] sm:$0xf] %v515
        %600 = vst [vmem:[%s595 + $0x30] sm:$0xf] %v516
        %601 = vst [vmem:[%s595 + $0x3c] sm:$0xf] %v517
        %602 = vst [vmem:[%s595 + $0x48] sm:$0xf] %v518
        %603 = vst [vmem:[%s595 + $0x54] sm:$0xf] %v519
        %604 = vst [vmem:[%s595 + $0x78] sm:$0xf] %v520
        %605 = vst [vmem:[%s595 + $0x84] sm:$0xf] %v521
        %606 = vst [vmem:[%s595 + $0x90] sm:$0xf] %v522
        %607 = vst [vmem:[%s595 + $0x9c] sm:$0xf] %v523
        %608 = vst [vmem:[%s595 + $0xa8] sm:$0xf] %v524
        %609 = vst [vmem:[%s595 + $0xb4] sm:$0xf] %v525
        %610 = vst [vmem:[%s595 + $0xc0] sm:$0xf] %v526
        %611 = vst [vmem:[%s595 + $0xcc] sm:$0xf] %v527
        %612 = vst [vmem:[%s595 + $0x4] sm:$0xf] %v317
        %613 = vst [vmem:[%s595 + $0x10] sm:$0xf] %v318
        %614 = vst [vmem:[%s595 + $0x1c] sm:$0xf] %v319
        %615 = vst [vmem:[%s595 + $0x28] sm:$0xf] %v320
        %616 = vst [vmem:[%s595 + $0x34] sm:$0xf] %v321
        %617 = vst [vmem:[%s595 + $0x40] sm:$0xf] %v322
        %618 = vst [vmem:[%s595 + $0x4c] sm:$0xf] %v323
        %619 = vst [vmem:[%s595 + $0x58] sm:$0xf] %v324
        %620 = vst [vmem:[%s595 + $0x7c] sm:$0xf] %v325
        %621 = vst [vmem:[%s595 + $0x88] sm:$0xf] %v326
        %622 = vst [vmem:[%s595 + $0x94] sm:$0xf] %v327
        %623 = vst [vmem:[%s595 + $0xa0] sm:$0xf] %v328
        %624 = vst [vmem:[%s595 + $0xac] sm:$0xf] %v329
        %625 = vst [vmem:[%s595 + $0xb8] sm:$0xf] %v330
        %626 = vst [vmem:[%s595 + $0xc4] sm:$0xf] %v331
        %627 = vst [vmem:[%s595 + $0xd0] sm:$0xf] %v332
        %628 = vst [vmem:[%s595 + $0x8] sm:$0xf] %v579
        %629 = vst [vmem:[%s595 + $0x14] sm:$0xf] %v580
        %630 = vst [vmem:[%s595 + $0x20] sm:$0xf] %v581
        %631 = vst [vmem:[%s595 + $0x2c] sm:$0xf] %v582
        %632 = vst [vmem:[%s595 + $0x38] sm:$0xf] %v583
        %633 = vst [vmem:[%s595 + $0x44] sm:$0xf] %v584
        %634 = vst [vmem:[%s595 + $0x50] sm:$0xf] %v585
        %635 = vst [vmem:[%s595 + $0x5c] sm:$0xf] %v586
        %636 = vst [vmem:[%s595 + $0x80] sm:$0xf] %v587
        %637 = vst [vmem:[%s595 + $0x8c] sm:$0xf] %v588
        %638 = vst [vmem:[%s595 + $0x98] sm:$0xf] %v589
        %639 = vst [vmem:[%s595 + $0xa4] sm:$0xf] %v590
        %640 = vst [vmem:[%s595 + $0xb0] sm:$0xf] %v591
        %641 = vst [vmem:[%s595 + $0xbc] sm:$0xf] %v592
        %642 = vst [vmem:[%s595 + $0xc8] sm:$0xf] %v593
        %643 = vst [vmem:[%s595 + $0xd4] sm:$0xf] %v594
        %v644 = vld [vmem:[#allocation2] sm:$0xff]
        %v645 = vld [vmem:[#allocation2 + $0x8] sm:$0xf]
        %v646 = vld [vmem:[#allocation2 + $0xc] sm:$0xff]
        %v647 = vld [vmem:[#allocation2 + $0x14] sm:$0xf]
        %v648 = vld [vmem:[#allocation2 + $0x18] sm:$0xff]
        %v649 = vld [vmem:[#allocation2 + $0x20] sm:$0xf]
        %v650 = vld [vmem:[#allocation2 + $0x24] sm:$0xff]
        %v651 = vld [vmem:[#allocation2 + $0x2c] sm:$0xf]
        %v652 = vld [vmem:[#allocation2 + $0x30] sm:$0xff]
        %v653 = vld [vmem:[#allocation2 + $0x38] sm:$0xf]
        %v654 = vld [vmem:[#allocation2 + $0x3c] sm:$0xff]
        %v655 = vld [vmem:[#allocation2 + $0x44] sm:$0xf]
        %v656 = vld [vmem:[#allocation2 + $0x48] sm:$0xff]
        %v657 = vld [vmem:[#allocation2 + $0x50] sm:$0xf]
        %v658 = vld [vmem:[#allocation2 + $0x54] sm:$0xff]
        %v659 = vld [vmem:[#allocation2 + $0x5c] sm:$0xf]
        %v660 = vld [vmem:[#allocation2 + $0x78] sm:$0xff]
        %v661 = vld [vmem:[#allocation2 + $0x80] sm:$0xf]
        %v662 = vld [vmem:[#allocation2 + $0x84] sm:$0xff]
        %v663 = vld [vmem:[#allocation2 + $0x8c] sm:$0xf]
        %v664 = vld [vmem:[#allocation2 + $0x90] sm:$0xff]
        %v665 = vld [vmem:[#allocation2 + $0x98] sm:$0xf]
        %v666 = vld [vmem:[#allocation2 + $0x9c] sm:$0xff]
        %v667 = vld [vmem:[#allocation2 + $0xa4] sm:$0xf]
        %v668 = vld [vmem:[#allocation2 + $0xa8] sm:$0xff]
        %v669 = vld [vmem:[#allocation2 + $0xb0] sm:$0xf]
        %v670 = vld [vmem:[#allocation2 + $0xb4] sm:$0xff]
        %v671 = vld [vmem:[#allocation2 + $0xbc] sm:$0xf]
        %v672 = vld [vmem:[#allocation2 + $0xc0] sm:$0xff]
        %v673 = vld [vmem:[#allocation2 + $0xc8] sm:$0xf]
        %v674 = vld [vmem:[#allocation2 + $0xcc] sm:$0xff]
        %v675 = vld [vmem:[#allocation2 + $0xd4] sm:$0xf]
        %v676 = vld [vmem:[#allocation6] sm:$0xf]
        %v677 = vld [vmem:[#allocation6 + $0x4] sm:$0xf]
        %v678 = vld [vmem:[#allocation6 + $0x8] sm:$0xf]
        %v679 = vld [vmem:[#allocation6 + $0xc] sm:$0xf]
        %v680 = vld [vmem:[#allocation6 + $0x10] sm:$0xf]
        %v681 = vld [vmem:[#allocation6 + $0x14] sm:$0xf]
        %v682 = vld [vmem:[#allocation6 + $0x18] sm:$0xf]
        %v683 = vld [vmem:[#allocation6 + $0x1c] sm:$0xf]
        %v684 = vld [vmem:[#allocation6 + $0x20] sm:$0xf]
        %v685 = vld [vmem:[#allocation6 + $0x24] sm:$0xf]
        %v686 = vld [vmem:[#allocation6 + $0x28] sm:$0xf]
        %v687 = vld [vmem:[#allocation6 + $0x2c] sm:$0xf]
        %v688 = vld [vmem:[#allocation6 + $0x30] sm:$0xf]
        %v689 = vld [vmem:[#allocation6 + $0x34] sm:$0xf]
        %v690 = vld [vmem:[#allocation6 + $0x38] sm:$0xf]
        %v691 = vld [vmem:[#allocation6 + $0x3c] sm:$0xf]
        %v692 = vld [vmem:[#allocation6 + $0x40] sm:$0xf]
        %v693 = vld [vmem:[#allocation6 + $0x44] sm:$0xf]
        %v694 = vld [vmem:[#allocation6 + $0x48] sm:$0xf]
        %v695 = vld [vmem:[#allocation6 + $0x4c] sm:$0xf]
        %v696 = vld [vmem:[#allocation6 + $0x50] sm:$0xf]
        %v697 = vld [vmem:[#allocation6 + $0x54] sm:$0xf]
        %v698 = vld [vmem:[#allocation6 + $0x58] sm:$0xf]
        %v699 = vld [vmem:[#allocation6 + $0x5c] sm:$0xf]
        %v700 = vld [vmem:[#allocation6 + $0x60] sm:$0xf]
        %v701 = vld [vmem:[#allocation6 + $0x64] sm:$0xf]
        %v702 = vld [vmem:[#allocation6 + $0x68] sm:$0xf]
        %v703 = vld [vmem:[#allocation6 + $0x6c] sm:$0xf]
        %v704 = vld [vmem:[#allocation6 + $0x70] sm:$0xf]
        %v705 = vld [vmem:[#allocation6 + $0x74] sm:$0xf]
        %v706 = vld [vmem:[#allocation6 + $0x78] sm:$0xf]
        %v707 = vld [vmem:[#allocation6 + $0x7c] sm:$0xf]
        %v708 = vld [vmem:[#allocation6 + $0x80] sm:$0xf]
        %v709 = vld [vmem:[#allocation6 + $0x84] sm:$0xf]
        %v710 = vld [vmem:[#allocation6 + $0x88] sm:$0xf]
        %v711 = vld [vmem:[#allocation6 + $0x8c] sm:$0xf]
        %v712 = vld [vmem:[#allocation6 + $0x90] sm:$0xf]
        %v713 = vld [vmem:[#allocation6 + $0x94] sm:$0xf]
        %v714 = vld [vmem:[#allocation6 + $0x98] sm:$0xf]
        %v715 = vld [vmem:[#allocation6 + $0x9c] sm:$0xf]
        %v716 = vld [vmem:[#allocation6 + $0xa0] sm:$0xf]
        %v717 = vld [vmem:[#allocation6 + $0xa4] sm:$0xf]
        %v718 = vld [vmem:[#allocation6 + $0xa8] sm:$0xf]
        %v719 = vld [vmem:[#allocation6 + $0xac] sm:$0xf]
        %v720 = vld [vmem:[#allocation6 + $0xb0] sm:$0xf]
        %v721 = vld [vmem:[#allocation6 + $0xb4] sm:$0xf]
        %v722 = vld [vmem:[#allocation6 + $0xb8] sm:$0xf]
        %v723 = vld [vmem:[#allocation6 + $0xbc] sm:$0xf]
        %v724 = vld [vmem:[%s595] sm:$0xff]
        %v725 = vld [vmem:[%s595 + $0x8] sm:$0xf]
        %v726 = vld [vmem:[%s595 + $0xc] sm:$0xff]
        %v727 = vld [vmem:[%s595 + $0x14] sm:$0xf]
        %v728 = vld [vmem:[%s595 + $0x18] sm:$0xff]
        %v729 = vld [vmem:[%s595 + $0x20] sm:$0xf]
        %v730 = vld [vmem:[%s595 + $0x24] sm:$0xff]
        %v731 = vld [vmem:[%s595 + $0x2c] sm:$0xf]
        %v732 = vld [vmem:[%s595 + $0x30] sm:$0xff]
        %v733 = vld [vmem:[%s595 + $0x38] sm:$0xf]
        %v734 = vld [vmem:[%s595 + $0x3c] sm:$0xff]
        %v735 = vld [vmem:[%s595 + $0x44] sm:$0xf]
        %v736 = vld [vmem:[%s595 + $0x48] sm:$0xff]
        %v737 = vld [vmem:[%s595 + $0x50] sm:$0xf]
        %v738 = vld [vmem:[%s595 + $0x54] sm:$0xff]
        %v739 = vld [vmem:[%s595 + $0x5c] sm:$0xf]
        %v740 = vld [vmem:[%s595 + $0x78] sm:$0xff]
        %v741 = vld [vmem:[%s595 + $0x80] sm:$0xf]
        %v742 = vld [vmem:[%s595 + $0x84] sm:$0xff]
        %v743 = vld [vmem:[%s595 + $0x8c] sm:$0xf]
        %v744 = vld [vmem:[%s595 + $0x90] sm:$0xff]
        %v745 = vld [vmem:[%s595 + $0x98] sm:$0xf]
        %v746 = vld [vmem:[%s595 + $0x9c] sm:$0xff]
        %v747 = vld [vmem:[%s595 + $0xa4] sm:$0xf]
        %v748 = vld [vmem:[%s595 + $0xa8] sm:$0xff]
        %v749 = vld [vmem:[%s595 + $0xb0] sm:$0xf]
        %v750 = vld [vmem:[%s595 + $0xb4] sm:$0xff]
        %v751 = vld [vmem:[%s595 + $0xbc] sm:$0xf]
        %v752 = vld [vmem:[%s595 + $0xc0] sm:$0xff]
        %v753 = vld [vmem:[%s595 + $0xc8] sm:$0xf]
        %v754 = vld [vmem:[%s595 + $0xcc] sm:$0xff]
        %v755 = vld [vmem:[%s595 + $0xd4] sm:$0xf]
        %s756 = scalar_lea.vmem [#allocation6], 192
        %v757 = vld [vmem:[%s756] sm:$0xf]
        %v758 = vld [vmem:[%s756 + $0x4] sm:$0xf]
        %v759 = vld [vmem:[%s756 + $0x8] sm:$0xf]
        %v760 = vld [vmem:[%s756 + $0xc] sm:$0xf]
        %v761 = vld [vmem:[%s756 + $0x10] sm:$0xf]
        %v762 = vld [vmem:[%s756 + $0x14] sm:$0xf]
        %v763 = vld [vmem:[%s756 + $0x18] sm:$0xf]
        %v764 = vld [vmem:[%s756 + $0x1c] sm:$0xf]
        %v765 = vld [vmem:[%s756 + $0x20] sm:$0xf]
        %v766 = vld [vmem:[%s756 + $0x24] sm:$0xf]
        %v767 = vld [vmem:[%s756 + $0x28] sm:$0xf]
        %v768 = vld [vmem:[%s756 + $0x2c] sm:$0xf]
        %v769 = vld [vmem:[%s756 + $0x30] sm:$0xf]
        %v770 = vld [vmem:[%s756 + $0x34] sm:$0xf]
        %v771 = vld [vmem:[%s756 + $0x38] sm:$0xf]
        %v772 = vld [vmem:[%s756 + $0x3c] sm:$0xf]
        %v773 = vld [vmem:[%s756 + $0x40] sm:$0xf]
        %v774 = vld [vmem:[%s756 + $0x44] sm:$0xf]
        %v775 = vld [vmem:[%s756 + $0x48] sm:$0xf]
        %v776 = vld [vmem:[%s756 + $0x4c] sm:$0xf]
        %v777 = vld [vmem:[%s756 + $0x50] sm:$0xf]
        %v778 = vld [vmem:[%s756 + $0x54] sm:$0xf]
        %v779 = vld [vmem:[%s756 + $0x58] sm:$0xf]
        %v780 = vld [vmem:[%s756 + $0x5c] sm:$0xf]
        %v781 = vld [vmem:[%s756 + $0x60] sm:$0xf]
        %v782 = vld [vmem:[%s756 + $0x64] sm:$0xf]
        %v783 = vld [vmem:[%s756 + $0x68] sm:$0xf]
        %v784 = vld [vmem:[%s756 + $0x6c] sm:$0xf]
        %v785 = vld [vmem:[%s756 + $0x70] sm:$0xf]
        %v786 = vld [vmem:[%s756 + $0x74] sm:$0xf]
        %v787 = vld [vmem:[%s756 + $0x78] sm:$0xf]
        %v788 = vld [vmem:[%s756 + $0x7c] sm:$0xf]
        %v789 = vld [vmem:[%s756 + $0x80] sm:$0xf]
        %v790 = vld [vmem:[%s756 + $0x84] sm:$0xf]
        %v791 = vld [vmem:[%s756 + $0x88] sm:$0xf]
        %v792 = vld [vmem:[%s756 + $0x8c] sm:$0xf]
        %v793 = vld [vmem:[%s756 + $0x90] sm:$0xf]
        %v794 = vld [vmem:[%s756 + $0x94] sm:$0xf]
        %v795 = vld [vmem:[%s756 + $0x98] sm:$0xf]
        %v796 = vld [vmem:[%s756 + $0x9c] sm:$0xf]
        %v797 = vld [vmem:[%s756 + $0xa0] sm:$0xf]
        %v798 = vld [vmem:[%s756 + $0xa4] sm:$0xf]
        %v799 = vld [vmem:[%s756 + $0xa8] sm:$0xf]
        %v800 = vld [vmem:[%s756 + $0xac] sm:$0xf]
        %v801 = vld [vmem:[%s756 + $0xb0] sm:$0xf]
        %v802 = vld [vmem:[%s756 + $0xb4] sm:$0xf]
        %v803 = vld [vmem:[%s756 + $0xb8] sm:$0xf]
        %v804 = vld [vmem:[%s756 + $0xbc] sm:$0xf]
        %v837 = vunpack.c.l.b16 %v724
        %v838 = vunpack.c.h.b16 %v724
        %v839 = vunpack.c.l.b16 %v725
        %v840 = vunpack.c.l.b16 %v726
        %v841 = vunpack.c.h.b16 %v726
        %v842 = vunpack.c.l.b16 %v727
        %v843 = vunpack.c.l.b16 %v728
        %v844 = vunpack.c.h.b16 %v728
        %v845 = vunpack.c.l.b16 %v729
        %v846 = vunpack.c.l.b16 %v730
        %v847 = vunpack.c.h.b16 %v730
        %v848 = vunpack.c.l.b16 %v731
        %v849 = vunpack.c.l.b16 %v732
        %v850 = vunpack.c.h.b16 %v732
        %v851 = vunpack.c.l.b16 %v733
        %v852 = vunpack.c.l.b16 %v734
        %v853 = vunpack.c.h.b16 %v734
        %v854 = vunpack.c.l.b16 %v735
        %v855 = vunpack.c.l.b16 %v736
        %v856 = vunpack.c.h.b16 %v736
        %v857 = vunpack.c.l.b16 %v737
        %v858 = vunpack.c.l.b16 %v738
        %v859 = vunpack.c.h.b16 %v738
        %v860 = vunpack.c.l.b16 %v739
        %v861 = vunpack.c.l.b16 %v740
        %v862 = vunpack.c.h.b16 %v740
        %v863 = vunpack.c.l.b16 %v741
        %v864 = vunpack.c.l.b16 %v742
        %v865 = vunpack.c.h.b16 %v742
        %v866 = vunpack.c.l.b16 %v743
        %v867 = vunpack.c.l.b16 %v744
        %v868 = vunpack.c.h.b16 %v744
        %v869 = vunpack.c.l.b16 %v745
        %v870 = vunpack.c.l.b16 %v746
        %v871 = vunpack.c.h.b16 %v746
        %v872 = vunpack.c.l.b16 %v747
        %v873 = vunpack.c.l.b16 %v748
        %v874 = vunpack.c.h.b16 %v748
        %v875 = vunpack.c.l.b16 %v749
        %v876 = vunpack.c.l.b16 %v750
        %v877 = vunpack.c.h.b16 %v750
        %v878 = vunpack.c.l.b16 %v751
        %v879 = vunpack.c.l.b16 %v752
        %v880 = vunpack.c.h.b16 %v752
        %v881 = vunpack.c.l.b16 %v753
        %v882 = vunpack.c.l.b16 %v754
        %v883 = vunpack.c.h.b16 %v754
        %v884 = vunpack.c.l.b16 %v755
        %v885 = vpack.c.b16 %v840, %v837
        %v886 = vpack.c.b16 %v841, %v838
        %v887 = vpack.c.b16 %v842, %v839
        %v888 = vpack.c.b16 %v846, %v843
        %v889 = vpack.c.b16 %v847, %v844
        %v890 = vpack.c.b16 %v848, %v845
        %v891 = vpack.c.b16 %v852, %v849
        %v892 = vpack.c.b16 %v853, %v850
        %v893 = vpack.c.b16 %v854, %v851
        %v894 = vpack.c.b16 %v858, %v855
        %v895 = vpack.c.b16 %v859, %v856
        %v896 = vpack.c.b16 %v860, %v857
        %v897 = vpack.c.b16 %v864, %v861
        %v898 = vpack.c.b16 %v865, %v862
        %v899 = vpack.c.b16 %v866, %v863
        %v900 = vpack.c.b16 %v870, %v867
        %v901 = vpack.c.b16 %v871, %v868
        %v902 = vpack.c.b16 %v872, %v869
        %v903 = vpack.c.b16 %v876, %v873
        %v904 = vpack.c.b16 %v877, %v874
        %v905 = vpack.c.b16 %v878, %v875
        %v906 = vpack.c.b16 %v882, %v879
        %v907 = vpack.c.b16 %v883, %v880
        %v908 = vpack.c.b16 %v884, %v881
        %v981 = vunpack.c.l.b16 %v757
        %v982 = vunpack.c.l.b16 %v758
        %v983 = vunpack.c.l.b16 %v759
        %v984 = vunpack.c.l.b16 %v760
        %v985 = vunpack.c.l.b16 %v761
        %v986 = vunpack.c.l.b16 %v762
        %v987 = vunpack.c.l.b16 %v763
        %v988 = vunpack.c.l.b16 %v764
        %v989 = vunpack.c.l.b16 %v765
        %v990 = vunpack.c.l.b16 %v766
        %v991 = vunpack.c.l.b16 %v767
        %v992 = vunpack.c.l.b16 %v768
        %v993 = vunpack.c.l.b16 %v769
        %v994 = vunpack.c.l.b16 %v770
        %v995 = vunpack.c.l.b16 %v771
        %v996 = vunpack.c.l.b16 %v772
        %v997 = vunpack.c.l.b16 %v773
        %v998 = vunpack.c.l.b16 %v774
        %v999 = vunpack.c.l.b16 %v775
        %v1000 = vunpack.c.l.b16 %v776
        %v1001 = vunpack.c.l.b16 %v777
        %v1002 = vunpack.c.l.b16 %v778
        %v1003 = vunpack.c.l.b16 %v779
        %v1004 = vunpack.c.l.b16 %v780
        %v1005 = vunpack.c.l.b16 %v781
        %v1006 = vunpack.c.l.b16 %v782
        %v1007 = vunpack.c.l.b16 %v783
        %v1008 = vunpack.c.l.b16 %v784
        %v1009 = vunpack.c.l.b16 %v785
        %v1010 = vunpack.c.l.b16 %v786
        %v1011 = vunpack.c.l.b16 %v787
        %v1012 = vunpack.c.l.b16 %v788
        %v1013 = vunpack.c.l.b16 %v789
        %v1014 = vunpack.c.l.b16 %v790
        %v1015 = vunpack.c.l.b16 %v791
        %v1016 = vunpack.c.l.b16 %v792
        %v1017 = vunpack.c.l.b16 %v793
        %v1018 = vunpack.c.l.b16 %v794
        %v1019 = vunpack.c.l.b16 %v795
        %v1020 = vunpack.c.l.b16 %v796
        %v1021 = vunpack.c.l.b16 %v797
        %v1022 = vunpack.c.l.b16 %v798
        %v1023 = vunpack.c.l.b16 %v799
        %v1024 = vunpack.c.l.b16 %v800
        %v1025 = vunpack.c.l.b16 %v801
        %v1026 = vunpack.c.l.b16 %v802
        %v1027 = vunpack.c.l.b16 %v803
        %v1028 = vunpack.c.l.b16 %v804
        %v1029 = vpack.c.b16 %v982, %v981
        %v1030 = vpack.c.b16 %v984, %v983
        %v1031 = vpack.c.b16 %v986, %v985
        %v1032 = vpack.c.b16 %v988, %v987
        %v1033 = vpack.c.b16 %v990, %v989
        %v1034 = vpack.c.b16 %v992, %v991
        %v1035 = vpack.c.b16 %v994, %v993
        %v1036 = vpack.c.b16 %v996, %v995
        %v1037 = vpack.c.b16 %v998, %v997
        %v1038 = vpack.c.b16 %v1000, %v999
        %v1039 = vpack.c.b16 %v1002, %v1001
        %v1040 = vpack.c.b16 %v1004, %v1003
        %v1041 = vpack.c.b16 %v1006, %v1005
        %v1042 = vpack.c.b16 %v1008, %v1007
        %v1043 = vpack.c.b16 %v1010, %v1009
        %v1044 = vpack.c.b16 %v1012, %v1011
        %v1045 = vpack.c.b16 %v1014, %v1013
        %v1046 = vpack.c.b16 %v1016, %v1015
        %v1047 = vpack.c.b16 %v1018, %v1017
        %v1048 = vpack.c.b16 %v1020, %v1019
        %v1049 = vpack.c.b16 %v1022, %v1021
        %v1050 = vpack.c.b16 %v1024, %v1023
        %v1051 = vpack.c.b16 %v1026, %v1025
        %v1052 = vpack.c.b16 %v1028, %v1027
        %1077 = vmatpush.bf16.msra.mxu0 %v1036
        %1078 = vmatpush.bf16.msra.mxu0 %v1035
        %1079 = vmatpush.bf16.msra.mxu0 %v1034
        %1080 = vmatpush.bf16.msra.mxu0 %v1033
        %1081 = vmatpush.bf16.msra.mxu0 %v1032
        %1082 = vmatpush.bf16.msra.mxu0 %v1031
        %1083 = vmatpush.bf16.msra.mxu0 %v1030
        %1084 = vmatpush.bf16.msra.mxu0 %v1029
        %1085 = vmatmul.bf16.gmra.mxu0 %v885
        %v1086 = vpop.f32.mrf.mxu0
        %v1087 = vadd.f32 0.0, %v1086
        %v1088 = vpop.f32.mrf.mxu0
        %v1089 = vadd.f32 0.0, %v1088
        %1090 = vmatmul.bf16.gmra.mxu0 %v888
        %v1091 = vpop.f32.mrf.mxu0
        %v1092 = vadd.f32 0.0, %v1091
        %v1093 = vpop.f32.mrf.mxu0
        %v1094 = vadd.f32 0.0, %v1093
        %1095 = vmatmul.bf16.gmra.mxu0 %v891
        %v1096 = vpop.f32.mrf.mxu0
        %v1097 = vadd.f32 0.0, %v1096
        %v1098 = vpop.f32.mrf.mxu0
        %v1099 = vadd.f32 0.0, %v1098
        %1100 = vmatmul.bf16.gmra.mxu0 %v894
        %v1101 = vpop.f32.mrf.mxu0
        %v1102 = vadd.f32 0.0, %v1101
        %v1103 = vpop.f32.mrf.mxu0
        %v1104 = vadd.f32 0.0, %v1103
        %1105 = vmatmul.bf16.gmra.mxu0 %v897
        %v1106 = vpop.f32.mrf.mxu0
        %v1107 = vadd.f32 0.0, %v1106
        %v1108 = vpop.f32.mrf.mxu0
        %v1109 = vadd.f32 0.0, %v1108
        %1110 = vmatmul.bf16.gmra.mxu0 %v900
        %v1111 = vpop.f32.mrf.mxu0
        %v1112 = vadd.f32 0.0, %v1111
        %v1113 = vpop.f32.mrf.mxu0
        %v1114 = vadd.f32 0.0, %v1113
        %1115 = vmatmul.bf16.gmra.mxu0 %v903
        %v1116 = vpop.f32.mrf.mxu0
        %v1117 = vadd.f32 0.0, %v1116
        %v1118 = vpop.f32.mrf.mxu0
        %v1119 = vadd.f32 0.0, %v1118
        %1120 = vmatmul.bf16.gmra.mxu0 %v906
        %v1121 = vpop.f32.mrf.mxu0
        %v1122 = vadd.f32 0.0, %v1121
        %v1123 = vpop.f32.mrf.mxu0
        %v1124 = vadd.f32 0.0, %v1123
        %1125 = vdwg.mxu0
        %1126 = vmatpush.bf16.msra.mxu0 %v1044
        %1127 = vmatpush.bf16.msra.mxu0 %v1043
        %1128 = vmatpush.bf16.msra.mxu0 %v1042
        %1129 = vmatpush.bf16.msra.mxu0 %v1041
        %1130 = vmatpush.bf16.msra.mxu0 %v1040
        %1131 = vmatpush.bf16.msra.mxu0 %v1039
        %1132 = vmatpush.bf16.msra.mxu0 %v1038
        %1133 = vmatpush.bf16.msra.mxu0 %v1037
        %1134 = vmatmul.bf16.gmra.mxu0 %v886
        %v1135 = vpop.f32.mrf.mxu0
        %v1136 = vadd.f32 %v1087, %v1135
        %v1137 = vpop.f32.mrf.mxu0
        %v1138 = vadd.f32 %v1089, %v1137
        %1139 = vmatmul.bf16.gmra.mxu0 %v889
        %v1140 = vpop.f32.mrf.mxu0
        %v1141 = vadd.f32 %v1092, %v1140
        %v1142 = vpop.f32.mrf.mxu0
        %v1143 = vadd.f32 %v1094, %v1142
        %1144 = vmatmul.bf16.gmra.mxu0 %v892
        %v1145 = vpop.f32.mrf.mxu0
        %v1146 = vadd.f32 %v1097, %v1145
        %v1147 = vpop.f32.mrf.mxu0
        %v1148 = vadd.f32 %v1099, %v1147
        %1149 = vmatmul.bf16.gmra.mxu0 %v895
        %v1150 = vpop.f32.mrf.mxu0
        %v1151 = vadd.f32 %v1102, %v1150
        %v1152 = vpop.f32.mrf.mxu0
        %v1153 = vadd.f32 %v1104, %v1152
        %1154 = vmatmul.bf16.gmra.mxu0 %v898
        %v1155 = vpop.f32.mrf.mxu0
        %v1156 = vadd.f32 %v1107, %v1155
        %v1157 = vpop.f32.mrf.mxu0
        %v1158 = vadd.f32 %v1109, %v1157
        %1159 = vmatmul.bf16.gmra.mxu0 %v901
        %v1160 = vpop.f32.mrf.mxu0
        %v1161 = vadd.f32 %v1112, %v1160
        %v1162 = vpop.f32.mrf.mxu0
        %v1163 = vadd.f32 %v1114, %v1162
        %1164 = vmatmul.bf16.gmra.mxu0 %v904
        %v1165 = vpop.f32.mrf.mxu0
        %v1166 = vadd.f32 %v1117, %v1165
        %v1167 = vpop.f32.mrf.mxu0
        %v1168 = vadd.f32 %v1119, %v1167
        %1169 = vmatmul.bf16.gmra.mxu0 %v907
        %v1170 = vpop.f32.mrf.mxu0
        %v1171 = vadd.f32 %v1122, %v1170
        %v1172 = vpop.f32.mrf.mxu0
        %v1173 = vadd.f32 %v1124, %v1172
        %1174 = vdwg.mxu0
        %1175 = vmatpush.bf16.msra.mxu0 %v1052
        %1176 = vmatpush.bf16.msra.mxu0 %v1051
        %1177 = vmatpush.bf16.msra.mxu0 %v1050
        %1178 = vmatpush.bf16.msra.mxu0 %v1049
        %1179 = vmatpush.bf16.msra.mxu0 %v1048
        %1180 = vmatpush.bf16.msra.mxu0 %v1047
        %1181 = vmatpush.bf16.msra.mxu0 %v1046
        %1182 = vmatpush.bf16.msra.mxu0 %v1045
        %1183 = vmatmul.bf16.gmra.mxu0 %v887
        %v1184 = vpop.f32.mrf.mxu0
        %v1185 = vadd.f32 %v1136, %v1184
        %v1186 = vpop.f32.mrf.mxu0
        %v1187 = vadd.f32 %v1138, %v1186
        %1188 = vmatmul.bf16.gmra.mxu0 %v890
        %v1189 = vpop.f32.mrf.mxu0
        %v1190 = vadd.f32 %v1141, %v1189
        %v1191 = vpop.f32.mrf.mxu0
        %v1192 = vadd.f32 %v1143, %v1191
        %1193 = vmatmul.bf16.gmra.mxu0 %v893
        %v1194 = vpop.f32.mrf.mxu0
        %v1195 = vadd.f32 %v1146, %v1194
        %v1196 = vpop.f32.mrf.mxu0
        %v1197 = vadd.f32 %v1148, %v1196
        %1198 = vmatmul.bf16.gmra.mxu0 %v896
        %v1199 = vpop.f32.mrf.mxu0
        %v1200 = vadd.f32 %v1151, %v1199
        %v1201 = vpop.f32.mrf.mxu0
        %v1202 = vadd.f32 %v1153, %v1201
        %1203 = vmatmul.bf16.gmra.mxu0 %v899
        %v1204 = vpop.f32.mrf.mxu0
        %v1205 = vadd.f32 %v1156, %v1204
        %v1206 = vpop.f32.mrf.mxu0
        %v1207 = vadd.f32 %v1158, %v1206
        %1208 = vmatmul.bf16.gmra.mxu0 %v902
        %v1209 = vpop.f32.mrf.mxu0
        %v1210 = vadd.f32 %v1161, %v1209
        %v1211 = vpop.f32.mrf.mxu0
        %v1212 = vadd.f32 %v1163, %v1211
        %1213 = vmatmul.bf16.gmra.mxu0 %v905
        %v1214 = vpop.f32.mrf.mxu0
        %v1215 = vadd.f32 %v1166, %v1214
        %v1216 = vpop.f32.mrf.mxu0
        %v1217 = vadd.f32 %v1168, %v1216
        %1218 = vmatmul.bf16.gmra.mxu0 %v908
        %v1219 = vpop.f32.mrf.mxu0
        %v1220 = vadd.f32 %v1171, %v1219
        %v1221 = vpop.f32.mrf.mxu0
        %v1222 = vadd.f32 %v1173, %v1221
        %1223 = vdwg.mxu0
        %v1256 = vunpack.c.l.b16 %v644
        %v1257 = vunpack.c.h.b16 %v644
        %v1258 = vunpack.c.l.b16 %v645
        %v1259 = vunpack.c.l.b16 %v646
        %v1260 = vunpack.c.h.b16 %v646
        %v1261 = vunpack.c.l.b16 %v647
        %v1262 = vunpack.c.l.b16 %v648
        %v1263 = vunpack.c.h.b16 %v648
        %v1264 = vunpack.c.l.b16 %v649
        %v1265 = vunpack.c.l.b16 %v650
        %v1266 = vunpack.c.h.b16 %v650
        %v1267 = vunpack.c.l.b16 %v651
        %v1268 = vunpack.c.l.b16 %v652
        %v1269 = vunpack.c.h.b16 %v652
        %v1270 = vunpack.c.l.b16 %v653
        %v1271 = vunpack.c.l.b16 %v654
        %v1272 = vunpack.c.h.b16 %v654
        %v1273 = vunpack.c.l.b16 %v655
        %v1274 = vunpack.c.l.b16 %v656
        %v1275 = vunpack.c.h.b16 %v656
        %v1276 = vunpack.c.l.b16 %v657
        %v1277 = vunpack.c.l.b16 %v658
        %v1278 = vunpack.c.h.b16 %v658
        %v1279 = vunpack.c.l.b16 %v659
        %v1280 = vunpack.c.l.b16 %v660
        %v1281 = vunpack.c.h.b16 %v660
        %v1282 = vunpack.c.l.b16 %v661
        %v1283 = vunpack.c.l.b16 %v662
        %v1284 = vunpack.c.h.b16 %v662
        %v1285 = vunpack.c.l.b16 %v663
        %v1286 = vunpack.c.l.b16 %v664
        %v1287 = vunpack.c.h.b16 %v664
        %v1288 = vunpack.c.l.b16 %v665
        %v1289 = vunpack.c.l.b16 %v666
        %v1290 = vunpack.c.h.b16 %v666
        %v1291 = vunpack.c.l.b16 %v667
        %v1292 = vunpack.c.l.b16 %v668
        %v1293 = vunpack.c.h.b16 %v668
        %v1294 = vunpack.c.l.b16 %v669
        %v1295 = vunpack.c.l.b16 %v670
        %v1296 = vunpack.c.h.b16 %v670
        %v1297 = vunpack.c.l.b16 %v671
        %v1298 = vunpack.c.l.b16 %v672
        %v1299 = vunpack.c.h.b16 %v672
        %v1300 = vunpack.c.l.b16 %v673
        %v1301 = vunpack.c.l.b16 %v674
        %v1302 = vunpack.c.h.b16 %v674
        %v1303 = vunpack.c.l.b16 %v675
        %v1304 = vpack.c.b16 %v1259, %v1256
        %v1305 = vpack.c.b16 %v1260, %v1257
        %v1306 = vpack.c.b16 %v1261, %v1258
        %v1307 = vpack.c.b16 %v1265, %v1262
        %v1308 = vpack.c.b16 %v1266, %v1263
        %v1309 = vpack.c.b16 %v1267, %v1264
        %v1310 = vpack.c.b16 %v1271, %v1268
        %v1311 = vpack.c.b16 %v1272, %v1269
        %v1312 = vpack.c.b16 %v1273, %v1270
        %v1313 = vpack.c.b16 %v1277, %v1274
        %v1314 = vpack.c.b16 %v1278, %v1275
        %v1315 = vpack.c.b16 %v1279, %v1276
        %v1316 = vpack.c.b16 %v1283, %v1280
        %v1317 = vpack.c.b16 %v1284, %v1281
        %v1318 = vpack.c.b16 %v1285, %v1282
        %v1319 = vpack.c.b16 %v1289, %v1286
        %v1320 = vpack.c.b16 %v1290, %v1287
        %v1321 = vpack.c.b16 %v1291, %v1288
        %v1322 = vpack.c.b16 %v1295, %v1292
        %v1323 = vpack.c.b16 %v1296, %v1293
        %v1324 = vpack.c.b16 %v1297, %v1294
        %v1325 = vpack.c.b16 %v1301, %v1298
        %v1326 = vpack.c.b16 %v1302, %v1299
        %v1327 = vpack.c.b16 %v1303, %v1300
        %v1400 = vunpack.c.l.b16 %v676
        %v1401 = vunpack.c.l.b16 %v677
        %v1402 = vunpack.c.l.b16 %v678
        %v1403 = vunpack.c.l.b16 %v679
        %v1404 = vunpack.c.l.b16 %v680
        %v1405 = vunpack.c.l.b16 %v681
        %v1406 = vunpack.c.l.b16 %v682
        %v1407 = vunpack.c.l.b16 %v683
        %v1408 = vunpack.c.l.b16 %v684
        %v1409 = vunpack.c.l.b16 %v685
        %v1410 = vunpack.c.l.b16 %v686
        %v1411 = vunpack.c.l.b16 %v687
        %v1412 = vunpack.c.l.b16 %v688
        %v1413 = vunpack.c.l.b16 %v689
        %v1414 = vunpack.c.l.b16 %v690
        %v1415 = vunpack.c.l.b16 %v691
        %v1416 = vunpack.c.l.b16 %v692
        %v1417 = vunpack.c.l.b16 %v693
        %v1418 = vunpack.c.l.b16 %v694
        %v1419 = vunpack.c.l.b16 %v695
        %v1420 = vunpack.c.l.b16 %v696
        %v1421 = vunpack.c.l.b16 %v697
        %v1422 = vunpack.c.l.b16 %v698
        %v1423 = vunpack.c.l.b16 %v699
        %v1424 = vunpack.c.l.b16 %v700
        %v1425 = vunpack.c.l.b16 %v701
        %v1426 = vunpack.c.l.b16 %v702
        %v1427 = vunpack.c.l.b16 %v703
        %v1428 = vunpack.c.l.b16 %v704
        %v1429 = vunpack.c.l.b16 %v705
        %v1430 = vunpack.c.l.b16 %v706
        %v1431 = vunpack.c.l.b16 %v707
        %v1432 = vunpack.c.l.b16 %v708
        %v1433 = vunpack.c.l.b16 %v709
        %v1434 = vunpack.c.l.b16 %v710
        %v1435 = vunpack.c.l.b16 %v711
        %v1436 = vunpack.c.l.b16 %v712
        %v1437 = vunpack.c.l.b16 %v713
        %v1438 = vunpack.c.l.b16 %v714
        %v1439 = vunpack.c.l.b16 %v715
        %v1440 = vunpack.c.l.b16 %v716
        %v1441 = vunpack.c.l.b16 %v717
        %v1442 = vunpack.c.l.b16 %v718
        %v1443 = vunpack.c.l.b16 %v719
        %v1444 = vunpack.c.l.b16 %v720
        %v1445 = vunpack.c.l.b16 %v721
        %v1446 = vunpack.c.l.b16 %v722
        %v1447 = vunpack.c.l.b16 %v723
        %v1448 = vpack.c.b16 %v1401, %v1400
        %v1449 = vpack.c.b16 %v1403, %v1402
        %v1450 = vpack.c.b16 %v1405, %v1404
        %v1451 = vpack.c.b16 %v1407, %v1406
        %v1452 = vpack.c.b16 %v1409, %v1408
        %v1453 = vpack.c.b16 %v1411, %v1410
        %v1454 = vpack.c.b16 %v1413, %v1412
        %v1455 = vpack.c.b16 %v1415, %v1414
        %v1456 = vpack.c.b16 %v1417, %v1416
        %v1457 = vpack.c.b16 %v1419, %v1418
        %v1458 = vpack.c.b16 %v1421, %v1420
        %v1459 = vpack.c.b16 %v1423, %v1422
        %v1460 = vpack.c.b16 %v1425, %v1424
        %v1461 = vpack.c.b16 %v1427, %v1426
        %v1462 = vpack.c.b16 %v1429, %v1428
        %v1463 = vpack.c.b16 %v1431, %v1430
        %v1464 = vpack.c.b16 %v1433, %v1432
        %v1465 = vpack.c.b16 %v1435, %v1434
        %v1466 = vpack.c.b16 %v1437, %v1436
        %v1467 = vpack.c.b16 %v1439, %v1438
        %v1468 = vpack.c.b16 %v1441, %v1440
        %v1469 = vpack.c.b16 %v1443, %v1442
        %v1470 = vpack.c.b16 %v1445, %v1444
        %v1471 = vpack.c.b16 %v1447, %v1446
        %1496 = vmatpush.bf16.msra.mxu0 %v1455
        %1497 = vmatpush.bf16.msra.mxu0 %v1454
        %1498 = vmatpush.bf16.msra.mxu0 %v1453
        %1499 = vmatpush.bf16.msra.mxu0 %v1452
        %1500 = vmatpush.bf16.msra.mxu0 %v1451
        %1501 = vmatpush.bf16.msra.mxu0 %v1450
        %1502 = vmatpush.bf16.msra.mxu0 %v1449
        %1503 = vmatpush.bf16.msra.mxu0 %v1448
        %1504 = vmatmul.bf16.gmra.mxu0 %v1304
        %v1505 = vpop.f32.mrf.mxu0
        %v1506 = vadd.f32 %v1185, %v1505
        %v1507 = vpop.f32.mrf.mxu0
        %v1508 = vadd.f32 %v1187, %v1507
        %1509 = vmatmul.bf16.gmra.mxu0 %v1307
        %v1510 = vpop.f32.mrf.mxu0
        %v1511 = vadd.f32 %v1190, %v1510
        %v1512 = vpop.f32.mrf.mxu0
        %v1513 = vadd.f32 %v1192, %v1512
        %1514 = vmatmul.bf16.gmra.mxu0 %v1310
        %v1515 = vpop.f32.mrf.mxu0
        %v1516 = vadd.f32 %v1195, %v1515
        %v1517 = vpop.f32.mrf.mxu0
        %v1518 = vadd.f32 %v1197, %v1517
        %1519 = vmatmul.bf16.gmra.mxu0 %v1313
        %v1520 = vpop.f32.mrf.mxu0
        %v1521 = vadd.f32 %v1200, %v1520
        %v1522 = vpop.f32.mrf.mxu0
        %v1523 = vadd.f32 %v1202, %v1522
        %1524 = vmatmul.bf16.gmra.mxu0 %v1316
        %v1525 = vpop.f32.mrf.mxu0
        %v1526 = vadd.f32 %v1205, %v1525
        %v1527 = vpop.f32.mrf.mxu0
        %v1528 = vadd.f32 %v1207, %v1527
        %1529 = vmatmul.bf16.gmra.mxu0 %v1319
        %v1530 = vpop.f32.mrf.mxu0
        %v1531 = vadd.f32 %v1210, %v1530
        %v1532 = vpop.f32.mrf.mxu0
        %v1533 = vadd.f32 %v1212, %v1532
        %1534 = vmatmul.bf16.gmra.mxu0 %v1322
        %v1535 = vpop.f32.mrf.mxu0
        %v1536 = vadd.f32 %v1215, %v1535
        %v1537 = vpop.f32.mrf.mxu0
        %v1538 = vadd.f32 %v1217, %v1537
        %1539 = vmatmul.bf16.gmra.mxu0 %v1325
        %v1540 = vpop.f32.mrf.mxu0
        %v1541 = vadd.f32 %v1220, %v1540
        %v1542 = vpop.f32.mrf.mxu0
        %v1543 = vadd.f32 %v1222, %v1542
        %1544 = vdwg.mxu0
        %1545 = vmatpush.bf16.msra.mxu0 %v1463
        %1546 = vmatpush.bf16.msra.mxu0 %v1462
        %1547 = vmatpush.bf16.msra.mxu0 %v1461
        %1548 = vmatpush.bf16.msra.mxu0 %v1460
        %1549 = vmatpush.bf16.msra.mxu0 %v1459
        %1550 = vmatpush.bf16.msra.mxu0 %v1458
        %1551 = vmatpush.bf16.msra.mxu0 %v1457
        %1552 = vmatpush.bf16.msra.mxu0 %v1456
        %1553 = vmatmul.bf16.gmra.mxu0 %v1305
        %v1554 = vpop.f32.mrf.mxu0
        %v1555 = vadd.f32 %v1506, %v1554
        %v1556 = vpop.f32.mrf.mxu0
        %v1557 = vadd.f32 %v1508, %v1556
        %1558 = vmatmul.bf16.gmra.mxu0 %v1308
        %v1559 = vpop.f32.mrf.mxu0
        %v1560 = vadd.f32 %v1511, %v1559
        %v1561 = vpop.f32.mrf.mxu0
        %v1562 = vadd.f32 %v1513, %v1561
        %1563 = vmatmul.bf16.gmra.mxu0 %v1311
        %v1564 = vpop.f32.mrf.mxu0
        %v1565 = vadd.f32 %v1516, %v1564
        %v1566 = vpop.f32.mrf.mxu0
        %v1567 = vadd.f32 %v1518, %v1566
        %1568 = vmatmul.bf16.gmra.mxu0 %v1314
        %v1569 = vpop.f32.mrf.mxu0
        %v1570 = vadd.f32 %v1521, %v1569
        %v1571 = vpop.f32.mrf.mxu0
        %v1572 = vadd.f32 %v1523, %v1571
        %1573 = vmatmul.bf16.gmra.mxu0 %v1317
        %v1574 = vpop.f32.mrf.mxu0
        %v1575 = vadd.f32 %v1526, %v1574
        %v1576 = vpop.f32.mrf.mxu0
        %v1577 = vadd.f32 %v1528, %v1576
        %1578 = vmatmul.bf16.gmra.mxu0 %v1320
        %v1579 = vpop.f32.mrf.mxu0
        %v1580 = vadd.f32 %v1531, %v1579
        %v1581 = vpop.f32.mrf.mxu0
        %v1582 = vadd.f32 %v1533, %v1581
        %1583 = vmatmul.bf16.gmra.mxu0 %v1323
        %v1584 = vpop.f32.mrf.mxu0
        %v1585 = vadd.f32 %v1536, %v1584
        %v1586 = vpop.f32.mrf.mxu0
        %v1587 = vadd.f32 %v1538, %v1586
        %1588 = vmatmul.bf16.gmra.mxu0 %v1326
        %v1589 = vpop.f32.mrf.mxu0
        %v1590 = vadd.f32 %v1541, %v1589
        %v1591 = vpop.f32.mrf.mxu0
        %v1592 = vadd.f32 %v1543, %v1591
        %1593 = vdwg.mxu0
        %1594 = vmatpush.bf16.msra.mxu0 %v1471
        %1595 = vmatpush.bf16.msra.mxu0 %v1470
        %1596 = vmatpush.bf16.msra.mxu0 %v1469
        %1597 = vmatpush.bf16.msra.mxu0 %v1468
        %1598 = vmatpush.bf16.msra.mxu0 %v1467
        %1599 = vmatpush.bf16.msra.mxu0 %v1466
        %1600 = vmatpush.bf16.msra.mxu0 %v1465
        %1601 = vmatpush.bf16.msra.mxu0 %v1464
        %1602 = vmatmul.bf16.gmra.mxu0 %v1306
        %v1603 = vpop.f32.mrf.mxu0
        %v1604 = vadd.f32 %v1555, %v1603
        %v1605 = vpop.f32.mrf.mxu0
        %v1606 = vadd.f32 %v1557, %v1605
        %1607 = vmatmul.bf16.gmra.mxu0 %v1309
        %v1608 = vpop.f32.mrf.mxu0
        %v1609 = vadd.f32 %v1560, %v1608
        %v1610 = vpop.f32.mrf.mxu0
        %v1611 = vadd.f32 %v1562, %v1610
        %1612 = vmatmul.bf16.gmra.mxu0 %v1312
        %v1613 = vpop.f32.mrf.mxu0
        %v1614 = vadd.f32 %v1565, %v1613
        %v1615 = vpop.f32.mrf.mxu0
        %v1616 = vadd.f32 %v1567, %v1615
        %1617 = vmatmul.bf16.gmra.mxu0 %v1315
        %v1618 = vpop.f32.mrf.mxu0
        %v1619 = vadd.f32 %v1570, %v1618
        %v1620 = vpop.f32.mrf.mxu0
        %v1621 = vadd.f32 %v1572, %v1620
        %1622 = vmatmul.bf16.gmra.mxu0 %v1318
        %v1623 = vpop.f32.mrf.mxu0
        %v1624 = vadd.f32 %v1575, %v1623
        %v1625 = vpop.f32.mrf.mxu0
        %v1626 = vadd.f32 %v1577, %v1625
        %1627 = vmatmul.bf16.gmra.mxu0 %v1321
        %v1628 = vpop.f32.mrf.mxu0
        %v1629 = vadd.f32 %v1580, %v1628
        %v1630 = vpop.f32.mrf.mxu0
        %v1631 = vadd.f32 %v1582, %v1630
        %1632 = vmatmul.bf16.gmra.mxu0 %v1324
        %v1633 = vpop.f32.mrf.mxu0
        %v1634 = vadd.f32 %v1585, %v1633
        %v1635 = vpop.f32.mrf.mxu0
        %v1636 = vadd.f32 %v1587, %v1635
        %1637 = vmatmul.bf16.gmra.mxu0 %v1327
        %v1638 = vpop.f32.mrf.mxu0
        %v1639 = vadd.f32 %v1590, %v1638
        %v1640 = vpop.f32.mrf.mxu0
        %v1641 = vadd.f32 %v1592, %v1640
        %1642 = vdwg.mxu0
        %s1643 = scalar_lea.vmem [#allocation2], 24
        %v1644 = vld [vmem:[%s1643] sm:$0xff]
        %v1645 = vld [vmem:[%s1643 + $0x8] sm:$0xf]
        %v1646 = vld [vmem:[%s1643 + $0xc] sm:$0xff]
        %v1647 = vld [vmem:[%s1643 + $0x14] sm:$0xf]
        %v1648 = vld [vmem:[%s1643 + $0x18] sm:$0xff]
        %v1649 = vld [vmem:[%s1643 + $0x20] sm:$0xf]
        %v1650 = vld [vmem:[%s1643 + $0x24] sm:$0xff]
        %v1651 = vld [vmem:[%s1643 + $0x2c] sm:$0xf]
        %v1652 = vld [vmem:[%s1643 + $0x30] sm:$0xff]
        %v1653 = vld [vmem:[%s1643 + $0x38] sm:$0xf]
        %v1654 = vld [vmem:[%s1643 + $0x3c] sm:$0xff]
        %v1655 = vld [vmem:[%s1643 + $0x44] sm:$0xf]
        %v1656 = vld [vmem:[%s1643 + $0x48] sm:$0xff]
        %v1657 = vld [vmem:[%s1643 + $0x50] sm:$0xf]
        %v1658 = vld [vmem:[%s1643 + $0x54] sm:$0xff]
        %v1659 = vld [vmem:[%s1643 + $0x5c] sm:$0xf]
        %v1660 = vld [vmem:[%s1643 + $0x78] sm:$0xff]
        %v1661 = vld [vmem:[%s1643 + $0x80] sm:$0xf]
        %v1662 = vld [vmem:[%s1643 + $0x84] sm:$0xff]
        %v1663 = vld [vmem:[%s1643 + $0x8c] sm:$0xf]
        %v1664 = vld [vmem:[%s1643 + $0x90] sm:$0xff]
        %v1665 = vld [vmem:[%s1643 + $0x98] sm:$0xf]
        %v1666 = vld [vmem:[%s1643 + $0x9c] sm:$0xff]
        %v1667 = vld [vmem:[%s1643 + $0xa4] sm:$0xf]
        %v1668 = vld [vmem:[%s1643 + $0xa8] sm:$0xff]
        %v1669 = vld [vmem:[%s1643 + $0xb0] sm:$0xf]
        %v1670 = vld [vmem:[%s1643 + $0xb4] sm:$0xff]
        %v1671 = vld [vmem:[%s1643 + $0xbc] sm:$0xf]
        %v1672 = vld [vmem:[%s1643 + $0xc0] sm:$0xff]
        %v1673 = vld [vmem:[%s1643 + $0xc8] sm:$0xf]
        %v1674 = vld [vmem:[%s1643 + $0xcc] sm:$0xff]
        %v1675 = vld [vmem:[%s1643 + $0xd4] sm:$0xf]
        %s1676 = scalar_lea.vmem [#allocation6], 384
        %v1677 = vld [vmem:[%s1676] sm:$0xf]
        %v1678 = vld [vmem:[%s1676 + $0x4] sm:$0xf]
        %v1679 = vld [vmem:[%s1676 + $0x8] sm:$0xf]
        %v1680 = vld [vmem:[%s1676 + $0xc] sm:$0xf]
        %v1681 = vld [vmem:[%s1676 + $0x10] sm:$0xf]
        %v1682 = vld [vmem:[%s1676 + $0x14] sm:$0xf]
        %v1683 = vld [vmem:[%s1676 + $0x18] sm:$0xf]
        %v1684 = vld [vmem:[%s1676 + $0x1c] sm:$0xf]
        %v1685 = vld [vmem:[%s1676 + $0x20] sm:$0xf]
        %v1686 = vld [vmem:[%s1676 + $0x24] sm:$0xf]
        %v1687 = vld [vmem:[%s1676 + $0x28] sm:$0xf]
        %v1688 = vld [vmem:[%s1676 + $0x2c] sm:$0xf]
        %v1689 = vld [vmem:[%s1676 + $0x30] sm:$0xf]
        %v1690 = vld [vmem:[%s1676 + $0x34] sm:$0xf]
        %v1691 = vld [vmem:[%s1676 + $0x38] sm:$0xf]
        %v1692 = vld [vmem:[%s1676 + $0x3c] sm:$0xf]
        %v1693 = vld [vmem:[%s1676 + $0x40] sm:$0xf]
        %v1694 = vld [vmem:[%s1676 + $0x44] sm:$0xf]
        %v1695 = vld [vmem:[%s1676 + $0x48] sm:$0xf]
        %v1696 = vld [vmem:[%s1676 + $0x4c] sm:$0xf]
        %v1697 = vld [vmem:[%s1676 + $0x50] sm:$0xf]
        %v1698 = vld [vmem:[%s1676 + $0x54] sm:$0xf]
        %v1699 = vld [vmem:[%s1676 + $0x58] sm:$0xf]
        %v1700 = vld [vmem:[%s1676 + $0x5c] sm:$0xf]
        %v1701 = vld [vmem:[%s1676 + $0x60] sm:$0xf]
        %v1702 = vld [vmem:[%s1676 + $0x64] sm:$0xf]
        %v1703 = vld [vmem:[%s1676 + $0x68] sm:$0xf]
        %v1704 = vld [vmem:[%s1676 + $0x6c] sm:$0xf]
        %v1705 = vld [vmem:[%s1676 + $0x70] sm:$0xf]
        %v1706 = vld [vmem:[%s1676 + $0x74] sm:$0xf]
        %v1707 = vld [vmem:[%s1676 + $0x78] sm:$0xf]
        %v1708 = vld [vmem:[%s1676 + $0x7c] sm:$0xf]
        %v1709 = vld [vmem:[%s1676 + $0x80] sm:$0xf]
        %v1710 = vld [vmem:[%s1676 + $0x84] sm:$0xf]
        %v1711 = vld [vmem:[%s1676 + $0x88] sm:$0xf]
        %v1712 = vld [vmem:[%s1676 + $0x8c] sm:$0xf]
        %v1713 = vld [vmem:[%s1676 + $0x90] sm:$0xf]
        %v1714 = vld [vmem:[%s1676 + $0x94] sm:$0xf]
        %v1715 = vld [vmem:[%s1676 + $0x98] sm:$0xf]
        %v1716 = vld [vmem:[%s1676 + $0x9c] sm:$0xf]
        %v1717 = vld [vmem:[%s1676 + $0xa0] sm:$0xf]
        %v1718 = vld [vmem:[%s1676 + $0xa4] sm:$0xf]
        %v1719 = vld [vmem:[%s1676 + $0xa8] sm:$0xf]
        %v1720 = vld [vmem:[%s1676 + $0xac] sm:$0xf]
        %v1721 = vld [vmem:[%s1676 + $0xb0] sm:$0xf]
        %v1722 = vld [vmem:[%s1676 + $0xb4] sm:$0xf]
        %v1723 = vld [vmem:[%s1676 + $0xb8] sm:$0xf]
        %v1724 = vld [vmem:[%s1676 + $0xbc] sm:$0xf]
        %v1757 = vunpack.c.l.b16 %v1644
        %v1758 = vunpack.c.h.b16 %v1644
        %v1759 = vunpack.c.l.b16 %v1645
        %v1760 = vunpack.c.l.b16 %v1646
        %v1761 = vunpack.c.h.b16 %v1646
        %v1762 = vunpack.c.l.b16 %v1647
        %v1763 = vunpack.c.l.b16 %v1648
        %v1764 = vunpack.c.h.b16 %v1648
        %v1765 = vunpack.c.l.b16 %v1649
        %v1766 = vunpack.c.l.b16 %v1650
        %v1767 = vunpack.c.h.b16 %v1650
        %v1768 = vunpack.c.l.b16 %v1651
        %v1769 = vunpack.c.l.b16 %v1652
        %v1770 = vunpack.c.h.b16 %v1652
        %v1771 = vunpack.c.l.b16 %v1653
        %v1772 = vunpack.c.l.b16 %v1654
        %v1773 = vunpack.c.h.b16 %v1654
        %v1774 = vunpack.c.l.b16 %v1655
        %v1775 = vunpack.c.l.b16 %v1656
        %v1776 = vunpack.c.h.b16 %v1656
        %v1777 = vunpack.c.l.b16 %v1657
        %v1778 = vunpack.c.l.b16 %v1658
        %v1779 = vunpack.c.h.b16 %v1658
        %v1780 = vunpack.c.l.b16 %v1659
        %v1781 = vunpack.c.l.b16 %v1660
        %v1782 = vunpack.c.h.b16 %v1660
        %v1783 = vunpack.c.l.b16 %v1661
        %v1784 = vunpack.c.l.b16 %v1662
        %v1785 = vunpack.c.h.b16 %v1662
        %v1786 = vunpack.c.l.b16 %v1663
        %v1787 = vunpack.c.l.b16 %v1664
        %v1788 = vunpack.c.h.b16 %v1664
        %v1789 = vunpack.c.l.b16 %v1665
        %v1790 = vunpack.c.l.b16 %v1666
        %v1791 = vunpack.c.h.b16 %v1666
        %v1792 = vunpack.c.l.b16 %v1667
        %v1793 = vunpack.c.l.b16 %v1668
        %v1794 = vunpack.c.h.b16 %v1668
        %v1795 = vunpack.c.l.b16 %v1669
        %v1796 = vunpack.c.l.b16 %v1670
        %v1797 = vunpack.c.h.b16 %v1670
        %v1798 = vunpack.c.l.b16 %v1671
        %v1799 = vunpack.c.l.b16 %v1672
        %v1800 = vunpack.c.h.b16 %v1672
        %v1801 = vunpack.c.l.b16 %v1673
        %v1802 = vunpack.c.l.b16 %v1674
        %v1803 = vunpack.c.h.b16 %v1674
        %v1804 = vunpack.c.l.b16 %v1675
        %v1805 = vpack.c.b16 %v1760, %v1757
        %v1806 = vpack.c.b16 %v1761, %v1758
        %v1807 = vpack.c.b16 %v1762, %v1759
        %v1808 = vpack.c.b16 %v1766, %v1763
        %v1809 = vpack.c.b16 %v1767, %v1764
        %v1810 = vpack.c.b16 %v1768, %v1765
        %v1811 = vpack.c.b16 %v1772, %v1769
        %v1812 = vpack.c.b16 %v1773, %v1770
        %v1813 = vpack.c.b16 %v1774, %v1771
        %v1814 = vpack.c.b16 %v1778, %v1775
        %v1815 = vpack.c.b16 %v1779, %v1776
        %v1816 = vpack.c.b16 %v1780, %v1777
        %v1817 = vpack.c.b16 %v1784, %v1781
        %v1818 = vpack.c.b16 %v1785, %v1782
        %v1819 = vpack.c.b16 %v1786, %v1783
        %v1820 = vpack.c.b16 %v1790, %v1787
        %v1821 = vpack.c.b16 %v1791, %v1788
        %v1822 = vpack.c.b16 %v1792, %v1789
        %v1823 = vpack.c.b16 %v1796, %v1793
        %v1824 = vpack.c.b16 %v1797, %v1794
        %v1825 = vpack.c.b16 %v1798, %v1795
        %v1826 = vpack.c.b16 %v1802, %v1799
        %v1827 = vpack.c.b16 %v1803, %v1800
        %v1828 = vpack.c.b16 %v1804, %v1801
        %v1901 = vunpack.c.l.b16 %v1677
        %v1902 = vunpack.c.l.b16 %v1678
        %v1903 = vunpack.c.l.b16 %v1679
        %v1904 = vunpack.c.l.b16 %v1680
        %v1905 = vunpack.c.l.b16 %v1681
        %v1906 = vunpack.c.l.b16 %v1682
        %v1907 = vunpack.c.l.b16 %v1683
        %v1908 = vunpack.c.l.b16 %v1684
        %v1909 = vunpack.c.l.b16 %v1685
        %v1910 = vunpack.c.l.b16 %v1686
        %v1911 = vunpack.c.l.b16 %v1687
        %v1912 = vunpack.c.l.b16 %v1688
        %v1913 = vunpack.c.l.b16 %v1689
        %v1914 = vunpack.c.l.b16 %v1690
        %v1915 = vunpack.c.l.b16 %v1691
        %v1916 = vunpack.c.l.b16 %v1692
        %v1917 = vunpack.c.l.b16 %v1693
        %v1918 = vunpack.c.l.b16 %v1694
        %v1919 = vunpack.c.l.b16 %v1695
        %v1920 = vunpack.c.l.b16 %v1696
        %v1921 = vunpack.c.l.b16 %v1697
        %v1922 = vunpack.c.l.b16 %v1698
        %v1923 = vunpack.c.l.b16 %v1699
        %v1924 = vunpack.c.l.b16 %v1700
        %v1925 = vunpack.c.l.b16 %v1701
        %v1926 = vunpack.c.l.b16 %v1702
        %v1927 = vunpack.c.l.b16 %v1703
        %v1928 = vunpack.c.l.b16 %v1704
        %v1929 = vunpack.c.l.b16 %v1705
        %v1930 = vunpack.c.l.b16 %v1706
        %v1931 = vunpack.c.l.b16 %v1707
        %v1932 = vunpack.c.l.b16 %v1708
        %v1933 = vunpack.c.l.b16 %v1709
        %v1934 = vunpack.c.l.b16 %v1710
        %v1935 = vunpack.c.l.b16 %v1711
        %v1936 = vunpack.c.l.b16 %v1712
        %v1937 = vunpack.c.l.b16 %v1713
        %v1938 = vunpack.c.l.b16 %v1714
        %v1939 = vunpack.c.l.b16 %v1715
        %v1940 = vunpack.c.l.b16 %v1716
        %v1941 = vunpack.c.l.b16 %v1717
        %v1942 = vunpack.c.l.b16 %v1718
        %v1943 = vunpack.c.l.b16 %v1719
        %v1944 = vunpack.c.l.b16 %v1720
        %v1945 = vunpack.c.l.b16 %v1721
        %v1946 = vunpack.c.l.b16 %v1722
        %v1947 = vunpack.c.l.b16 %v1723
        %v1948 = vunpack.c.l.b16 %v1724
        %v1949 = vpack.c.b16 %v1902, %v1901
        %v1950 = vpack.c.b16 %v1904, %v1903
        %v1951 = vpack.c.b16 %v1906, %v1905
        %v1952 = vpack.c.b16 %v1908, %v1907
        %v1953 = vpack.c.b16 %v1910, %v1909
        %v1954 = vpack.c.b16 %v1912, %v1911
        %v1955 = vpack.c.b16 %v1914, %v1913
        %v1956 = vpack.c.b16 %v1916, %v1915
        %v1957 = vpack.c.b16 %v1918, %v1917
        %v1958 = vpack.c.b16 %v1920, %v1919
        %v1959 = vpack.c.b16 %v1922, %v1921
        %v1960 = vpack.c.b16 %v1924, %v1923
        %v1961 = vpack.c.b16 %v1926, %v1925
        %v1962 = vpack.c.b16 %v1928, %v1927
        %v1963 = vpack.c.b16 %v1930, %v1929
        %v1964 = vpack.c.b16 %v1932, %v1931
        %v1965 = vpack.c.b16 %v1934, %v1933
        %v1966 = vpack.c.b16 %v1936, %v1935
        %v1967 = vpack.c.b16 %v1938, %v1937
        %v1968 = vpack.c.b16 %v1940, %v1939
        %v1969 = vpack.c.b16 %v1942, %v1941
        %v1970 = vpack.c.b16 %v1944, %v1943
        %v1971 = vpack.c.b16 %v1946, %v1945
        %v1972 = vpack.c.b16 %v1948, %v1947
        %1997 = vmatpush.bf16.msra.mxu0 %v1956
        %1998 = vmatpush.bf16.msra.mxu0 %v1955
        %1999 = vmatpush.bf16.msra.mxu0 %v1954
        %2000 = vmatpush.bf16.msra.mxu0 %v1953
        %2001 = vmatpush.bf16.msra.mxu0 %v1952
        %2002 = vmatpush.bf16.msra.mxu0 %v1951
        %2003 = vmatpush.bf16.msra.mxu0 %v1950
        %2004 = vmatpush.bf16.msra.mxu0 %v1949
        %2005 = vmatmul.bf16.gmra.mxu0 %v1805
        %v2006 = vpop.f32.mrf.mxu0
        %v2007 = vadd.f32 0.0, %v2006
        %v2008 = vpop.f32.mrf.mxu0
        %v2009 = vadd.f32 0.0, %v2008
        %2010 = vmatmul.bf16.gmra.mxu0 %v1808
        %v2011 = vpop.f32.mrf.mxu0
        %v2012 = vadd.f32 0.0, %v2011
        %v2013 = vpop.f32.mrf.mxu0
        %v2014 = vadd.f32 0.0, %v2013
        %2015 = vmatmul.bf16.gmra.mxu0 %v1811
        %v2016 = vpop.f32.mrf.mxu0
        %v2017 = vadd.f32 0.0, %v2016
        %v2018 = vpop.f32.mrf.mxu0
        %v2019 = vadd.f32 0.0, %v2018
        %2020 = vmatmul.bf16.gmra.mxu0 %v1814
        %v2021 = vpop.f32.mrf.mxu0
        %v2022 = vadd.f32 0.0, %v2021
        %v2023 = vpop.f32.mrf.mxu0
        %v2024 = vadd.f32 0.0, %v2023
        %2025 = vmatmul.bf16.gmra.mxu0 %v1817
        %v2026 = vpop.f32.mrf.mxu0
        %v2027 = vadd.f32 0.0, %v2026
        %v2028 = vpop.f32.mrf.mxu0
        %v2029 = vadd.f32 0.0, %v2028
        %2030 = vmatmul.bf16.gmra.mxu0 %v1820
        %v2031 = vpop.f32.mrf.mxu0
        %v2032 = vadd.f32 0.0, %v2031
        %v2033 = vpop.f32.mrf.mxu0
        %v2034 = vadd.f32 0.0, %v2033
        %2035 = vmatmul.bf16.gmra.mxu0 %v1823
        %v2036 = vpop.f32.mrf.mxu0
        %v2037 = vadd.f32 0.0, %v2036
        %v2038 = vpop.f32.mrf.mxu0
        %v2039 = vadd.f32 0.0, %v2038
        %2040 = vmatmul.bf16.gmra.mxu0 %v1826
        %v2041 = vpop.f32.mrf.mxu0
        %v2042 = vadd.f32 0.0, %v2041
        %v2043 = vpop.f32.mrf.mxu0
        %v2044 = vadd.f32 0.0, %v2043
        %2045 = vdwg.mxu0
        %2046 = vmatpush.bf16.msra.mxu0 %v1964
        %2047 = vmatpush.bf16.msra.mxu0 %v1963
        %2048 = vmatpush.bf16.msra.mxu0 %v1962
        %2049 = vmatpush.bf16.msra.mxu0 %v1961
        %2050 = vmatpush.bf16.msra.mxu0 %v1960
        %2051 = vmatpush.bf16.msra.mxu0 %v1959
        %2052 = vmatpush.bf16.msra.mxu0 %v1958
        %2053 = vmatpush.bf16.msra.mxu0 %v1957
        %2054 = vmatmul.bf16.gmra.mxu0 %v1806
        %v2055 = vpop.f32.mrf.mxu0
        %v2056 = vadd.f32 %v2007, %v2055
        %v2057 = vpop.f32.mrf.mxu0
        %v2058 = vadd.f32 %v2009, %v2057
        %2059 = vmatmul.bf16.gmra.mxu0 %v1809
        %v2060 = vpop.f32.mrf.mxu0
        %v2061 = vadd.f32 %v2012, %v2060
        %v2062 = vpop.f32.mrf.mxu0
        %v2063 = vadd.f32 %v2014, %v2062
        %2064 = vmatmul.bf16.gmra.mxu0 %v1812
        %v2065 = vpop.f32.mrf.mxu0
        %v2066 = vadd.f32 %v2017, %v2065
        %v2067 = vpop.f32.mrf.mxu0
        %v2068 = vadd.f32 %v2019, %v2067
        %2069 = vmatmul.bf16.gmra.mxu0 %v1815
        %v2070 = vpop.f32.mrf.mxu0
        %v2071 = vadd.f32 %v2022, %v2070
        %v2072 = vpop.f32.mrf.mxu0
        %v2073 = vadd.f32 %v2024, %v2072
        %2074 = vmatmul.bf16.gmra.mxu0 %v1818
        %v2075 = vpop.f32.mrf.mxu0
        %v2076 = vadd.f32 %v2027, %v2075
        %v2077 = vpop.f32.mrf.mxu0
        %v2078 = vadd.f32 %v2029, %v2077
        %2079 = vmatmul.bf16.gmra.mxu0 %v1821
        %v2080 = vpop.f32.mrf.mxu0
        %v2081 = vadd.f32 %v2032, %v2080
        %v2082 = vpop.f32.mrf.mxu0
        %v2083 = vadd.f32 %v2034, %v2082
        %2084 = vmatmul.bf16.gmra.mxu0 %v1824
        %v2085 = vpop.f32.mrf.mxu0
        %v2086 = vadd.f32 %v2037, %v2085
        %v2087 = vpop.f32.mrf.mxu0
        %v2088 = vadd.f32 %v2039, %v2087
        %2089 = vmatmul.bf16.gmra.mxu0 %v1827
        %v2090 = vpop.f32.mrf.mxu0
        %v2091 = vadd.f32 %v2042, %v2090
        %v2092 = vpop.f32.mrf.mxu0
        %v2093 = vadd.f32 %v2044, %v2092
        %2094 = vdwg.mxu0
        %2095 = vmatpush.bf16.msra.mxu0 %v1972
        %2096 = vmatpush.bf16.msra.mxu0 %v1971
        %2097 = vmatpush.bf16.msra.mxu0 %v1970
        %2098 = vmatpush.bf16.msra.mxu0 %v1969
        %2099 = vmatpush.bf16.msra.mxu0 %v1968
        %2100 = vmatpush.bf16.msra.mxu0 %v1967
        %2101 = vmatpush.bf16.msra.mxu0 %v1966
        %2102 = vmatpush.bf16.msra.mxu0 %v1965
        %2103 = vmatmul.bf16.gmra.mxu0 %v1807
        %v2104 = vpop.f32.mrf.mxu0
        %v2105 = vadd.f32 %v2056, %v2104
        %v2106 = vpop.f32.mrf.mxu0
        %v2107 = vadd.f32 %v2058, %v2106
        %2108 = vmatmul.bf16.gmra.mxu0 %v1810
        %v2109 = vpop.f32.mrf.mxu0
        %v2110 = vadd.f32 %v2061, %v2109
        %v2111 = vpop.f32.mrf.mxu0
        %v2112 = vadd.f32 %v2063, %v2111
        %2113 = vmatmul.bf16.gmra.mxu0 %v1813
        %v2114 = vpop.f32.mrf.mxu0
        %v2115 = vadd.f32 %v2066, %v2114
        %v2116 = vpop.f32.mrf.mxu0
        %v2117 = vadd.f32 %v2068, %v2116
        %2118 = vmatmul.bf16.gmra.mxu0 %v1816
        %v2119 = vpop.f32.mrf.mxu0
        %v2120 = vadd.f32 %v2071, %v2119
        %v2121 = vpop.f32.mrf.mxu0
        %v2122 = vadd.f32 %v2073, %v2121
        %2123 = vmatmul.bf16.gmra.mxu0 %v1819
        %v2124 = vpop.f32.mrf.mxu0
        %v2125 = vadd.f32 %v2076, %v2124
        %v2126 = vpop.f32.mrf.mxu0
        %v2127 = vadd.f32 %v2078, %v2126
        %2128 = vmatmul.bf16.gmra.mxu0 %v1822
        %v2129 = vpop.f32.mrf.mxu0
        %v2130 = vadd.f32 %v2081, %v2129
        %v2131 = vpop.f32.mrf.mxu0
        %v2132 = vadd.f32 %v2083, %v2131
        %2133 = vmatmul.bf16.gmra.mxu0 %v1825
        %v2134 = vpop.f32.mrf.mxu0
        %v2135 = vadd.f32 %v2086, %v2134
        %v2136 = vpop.f32.mrf.mxu0
        %v2137 = vadd.f32 %v2088, %v2136
        %2138 = vmatmul.bf16.gmra.mxu0 %v1828
        %v2139 = vpop.f32.mrf.mxu0
        %v2140 = vadd.f32 %v2091, %v2139
        %v2141 = vpop.f32.mrf.mxu0
        %v2142 = vadd.f32 %v2093, %v2141
        %2143 = vdwg.mxu0
        %v2144 = vadd.f32 %v1604, %v2105
        %v2145 = vadd.f32 %v1606, %v2107
        %v2146 = vadd.f32 %v1609, %v2110
        %v2147 = vadd.f32 %v1611, %v2112
        %v2148 = vadd.f32 %v1614, %v2115
        %v2149 = vadd.f32 %v1616, %v2117
        %v2150 = vadd.f32 %v1619, %v2120
        %v2151 = vadd.f32 %v1621, %v2122
        %v2152 = vadd.f32 %v1624, %v2125
        %v2153 = vadd.f32 %v1626, %v2127
        %v2154 = vadd.f32 %v1629, %v2130
        %v2155 = vadd.f32 %v1631, %v2132
        %v2156 = vadd.f32 %v1634, %v2135
        %v2157 = vadd.f32 %v1636, %v2137
        %v2158 = vadd.f32 %v1639, %v2140
        %v2159 = vadd.f32 %v1641, %v2142
        %v2161 = vperm.slane %v299, 0
        %v2163 = vadd.f32 %v2144, %v2161
        %v2164 = vadd.f32 %v2145, %v2161
        %v2165 = vadd.f32 %v2146, %v2161
        %v2166 = vadd.f32 %v2147, %v2161
        %v2167 = vadd.f32 %v2148, %v2161
        %v2168 = vadd.f32 %v2149, %v2161
        %v2169 = vadd.f32 %v2150, %v2161
        %v2170 = vadd.f32 %v2151, %v2161
        %v2171 = vadd.f32 %v2152, %v2161
        %v2172 = vadd.f32 %v2153, %v2161
        %v2173 = vadd.f32 %v2154, %v2161
        %v2174 = vadd.f32 %v2155, %v2161
        %v2175 = vadd.f32 %v2156, %v2161
        %v2176 = vadd.f32 %v2157, %v2161
        %v2177 = vadd.f32 %v2158, %v2161
        %v2178 = vadd.f32 %v2159, %v2161
        %v2179 = vmax.f32 %v2163, 0.0
        %v2180 = vmax.f32 %v2164, 0.0
        %v2181 = vmax.f32 %v2165, 0.0
        %v2182 = vmax.f32 %v2166, 0.0
        %v2183 = vmax.f32 %v2167, 0.0
        %v2184 = vmax.f32 %v2168, 0.0
        %v2185 = vmax.f32 %v2169, 0.0
        %v2186 = vmax.f32 %v2170, 0.0
        %v2187 = vmax.f32 %v2171, 0.0
        %v2188 = vmax.f32 %v2172, 0.0
        %v2189 = vmax.f32 %v2173, 0.0
        %v2190 = vmax.f32 %v2174, 0.0
        %v2191 = vmax.f32 %v2175, 0.0
        %v2192 = vmax.f32 %v2176, 0.0
        %v2193 = vmax.f32 %v2177, 0.0
        %v2194 = vmax.f32 %v2178, 0.0
        %v2195 = vpack.c.bf16 %v2179, %v2179
        %v2196 = vpack.c.bf16 %v2180, %v2180
        %v2197 = vpack.c.bf16 %v2181, %v2181
        %v2198 = vpack.c.bf16 %v2182, %v2182
        %v2199 = vpack.c.bf16 %v2183, %v2183
        %v2200 = vpack.c.bf16 %v2184, %v2184
        %v2201 = vpack.c.bf16 %v2185, %v2185
        %v2202 = vpack.c.bf16 %v2186, %v2186
        %v2203 = vpack.c.bf16 %v2187, %v2187
        %v2204 = vpack.c.bf16 %v2188, %v2188
        %v2205 = vpack.c.bf16 %v2189, %v2189
        %v2206 = vpack.c.bf16 %v2190, %v2190
        %v2207 = vpack.c.bf16 %v2191, %v2191
        %v2208 = vpack.c.bf16 %v2192, %v2192
        %v2209 = vpack.c.bf16 %v2193, %v2193
        %v2210 = vpack.c.bf16 %v2194, %v2194
        %v2227 = vunpack.c.l.b16 %v2195
        %v2228 = vunpack.c.l.b16 %v2196
        %v2229 = vunpack.c.l.b16 %v2197
        %v2230 = vunpack.c.l.b16 %v2198
        %v2231 = vunpack.c.l.b16 %v2199
        %v2232 = vunpack.c.l.b16 %v2200
        %v2233 = vunpack.c.l.b16 %v2201
        %v2234 = vunpack.c.l.b16 %v2202
        %v2235 = vunpack.c.l.b16 %v2203
        %v2236 = vunpack.c.l.b16 %v2204
        %v2237 = vunpack.c.l.b16 %v2205
        %v2238 = vunpack.c.l.b16 %v2206
        %v2239 = vunpack.c.l.b16 %v2207
        %v2240 = vunpack.c.l.b16 %v2208
        %v2241 = vunpack.c.l.b16 %v2209
        %v2242 = vunpack.c.l.b16 %v2210
        %v2243 = vpack.c.b16 %v2227, %v2227
        %v2244 = vpack.c.b16 %v2228, %v2228
        %v2245 = vpack.c.b16 %v2229, %v2229
        %v2246 = vpack.c.b16 %v2230, %v2230
        %v2247 = vpack.c.b16 %v2231, %v2231
        %v2248 = vpack.c.b16 %v2232, %v2232
        %v2249 = vpack.c.b16 %v2233, %v2233
        %v2250 = vpack.c.b16 %v2234, %v2234
        %v2251 = vpack.c.b16 %v2235, %v2235
        %v2252 = vpack.c.b16 %v2236, %v2236
        %v2253 = vpack.c.b16 %v2237, %v2237
        %v2254 = vpack.c.b16 %v2238, %v2238
        %v2255 = vpack.c.b16 %v2239, %v2239
        %v2256 = vpack.c.b16 %v2240, %v2240
        %v2257 = vpack.c.b16 %v2241, %v2241
        %v2258 = vpack.c.b16 %v2242, %v2242
        %v2260 = vshrl.u32 %v2243, 16
        %v2262 = vrot.slane %v2260, 7
        %v2263 = vshll.u32 %v2243, 16
        %v2265 = vor.u32 %v2262, %v2263
        %v2267 = vshrl.u32 %v2244, 16
        %v2269 = vrot.slane %v2267, 7
        %v2270 = vshll.u32 %v2244, 16
        %v2272 = vor.u32 %v2269, %v2270
        %v2274 = vshrl.u32 %v2245, 16
        %v2276 = vrot.slane %v2274, 7
        %v2277 = vshll.u32 %v2245, 16
        %v2279 = vor.u32 %v2276, %v2277
        %v2281 = vshrl.u32 %v2246, 16
        %v2283 = vrot.slane %v2281, 7
        %v2284 = vshll.u32 %v2246, 16
        %v2286 = vor.u32 %v2283, %v2284
        %v2288 = vshrl.u32 %v2247, 16
        %v2290 = vrot.slane %v2288, 7
        %v2291 = vshll.u32 %v2247, 16
        %v2293 = vor.u32 %v2290, %v2291
        %v2295 = vshrl.u32 %v2248, 16
        %v2297 = vrot.slane %v2295, 7
        %v2298 = vshll.u32 %v2248, 16
        %v2300 = vor.u32 %v2297, %v2298
        %v2302 = vshrl.u32 %v2249, 16
        %v2304 = vrot.slane %v2302, 7
        %v2305 = vshll.u32 %v2249, 16
        %v2307 = vor.u32 %v2304, %v2305
        %v2309 = vshrl.u32 %v2250, 16
        %v2311 = vrot.slane %v2309, 7
        %v2312 = vshll.u32 %v2250, 16
        %v2314 = vor.u32 %v2311, %v2312
        %v2316 = vshrl.u32 %v2251, 16
        %v2318 = vrot.slane %v2316, 7
        %v2319 = vshll.u32 %v2251, 16
        %v2321 = vor.u32 %v2318, %v2319
        %v2323 = vshrl.u32 %v2252, 16
        %v2325 = vrot.slane %v2323, 7
        %v2326 = vshll.u32 %v2252, 16
        %v2328 = vor.u32 %v2325, %v2326
        %v2330 = vshrl.u32 %v2253, 16
        %v2332 = vrot.slane %v2330, 7
        %v2333 = vshll.u32 %v2253, 16
        %v2335 = vor.u32 %v2332, %v2333
        %v2337 = vshrl.u32 %v2254, 16
        %v2339 = vrot.slane %v2337, 7
        %v2340 = vshll.u32 %v2254, 16
        %v2342 = vor.u32 %v2339, %v2340
        %v2344 = vshrl.u32 %v2255, 16
        %v2346 = vrot.slane %v2344, 7
        %v2347 = vshll.u32 %v2255, 16
        %v2349 = vor.u32 %v2346, %v2347
        %v2351 = vshrl.u32 %v2256, 16
        %v2353 = vrot.slane %v2351, 7
        %v2354 = vshll.u32 %v2256, 16
        %v2356 = vor.u32 %v2353, %v2354
        %v2358 = vshrl.u32 %v2257, 16
        %v2360 = vrot.slane %v2358, 7
        %v2361 = vshll.u32 %v2257, 16
        %v2363 = vor.u32 %v2360, %v2361
        %v2365 = vshrl.u32 %v2258, 16
        %v2367 = vrot.slane %v2365, 7
        %v2368 = vshll.u32 %v2258, 16
        %v2370 = vor.u32 %v2367, %v2368
        %v2387 = vsel %vm511, 0, %v2265
        %v2388 = vsel %vm511, 0, %v2272
        %v2389 = vsel %vm511, 0, %v2279
        %v2390 = vsel %vm511, 0, %v2286
        %v2391 = vsel %vm511, 0, %v2293
        %v2392 = vsel %vm511, 0, %v2300
        %v2393 = vsel %vm511, 0, %v2307
        %v2394 = vsel %vm511, 0, %v2314
        %v2395 = vsel %vm511, 0, %v2321
        %v2396 = vsel %vm511, 0, %v2328
        %v2397 = vsel %vm511, 0, %v2335
        %v2398 = vsel %vm511, 0, %v2342
        %v2399 = vsel %vm511, 0, %v2349
        %v2400 = vsel %vm511, 0, %v2356
        %v2401 = vsel %vm511, 0, %v2363
        %v2402 = vsel %vm511, 0, %v2370
        %v2403 = vrot.slane %v2263, 1
        %v2404 = vor.u32 %v2260, %v2403
        %v2405 = vrot.slane %v2270, 1
        %v2406 = vor.u32 %v2267, %v2405
        %v2407 = vrot.slane %v2277, 1
        %v2408 = vor.u32 %v2274, %v2407
        %v2409 = vrot.slane %v2284, 1
        %v2410 = vor.u32 %v2281, %v2409
        %v2411 = vrot.slane %v2291, 1
        %v2412 = vor.u32 %v2288, %v2411
        %v2413 = vrot.slane %v2298, 1
        %v2414 = vor.u32 %v2295, %v2413
        %v2415 = vrot.slane %v2305, 1
        %v2416 = vor.u32 %v2302, %v2415
        %v2417 = vrot.slane %v2312, 1
        %v2418 = vor.u32 %v2309, %v2417
        %v2419 = vrot.slane %v2319, 1
        %v2420 = vor.u32 %v2316, %v2419
        %v2421 = vrot.slane %v2326, 1
        %v2422 = vor.u32 %v2323, %v2421
        %v2423 = vrot.slane %v2333, 1
        %v2424 = vor.u32 %v2330, %v2423
        %v2425 = vrot.slane %v2340, 1
        %v2426 = vor.u32 %v2337, %v2425
        %v2427 = vrot.slane %v2347, 1
        %v2428 = vor.u32 %v2344, %v2427
        %v2429 = vrot.slane %v2354, 1
        %v2430 = vor.u32 %v2351, %v2429
        %v2431 = vrot.slane %v2361, 1
        %v2432 = vor.u32 %v2358, %v2431
        %v2433 = vrot.slane %v2368, 1
        %v2434 = vor.u32 %v2365, %v2433
        %v2451 = vsel %vm578, %v2404, 0
        %v2452 = vsel %vm578, %v2406, 0
        %v2453 = vsel %vm578, %v2408, 0
        %v2454 = vsel %vm578, %v2410, 0
        %v2455 = vsel %vm578, %v2412, 0
        %v2456 = vsel %vm578, %v2414, 0
        %v2457 = vsel %vm578, %v2416, 0
        %v2458 = vsel %vm578, %v2418, 0
        %v2459 = vsel %vm578, %v2420, 0
        %v2460 = vsel %vm578, %v2422, 0
        %v2461 = vsel %vm578, %v2424, 0
        %v2462 = vsel %vm578, %v2426, 0
        %v2463 = vsel %vm578, %v2428, 0
        %v2464 = vsel %vm578, %v2430, 0
        %v2465 = vsel %vm578, %v2432, 0
        %v2466 = vsel %vm578, %v2434, 0
        %2467 = vst [vmem:[%s595] sm:$0xf] %v2387
        %2468 = vst [vmem:[%s595 + $0xc] sm:$0xf] %v2388
        %2469 = vst [vmem:[%s595 + $0x18] sm:$0xf] %v2389
        %2470 = vst [vmem:[%s595 + $0x24] sm:$0xf] %v2390
        %2471 = vst [vmem:[%s595 + $0x30] sm:$0xf] %v2391
        %2472 = vst [vmem:[%s595 + $0x3c] sm:$0xf] %v2392
        %2473 = vst [vmem:[%s595 + $0x48] sm:$0xf] %v2393
        %2474 = vst [vmem:[%s595 + $0x54] sm:$0xf] %v2394
        %2475 = vst [vmem:[%s595 + $0x78] sm:$0xf] %v2395
        %2476 = vst [vmem:[%s595 + $0x84] sm:$0xf] %v2396
        %2477 = vst [vmem:[%s595 + $0x90] sm:$0xf] %v2397
        %2478 = vst [vmem:[%s595 + $0x9c] sm:$0xf] %v2398
        %2479 = vst [vmem:[%s595 + $0xa8] sm:$0xf] %v2399
        %2480 = vst [vmem:[%s595 + $0xb4] sm:$0xf] %v2400
        %2481 = vst [vmem:[%s595 + $0xc0] sm:$0xf] %v2401
        %2482 = vst [vmem:[%s595 + $0xcc] sm:$0xf] %v2402
        %2483 = vst [vmem:[%s595 + $0x4] sm:$0xf] %v2195
        %2484 = vst [vmem:[%s595 + $0x10] sm:$0xf] %v2196
        %2485 = vst [vmem:[%s595 + $0x1c] sm:$0xf] %v2197
        %2486 = vst [vmem:[%s595 + $0x28] sm:$0xf] %v2198
        %2487 = vst [vmem:[%s595 + $0x34] sm:$0xf] %v2199
        %2488 = vst [vmem:[%s595 + $0x40] sm:$0xf] %v2200
        %2489 = vst [vmem:[%s595 + $0x4c] sm:$0xf] %v2201
        %2490 = vst [vmem:[%s595 + $0x58] sm:$0xf] %v2202
        %2491 = vst [vmem:[%s595 + $0x7c] sm:$0xf] %v2203
        %2492 = vst [vmem:[%s595 + $0x88] sm:$0xf] %v2204
        %2493 = vst [vmem:[%s595 + $0x94] sm:$0xf] %v2205
        %2494 = vst [vmem:[%s595 + $0xa0] sm:$0xf] %v2206
        %2495 = vst [vmem:[%s595 + $0xac] sm:$0xf] %v2207
        %2496 = vst [vmem:[%s595 + $0xb8] sm:$0xf] %v2208
        %2497 = vst [vmem:[%s595 + $0xc4] sm:$0xf] %v2209
        %2498 = vst [vmem:[%s595 + $0xd0] sm:$0xf] %v2210
        %2499 = vst [vmem:[%s595 + $0x8] sm:$0xf] %v2451
        %2500 = vst [vmem:[%s595 + $0x14] sm:$0xf] %v2452
        %2501 = vst [vmem:[%s595 + $0x20] sm:$0xf] %v2453
        %2502 = vst [vmem:[%s595 + $0x2c] sm:$0xf] %v2454
        %2503 = vst [vmem:[%s595 + $0x38] sm:$0xf] %v2455
        %2504 = vst [vmem:[%s595 + $0x44] sm:$0xf] %v2456
        %2505 = vst [vmem:[%s595 + $0x50] sm:$0xf] %v2457
        %2506 = vst [vmem:[%s595 + $0x5c] sm:$0xf] %v2458
        %2507 = vst [vmem:[%s595 + $0x80] sm:$0xf] %v2459
        %2508 = vst [vmem:[%s595 + $0x8c] sm:$0xf] %v2460
        %2509 = vst [vmem:[%s595 + $0x98] sm:$0xf] %v2461
        %2510 = vst [vmem:[%s595 + $0xa4] sm:$0xf] %v2462
        %2511 = vst [vmem:[%s595 + $0xb0] sm:$0xf] %v2463
        %2512 = vst [vmem:[%s595 + $0xbc] sm:$0xf] %v2464
        %2513 = vst [vmem:[%s595 + $0xc8] sm:$0xf] %v2465
        %2514 = vst [vmem:[%s595 + $0xd4] sm:$0xf] %v2466
        %v2515 = vld [vmem:[%s241] sm:$0xff]
        %v2516 = vld [vmem:[%s241 + $0x8] sm:$0xff]
        %v2517 = vld [vmem:[%s241 + $0x10] sm:$0xff]
        %v2518 = vld [vmem:[%s241 + $0x18] sm:$0xff]
        %v2519 = vld [vmem:[%s241 + $0x20] sm:$0xff]
        %v2520 = vld [vmem:[%s241 + $0x28] sm:$0xff]
        %v2521 = vld [vmem:[%s241 + $0x30] sm:$0xff]
        %v2522 = vld [vmem:[%s241 + $0x38] sm:$0xff]
        %v2523 = vld [vmem:[%s241 + $0x40] sm:$0xff]
        %v2524 = vld [vmem:[%s241 + $0x48] sm:$0xff]
        %v2525 = vld [vmem:[%s241 + $0x50] sm:$0xff]
        %v2526 = vld [vmem:[%s241 + $0x58] sm:$0xff]
        %v2527 = vld [vmem:[%s241 + $0x60] sm:$0xff]
        %v2528 = vld [vmem:[%s241 + $0x68] sm:$0xff]
        %v2529 = vld [vmem:[%s241 + $0x70] sm:$0xff]
        %v2530 = vld [vmem:[%s241 + $0x78] sm:$0xff]
        %v2531 = vld [vmem:[#allocation2] sm:$0xff]
        %v2532 = vld [vmem:[#allocation2 + $0x8] sm:$0xf]
        %v2533 = vld [vmem:[#allocation2 + $0xc] sm:$0xff]
        %v2534 = vld [vmem:[#allocation2 + $0x14] sm:$0xf]
        %v2535 = vld [vmem:[#allocation2 + $0x18] sm:$0xff]
        %v2536 = vld [vmem:[#allocation2 + $0x20] sm:$0xf]
        %v2537 = vld [vmem:[#allocation2 + $0x24] sm:$0xff]
        %v2538 = vld [vmem:[#allocation2 + $0x2c] sm:$0xf]
        %v2539 = vld [vmem:[#allocation2 + $0x30] sm:$0xff]
        %v2540 = vld [vmem:[#allocation2 + $0x38] sm:$0xf]
        %v2541 = vld [vmem:[#allocation2 + $0x3c] sm:$0xff]
        %v2542 = vld [vmem:[#allocation2 + $0x44] sm:$0xf]
        %v2543 = vld [vmem:[#allocation2 + $0x48] sm:$0xff]
        %v2544 = vld [vmem:[#allocation2 + $0x50] sm:$0xf]
        %v2545 = vld [vmem:[#allocation2 + $0x54] sm:$0xff]
        %v2546 = vld [vmem:[#allocation2 + $0x5c] sm:$0xf]
        %v2547 = vld [vmem:[#allocation2 + $0x78] sm:$0xff]
        %v2548 = vld [vmem:[#allocation2 + $0x80] sm:$0xf]
        %v2549 = vld [vmem:[#allocation2 + $0x84] sm:$0xff]
        %v2550 = vld [vmem:[#allocation2 + $0x8c] sm:$0xf]
        %v2551 = vld [vmem:[#allocation2 + $0x90] sm:$0xff]
        %v2552 = vld [vmem:[#allocation2 + $0x98] sm:$0xf]
        %v2553 = vld [vmem:[#allocation2 + $0x9c] sm:$0xff]
        %v2554 = vld [vmem:[#allocation2 + $0xa4] sm:$0xf]
        %v2555 = vld [vmem:[#allocation2 + $0xa8] sm:$0xff]
        %v2556 = vld [vmem:[#allocation2 + $0xb0] sm:$0xf]
        %v2557 = vld [vmem:[#allocation2 + $0xb4] sm:$0xff]
        %v2558 = vld [vmem:[#allocation2 + $0xbc] sm:$0xf]
        %v2559 = vld [vmem:[#allocation2 + $0xc0] sm:$0xff]
        %v2560 = vld [vmem:[#allocation2 + $0xc8] sm:$0xf]
        %v2561 = vld [vmem:[#allocation2 + $0xcc] sm:$0xff]
        %v2562 = vld [vmem:[#allocation2 + $0xd4] sm:$0xf]
        %v2563 = vld [vmem:[#allocation8] sm:$0xf]
        %v2564 = vld [vmem:[#allocation8 + $0x4] sm:$0xf]
        %v2565 = vld [vmem:[#allocation8 + $0x8] sm:$0xf]
        %v2566 = vld [vmem:[#allocation8 + $0xc] sm:$0xf]
        %v2567 = vld [vmem:[#allocation8 + $0x10] sm:$0xf]
        %v2568 = vld [vmem:[#allocation8 + $0x14] sm:$0xf]
        %v2569 = vld [vmem:[#allocation8 + $0x18] sm:$0xf]
        %v2570 = vld [vmem:[#allocation8 + $0x1c] sm:$0xf]
        %v2571 = vld [vmem:[#allocation8 + $0x20] sm:$0xf]
        %v2572 = vld [vmem:[#allocation8 + $0x24] sm:$0xf]
        %v2573 = vld [vmem:[#allocation8 + $0x28] sm:$0xf]
        %v2574 = vld [vmem:[#allocation8 + $0x2c] sm:$0xf]
        %v2575 = vld [vmem:[#allocation8 + $0x30] sm:$0xf]
        %v2576 = vld [vmem:[#allocation8 + $0x34] sm:$0xf]
        %v2577 = vld [vmem:[#allocation8 + $0x38] sm:$0xf]
        %v2578 = vld [vmem:[#allocation8 + $0x3c] sm:$0xf]
        %v2579 = vld [vmem:[#allocation8 + $0x40] sm:$0xf]
        %v2580 = vld [vmem:[#allocation8 + $0x44] sm:$0xf]
        %v2581 = vld [vmem:[#allocation8 + $0x48] sm:$0xf]
        %v2582 = vld [vmem:[#allocation8 + $0x4c] sm:$0xf]
        %v2583 = vld [vmem:[#allocation8 + $0x50] sm:$0xf]
        %v2584 = vld [vmem:[#allocation8 + $0x54] sm:$0xf]
        %v2585 = vld [vmem:[#allocation8 + $0x58] sm:$0xf]
        %v2586 = vld [vmem:[#allocation8 + $0x5c] sm:$0xf]
        %v2587 = vld [vmem:[#allocation8 + $0x60] sm:$0xf]
        %v2588 = vld [vmem:[#allocation8 + $0x64] sm:$0xf]
        %v2589 = vld [vmem:[#allocation8 + $0x68] sm:$0xf]
        %v2590 = vld [vmem:[#allocation8 + $0x6c] sm:$0xf]
        %v2591 = vld [vmem:[#allocation8 + $0x70] sm:$0xf]
        %v2592 = vld [vmem:[#allocation8 + $0x74] sm:$0xf]
        %v2593 = vld [vmem:[#allocation8 + $0x78] sm:$0xf]
        %v2594 = vld [vmem:[#allocation8 + $0x7c] sm:$0xf]
        %v2595 = vld [vmem:[#allocation8 + $0x80] sm:$0xf]
        %v2596 = vld [vmem:[#allocation8 + $0x84] sm:$0xf]
        %v2597 = vld [vmem:[#allocation8 + $0x88] sm:$0xf]
        %v2598 = vld [vmem:[#allocation8 + $0x8c] sm:$0xf]
        %v2599 = vld [vmem:[#allocation8 + $0x90] sm:$0xf]
        %v2600 = vld [vmem:[#allocation8 + $0x94] sm:$0xf]
        %v2601 = vld [vmem:[#allocation8 + $0x98] sm:$0xf]
        %v2602 = vld [vmem:[#allocation8 + $0x9c] sm:$0xf]
        %v2603 = vld [vmem:[#allocation8 + $0xa0] sm:$0xf]
        %v2604 = vld [vmem:[#allocation8 + $0xa4] sm:$0xf]
        %v2605 = vld [vmem:[#allocation8 + $0xa8] sm:$0xf]
        %v2606 = vld [vmem:[#allocation8 + $0xac] sm:$0xf]
        %v2607 = vld [vmem:[#allocation8 + $0xb0] sm:$0xf]
        %v2608 = vld [vmem:[#allocation8 + $0xb4] sm:$0xf]
        %v2609 = vld [vmem:[#allocation8 + $0xb8] sm:$0xf]
        %v2610 = vld [vmem:[#allocation8 + $0xbc] sm:$0xf]
        %v2611 = vld [vmem:[%s595] sm:$0xff]
        %v2612 = vld [vmem:[%s595 + $0x8] sm:$0xf]
        %v2613 = vld [vmem:[%s595 + $0xc] sm:$0xff]
        %v2614 = vld [vmem:[%s595 + $0x14] sm:$0xf]
        %v2615 = vld [vmem:[%s595 + $0x18] sm:$0xff]
        %v2616 = vld [vmem:[%s595 + $0x20] sm:$0xf]
        %v2617 = vld [vmem:[%s595 + $0x24] sm:$0xff]
        %v2618 = vld [vmem:[%s595 + $0x2c] sm:$0xf]
        %v2619 = vld [vmem:[%s595 + $0x30] sm:$0xff]
        %v2620 = vld [vmem:[%s595 + $0x38] sm:$0xf]
        %v2621 = vld [vmem:[%s595 + $0x3c] sm:$0xff]
        %v2622 = vld [vmem:[%s595 + $0x44] sm:$0xf]
        %v2623 = vld [vmem:[%s595 + $0x48] sm:$0xff]
        %v2624 = vld [vmem:[%s595 + $0x50] sm:$0xf]
        %v2625 = vld [vmem:[%s595 + $0x54] sm:$0xff]
        %v2626 = vld [vmem:[%s595 + $0x5c] sm:$0xf]
        %v2627 = vld [vmem:[%s595 + $0x78] sm:$0xff]
        %v2628 = vld [vmem:[%s595 + $0x80] sm:$0xf]
        %v2629 = vld [vmem:[%s595 + $0x84] sm:$0xff]
        %v2630 = vld [vmem:[%s595 + $0x8c] sm:$0xf]
        %v2631 = vld [vmem:[%s595 + $0x90] sm:$0xff]
        %v2632 = vld [vmem:[%s595 + $0x98] sm:$0xf]
        %v2633 = vld [vmem:[%s595 + $0x9c] sm:$0xff]
        %v2634 = vld [vmem:[%s595 + $0xa4] sm:$0xf]
        %v2635 = vld [vmem:[%s595 + $0xa8] sm:$0xff]
        %v2636 = vld [vmem:[%s595 + $0xb0] sm:$0xf]
        %v2637 = vld [vmem:[%s595 + $0xb4] sm:$0xff]
        %v2638 = vld [vmem:[%s595 + $0xbc] sm:$0xf]
        %v2639 = vld [vmem:[%s595 + $0xc0] sm:$0xff]
        %v2640 = vld [vmem:[%s595 + $0xc8] sm:$0xf]
        %v2641 = vld [vmem:[%s595 + $0xcc] sm:$0xff]
        %v2642 = vld [vmem:[%s595 + $0xd4] sm:$0xf]
        %s2643 = scalar_lea.vmem [#allocation8], 192
        %v2644 = vld [vmem:[%s2643] sm:$0xf]
        %v2645 = vld [vmem:[%s2643 + $0x4] sm:$0xf]
        %v2646 = vld [vmem:[%s2643 + $0x8] sm:$0xf]
        %v2647 = vld [vmem:[%s2643 + $0xc] sm:$0xf]
        %v2648 = vld [vmem:[%s2643 + $0x10] sm:$0xf]
        %v2649 = vld [vmem:[%s2643 + $0x14] sm:$0xf]
        %v2650 = vld [vmem:[%s2643 + $0x18] sm:$0xf]
        %v2651 = vld [vmem:[%s2643 + $0x1c] sm:$0xf]
        %v2652 = vld [vmem:[%s2643 + $0x20] sm:$0xf]
        %v2653 = vld [vmem:[%s2643 + $0x24] sm:$0xf]
        %v2654 = vld [vmem:[%s2643 + $0x28] sm:$0xf]
        %v2655 = vld [vmem:[%s2643 + $0x2c] sm:$0xf]
        %v2656 = vld [vmem:[%s2643 + $0x30] sm:$0xf]
        %v2657 = vld [vmem:[%s2643 + $0x34] sm:$0xf]
        %v2658 = vld [vmem:[%s2643 + $0x38] sm:$0xf]
        %v2659 = vld [vmem:[%s2643 + $0x3c] sm:$0xf]
        %v2660 = vld [vmem:[%s2643 + $0x40] sm:$0xf]
        %v2661 = vld [vmem:[%s2643 + $0x44] sm:$0xf]
        %v2662 = vld [vmem:[%s2643 + $0x48] sm:$0xf]
        %v2663 = vld [vmem:[%s2643 + $0x4c] sm:$0xf]
        %v2664 = vld [vmem:[%s2643 + $0x50] sm:$0xf]
        %v2665 = vld [vmem:[%s2643 + $0x54] sm:$0xf]
        %v2666 = vld [vmem:[%s2643 + $0x58] sm:$0xf]
        %v2667 = vld [vmem:[%s2643 + $0x5c] sm:$0xf]
        %v2668 = vld [vmem:[%s2643 + $0x60] sm:$0xf]
        %v2669 = vld [vmem:[%s2643 + $0x64] sm:$0xf]
        %v2670 = vld [vmem:[%s2643 + $0x68] sm:$0xf]
        %v2671 = vld [vmem:[%s2643 + $0x6c] sm:$0xf]
        %v2672 = vld [vmem:[%s2643 + $0x70] sm:$0xf]
        %v2673 = vld [vmem:[%s2643 + $0x74] sm:$0xf]
        %v2674 = vld [vmem:[%s2643 + $0x78] sm:$0xf]
        %v2675 = vld [vmem:[%s2643 + $0x7c] sm:$0xf]
        %v2676 = vld [vmem:[%s2643 + $0x80] sm:$0xf]
        %v2677 = vld [vmem:[%s2643 + $0x84] sm:$0xf]
        %v2678 = vld [vmem:[%s2643 + $0x88] sm:$0xf]
        %v2679 = vld [vmem:[%s2643 + $0x8c] sm:$0xf]
        %v2680 = vld [vmem:[%s2643 + $0x90] sm:$0xf]
        %v2681 = vld [vmem:[%s2643 + $0x94] sm:$0xf]
        %v2682 = vld [vmem:[%s2643 + $0x98] sm:$0xf]
        %v2683 = vld [vmem:[%s2643 + $0x9c] sm:$0xf]
        %v2684 = vld [vmem:[%s2643 + $0xa0] sm:$0xf]
        %v2685 = vld [vmem:[%s2643 + $0xa4] sm:$0xf]
        %v2686 = vld [vmem:[%s2643 + $0xa8] sm:$0xf]
        %v2687 = vld [vmem:[%s2643 + $0xac] sm:$0xf]
        %v2688 = vld [vmem:[%s2643 + $0xb0] sm:$0xf]
        %v2689 = vld [vmem:[%s2643 + $0xb4] sm:$0xf]
        %v2690 = vld [vmem:[%s2643 + $0xb8] sm:$0xf]
        %v2691 = vld [vmem:[%s2643 + $0xbc] sm:$0xf]
        %v2724 = vunpack.c.l.b16 %v2611
        %v2725 = vunpack.c.h.b16 %v2611
        %v2726 = vunpack.c.l.b16 %v2612
        %v2727 = vunpack.c.l.b16 %v2613
        %v2728 = vunpack.c.h.b16 %v2613
        %v2729 = vunpack.c.l.b16 %v2614
        %v2730 = vunpack.c.l.b16 %v2615
        %v2731 = vunpack.c.h.b16 %v2615
        %v2732 = vunpack.c.l.b16 %v2616
        %v2733 = vunpack.c.l.b16 %v2617
        %v2734 = vunpack.c.h.b16 %v2617
        %v2735 = vunpack.c.l.b16 %v2618
        %v2736 = vunpack.c.l.b16 %v2619
        %v2737 = vunpack.c.h.b16 %v2619
        %v2738 = vunpack.c.l.b16 %v2620
        %v2739 = vunpack.c.l.b16 %v2621
        %v2740 = vunpack.c.h.b16 %v2621
        %v2741 = vunpack.c.l.b16 %v2622
        %v2742 = vunpack.c.l.b16 %v2623
        %v2743 = vunpack.c.h.b16 %v2623
        %v2744 = vunpack.c.l.b16 %v2624
        %v2745 = vunpack.c.l.b16 %v2625
        %v2746 = vunpack.c.h.b16 %v2625
        %v2747 = vunpack.c.l.b16 %v2626
        %v2748 = vunpack.c.l.b16 %v2627
        %v2749 = vunpack.c.h.b16 %v2627
        %v2750 = vunpack.c.l.b16 %v2628
        %v2751 = vunpack.c.l.b16 %v2629
        %v2752 = vunpack.c.h.b16 %v2629
        %v2753 = vunpack.c.l.b16 %v2630
        %v2754 = vunpack.c.l.b16 %v2631
        %v2755 = vunpack.c.h.b16 %v2631
        %v2756 = vunpack.c.l.b16 %v2632
        %v2757 = vunpack.c.l.b16 %v2633
        %v2758 = vunpack.c.h.b16 %v2633
        %v2759 = vunpack.c.l.b16 %v2634
        %v2760 = vunpack.c.l.b16 %v2635
        %v2761 = vunpack.c.h.b16 %v2635
        %v2762 = vunpack.c.l.b16 %v2636
        %v2763 = vunpack.c.l.b16 %v2637
        %v2764 = vunpack.c.h.b16 %v2637
        %v2765 = vunpack.c.l.b16 %v2638
        %v2766 = vunpack.c.l.b16 %v2639
        %v2767 = vunpack.c.h.b16 %v2639
        %v2768 = vunpack.c.l.b16 %v2640
        %v2769 = vunpack.c.l.b16 %v2641
        %v2770 = vunpack.c.h.b16 %v2641
        %v2771 = vunpack.c.l.b16 %v2642
        %v2772 = vpack.c.b16 %v2727, %v2724
        %v2773 = vpack.c.b16 %v2728, %v2725
        %v2774 = vpack.c.b16 %v2729, %v2726
        %v2775 = vpack.c.b16 %v2733, %v2730
        %v2776 = vpack.c.b16 %v2734, %v2731
        %v2777 = vpack.c.b16 %v2735, %v2732
        %v2778 = vpack.c.b16 %v2739, %v2736
        %v2779 = vpack.c.b16 %v2740, %v2737
        %v2780 = vpack.c.b16 %v2741, %v2738
        %v2781 = vpack.c.b16 %v2745, %v2742
        %v2782 = vpack.c.b16 %v2746, %v2743
        %v2783 = vpack.c.b16 %v2747, %v2744
        %v2784 = vpack.c.b16 %v2751, %v2748
        %v2785 = vpack.c.b16 %v2752, %v2749
        %v2786 = vpack.c.b16 %v2753, %v2750
        %v2787 = vpack.c.b16 %v2757, %v2754
        %v2788 = vpack.c.b16 %v2758, %v2755
        %v2789 = vpack.c.b16 %v2759, %v2756
        %v2790 = vpack.c.b16 %v2763, %v2760
        %v2791 = vpack.c.b16 %v2764, %v2761
        %v2792 = vpack.c.b16 %v2765, %v2762
        %v2793 = vpack.c.b16 %v2769, %v2766
        %v2794 = vpack.c.b16 %v2770, %v2767
        %v2795 = vpack.c.b16 %v2771, %v2768
        %v2868 = vunpack.c.l.b16 %v2644
        %v2869 = vunpack.c.l.b16 %v2645
        %v2870 = vunpack.c.l.b16 %v2646
        %v2871 = vunpack.c.l.b16 %v2647
        %v2872 = vunpack.c.l.b16 %v2648
        %v2873 = vunpack.c.l.b16 %v2649
        %v2874 = vunpack.c.l.b16 %v2650
        %v2875 = vunpack.c.l.b16 %v2651
        %v2876 = vunpack.c.l.b16 %v2652
        %v2877 = vunpack.c.l.b16 %v2653
        %v2878 = vunpack.c.l.b16 %v2654
        %v2879 = vunpack.c.l.b16 %v2655
        %v2880 = vunpack.c.l.b16 %v2656
        %v2881 = vunpack.c.l.b16 %v2657
        %v2882 = vunpack.c.l.b16 %v2658
        %v2883 = vunpack.c.l.b16 %v2659
        %v2884 = vunpack.c.l.b16 %v2660
        %v2885 = vunpack.c.l.b16 %v2661
        %v2886 = vunpack.c.l.b16 %v2662
        %v2887 = vunpack.c.l.b16 %v2663
        %v2888 = vunpack.c.l.b16 %v2664
        %v2889 = vunpack.c.l.b16 %v2665
        %v2890 = vunpack.c.l.b16 %v2666
        %v2891 = vunpack.c.l.b16 %v2667
        %v2892 = vunpack.c.l.b16 %v2668
        %v2893 = vunpack.c.l.b16 %v2669
        %v2894 = vunpack.c.l.b16 %v2670
        %v2895 = vunpack.c.l.b16 %v2671
        %v2896 = vunpack.c.l.b16 %v2672
        %v2897 = vunpack.c.l.b16 %v2673
        %v2898 = vunpack.c.l.b16 %v2674
        %v2899 = vunpack.c.l.b16 %v2675
        %v2900 = vunpack.c.l.b16 %v2676
        %v2901 = vunpack.c.l.b16 %v2677
        %v2902 = vunpack.c.l.b16 %v2678
        %v2903 = vunpack.c.l.b16 %v2679
        %v2904 = vunpack.c.l.b16 %v2680
        %v2905 = vunpack.c.l.b16 %v2681
        %v2906 = vunpack.c.l.b16 %v2682
        %v2907 = vunpack.c.l.b16 %v2683
        %v2908 = vunpack.c.l.b16 %v2684
        %v2909 = vunpack.c.l.b16 %v2685
        %v2910 = vunpack.c.l.b16 %v2686
        %v2911 = vunpack.c.l.b16 %v2687
        %v2912 = vunpack.c.l.b16 %v2688
        %v2913 = vunpack.c.l.b16 %v2689
        %v2914 = vunpack.c.l.b16 %v2690
        %v2915 = vunpack.c.l.b16 %v2691
        %v2916 = vpack.c.b16 %v2869, %v2868
        %v2917 = vpack.c.b16 %v2871, %v2870
        %v2918 = vpack.c.b16 %v2873, %v2872
        %v2919 = vpack.c.b16 %v2875, %v2874
        %v2920 = vpack.c.b16 %v2877, %v2876
        %v2921 = vpack.c.b16 %v2879, %v2878
        %v2922 = vpack.c.b16 %v2881, %v2880
        %v2923 = vpack.c.b16 %v2883, %v2882
        %v2924 = vpack.c.b16 %v2885, %v2884
        %v2925 = vpack.c.b16 %v2887, %v2886
        %v2926 = vpack.c.b16 %v2889, %v2888
        %v2927 = vpack.c.b16 %v2891, %v2890
        %v2928 = vpack.c.b16 %v2893, %v2892
        %v2929 = vpack.c.b16 %v2895, %v2894
        %v2930 = vpack.c.b16 %v2897, %v2896
        %v2931 = vpack.c.b16 %v2899, %v2898
        %v2932 = vpack.c.b16 %v2901, %v2900
        %v2933 = vpack.c.b16 %v2903, %v2902
        %v2934 = vpack.c.b16 %v2905, %v2904
        %v2935 = vpack.c.b16 %v2907, %v2906
        %v2936 = vpack.c.b16 %v2909, %v2908
        %v2937 = vpack.c.b16 %v2911, %v2910
        %v2938 = vpack.c.b16 %v2913, %v2912
        %v2939 = vpack.c.b16 %v2915, %v2914
        %2964 = vmatpush.bf16.msra.mxu0 %v2923
        %2965 = vmatpush.bf16.msra.mxu0 %v2922
        %2966 = vmatpush.bf16.msra.mxu0 %v2921
        %2967 = vmatpush.bf16.msra.mxu0 %v2920
        %2968 = vmatpush.bf16.msra.mxu0 %v2919
        %2969 = vmatpush.bf16.msra.mxu0 %v2918
        %2970 = vmatpush.bf16.msra.mxu0 %v2917
        %2971 = vmatpush.bf16.msra.mxu0 %v2916
        %2972 = vmatmul.bf16.gmra.mxu0 %v2772
        %v2973 = vpop.f32.mrf.mxu0
        %v2974 = vadd.f32 0.0, %v2973
        %v2975 = vpop.f32.mrf.mxu0
        %v2976 = vadd.f32 0.0, %v2975
        %2977 = vmatmul.bf16.gmra.mxu0 %v2775
        %v2978 = vpop.f32.mrf.mxu0
        %v2979 = vadd.f32 0.0, %v2978
        %v2980 = vpop.f32.mrf.mxu0
        %v2981 = vadd.f32 0.0, %v2980
        %2982 = vmatmul.bf16.gmra.mxu0 %v2778
        %v2983 = vpop.f32.mrf.mxu0
        %v2984 = vadd.f32 0.0, %v2983
        %v2985 = vpop.f32.mrf.mxu0
        %v2986 = vadd.f32 0.0, %v2985
        %2987 = vmatmul.bf16.gmra.mxu0 %v2781
        %v2988 = vpop.f32.mrf.mxu0
        %v2989 = vadd.f32 0.0, %v2988
        %v2990 = vpop.f32.mrf.mxu0
        %v2991 = vadd.f32 0.0, %v2990
        %2992 = vmatmul.bf16.gmra.mxu0 %v2784
        %v2993 = vpop.f32.mrf.mxu0
        %v2994 = vadd.f32 0.0, %v2993
        %v2995 = vpop.f32.mrf.mxu0
        %v2996 = vadd.f32 0.0, %v2995
        %2997 = vmatmul.bf16.gmra.mxu0 %v2787
        %v2998 = vpop.f32.mrf.mxu0
        %v2999 = vadd.f32 0.0, %v2998
        %v3000 = vpop.f32.mrf.mxu0
        %v3001 = vadd.f32 0.0, %v3000
        %3002 = vmatmul.bf16.gmra.mxu0 %v2790
        %v3003 = vpop.f32.mrf.mxu0
        %v3004 = vadd.f32 0.0, %v3003
        %v3005 = vpop.f32.mrf.mxu0
        %v3006 = vadd.f32 0.0, %v3005
        %3007 = vmatmul.bf16.gmra.mxu0 %v2793
        %v3008 = vpop.f32.mrf.mxu0
        %v3009 = vadd.f32 0.0, %v3008
        %v3010 = vpop.f32.mrf.mxu0
        %v3011 = vadd.f32 0.0, %v3010
        %3012 = vdwg.mxu0
        %3013 = vmatpush.bf16.msra.mxu0 %v2931
        %3014 = vmatpush.bf16.msra.mxu0 %v2930
        %3015 = vmatpush.bf16.msra.mxu0 %v2929
        %3016 = vmatpush.bf16.msra.mxu0 %v2928
        %3017 = vmatpush.bf16.msra.mxu0 %v2927
        %3018 = vmatpush.bf16.msra.mxu0 %v2926
        %3019 = vmatpush.bf16.msra.mxu0 %v2925
        %3020 = vmatpush.bf16.msra.mxu0 %v2924
        %3021 = vmatmul.bf16.gmra.mxu0 %v2773
        %v3022 = vpop.f32.mrf.mxu0
        %v3023 = vadd.f32 %v2974, %v3022
        %v3024 = vpop.f32.mrf.mxu0
        %v3025 = vadd.f32 %v2976, %v3024
        %3026 = vmatmul.bf16.gmra.mxu0 %v2776
        %v3027 = vpop.f32.mrf.mxu0
        %v3028 = vadd.f32 %v2979, %v3027
        %v3029 = vpop.f32.mrf.mxu0
        %v3030 = vadd.f32 %v2981, %v3029
        %3031 = vmatmul.bf16.gmra.mxu0 %v2779
        %v3032 = vpop.f32.mrf.mxu0
        %v3033 = vadd.f32 %v2984, %v3032
        %v3034 = vpop.f32.mrf.mxu0
        %v3035 = vadd.f32 %v2986, %v3034
        %3036 = vmatmul.bf16.gmra.mxu0 %v2782
        %v3037 = vpop.f32.mrf.mxu0
        %v3038 = vadd.f32 %v2989, %v3037
        %v3039 = vpop.f32.mrf.mxu0
        %v3040 = vadd.f32 %v2991, %v3039
        %3041 = vmatmul.bf16.gmra.mxu0 %v2785
        %v3042 = vpop.f32.mrf.mxu0
        %v3043 = vadd.f32 %v2994, %v3042
        %v3044 = vpop.f32.mrf.mxu0
        %v3045 = vadd.f32 %v2996, %v3044
        %3046 = vmatmul.bf16.gmra.mxu0 %v2788
        %v3047 = vpop.f32.mrf.mxu0
        %v3048 = vadd.f32 %v2999, %v3047
        %v3049 = vpop.f32.mrf.mxu0
        %v3050 = vadd.f32 %v3001, %v3049
        %3051 = vmatmul.bf16.gmra.mxu0 %v2791
        %v3052 = vpop.f32.mrf.mxu0
        %v3053 = vadd.f32 %v3004, %v3052
        %v3054 = vpop.f32.mrf.mxu0
        %v3055 = vadd.f32 %v3006, %v3054
        %3056 = vmatmul.bf16.gmra.mxu0 %v2794
        %v3057 = vpop.f32.mrf.mxu0
        %v3058 = vadd.f32 %v3009, %v3057
        %v3059 = vpop.f32.mrf.mxu0
        %v3060 = vadd.f32 %v3011, %v3059
        %3061 = vdwg.mxu0
        %3062 = vmatpush.bf16.msra.mxu0 %v2939
        %3063 = vmatpush.bf16.msra.mxu0 %v2938
        %3064 = vmatpush.bf16.msra.mxu0 %v2937
        %3065 = vmatpush.bf16.msra.mxu0 %v2936
        %3066 = vmatpush.bf16.msra.mxu0 %v2935
        %3067 = vmatpush.bf16.msra.mxu0 %v2934
        %3068 = vmatpush.bf16.msra.mxu0 %v2933
        %3069 = vmatpush.bf16.msra.mxu0 %v2932
        %3070 = vmatmul.bf16.gmra.mxu0 %v2774
        %v3071 = vpop.f32.mrf.mxu0
        %v3072 = vadd.f32 %v3023, %v3071
        %v3073 = vpop.f32.mrf.mxu0
        %v3074 = vadd.f32 %v3025, %v3073
        %3075 = vmatmul.bf16.gmra.mxu0 %v2777
        %v3076 = vpop.f32.mrf.mxu0
        %v3077 = vadd.f32 %v3028, %v3076
        %v3078 = vpop.f32.mrf.mxu0
        %v3079 = vadd.f32 %v3030, %v3078
        %3080 = vmatmul.bf16.gmra.mxu0 %v2780
        %v3081 = vpop.f32.mrf.mxu0
        %v3082 = vadd.f32 %v3033, %v3081
        %v3083 = vpop.f32.mrf.mxu0
        %v3084 = vadd.f32 %v3035, %v3083
        %3085 = vmatmul.bf16.gmra.mxu0 %v2783
        %v3086 = vpop.f32.mrf.mxu0
        %v3087 = vadd.f32 %v3038, %v3086
        %v3088 = vpop.f32.mrf.mxu0
        %v3089 = vadd.f32 %v3040, %v3088
        %3090 = vmatmul.bf16.gmra.mxu0 %v2786
        %v3091 = vpop.f32.mrf.mxu0
        %v3092 = vadd.f32 %v3043, %v3091
        %v3093 = vpop.f32.mrf.mxu0
        %v3094 = vadd.f32 %v3045, %v3093
        %3095 = vmatmul.bf16.gmra.mxu0 %v2789
        %v3096 = vpop.f32.mrf.mxu0
        %v3097 = vadd.f32 %v3048, %v3096
        %v3098 = vpop.f32.mrf.mxu0
        %v3099 = vadd.f32 %v3050, %v3098
        %3100 = vmatmul.bf16.gmra.mxu0 %v2792
        %v3101 = vpop.f32.mrf.mxu0
        %v3102 = vadd.f32 %v3053, %v3101
        %v3103 = vpop.f32.mrf.mxu0
        %v3104 = vadd.f32 %v3055, %v3103
        %3105 = vmatmul.bf16.gmra.mxu0 %v2795
        %v3106 = vpop.f32.mrf.mxu0
        %v3107 = vadd.f32 %v3058, %v3106
        %v3108 = vpop.f32.mrf.mxu0
        %v3109 = vadd.f32 %v3060, %v3108
        %3110 = vdwg.mxu0
        %v3143 = vunpack.c.l.b16 %v2531
        %v3144 = vunpack.c.h.b16 %v2531
        %v3145 = vunpack.c.l.b16 %v2532
        %v3146 = vunpack.c.l.b16 %v2533
        %v3147 = vunpack.c.h.b16 %v2533
        %v3148 = vunpack.c.l.b16 %v2534
        %v3149 = vunpack.c.l.b16 %v2535
        %v3150 = vunpack.c.h.b16 %v2535
        %v3151 = vunpack.c.l.b16 %v2536
        %v3152 = vunpack.c.l.b16 %v2537
        %v3153 = vunpack.c.h.b16 %v2537
        %v3154 = vunpack.c.l.b16 %v2538
        %v3155 = vunpack.c.l.b16 %v2539
        %v3156 = vunpack.c.h.b16 %v2539
        %v3157 = vunpack.c.l.b16 %v2540
        %v3158 = vunpack.c.l.b16 %v2541
        %v3159 = vunpack.c.h.b16 %v2541
        %v3160 = vunpack.c.l.b16 %v2542
        %v3161 = vunpack.c.l.b16 %v2543
        %v3162 = vunpack.c.h.b16 %v2543
        %v3163 = vunpack.c.l.b16 %v2544
        %v3164 = vunpack.c.l.b16 %v2545
        %v3165 = vunpack.c.h.b16 %v2545
        %v3166 = vunpack.c.l.b16 %v2546
        %v3167 = vunpack.c.l.b16 %v2547
        %v3168 = vunpack.c.h.b16 %v2547
        %v3169 = vunpack.c.l.b16 %v2548
        %v3170 = vunpack.c.l.b16 %v2549
        %v3171 = vunpack.c.h.b16 %v2549
        %v3172 = vunpack.c.l.b16 %v2550
        %v3173 = vunpack.c.l.b16 %v2551
        %v3174 = vunpack.c.h.b16 %v2551
        %v3175 = vunpack.c.l.b16 %v2552
        %v3176 = vunpack.c.l.b16 %v2553
        %v3177 = vunpack.c.h.b16 %v2553
        %v3178 = vunpack.c.l.b16 %v2554
        %v3179 = vunpack.c.l.b16 %v2555
        %v3180 = vunpack.c.h.b16 %v2555
        %v3181 = vunpack.c.l.b16 %v2556
        %v3182 = vunpack.c.l.b16 %v2557
        %v3183 = vunpack.c.h.b16 %v2557
        %v3184 = vunpack.c.l.b16 %v2558
        %v3185 = vunpack.c.l.b16 %v2559
        %v3186 = vunpack.c.h.b16 %v2559
        %v3187 = vunpack.c.l.b16 %v2560
        %v3188 = vunpack.c.l.b16 %v2561
        %v3189 = vunpack.c.h.b16 %v2561
        %v3190 = vunpack.c.l.b16 %v2562
        %v3191 = vpack.c.b16 %v3146, %v3143
        %v3192 = vpack.c.b16 %v3147, %v3144
        %v3193 = vpack.c.b16 %v3148, %v3145
        %v3194 = vpack.c.b16 %v3152, %v3149
        %v3195 = vpack.c.b16 %v3153, %v3150
        %v3196 = vpack.c.b16 %v3154, %v3151
        %v3197 = vpack.c.b16 %v3158, %v3155
        %v3198 = vpack.c.b16 %v3159, %v3156
        %v3199 = vpack.c.b16 %v3160, %v3157
        %v3200 = vpack.c.b16 %v3164, %v3161
        %v3201 = vpack.c.b16 %v3165, %v3162
        %v3202 = vpack.c.b16 %v3166, %v3163
        %v3203 = vpack.c.b16 %v3170, %v3167
        %v3204 = vpack.c.b16 %v3171, %v3168
        %v3205 = vpack.c.b16 %v3172, %v3169
        %v3206 = vpack.c.b16 %v3176, %v3173
        %v3207 = vpack.c.b16 %v3177, %v3174
        %v3208 = vpack.c.b16 %v3178, %v3175
        %v3209 = vpack.c.b16 %v3182, %v3179
        %v3210 = vpack.c.b16 %v3183, %v3180
        %v3211 = vpack.c.b16 %v3184, %v3181
        %v3212 = vpack.c.b16 %v3188, %v3185
        %v3213 = vpack.c.b16 %v3189, %v3186
        %v3214 = vpack.c.b16 %v3190, %v3187
        %v3287 = vunpack.c.l.b16 %v2563
        %v3288 = vunpack.c.l.b16 %v2564
        %v3289 = vunpack.c.l.b16 %v2565
        %v3290 = vunpack.c.l.b16 %v2566
        %v3291 = vunpack.c.l.b16 %v2567
        %v3292 = vunpack.c.l.b16 %v2568
        %v3293 = vunpack.c.l.b16 %v2569
        %v3294 = vunpack.c.l.b16 %v2570
        %v3295 = vunpack.c.l.b16 %v2571
        %v3296 = vunpack.c.l.b16 %v2572
        %v3297 = vunpack.c.l.b16 %v2573
        %v3298 = vunpack.c.l.b16 %v2574
        %v3299 = vunpack.c.l.b16 %v2575
        %v3300 = vunpack.c.l.b16 %v2576
        %v3301 = vunpack.c.l.b16 %v2577
        %v3302 = vunpack.c.l.b16 %v2578
        %v3303 = vunpack.c.l.b16 %v2579
        %v3304 = vunpack.c.l.b16 %v2580
        %v3305 = vunpack.c.l.b16 %v2581
        %v3306 = vunpack.c.l.b16 %v2582
        %v3307 = vunpack.c.l.b16 %v2583
        %v3308 = vunpack.c.l.b16 %v2584
        %v3309 = vunpack.c.l.b16 %v2585
        %v3310 = vunpack.c.l.b16 %v2586
        %v3311 = vunpack.c.l.b16 %v2587
        %v3312 = vunpack.c.l.b16 %v2588
        %v3313 = vunpack.c.l.b16 %v2589
        %v3314 = vunpack.c.l.b16 %v2590
        %v3315 = vunpack.c.l.b16 %v2591
        %v3316 = vunpack.c.l.b16 %v2592
        %v3317 = vunpack.c.l.b16 %v2593
        %v3318 = vunpack.c.l.b16 %v2594
        %v3319 = vunpack.c.l.b16 %v2595
        %v3320 = vunpack.c.l.b16 %v2596
        %v3321 = vunpack.c.l.b16 %v2597
        %v3322 = vunpack.c.l.b16 %v2598
        %v3323 = vunpack.c.l.b16 %v2599
        %v3324 = vunpack.c.l.b16 %v2600
        %v3325 = vunpack.c.l.b16 %v2601
        %v3326 = vunpack.c.l.b16 %v2602
        %v3327 = vunpack.c.l.b16 %v2603
        %v3328 = vunpack.c.l.b16 %v2604
        %v3329 = vunpack.c.l.b16 %v2605
        %v3330 = vunpack.c.l.b16 %v2606
        %v3331 = vunpack.c.l.b16 %v2607
        %v3332 = vunpack.c.l.b16 %v2608
        %v3333 = vunpack.c.l.b16 %v2609
        %v3334 = vunpack.c.l.b16 %v2610
        %v3335 = vpack.c.b16 %v3288, %v3287
        %v3336 = vpack.c.b16 %v3290, %v3289
        %v3337 = vpack.c.b16 %v3292, %v3291
        %v3338 = vpack.c.b16 %v3294, %v3293
        %v3339 = vpack.c.b16 %v3296, %v3295
        %v3340 = vpack.c.b16 %v3298, %v3297
        %v3341 = vpack.c.b16 %v3300, %v3299
        %v3342 = vpack.c.b16 %v3302, %v3301
        %v3343 = vpack.c.b16 %v3304, %v3303
        %v3344 = vpack.c.b16 %v3306, %v3305
        %v3345 = vpack.c.b16 %v3308, %v3307
        %v3346 = vpack.c.b16 %v3310, %v3309
        %v3347 = vpack.c.b16 %v3312, %v3311
        %v3348 = vpack.c.b16 %v3314, %v3313
        %v3349 = vpack.c.b16 %v3316, %v3315
        %v3350 = vpack.c.b16 %v3318, %v3317
        %v3351 = vpack.c.b16 %v3320, %v3319
        %v3352 = vpack.c.b16 %v3322, %v3321
        %v3353 = vpack.c.b16 %v3324, %v3323
        %v3354 = vpack.c.b16 %v3326, %v3325
        %v3355 = vpack.c.b16 %v3328, %v3327
        %v3356 = vpack.c.b16 %v3330, %v3329
        %v3357 = vpack.c.b16 %v3332, %v3331
        %v3358 = vpack.c.b16 %v3334, %v3333
        %3383 = vmatpush.bf16.msra.mxu0 %v3342
        %3384 = vmatpush.bf16.msra.mxu0 %v3341
        %3385 = vmatpush.bf16.msra.mxu0 %v3340
        %3386 = vmatpush.bf16.msra.mxu0 %v3339
        %3387 = vmatpush.bf16.msra.mxu0 %v3338
        %3388 = vmatpush.bf16.msra.mxu0 %v3337
        %3389 = vmatpush.bf16.msra.mxu0 %v3336
        %3390 = vmatpush.bf16.msra.mxu0 %v3335
        %3391 = vmatmul.bf16.gmra.mxu0 %v3191
        %v3392 = vpop.f32.mrf.mxu0
        %v3393 = vadd.f32 %v3072, %v3392
        %v3394 = vpop.f32.mrf.mxu0
        %v3395 = vadd.f32 %v3074, %v3394
        %3396 = vmatmul.bf16.gmra.mxu0 %v3194
        %v3397 = vpop.f32.mrf.mxu0
        %v3398 = vadd.f32 %v3077, %v3397
        %v3399 = vpop.f32.mrf.mxu0
        %v3400 = vadd.f32 %v3079, %v3399
        %3401 = vmatmul.bf16.gmra.mxu0 %v3197
        %v3402 = vpop.f32.mrf.mxu0
        %v3403 = vadd.f32 %v3082, %v3402
        %v3404 = vpop.f32.mrf.mxu0
        %v3405 = vadd.f32 %v3084, %v3404
        %3406 = vmatmul.bf16.gmra.mxu0 %v3200
        %v3407 = vpop.f32.mrf.mxu0
        %v3408 = vadd.f32 %v3087, %v3407
        %v3409 = vpop.f32.mrf.mxu0
        %v3410 = vadd.f32 %v3089, %v3409
        %3411 = vmatmul.bf16.gmra.mxu0 %v3203
        %v3412 = vpop.f32.mrf.mxu0
        %v3413 = vadd.f32 %v3092, %v3412
        %v3414 = vpop.f32.mrf.mxu0
        %v3415 = vadd.f32 %v3094, %v3414
        %3416 = vmatmul.bf16.gmra.mxu0 %v3206
        %v3417 = vpop.f32.mrf.mxu0
        %v3418 = vadd.f32 %v3097, %v3417
        %v3419 = vpop.f32.mrf.mxu0
        %v3420 = vadd.f32 %v3099, %v3419
        %3421 = vmatmul.bf16.gmra.mxu0 %v3209
        %v3422 = vpop.f32.mrf.mxu0
        %v3423 = vadd.f32 %v3102, %v3422
        %v3424 = vpop.f32.mrf.mxu0
        %v3425 = vadd.f32 %v3104, %v3424
        %3426 = vmatmul.bf16.gmra.mxu0 %v3212
        %v3427 = vpop.f32.mrf.mxu0
        %v3428 = vadd.f32 %v3107, %v3427
        %v3429 = vpop.f32.mrf.mxu0
        %v3430 = vadd.f32 %v3109, %v3429
        %3431 = vdwg.mxu0
        %3432 = vmatpush.bf16.msra.mxu0 %v3350
        %3433 = vmatpush.bf16.msra.mxu0 %v3349
        %3434 = vmatpush.bf16.msra.mxu0 %v3348
        %3435 = vmatpush.bf16.msra.mxu0 %v3347
        %3436 = vmatpush.bf16.msra.mxu0 %v3346
        %3437 = vmatpush.bf16.msra.mxu0 %v3345
        %3438 = vmatpush.bf16.msra.mxu0 %v3344
        %3439 = vmatpush.bf16.msra.mxu0 %v3343
        %3440 = vmatmul.bf16.gmra.mxu0 %v3192
        %v3441 = vpop.f32.mrf.mxu0
        %v3442 = vadd.f32 %v3393, %v3441
        %v3443 = vpop.f32.mrf.mxu0
        %v3444 = vadd.f32 %v3395, %v3443
        %3445 = vmatmul.bf16.gmra.mxu0 %v3195
        %v3446 = vpop.f32.mrf.mxu0
        %v3447 = vadd.f32 %v3398, %v3446
        %v3448 = vpop.f32.mrf.mxu0
        %v3449 = vadd.f32 %v3400, %v3448
        %3450 = vmatmul.bf16.gmra.mxu0 %v3198
        %v3451 = vpop.f32.mrf.mxu0
        %v3452 = vadd.f32 %v3403, %v3451
        %v3453 = vpop.f32.mrf.mxu0
        %v3454 = vadd.f32 %v3405, %v3453
        %3455 = vmatmul.bf16.gmra.mxu0 %v3201
        %v3456 = vpop.f32.mrf.mxu0
        %v3457 = vadd.f32 %v3408, %v3456
        %v3458 = vpop.f32.mrf.mxu0
        %v3459 = vadd.f32 %v3410, %v3458
        %3460 = vmatmul.bf16.gmra.mxu0 %v3204
        %v3461 = vpop.f32.mrf.mxu0
        %v3462 = vadd.f32 %v3413, %v3461
        %v3463 = vpop.f32.mrf.mxu0
        %v3464 = vadd.f32 %v3415, %v3463
        %3465 = vmatmul.bf16.gmra.mxu0 %v3207
        %v3466 = vpop.f32.mrf.mxu0
        %v3467 = vadd.f32 %v3418, %v3466
        %v3468 = vpop.f32.mrf.mxu0
        %v3469 = vadd.f32 %v3420, %v3468
        %3470 = vmatmul.bf16.gmra.mxu0 %v3210
        %v3471 = vpop.f32.mrf.mxu0
        %v3472 = vadd.f32 %v3423, %v3471
        %v3473 = vpop.f32.mrf.mxu0
        %v3474 = vadd.f32 %v3425, %v3473
        %3475 = vmatmul.bf16.gmra.mxu0 %v3213
        %v3476 = vpop.f32.mrf.mxu0
        %v3477 = vadd.f32 %v3428, %v3476
        %v3478 = vpop.f32.mrf.mxu0
        %v3479 = vadd.f32 %v3430, %v3478
        %3480 = vdwg.mxu0
        %3481 = vmatpush.bf16.msra.mxu0 %v3358
        %3482 = vmatpush.bf16.msra.mxu0 %v3357
        %3483 = vmatpush.bf16.msra.mxu0 %v3356
        %3484 = vmatpush.bf16.msra.mxu0 %v3355
        %3485 = vmatpush.bf16.msra.mxu0 %v3354
        %3486 = vmatpush.bf16.msra.mxu0 %v3353
        %3487 = vmatpush.bf16.msra.mxu0 %v3352
        %3488 = vmatpush.bf16.msra.mxu0 %v3351
        %3489 = vmatmul.bf16.gmra.mxu0 %v3193
        %v3490 = vpop.f32.mrf.mxu0
        %v3491 = vadd.f32 %v3442, %v3490
        %v3492 = vpop.f32.mrf.mxu0
        %v3493 = vadd.f32 %v3444, %v3492
        %3494 = vmatmul.bf16.gmra.mxu0 %v3196
        %v3495 = vpop.f32.mrf.mxu0
        %v3496 = vadd.f32 %v3447, %v3495
        %v3497 = vpop.f32.mrf.mxu0
        %v3498 = vadd.f32 %v3449, %v3497
        %3499 = vmatmul.bf16.gmra.mxu0 %v3199
        %v3500 = vpop.f32.mrf.mxu0
        %v3501 = vadd.f32 %v3452, %v3500
        %v3502 = vpop.f32.mrf.mxu0
        %v3503 = vadd.f32 %v3454, %v3502
        %3504 = vmatmul.bf16.gmra.mxu0 %v3202
        %v3505 = vpop.f32.mrf.mxu0
        %v3506 = vadd.f32 %v3457, %v3505
        %v3507 = vpop.f32.mrf.mxu0
        %v3508 = vadd.f32 %v3459, %v3507
        %3509 = vmatmul.bf16.gmra.mxu0 %v3205
        %v3510 = vpop.f32.mrf.mxu0
        %v3511 = vadd.f32 %v3462, %v3510
        %v3512 = vpop.f32.mrf.mxu0
        %v3513 = vadd.f32 %v3464, %v3512
        %3514 = vmatmul.bf16.gmra.mxu0 %v3208
        %v3515 = vpop.f32.mrf.mxu0
        %v3516 = vadd.f32 %v3467, %v3515
        %v3517 = vpop.f32.mrf.mxu0
        %v3518 = vadd.f32 %v3469, %v3517
        %3519 = vmatmul.bf16.gmra.mxu0 %v3211
        %v3520 = vpop.f32.mrf.mxu0
        %v3521 = vadd.f32 %v3472, %v3520
        %v3522 = vpop.f32.mrf.mxu0
        %v3523 = vadd.f32 %v3474, %v3522
        %3524 = vmatmul.bf16.gmra.mxu0 %v3214
        %v3525 = vpop.f32.mrf.mxu0
        %v3526 = vadd.f32 %v3477, %v3525
        %v3527 = vpop.f32.mrf.mxu0
        %v3528 = vadd.f32 %v3479, %v3527
        %3529 = vdwg.mxu0
        %v3530 = vld [vmem:[%s1643] sm:$0xff]
        %v3531 = vld [vmem:[%s1643 + $0x8] sm:$0xf]
        %v3532 = vld [vmem:[%s1643 + $0xc] sm:$0xff]
        %v3533 = vld [vmem:[%s1643 + $0x14] sm:$0xf]
        %v3534 = vld [vmem:[%s1643 + $0x18] sm:$0xff]
        %v3535 = vld [vmem:[%s1643 + $0x20] sm:$0xf]
        %v3536 = vld [vmem:[%s1643 + $0x24] sm:$0xff]
        %v3537 = vld [vmem:[%s1643 + $0x2c] sm:$0xf]
        %v3538 = vld [vmem:[%s1643 + $0x30] sm:$0xff]
        %v3539 = vld [vmem:[%s1643 + $0x38] sm:$0xf]
        %v3540 = vld [vmem:[%s1643 + $0x3c] sm:$0xff]
        %v3541 = vld [vmem:[%s1643 + $0x44] sm:$0xf]
        %v3542 = vld [vmem:[%s1643 + $0x48] sm:$0xff]
        %v3543 = vld [vmem:[%s1643 + $0x50] sm:$0xf]
        %v3544 = vld [vmem:[%s1643 + $0x54] sm:$0xff]
        %v3545 = vld [vmem:[%s1643 + $0x5c] sm:$0xf]
        %v3546 = vld [vmem:[%s1643 + $0x78] sm:$0xff]
        %v3547 = vld [vmem:[%s1643 + $0x80] sm:$0xf]
        %v3548 = vld [vmem:[%s1643 + $0x84] sm:$0xff]
        %v3549 = vld [vmem:[%s1643 + $0x8c] sm:$0xf]
        %v3550 = vld [vmem:[%s1643 + $0x90] sm:$0xff]
        %v3551 = vld [vmem:[%s1643 + $0x98] sm:$0xf]
        %v3552 = vld [vmem:[%s1643 + $0x9c] sm:$0xff]
        %v3553 = vld [vmem:[%s1643 + $0xa4] sm:$0xf]
        %v3554 = vld [vmem:[%s1643 + $0xa8] sm:$0xff]
        %v3555 = vld [vmem:[%s1643 + $0xb0] sm:$0xf]
        %v3556 = vld [vmem:[%s1643 + $0xb4] sm:$0xff]
        %v3557 = vld [vmem:[%s1643 + $0xbc] sm:$0xf]
        %v3558 = vld [vmem:[%s1643 + $0xc0] sm:$0xff]
        %v3559 = vld [vmem:[%s1643 + $0xc8] sm:$0xf]
        %v3560 = vld [vmem:[%s1643 + $0xcc] sm:$0xff]
        %v3561 = vld [vmem:[%s1643 + $0xd4] sm:$0xf]
        %s3562 = scalar_lea.vmem [#allocation8], 384
        %v3563 = vld [vmem:[%s3562] sm:$0xf]
        %v3564 = vld [vmem:[%s3562 + $0x4] sm:$0xf]
        %v3565 = vld [vmem:[%s3562 + $0x8] sm:$0xf]
        %v3566 = vld [vmem:[%s3562 + $0xc] sm:$0xf]
        %v3567 = vld [vmem:[%s3562 + $0x10] sm:$0xf]
        %v3568 = vld [vmem:[%s3562 + $0x14] sm:$0xf]
        %v3569 = vld [vmem:[%s3562 + $0x18] sm:$0xf]
        %v3570 = vld [vmem:[%s3562 + $0x1c] sm:$0xf]
        %v3571 = vld [vmem:[%s3562 + $0x20] sm:$0xf]
        %v3572 = vld [vmem:[%s3562 + $0x24] sm:$0xf]
        %v3573 = vld [vmem:[%s3562 + $0x28] sm:$0xf]
        %v3574 = vld [vmem:[%s3562 + $0x2c] sm:$0xf]
        %v3575 = vld [vmem:[%s3562 + $0x30] sm:$0xf]
        %v3576 = vld [vmem:[%s3562 + $0x34] sm:$0xf]
        %v3577 = vld [vmem:[%s3562 + $0x38] sm:$0xf]
        %v3578 = vld [vmem:[%s3562 + $0x3c] sm:$0xf]
        %v3579 = vld [vmem:[%s3562 + $0x40] sm:$0xf]
        %v3580 = vld [vmem:[%s3562 + $0x44] sm:$0xf]
        %v3581 = vld [vmem:[%s3562 + $0x48] sm:$0xf]
        %v3582 = vld [vmem:[%s3562 + $0x4c] sm:$0xf]
        %v3583 = vld [vmem:[%s3562 + $0x50] sm:$0xf]
        %v3584 = vld [vmem:[%s3562 + $0x54] sm:$0xf]
        %v3585 = vld [vmem:[%s3562 + $0x58] sm:$0xf]
        %v3586 = vld [vmem:[%s3562 + $0x5c] sm:$0xf]
        %v3587 = vld [vmem:[%s3562 + $0x60] sm:$0xf]
        %v3588 = vld [vmem:[%s3562 + $0x64] sm:$0xf]
        %v3589 = vld [vmem:[%s3562 + $0x68] sm:$0xf]
        %v3590 = vld [vmem:[%s3562 + $0x6c] sm:$0xf]
        %v3591 = vld [vmem:[%s3562 + $0x70] sm:$0xf]
        %v3592 = vld [vmem:[%s3562 + $0x74] sm:$0xf]
        %v3593 = vld [vmem:[%s3562 + $0x78] sm:$0xf]
        %v3594 = vld [vmem:[%s3562 + $0x7c] sm:$0xf]
        %v3595 = vld [vmem:[%s3562 + $0x80] sm:$0xf]
        %v3596 = vld [vmem:[%s3562 + $0x84] sm:$0xf]
        %v3597 = vld [vmem:[%s3562 + $0x88] sm:$0xf]
        %v3598 = vld [vmem:[%s3562 + $0x8c] sm:$0xf]
        %v3599 = vld [vmem:[%s3562 + $0x90] sm:$0xf]
        %v3600 = vld [vmem:[%s3562 + $0x94] sm:$0xf]
        %v3601 = vld [vmem:[%s3562 + $0x98] sm:$0xf]
        %v3602 = vld [vmem:[%s3562 + $0x9c] sm:$0xf]
        %v3603 = vld [vmem:[%s3562 + $0xa0] sm:$0xf]
        %v3604 = vld [vmem:[%s3562 + $0xa4] sm:$0xf]
        %v3605 = vld [vmem:[%s3562 + $0xa8] sm:$0xf]
        %v3606 = vld [vmem:[%s3562 + $0xac] sm:$0xf]
        %v3607 = vld [vmem:[%s3562 + $0xb0] sm:$0xf]
        %v3608 = vld [vmem:[%s3562 + $0xb4] sm:$0xf]
        %v3609 = vld [vmem:[%s3562 + $0xb8] sm:$0xf]
        %v3610 = vld [vmem:[%s3562 + $0xbc] sm:$0xf]
        %v3643 = vunpack.c.l.b16 %v3530
        %v3644 = vunpack.c.h.b16 %v3530
        %v3645 = vunpack.c.l.b16 %v3531
        %v3646 = vunpack.c.l.b16 %v3532
        %v3647 = vunpack.c.h.b16 %v3532
        %v3648 = vunpack.c.l.b16 %v3533
        %v3649 = vunpack.c.l.b16 %v3534
        %v3650 = vunpack.c.h.b16 %v3534
        %v3651 = vunpack.c.l.b16 %v3535
        %v3652 = vunpack.c.l.b16 %v3536
        %v3653 = vunpack.c.h.b16 %v3536
        %v3654 = vunpack.c.l.b16 %v3537
        %v3655 = vunpack.c.l.b16 %v3538
        %v3656 = vunpack.c.h.b16 %v3538
        %v3657 = vunpack.c.l.b16 %v3539
        %v3658 = vunpack.c.l.b16 %v3540
        %v3659 = vunpack.c.h.b16 %v3540
        %v3660 = vunpack.c.l.b16 %v3541
        %v3661 = vunpack.c.l.b16 %v3542
        %v3662 = vunpack.c.h.b16 %v3542
        %v3663 = vunpack.c.l.b16 %v3543
        %v3664 = vunpack.c.l.b16 %v3544
        %v3665 = vunpack.c.h.b16 %v3544
        %v3666 = vunpack.c.l.b16 %v3545
        %v3667 = vunpack.c.l.b16 %v3546
        %v3668 = vunpack.c.h.b16 %v3546
        %v3669 = vunpack.c.l.b16 %v3547
        %v3670 = vunpack.c.l.b16 %v3548
        %v3671 = vunpack.c.h.b16 %v3548
        %v3672 = vunpack.c.l.b16 %v3549
        %v3673 = vunpack.c.l.b16 %v3550
        %v3674 = vunpack.c.h.b16 %v3550
        %v3675 = vunpack.c.l.b16 %v3551
        %v3676 = vunpack.c.l.b16 %v3552
        %v3677 = vunpack.c.h.b16 %v3552
        %v3678 = vunpack.c.l.b16 %v3553
        %v3679 = vunpack.c.l.b16 %v3554
        %v3680 = vunpack.c.h.b16 %v3554
        %v3681 = vunpack.c.l.b16 %v3555
        %v3682 = vunpack.c.l.b16 %v3556
        %v3683 = vunpack.c.h.b16 %v3556
        %v3684 = vunpack.c.l.b16 %v3557
        %v3685 = vunpack.c.l.b16 %v3558
        %v3686 = vunpack.c.h.b16 %v3558
        %v3687 = vunpack.c.l.b16 %v3559
        %v3688 = vunpack.c.l.b16 %v3560
        %v3689 = vunpack.c.h.b16 %v3560
        %v3690 = vunpack.c.l.b16 %v3561
        %v3691 = vpack.c.b16 %v3646, %v3643
        %v3692 = vpack.c.b16 %v3647, %v3644
        %v3693 = vpack.c.b16 %v3648, %v3645
        %v3694 = vpack.c.b16 %v3652, %v3649
        %v3695 = vpack.c.b16 %v3653, %v3650
        %v3696 = vpack.c.b16 %v3654, %v3651
        %v3697 = vpack.c.b16 %v3658, %v3655
        %v3698 = vpack.c.b16 %v3659, %v3656
        %v3699 = vpack.c.b16 %v3660, %v3657
        %v3700 = vpack.c.b16 %v3664, %v3661
        %v3701 = vpack.c.b16 %v3665, %v3662
        %v3702 = vpack.c.b16 %v3666, %v3663
        %v3703 = vpack.c.b16 %v3670, %v3667
        %v3704 = vpack.c.b16 %v3671, %v3668
        %v3705 = vpack.c.b16 %v3672, %v3669
        %v3706 = vpack.c.b16 %v3676, %v3673
        %v3707 = vpack.c.b16 %v3677, %v3674
        %v3708 = vpack.c.b16 %v3678, %v3675
        %v3709 = vpack.c.b16 %v3682, %v3679
        %v3710 = vpack.c.b16 %v3683, %v3680
        %v3711 = vpack.c.b16 %v3684, %v3681
        %v3712 = vpack.c.b16 %v3688, %v3685
        %v3713 = vpack.c.b16 %v3689, %v3686
        %v3714 = vpack.c.b16 %v3690, %v3687
        %v3787 = vunpack.c.l.b16 %v3563
        %v3788 = vunpack.c.l.b16 %v3564
        %v3789 = vunpack.c.l.b16 %v3565
        %v3790 = vunpack.c.l.b16 %v3566
        %v3791 = vunpack.c.l.b16 %v3567
        %v3792 = vunpack.c.l.b16 %v3568
        %v3793 = vunpack.c.l.b16 %v3569
        %v3794 = vunpack.c.l.b16 %v3570
        %v3795 = vunpack.c.l.b16 %v3571
        %v3796 = vunpack.c.l.b16 %v3572
        %v3797 = vunpack.c.l.b16 %v3573
        %v3798 = vunpack.c.l.b16 %v3574
        %v3799 = vunpack.c.l.b16 %v3575
        %v3800 = vunpack.c.l.b16 %v3576
        %v3801 = vunpack.c.l.b16 %v3577
        %v3802 = vunpack.c.l.b16 %v3578
        %v3803 = vunpack.c.l.b16 %v3579
        %v3804 = vunpack.c.l.b16 %v3580
        %v3805 = vunpack.c.l.b16 %v3581
        %v3806 = vunpack.c.l.b16 %v3582
        %v3807 = vunpack.c.l.b16 %v3583
        %v3808 = vunpack.c.l.b16 %v3584
        %v3809 = vunpack.c.l.b16 %v3585
        %v3810 = vunpack.c.l.b16 %v3586
        %v3811 = vunpack.c.l.b16 %v3587
        %v3812 = vunpack.c.l.b16 %v3588
        %v3813 = vunpack.c.l.b16 %v3589
        %v3814 = vunpack.c.l.b16 %v3590
        %v3815 = vunpack.c.l.b16 %v3591
        %v3816 = vunpack.c.l.b16 %v3592
        %v3817 = vunpack.c.l.b16 %v3593
        %v3818 = vunpack.c.l.b16 %v3594
        %v3819 = vunpack.c.l.b16 %v3595
        %v3820 = vunpack.c.l.b16 %v3596
        %v3821 = vunpack.c.l.b16 %v3597
        %v3822 = vunpack.c.l.b16 %v3598
        %v3823 = vunpack.c.l.b16 %v3599
        %v3824 = vunpack.c.l.b16 %v3600
        %v3825 = vunpack.c.l.b16 %v3601
        %v3826 = vunpack.c.l.b16 %v3602
        %v3827 = vunpack.c.l.b16 %v3603
        %v3828 = vunpack.c.l.b16 %v3604
        %v3829 = vunpack.c.l.b16 %v3605
        %v3830 = vunpack.c.l.b16 %v3606
        %v3831 = vunpack.c.l.b16 %v3607
        %v3832 = vunpack.c.l.b16 %v3608
        %v3833 = vunpack.c.l.b16 %v3609
        %v3834 = vunpack.c.l.b16 %v3610
        %v3835 = vpack.c.b16 %v3788, %v3787
        %v3836 = vpack.c.b16 %v3790, %v3789
        %v3837 = vpack.c.b16 %v3792, %v3791
        %v3838 = vpack.c.b16 %v3794, %v3793
        %v3839 = vpack.c.b16 %v3796, %v3795
        %v3840 = vpack.c.b16 %v3798, %v3797
        %v3841 = vpack.c.b16 %v3800, %v3799
        %v3842 = vpack.c.b16 %v3802, %v3801
        %v3843 = vpack.c.b16 %v3804, %v3803
        %v3844 = vpack.c.b16 %v3806, %v3805
        %v3845 = vpack.c.b16 %v3808, %v3807
        %v3846 = vpack.c.b16 %v3810, %v3809
        %v3847 = vpack.c.b16 %v3812, %v3811
        %v3848 = vpack.c.b16 %v3814, %v3813
        %v3849 = vpack.c.b16 %v3816, %v3815
        %v3850 = vpack.c.b16 %v3818, %v3817
        %v3851 = vpack.c.b16 %v3820, %v3819
        %v3852 = vpack.c.b16 %v3822, %v3821
        %v3853 = vpack.c.b16 %v3824, %v3823
        %v3854 = vpack.c.b16 %v3826, %v3825
        %v3855 = vpack.c.b16 %v3828, %v3827
        %v3856 = vpack.c.b16 %v3830, %v3829
        %v3857 = vpack.c.b16 %v3832, %v3831
        %v3858 = vpack.c.b16 %v3834, %v3833
        %3883 = vmatpush.bf16.msra.mxu0 %v3842
        %3884 = vmatpush.bf16.msra.mxu0 %v3841
        %3885 = vmatpush.bf16.msra.mxu0 %v3840
        %3886 = vmatpush.bf16.msra.mxu0 %v3839
        %3887 = vmatpush.bf16.msra.mxu0 %v3838
        %3888 = vmatpush.bf16.msra.mxu0 %v3837
        %3889 = vmatpush.bf16.msra.mxu0 %v3836
        %3890 = vmatpush.bf16.msra.mxu0 %v3835
        %3891 = vmatmul.bf16.gmra.mxu0 %v3691
        %v3892 = vpop.f32.mrf.mxu0
        %v3893 = vadd.f32 0.0, %v3892
        %v3894 = vpop.f32.mrf.mxu0
        %v3895 = vadd.f32 0.0, %v3894
        %3896 = vmatmul.bf16.gmra.mxu0 %v3694
        %v3897 = vpop.f32.mrf.mxu0
        %v3898 = vadd.f32 0.0, %v3897
        %v3899 = vpop.f32.mrf.mxu0
        %v3900 = vadd.f32 0.0, %v3899
        %3901 = vmatmul.bf16.gmra.mxu0 %v3697
        %v3902 = vpop.f32.mrf.mxu0
        %v3903 = vadd.f32 0.0, %v3902
        %v3904 = vpop.f32.mrf.mxu0
        %v3905 = vadd.f32 0.0, %v3904
        %3906 = vmatmul.bf16.gmra.mxu0 %v3700
        %v3907 = vpop.f32.mrf.mxu0
        %v3908 = vadd.f32 0.0, %v3907
        %v3909 = vpop.f32.mrf.mxu0
        %v3910 = vadd.f32 0.0, %v3909
        %3911 = vmatmul.bf16.gmra.mxu0 %v3703
        %v3912 = vpop.f32.mrf.mxu0
        %v3913 = vadd.f32 0.0, %v3912
        %v3914 = vpop.f32.mrf.mxu0
        %v3915 = vadd.f32 0.0, %v3914
        %3916 = vmatmul.bf16.gmra.mxu0 %v3706
        %v3917 = vpop.f32.mrf.mxu0
        %v3918 = vadd.f32 0.0, %v3917
        %v3919 = vpop.f32.mrf.mxu0
        %v3920 = vadd.f32 0.0, %v3919
        %3921 = vmatmul.bf16.gmra.mxu0 %v3709
        %v3922 = vpop.f32.mrf.mxu0
        %v3923 = vadd.f32 0.0, %v3922
        %v3924 = vpop.f32.mrf.mxu0
        %v3925 = vadd.f32 0.0, %v3924
        %3926 = vmatmul.bf16.gmra.mxu0 %v3712
        %v3927 = vpop.f32.mrf.mxu0
        %v3928 = vadd.f32 0.0, %v3927
        %v3929 = vpop.f32.mrf.mxu0
        %v3930 = vadd.f32 0.0, %v3929
        %3931 = vdwg.mxu0
        %3932 = vmatpush.bf16.msra.mxu0 %v3850
        %3933 = vmatpush.bf16.msra.mxu0 %v3849
        %3934 = vmatpush.bf16.msra.mxu0 %v3848
        %3935 = vmatpush.bf16.msra.mxu0 %v3847
        %3936 = vmatpush.bf16.msra.mxu0 %v3846
        %3937 = vmatpush.bf16.msra.mxu0 %v3845
        %3938 = vmatpush.bf16.msra.mxu0 %v3844
        %3939 = vmatpush.bf16.msra.mxu0 %v3843
        %3940 = vmatmul.bf16.gmra.mxu0 %v3692
        %v3941 = vpop.f32.mrf.mxu0
        %v3942 = vadd.f32 %v3893, %v3941
        %v3943 = vpop.f32.mrf.mxu0
        %v3944 = vadd.f32 %v3895, %v3943
        %3945 = vmatmul.bf16.gmra.mxu0 %v3695
        %v3946 = vpop.f32.mrf.mxu0
        %v3947 = vadd.f32 %v3898, %v3946
        %v3948 = vpop.f32.mrf.mxu0
        %v3949 = vadd.f32 %v3900, %v3948
        %3950 = vmatmul.bf16.gmra.mxu0 %v3698
        %v3951 = vpop.f32.mrf.mxu0
        %v3952 = vadd.f32 %v3903, %v3951
        %v3953 = vpop.f32.mrf.mxu0
        %v3954 = vadd.f32 %v3905, %v3953
        %3955 = vmatmul.bf16.gmra.mxu0 %v3701
        %v3956 = vpop.f32.mrf.mxu0
        %v3957 = vadd.f32 %v3908, %v3956
        %v3958 = vpop.f32.mrf.mxu0
        %v3959 = vadd.f32 %v3910, %v3958
        %3960 = vmatmul.bf16.gmra.mxu0 %v3704
        %v3961 = vpop.f32.mrf.mxu0
        %v3962 = vadd.f32 %v3913, %v3961
        %v3963 = vpop.f32.mrf.mxu0
        %v3964 = vadd.f32 %v3915, %v3963
        %3965 = vmatmul.bf16.gmra.mxu0 %v3707
        %v3966 = vpop.f32.mrf.mxu0
        %v3967 = vadd.f32 %v3918, %v3966
        %v3968 = vpop.f32.mrf.mxu0
        %v3969 = vadd.f32 %v3920, %v3968
        %3970 = vmatmul.bf16.gmra.mxu0 %v3710
        %v3971 = vpop.f32.mrf.mxu0
        %v3972 = vadd.f32 %v3923, %v3971
        %v3973 = vpop.f32.mrf.mxu0
        %v3974 = vadd.f32 %v3925, %v3973
        %3975 = vmatmul.bf16.gmra.mxu0 %v3713
        %v3976 = vpop.f32.mrf.mxu0
        %v3977 = vadd.f32 %v3928, %v3976
        %v3978 = vpop.f32.mrf.mxu0
        %v3979 = vadd.f32 %v3930, %v3978
        %3980 = vdwg.mxu0
        %3981 = vmatpush.bf16.msra.mxu0 %v3858
        %3982 = vmatpush.bf16.msra.mxu0 %v3857
        %3983 = vmatpush.bf16.msra.mxu0 %v3856
        %3984 = vmatpush.bf16.msra.mxu0 %v3855
        %3985 = vmatpush.bf16.msra.mxu0 %v3854
        %3986 = vmatpush.bf16.msra.mxu0 %v3853
        %3987 = vmatpush.bf16.msra.mxu0 %v3852
        %3988 = vmatpush.bf16.msra.mxu0 %v3851
        %3989 = vmatmul.bf16.gmra.mxu0 %v3693
        %v3990 = vpop.f32.mrf.mxu0
        %v3991 = vadd.f32 %v3942, %v3990
        %v3992 = vpop.f32.mrf.mxu0
        %v3993 = vadd.f32 %v3944, %v3992
        %3994 = vmatmul.bf16.gmra.mxu0 %v3696
        %v3995 = vpop.f32.mrf.mxu0
        %v3996 = vadd.f32 %v3947, %v3995
        %v3997 = vpop.f32.mrf.mxu0
        %v3998 = vadd.f32 %v3949, %v3997
        %3999 = vmatmul.bf16.gmra.mxu0 %v3699
        %v4000 = vpop.f32.mrf.mxu0
        %v4001 = vadd.f32 %v3952, %v4000
        %v4002 = vpop.f32.mrf.mxu0
        %v4003 = vadd.f32 %v3954, %v4002
        %4004 = vmatmul.bf16.gmra.mxu0 %v3702
        %v4005 = vpop.f32.mrf.mxu0
        %v4006 = vadd.f32 %v3957, %v4005
        %v4007 = vpop.f32.mrf.mxu0
        %v4008 = vadd.f32 %v3959, %v4007
        %4009 = vmatmul.bf16.gmra.mxu0 %v3705
        %v4010 = vpop.f32.mrf.mxu0
        %v4011 = vadd.f32 %v3962, %v4010
        %v4012 = vpop.f32.mrf.mxu0
        %v4013 = vadd.f32 %v3964, %v4012
        %4014 = vmatmul.bf16.gmra.mxu0 %v3708
        %v4015 = vpop.f32.mrf.mxu0
        %v4016 = vadd.f32 %v3967, %v4015
        %v4017 = vpop.f32.mrf.mxu0
        %v4018 = vadd.f32 %v3969, %v4017
        %4019 = vmatmul.bf16.gmra.mxu0 %v3711
        %v4020 = vpop.f32.mrf.mxu0
        %v4021 = vadd.f32 %v3972, %v4020
        %v4022 = vpop.f32.mrf.mxu0
        %v4023 = vadd.f32 %v3974, %v4022
        %4024 = vmatmul.bf16.gmra.mxu0 %v3714
        %v4025 = vpop.f32.mrf.mxu0
        %v4026 = vadd.f32 %v3977, %v4025
        %v4027 = vpop.f32.mrf.mxu0
        %v4028 = vadd.f32 %v3979, %v4027
        %4029 = vdwg.mxu0
        %v4030 = vadd.f32 %v3491, %v3991
        %v4031 = vadd.f32 %v3493, %v3993
        %v4032 = vadd.f32 %v3496, %v3996
        %v4033 = vadd.f32 %v3498, %v3998
        %v4034 = vadd.f32 %v3501, %v4001
        %v4035 = vadd.f32 %v3503, %v4003
        %v4036 = vadd.f32 %v3506, %v4006
        %v4037 = vadd.f32 %v3508, %v4008
        %v4038 = vadd.f32 %v3511, %v4011
        %v4039 = vadd.f32 %v3513, %v4013
        %v4040 = vadd.f32 %v3516, %v4016
        %v4041 = vadd.f32 %v3518, %v4018
        %v4042 = vadd.f32 %v3521, %v4021
        %v4043 = vadd.f32 %v3523, %v4023
        %v4044 = vadd.f32 %v3526, %v4026
        %v4045 = vadd.f32 %v3528, %v4028
        %v4047 = vperm.slane %v300, 0
        %v4049 = vadd.f32 %v4030, %v4047
        %v4050 = vadd.f32 %v4031, %v4047
        %v4051 = vadd.f32 %v4032, %v4047
        %v4052 = vadd.f32 %v4033, %v4047
        %v4053 = vadd.f32 %v4034, %v4047
        %v4054 = vadd.f32 %v4035, %v4047
        %v4055 = vadd.f32 %v4036, %v4047
        %v4056 = vadd.f32 %v4037, %v4047
        %v4057 = vadd.f32 %v4038, %v4047
        %v4058 = vadd.f32 %v4039, %v4047
        %v4059 = vadd.f32 %v4040, %v4047
        %v4060 = vadd.f32 %v4041, %v4047
        %v4061 = vadd.f32 %v4042, %v4047
        %v4062 = vadd.f32 %v4043, %v4047
        %v4063 = vadd.f32 %v4044, %v4047
        %v4064 = vadd.f32 %v4045, %v4047
        %v4065 = vadd.f32 %v4049, %v2515
        %v4066 = vadd.f32 %v4050, %v2516
        %v4067 = vadd.f32 %v4051, %v2517
        %v4068 = vadd.f32 %v4052, %v2518
        %v4069 = vadd.f32 %v4053, %v2519
        %v4070 = vadd.f32 %v4054, %v2520
        %v4071 = vadd.f32 %v4055, %v2521
        %v4072 = vadd.f32 %v4056, %v2522
        %v4073 = vadd.f32 %v4057, %v2523
        %v4074 = vadd.f32 %v4058, %v2524
        %v4075 = vadd.f32 %v4059, %v2525
        %v4076 = vadd.f32 %v4060, %v2526
        %v4077 = vadd.f32 %v4061, %v2527
        %v4078 = vadd.f32 %v4062, %v2528
        %v4079 = vadd.f32 %v4063, %v2529
        %v4080 = vadd.f32 %v4064, %v2530
        %4081 = vst [vmem:[%s278] sm:$0xff] %v4065
        %4082 = vst [vmem:[%s278 + $0x8] sm:$0xff] %v4066
        %4083 = vst [vmem:[%s278 + $0x10] sm:$0xff] %v4067
        %4084 = vst [vmem:[%s278 + $0x18] sm:$0xff] %v4068
        %4085 = vst [vmem:[%s278 + $0x20] sm:$0xff] %v4069
        %4086 = vst [vmem:[%s278 + $0x28] sm:$0xff] %v4070
        %4087 = vst [vmem:[%s278 + $0x30] sm:$0xff] %v4071
        %4088 = vst [vmem:[%s278 + $0x38] sm:$0xff] %v4072
        %4089 = vst [vmem:[%s278 + $0x40] sm:$0xff] %v4073
        %4090 = vst [vmem:[%s278 + $0x48] sm:$0xff] %v4074
        %4091 = vst [vmem:[%s278 + $0x50] sm:$0xff] %v4075
        %4092 = vst [vmem:[%s278 + $0x58] sm:$0xff] %v4076
        %4093 = vst [vmem:[%s278 + $0x60] sm:$0xff] %v4077
        %4094 = vst [vmem:[%s278 + $0x68] sm:$0xff] %v4078
        %4095 = vst [vmem:[%s278 + $0x70] sm:$0xff] %v4079
        %4096 = vst [vmem:[%s278 + $0x78] sm:$0xff] %v4080
        %s4097 = scalar_lea.vmem %s241, 128 [#allocation3]
        %v4098 = vld [vmem:[%s4097] sm:$0xff]
        %v4099 = vld [vmem:[%s4097 + $0x8] sm:$0xff]
        %v4100 = vld [vmem:[%s4097 + $0x10] sm:$0xff]
        %v4101 = vld [vmem:[%s4097 + $0x18] sm:$0xff]
        %v4102 = vld [vmem:[%s4097 + $0x20] sm:$0xff]
        %v4103 = vld [vmem:[%s4097 + $0x28] sm:$0xff]
        %v4104 = vld [vmem:[%s4097 + $0x30] sm:$0xff]
        %v4105 = vld [vmem:[%s4097 + $0x38] sm:$0xff]
        %v4106 = vld [vmem:[%s4097 + $0x40] sm:$0xff]
        %v4107 = vld [vmem:[%s4097 + $0x48] sm:$0xff]
        %v4108 = vld [vmem:[%s4097 + $0x50] sm:$0xff]
        %v4109 = vld [vmem:[%s4097 + $0x58] sm:$0xff]
        %v4110 = vld [vmem:[%s4097 + $0x60] sm:$0xff]
        %v4111 = vld [vmem:[%s4097 + $0x68] sm:$0xff]
        %v4112 = vld [vmem:[%s4097 + $0x70] sm:$0xff]
        %v4113 = vld [vmem:[%s4097 + $0x78] sm:$0xff]
        %v4114 = vpack.c.bf16 %v4098, %v4098
        %v4115 = vpack.c.bf16 %v4099, %v4099
        %v4116 = vpack.c.bf16 %v4100, %v4100
        %v4117 = vpack.c.bf16 %v4101, %v4101
        %v4118 = vpack.c.bf16 %v4102, %v4102
        %v4119 = vpack.c.bf16 %v4103, %v4103
        %v4120 = vpack.c.bf16 %v4104, %v4104
        %v4121 = vpack.c.bf16 %v4105, %v4105
        %v4122 = vpack.c.bf16 %v4106, %v4106
        %v4123 = vpack.c.bf16 %v4107, %v4107
        %v4124 = vpack.c.bf16 %v4108, %v4108
        %v4125 = vpack.c.bf16 %v4109, %v4109
        %v4126 = vpack.c.bf16 %v4110, %v4110
        %v4127 = vpack.c.bf16 %v4111, %v4111
        %v4128 = vpack.c.bf16 %v4112, %v4112
        %v4129 = vpack.c.bf16 %v4113, %v4113
        %v4146 = vunpack.c.l.b16 %v4114
        %v4147 = vunpack.c.l.b16 %v4115
        %v4148 = vunpack.c.l.b16 %v4116
        %v4149 = vunpack.c.l.b16 %v4117
        %v4150 = vunpack.c.l.b16 %v4118
        %v4151 = vunpack.c.l.b16 %v4119
        %v4152 = vunpack.c.l.b16 %v4120
        %v4153 = vunpack.c.l.b16 %v4121
        %v4154 = vunpack.c.l.b16 %v4122
        %v4155 = vunpack.c.l.b16 %v4123
        %v4156 = vunpack.c.l.b16 %v4124
        %v4157 = vunpack.c.l.b16 %v4125
        %v4158 = vunpack.c.l.b16 %v4126
        %v4159 = vunpack.c.l.b16 %v4127
        %v4160 = vunpack.c.l.b16 %v4128
        %v4161 = vunpack.c.l.b16 %v4129
        %v4162 = vpack.c.b16 %v4146, %v4146
        %v4163 = vpack.c.b16 %v4147, %v4147
        %v4164 = vpack.c.b16 %v4148, %v4148
        %v4165 = vpack.c.b16 %v4149, %v4149
        %v4166 = vpack.c.b16 %v4150, %v4150
        %v4167 = vpack.c.b16 %v4151, %v4151
        %v4168 = vpack.c.b16 %v4152, %v4152
        %v4169 = vpack.c.b16 %v4153, %v4153
        %v4170 = vpack.c.b16 %v4154, %v4154
        %v4171 = vpack.c.b16 %v4155, %v4155
        %v4172 = vpack.c.b16 %v4156, %v4156
        %v4173 = vpack.c.b16 %v4157, %v4157
        %v4174 = vpack.c.b16 %v4158, %v4158
        %v4175 = vpack.c.b16 %v4159, %v4159
        %v4176 = vpack.c.b16 %v4160, %v4160
        %v4177 = vpack.c.b16 %v4161, %v4161
        %v4179 = vshrl.u32 %v4162, 16
        %v4181 = vrot.slane %v4179, 7
        %v4182 = vshll.u32 %v4162, 16
        %v4184 = vor.u32 %v4181, %v4182
        %v4186 = vshrl.u32 %v4163, 16
        %v4188 = vrot.slane %v4186, 7
        %v4189 = vshll.u32 %v4163, 16
        %v4191 = vor.u32 %v4188, %v4189
        %v4193 = vshrl.u32 %v4164, 16
        %v4195 = vrot.slane %v4193, 7
        %v4196 = vshll.u32 %v4164, 16
        %v4198 = vor.u32 %v4195, %v4196
        %v4200 = vshrl.u32 %v4165, 16
        %v4202 = vrot.slane %v4200, 7
        %v4203 = vshll.u32 %v4165, 16
        %v4205 = vor.u32 %v4202, %v4203
        %v4207 = vshrl.u32 %v4166, 16
        %v4209 = vrot.slane %v4207, 7
        %v4210 = vshll.u32 %v4166, 16
        %v4212 = vor.u32 %v4209, %v4210
        %v4214 = vshrl.u32 %v4167, 16
        %v4216 = vrot.slane %v4214, 7
        %v4217 = vshll.u32 %v4167, 16
        %v4219 = vor.u32 %v4216, %v4217
        %v4221 = vshrl.u32 %v4168, 16
        %v4223 = vrot.slane %v4221, 7
        %v4224 = vshll.u32 %v4168, 16
        %v4226 = vor.u32 %v4223, %v4224
        %v4228 = vshrl.u32 %v4169, 16
        %v4230 = vrot.slane %v4228, 7
        %v4231 = vshll.u32 %v4169, 16
        %v4233 = vor.u32 %v4230, %v4231
        %v4235 = vshrl.u32 %v4170, 16
        %v4237 = vrot.slane %v4235, 7
        %v4238 = vshll.u32 %v4170, 16
        %v4240 = vor.u32 %v4237, %v4238
        %v4242 = vshrl.u32 %v4171, 16
        %v4244 = vrot.slane %v4242, 7
        %v4245 = vshll.u32 %v4171, 16
        %v4247 = vor.u32 %v4244, %v4245
        %v4249 = vshrl.u32 %v4172, 16
        %v4251 = vrot.slane %v4249, 7
        %v4252 = vshll.u32 %v4172, 16
        %v4254 = vor.u32 %v4251, %v4252
        %v4256 = vshrl.u32 %v4173, 16
        %v4258 = vrot.slane %v4256, 7
        %v4259 = vshll.u32 %v4173, 16
        %v4261 = vor.u32 %v4258, %v4259
        %v4263 = vshrl.u32 %v4174, 16
        %v4265 = vrot.slane %v4263, 7
        %v4266 = vshll.u32 %v4174, 16
        %v4268 = vor.u32 %v4265, %v4266
        %v4270 = vshrl.u32 %v4175, 16
        %v4272 = vrot.slane %v4270, 7
        %v4273 = vshll.u32 %v4175, 16
        %v4275 = vor.u32 %v4272, %v4273
        %v4277 = vshrl.u32 %v4176, 16
        %v4279 = vrot.slane %v4277, 7
        %v4280 = vshll.u32 %v4176, 16
        %v4282 = vor.u32 %v4279, %v4280
        %v4284 = vshrl.u32 %v4177, 16
        %v4286 = vrot.slane %v4284, 7
        %v4287 = vshll.u32 %v4177, 16
        %v4289 = vor.u32 %v4286, %v4287
        %v4306 = vsel %vm511, 0, %v4184
        %v4307 = vsel %vm511, 0, %v4191
        %v4308 = vsel %vm511, 0, %v4198
        %v4309 = vsel %vm511, 0, %v4205
        %v4310 = vsel %vm511, 0, %v4212
        %v4311 = vsel %vm511, 0, %v4219
        %v4312 = vsel %vm511, 0, %v4226
        %v4313 = vsel %vm511, 0, %v4233
        %v4314 = vsel %vm511, 0, %v4240
        %v4315 = vsel %vm511, 0, %v4247
        %v4316 = vsel %vm511, 0, %v4254
        %v4317 = vsel %vm511, 0, %v4261
        %v4318 = vsel %vm511, 0, %v4268
        %v4319 = vsel %vm511, 0, %v4275
        %v4320 = vsel %vm511, 0, %v4282
        %v4321 = vsel %vm511, 0, %v4289
        %v4322 = vrot.slane %v4182, 1
        %v4323 = vor.u32 %v4179, %v4322
        %v4324 = vrot.slane %v4189, 1
        %v4325 = vor.u32 %v4186, %v4324
        %v4326 = vrot.slane %v4196, 1
        %v4327 = vor.u32 %v4193, %v4326
        %v4328 = vrot.slane %v4203, 1
        %v4329 = vor.u32 %v4200, %v4328
        %v4330 = vrot.slane %v4210, 1
        %v4331 = vor.u32 %v4207, %v4330
        %v4332 = vrot.slane %v4217, 1
        %v4333 = vor.u32 %v4214, %v4332
        %v4334 = vrot.slane %v4224, 1
        %v4335 = vor.u32 %v4221, %v4334
        %v4336 = vrot.slane %v4231, 1
        %v4337 = vor.u32 %v4228, %v4336
        %v4338 = vrot.slane %v4238, 1
        %v4339 = vor.u32 %v4235, %v4338
        %v4340 = vrot.slane %v4245, 1
        %v4341 = vor.u32 %v4242, %v4340
        %v4342 = vrot.slane %v4252, 1
        %v4343 = vor.u32 %v4249, %v4342
        %v4344 = vrot.slane %v4259, 1
        %v4345 = vor.u32 %v4256, %v4344
        %v4346 = vrot.slane %v4266, 1
        %v4347 = vor.u32 %v4263, %v4346
        %v4348 = vrot.slane %v4273, 1
        %v4349 = vor.u32 %v4270, %v4348
        %v4350 = vrot.slane %v4280, 1
        %v4351 = vor.u32 %v4277, %v4350
        %v4352 = vrot.slane %v4287, 1
        %v4353 = vor.u32 %v4284, %v4352
        %v4370 = vsel %vm578, %v4323, 0
        %v4371 = vsel %vm578, %v4325, 0
        %v4372 = vsel %vm578, %v4327, 0
        %v4373 = vsel %vm578, %v4329, 0
        %v4374 = vsel %vm578, %v4331, 0
        %v4375 = vsel %vm578, %v4333, 0
        %v4376 = vsel %vm578, %v4335, 0
        %v4377 = vsel %vm578, %v4337, 0
        %v4378 = vsel %vm578, %v4339, 0
        %v4379 = vsel %vm578, %v4341, 0
        %v4380 = vsel %vm578, %v4343, 0
        %v4381 = vsel %vm578, %v4345, 0
        %v4382 = vsel %vm578, %v4347, 0
        %v4383 = vsel %vm578, %v4349, 0
        %v4384 = vsel %vm578, %v4351, 0
        %v4385 = vsel %vm578, %v4353, 0
        %s4386 = scalar_lea.vmem [#allocation2], 252
        %4387 = vst [vmem:[%s4386] sm:$0xf] %v4306
        %4388 = vst [vmem:[%s4386 + $0xc] sm:$0xf] %v4307
        %4389 = vst [vmem:[%s4386 + $0x18] sm:$0xf] %v4308
        %4390 = vst [vmem:[%s4386 + $0x24] sm:$0xf] %v4309
        %4391 = vst [vmem:[%s4386 + $0x30] sm:$0xf] %v4310
        %4392 = vst [vmem:[%s4386 + $0x3c] sm:$0xf] %v4311
        %4393 = vst [vmem:[%s4386 + $0x48] sm:$0xf] %v4312
        %4394 = vst [vmem:[%s4386 + $0x54] sm:$0xf] %v4313
        %4395 = vst [vmem:[%s4386 + $0x78] sm:$0xf] %v4314
        %4396 = vst [vmem:[%s4386 + $0x84] sm:$0xf] %v4315
        %4397 = vst [vmem:[%s4386 + $0x90] sm:$0xf] %v4316
        %4398 = vst [vmem:[%s4386 + $0x9c] sm:$0xf] %v4317
        %4399 = vst [vmem:[%s4386 + $0xa8] sm:$0xf] %v4318
        %4400 = vst [vmem:[%s4386 + $0xb4] sm:$0xf] %v4319
        %4401 = vst [vmem:[%s4386 + $0xc0] sm:$0xf] %v4320
        %4402 = vst [vmem:[%s4386 + $0xcc] sm:$0xf] %v4321
        %4403 = vst [vmem:[%s4386 + $0x4] sm:$0xf] %v4114
        %4404 = vst [vmem:[%s4386 + $0x10] sm:$0xf] %v4115
        %4405 = vst [vmem:[%s4386 + $0x1c] sm:$0xf] %v4116
        %4406 = vst [vmem:[%s4386 + $0x28] sm:$0xf] %v4117
        %4407 = vst [vmem:[%s4386 + $0x34] sm:$0xf] %v4118
        %4408 = vst [vmem:[%s4386 + $0x40] sm:$0xf] %v4119
        %4409 = vst [vmem:[%s4386 + $0x4c] sm:$0xf] %v4120
        %4410 = vst [vmem:[%s4386 + $0x58] sm:$0xf] %v4121
        %4411 = vst [vmem:[%s4386 + $0x7c] sm:$0xf] %v4122
        %4412 = vst [vmem:[%s4386 + $0x88] sm:$0xf] %v4123
        %4413 = vst [vmem:[%s4386 + $0x94] sm:$0xf] %v4124
        %4414 = vst [vmem:[%s4386 + $0xa0] sm:$0xf] %v4125
        %4415 = vst [vmem:[%s4386 + $0xac] sm:$0xf] %v4126
        %4416 = vst [vmem:[%s4386 + $0xb8] sm:$0xf] %v4127
        %4417 = vst [vmem:[%s4386 + $0xc4] sm:$0xf] %v4128
        %4418 = vst [vmem:[%s4386 + $0xd0] sm:$0xf] %v4129
        %4419 = vst [vmem:[%s4386 + $0x8] sm:$0xf] %v4370
        %4420 = vst [vmem:[%s4386 + $0x14] sm:$0xf] %v4371
        %4421 = vst [vmem:[%s4386 + $0x20] sm:$0xf] %v4372
        %4422 = vst [vmem:[%s4386 + $0x2c] sm:$0xf] %v4373
        %4423 = vst [vmem:[%s4386 + $0x38] sm:$0xf] %v4374
        %4424 = vst [vmem:[%s4386 + $0x44] sm:$0xf] %v4375
        %4425 = vst [vmem:[%s4386 + $0x50] sm:$0xf] %v4376
        %4426 = vst [vmem:[%s4386 + $0x5c] sm:$0xf] %v4377
        %4427 = vst [vmem:[%s4386 + $0x80] sm:$0xf] %v4378
        %4428 = vst [vmem:[%s4386 + $0x8c] sm:$0xf] %v4379
        %4429 = vst [vmem:[%s4386 + $0x98] sm:$0xf] %v4380
        %4430 = vst [vmem:[%s4386 + $0xa4] sm:$0xf] %v4381
        %4431 = vst [vmem:[%s4386 + $0xb0] sm:$0xf] %v4382
        %4432 = vst [vmem:[%s4386 + $0xbc] sm:$0xf] %v4383
        %4433 = vst [vmem:[%s4386 + $0xc8] sm:$0xf] %v4384
        %4434 = vst [vmem:[%s4386 + $0xd4] sm:$0xf] %v4385
        %s4435 = scalar_lea.vmem [#allocation2], 240
        %v4436 = vld [vmem:[%s4435] sm:$0xff]
        %v4437 = vld [vmem:[%s4435 + $0x8] sm:$0xf]
        %v4438 = vld [vmem:[%s4435 + $0xc] sm:$0xff]
        %v4439 = vld [vmem:[%s4435 + $0x14] sm:$0xf]
        %v4440 = vld [vmem:[%s4435 + $0x18] sm:$0xff]
        %v4441 = vld [vmem:[%s4435 + $0x20] sm:$0xf]
        %v4442 = vld [vmem:[%s4435 + $0x24] sm:$0xff]
        %v4443 = vld [vmem:[%s4435 + $0x2c] sm:$0xf]
        %v4444 = vld [vmem:[%s4435 + $0x30] sm:$0xff]
        %v4445 = vld [vmem:[%s4435 + $0x38] sm:$0xf]
        %v4446 = vld [vmem:[%s4435 + $0x3c] sm:$0xff]
        %v4447 = vld [vmem:[%s4435 + $0x44] sm:$0xf]
        %v4448 = vld [vmem:[%s4435 + $0x48] sm:$0xff]
        %v4449 = vld [vmem:[%s4435 + $0x50] sm:$0xf]
        %v4450 = vld [vmem:[%s4435 + $0x54] sm:$0xff]
        %v4451 = vld [vmem:[%s4435 + $0x5c] sm:$0xf]
        %v4452 = vld [vmem:[%s4435 + $0x78] sm:$0xff]
        %v4453 = vld [vmem:[%s4435 + $0x80] sm:$0xf]
        %v4454 = vld [vmem:[%s4435 + $0x84] sm:$0xff]
        %v4455 = vld [vmem:[%s4435 + $0x8c] sm:$0xf]
        %v4456 = vld [vmem:[%s4435 + $0x90] sm:$0xff]
        %v4457 = vld [vmem:[%s4435 + $0x98] sm:$0xf]
        %v4458 = vld [vmem:[%s4435 + $0x9c] sm:$0xff]
        %v4459 = vld [vmem:[%s4435 + $0xa4] sm:$0xf]
        %v4460 = vld [vmem:[%s4435 + $0xa8] sm:$0xff]
        %v4461 = vld [vmem:[%s4435 + $0xb0] sm:$0xf]
        %v4462 = vld [vmem:[%s4435 + $0xb4] sm:$0xff]
        %v4463 = vld [vmem:[%s4435 + $0xbc] sm:$0xf]
        %v4464 = vld [vmem:[%s4435 + $0xc0] sm:$0xff]
        %v4465 = vld [vmem:[%s4435 + $0xc8] sm:$0xf]
        %v4466 = vld [vmem:[%s4435 + $0xcc] sm:$0xff]
        %v4467 = vld [vmem:[%s4435 + $0xd4] sm:$0xf]
        %v4468 = vld [vmem:[#allocation6] sm:$0xf]
        %v4469 = vld [vmem:[#allocation6 + $0x4] sm:$0xf]
        %v4470 = vld [vmem:[#allocation6 + $0x8] sm:$0xf]
        %v4471 = vld [vmem:[#allocation6 + $0xc] sm:$0xf]
        %v4472 = vld [vmem:[#allocation6 + $0x10] sm:$0xf]
        %v4473 = vld [vmem:[#allocation6 + $0x14] sm:$0xf]
        %v4474 = vld [vmem:[#allocation6 + $0x18] sm:$0xf]
        %v4475 = vld [vmem:[#allocation6 + $0x1c] sm:$0xf]
        %v4476 = vld [vmem:[#allocation6 + $0x20] sm:$0xf]
        %v4477 = vld [vmem:[#allocation6 + $0x24] sm:$0xf]
        %v4478 = vld [vmem:[#allocation6 + $0x28] sm:$0xf]
        %v4479 = vld [vmem:[#allocation6 + $0x2c] sm:$0xf]
        %v4480 = vld [vmem:[#allocation6 + $0x30] sm:$0xf]
        %v4481 = vld [vmem:[#allocation6 + $0x34] sm:$0xf]
        %v4482 = vld [vmem:[#allocation6 + $0x38] sm:$0xf]
        %v4483 = vld [vmem:[#allocation6 + $0x3c] sm:$0xf]
        %v4484 = vld [vmem:[#allocation6 + $0x40] sm:$0xf]
        %v4485 = vld [vmem:[#allocation6 + $0x44] sm:$0xf]
        %v4486 = vld [vmem:[#allocation6 + $0x48] sm:$0xf]
        %v4487 = vld [vmem:[#allocation6 + $0x4c] sm:$0xf]
        %v4488 = vld [vmem:[#allocation6 + $0x50] sm:$0xf]
        %v4489 = vld [vmem:[#allocation6 + $0x54] sm:$0xf]
        %v4490 = vld [vmem:[#allocation6 + $0x58] sm:$0xf]
        %v4491 = vld [vmem:[#allocation6 + $0x5c] sm:$0xf]
        %v4492 = vld [vmem:[#allocation6 + $0x60] sm:$0xf]
        %v4493 = vld [vmem:[#allocation6 + $0x64] sm:$0xf]
        %v4494 = vld [vmem:[#allocation6 + $0x68] sm:$0xf]
        %v4495 = vld [vmem:[#allocation6 + $0x6c] sm:$0xf]
        %v4496 = vld [vmem:[#allocation6 + $0x70] sm:$0xf]
        %v4497 = vld [vmem:[#allocation6 + $0x74] sm:$0xf]
        %v4498 = vld [vmem:[#allocation6 + $0x78] sm:$0xf]
        %v4499 = vld [vmem:[#allocation6 + $0x7c] sm:$0xf]
        %v4500 = vld [vmem:[#allocation6 + $0x80] sm:$0xf]
        %v4501 = vld [vmem:[#allocation6 + $0x84] sm:$0xf]
        %v4502 = vld [vmem:[#allocation6 + $0x88] sm:$0xf]
        %v4503 = vld [vmem:[#allocation6 + $0x8c] sm:$0xf]
        %v4504 = vld [vmem:[#allocation6 + $0x90] sm:$0xf]
        %v4505 = vld [vmem:[#allocation6 + $0x94] sm:$0xf]
        %v4506 = vld [vmem:[#allocation6 + $0x98] sm:$0xf]
        %v4507 = vld [vmem:[#allocation6 + $0x9c] sm:$0xf]
        %v4508 = vld [vmem:[#allocation6 + $0xa0] sm:$0xf]
        %v4509 = vld [vmem:[#allocation6 + $0xa4] sm:$0xf]
        %v4510 = vld [vmem:[#allocation6 + $0xa8] sm:$0xf]
        %v4511 = vld [vmem:[#allocation6 + $0xac] sm:$0xf]
        %v4512 = vld [vmem:[#allocation6 + $0xb0] sm:$0xf]
        %v4513 = vld [vmem:[#allocation6 + $0xb4] sm:$0xf]
        %v4514 = vld [vmem:[#allocation6 + $0xb8] sm:$0xf]
        %v4515 = vld [vmem:[#allocation6 + $0xbc] sm:$0xf]
        %v4516 = vld [vmem:[%s4386] sm:$0xff]
        %v4517 = vld [vmem:[%s4386 + $0x8] sm:$0xf]
        %v4518 = vld [vmem:[%s4386 + $0xc] sm:$0xff]
        %v4519 = vld [vmem:[%s4386 + $0x14] sm:$0xf]
        %v4520 = vld [vmem:[%s4386 + $0x18] sm:$0xff]
        %v4521 = vld [vmem:[%s4386 + $0x20] sm:$0xf]
        %v4522 = vld [vmem:[%s4386 + $0x24] sm:$0xff]
        %v4523 = vld [vmem:[%s4386 + $0x2c] sm:$0xf]
        %v4524 = vld [vmem:[%s4386 + $0x30] sm:$0xff]
        %v4525 = vld [vmem:[%s4386 + $0x38] sm:$0xf]
        %v4526 = vld [vmem:[%s4386 + $0x3c] sm:$0xff]
        %v4527 = vld [vmem:[%s4386 + $0x44] sm:$0xf]
        %v4528 = vld [vmem:[%s4386 + $0x48] sm:$0xff]
        %v4529 = vld [vmem:[%s4386 + $0x50] sm:$0xf]
        %v4530 = vld [vmem:[%s4386 + $0x54] sm:$0xff]
        %v4531 = vld [vmem:[%s4386 + $0x5c] sm:$0xf]
        %v4532 = vld [vmem:[%s4386 + $0x78] sm:$0xff]
        %v4533 = vld [vmem:[%s4386 + $0x80] sm:$0xf]
        %v4534 = vld [vmem:[%s4386 + $0x84] sm:$0xff]
        %v4535 = vld [vmem:[%s4386 + $0x8c] sm:$0xf]
        %v4536 = vld [vmem:[%s4386 + $0x90] sm:$0xff]
        %v4537 = vld [vmem:[%s4386 + $0x98] sm:$0xf]
        %v4538 = vld [vmem:[%s4386 + $0x9c] sm:$0xff]
        %v4539 = vld [vmem:[%s4386 + $0xa4] sm:$0xf]
        %v4540 = vld [vmem:[%s4386 + $0xa8] sm:$0xff]
        %v4541 = vld [vmem:[%s4386 + $0xb0] sm:$0xf]
        %v4542 = vld [vmem:[%s4386 + $0xb4] sm:$0xff]
        %v4543 = vld [vmem:[%s4386 + $0xbc] sm:$0xf]
        %v4544 = vld [vmem:[%s4386 + $0xc0] sm:$0xff]
        %v4545 = vld [vmem:[%s4386 + $0xc8] sm:$0xf]
        %v4546 = vld [vmem:[%s4386 + $0xcc] sm:$0xff]
        %v4547 = vld [vmem:[%s4386 + $0xd4] sm:$0xf]
        %v4548 = vld [vmem:[%s756] sm:$0xf]
        %v4549 = vld [vmem:[%s756 + $0x4] sm:$0xf]
        %v4550 = vld [vmem:[%s756 + $0x8] sm:$0xf]
        %v4551 = vld [vmem:[%s756 + $0xc] sm:$0xf]
        %v4552 = vld [vmem:[%s756 + $0x10] sm:$0xf]
        %v4553 = vld [vmem:[%s756 + $0x14] sm:$0xf]
        %v4554 = vld [vmem:[%s756 + $0x18] sm:$0xf]
        %v4555 = vld [vmem:[%s756 + $0x1c] sm:$0xf]
        %v4556 = vld [vmem:[%s756 + $0x20] sm:$0xf]
        %v4557 = vld [vmem:[%s756 + $0x24] sm:$0xf]
        %v4558 = vld [vmem:[%s756 + $0x28] sm:$0xf]
        %v4559 = vld [vmem:[%s756 + $0x2c] sm:$0xf]
        %v4560 = vld [vmem:[%s756 + $0x30] sm:$0xf]
        %v4561 = vld [vmem:[%s756 + $0x34] sm:$0xf]
        %v4562 = vld [vmem:[%s756 + $0x38] sm:$0xf]
        %v4563 = vld [vmem:[%s756 + $0x3c] sm:$0xf]
        %v4564 = vld [vmem:[%s756 + $0x40] sm:$0xf]
        %v4565 = vld [vmem:[%s756 + $0x44] sm:$0xf]
        %v4566 = vld [vmem:[%s756 + $0x48] sm:$0xf]
        %v4567 = vld [vmem:[%s756 + $0x4c] sm:$0xf]
        %v4568 = vld [vmem:[%s756 + $0x50] sm:$0xf]
        %v4569 = vld [vmem:[%s756 + $0x54] sm:$0xf]
        %v4570 = vld [vmem:[%s756 + $0x58] sm:$0xf]
        %v4571 = vld [vmem:[%s756 + $0x5c] sm:$0xf]
        %v4572 = vld [vmem:[%s756 + $0x60] sm:$0xf]
        %v4573 = vld [vmem:[%s756 + $0x64] sm:$0xf]
        %v4574 = vld [vmem:[%s756 + $0x68] sm:$0xf]
        %v4575 = vld [vmem:[%s756 + $0x6c] sm:$0xf]
        %v4576 = vld [vmem:[%s756 + $0x70] sm:$0xf]
        %v4577 = vld [vmem:[%s756 + $0x74] sm:$0xf]
        %v4578 = vld [vmem:[%s756 + $0x78] sm:$0xf]
        %v4579 = vld [vmem:[%s756 + $0x7c] sm:$0xf]
        %v4580 = vld [vmem:[%s756 + $0x80] sm:$0xf]
        %v4581 = vld [vmem:[%s756 + $0x84] sm:$0xf]
        %v4582 = vld [vmem:[%s756 + $0x88] sm:$0xf]
        %v4583 = vld [vmem:[%s756 + $0x8c] sm:$0xf]
        %v4584 = vld [vmem:[%s756 + $0x90] sm:$0xf]
        %v4585 = vld [vmem:[%s756 + $0x94] sm:$0xf]
        %v4586 = vld [vmem:[%s756 + $0x98] sm:$0xf]
        %v4587 = vld [vmem:[%s756 + $0x9c] sm:$0xf]
        %v4588 = vld [vmem:[%s756 + $0xa0] sm:$0xf]
        %v4589 = vld [vmem:[%s756 + $0xa4] sm:$0xf]
        %v4590 = vld [vmem:[%s756 + $0xa8] sm:$0xf]
        %v4591 = vld [vmem:[%s756 + $0xac] sm:$0xf]
        %v4592 = vld [vmem:[%s756 + $0xb0] sm:$0xf]
        %v4593 = vld [vmem:[%s756 + $0xb4] sm:$0xf]
        %v4594 = vld [vmem:[%s756 + $0xb8] sm:$0xf]
        %v4595 = vld [vmem:[%s756 + $0xbc] sm:$0xf]
        %v4628 = vunpack.c.l.b16 %v4516
        %v4629 = vunpack.c.h.b16 %v4516
        %v4630 = vunpack.c.l.b16 %v4517
        %v4631 = vunpack.c.l.b16 %v4518
        %v4632 = vunpack.c.h.b16 %v4518
        %v4633 = vunpack.c.l.b16 %v4519
        %v4634 = vunpack.c.l.b16 %v4520
        %v4635 = vunpack.c.h.b16 %v4520
        %v4636 = vunpack.c.l.b16 %v4521
        %v4637 = vunpack.c.l.b16 %v4522
        %v4638 = vunpack.c.h.b16 %v4522
        %v4639 = vunpack.c.l.b16 %v4523
        %v4640 = vunpack.c.l.b16 %v4524
        %v4641 = vunpack.c.h.b16 %v4524
        %v4642 = vunpack.c.l.b16 %v4525
        %v4643 = vunpack.c.l.b16 %v4526
        %v4644 = vunpack.c.h.b16 %v4526
        %v4645 = vunpack.c.l.b16 %v4527
        %v4646 = vunpack.c.l.b16 %v4528
        %v4647 = vunpack.c.h.b16 %v4528
        %v4648 = vunpack.c.l.b16 %v4529
        %v4649 = vunpack.c.l.b16 %v4530
        %v4650 = vunpack.c.h.b16 %v4530
        %v4651 = vunpack.c.l.b16 %v4531
        %v4652 = vunpack.c.l.b16 %v4532
        %v4653 = vunpack.c.h.b16 %v4532
        %v4654 = vunpack.c.l.b16 %v4533
        %v4655 = vunpack.c.l.b16 %v4534
        %v4656 = vunpack.c.h.b16 %v4534
        %v4657 = vunpack.c.l.b16 %v4535
        %v4658 = vunpack.c.l.b16 %v4536
        %v4659 = vunpack.c.h.b16 %v4536
        %v4660 = vunpack.c.l.b16 %v4537
        %v4661 = vunpack.c.l.b16 %v4538
        %v4662 = vunpack.c.h.b16 %v4538
        %v4663 = vunpack.c.l.b16 %v4539
        %v4664 = vunpack.c.l.b16 %v4540
        %v4665 = vunpack.c.h.b16 %v4540
        %v4666 = vunpack.c.l.b16 %v4541
        %v4667 = vunpack.c.l.b16 %v4542
        %v4668 = vunpack.c.h.b16 %v4542
        %v4669 = vunpack.c.l.b16 %v4543
        %v4670 = vunpack.c.l.b16 %v4544
        %v4671 = vunpack.c.h.b16 %v4544
        %v4672 = vunpack.c.l.b16 %v4545
        %v4673 = vunpack.c.l.b16 %v4546
        %v4674 = vunpack.c.h.b16 %v4546
        %v4675 = vunpack.c.l.b16 %v4547
        %v4676 = vpack.c.b16 %v4631, %v4628
        %v4677 = vpack.c.b16 %v4632, %v4629
        %v4678 = vpack.c.b16 %v4633, %v4630
        %v4679 = vpack.c.b16 %v4637, %v4634
        %v4680 = vpack.c.b16 %v4638, %v4635
        %v4681 = vpack.c.b16 %v4639, %v4636
        %v4682 = vpack.c.b16 %v4643, %v4640
        %v4683 = vpack.c.b16 %v4644, %v4641
        %v4684 = vpack.c.b16 %v4645, %v4642
        %v4685 = vpack.c.b16 %v4649, %v4646
        %v4686 = vpack.c.b16 %v4650, %v4647
        %v4687 = vpack.c.b16 %v4651, %v4648
        %v4688 = vpack.c.b16 %v4655, %v4652
        %v4689 = vpack.c.b16 %v4656, %v4653
        %v4690 = vpack.c.b16 %v4657, %v4654
        %v4691 = vpack.c.b16 %v4661, %v4658
        %v4692 = vpack.c.b16 %v4662, %v4659
        %v4693 = vpack.c.b16 %v4663, %v4660
        %v4694 = vpack.c.b16 %v4667, %v4664
        %v4695 = vpack.c.b16 %v4668, %v4665
        %v4696 = vpack.c.b16 %v4669, %v4666
        %v4697 = vpack.c.b16 %v4673, %v4670
        %v4698 = vpack.c.b16 %v4674, %v4671
        %v4699 = vpack.c.b16 %v4675, %v4672
        %v4772 = vunpack.c.l.b16 %v4548
        %v4773 = vunpack.c.l.b16 %v4549
        %v4774 = vunpack.c.l.b16 %v4550
        %v4775 = vunpack.c.l.b16 %v4551
        %v4776 = vunpack.c.l.b16 %v4552
        %v4777 = vunpack.c.l.b16 %v4553
        %v4778 = vunpack.c.l.b16 %v4554
        %v4779 = vunpack.c.l.b16 %v4555
        %v4780 = vunpack.c.l.b16 %v4556
        %v4781 = vunpack.c.l.b16 %v4557
        %v4782 = vunpack.c.l.b16 %v4558
        %v4783 = vunpack.c.l.b16 %v4559
        %v4784 = vunpack.c.l.b16 %v4560
        %v4785 = vunpack.c.l.b16 %v4561
        %v4786 = vunpack.c.l.b16 %v4562
        %v4787 = vunpack.c.l.b16 %v4563
        %v4788 = vunpack.c.l.b16 %v4564
        %v4789 = vunpack.c.l.b16 %v4565
        %v4790 = vunpack.c.l.b16 %v4566
        %v4791 = vunpack.c.l.b16 %v4567
        %v4792 = vunpack.c.l.b16 %v4568
        %v4793 = vunpack.c.l.b16 %v4569
        %v4794 = vunpack.c.l.b16 %v4570
        %v4795 = vunpack.c.l.b16 %v4571
        %v4796 = vunpack.c.l.b16 %v4572
        %v4797 = vunpack.c.l.b16 %v4573
        %v4798 = vunpack.c.l.b16 %v4574
        %v4799 = vunpack.c.l.b16 %v4575
        %v4800 = vunpack.c.l.b16 %v4576
        %v4801 = vunpack.c.l.b16 %v4577
        %v4802 = vunpack.c.l.b16 %v4578
        %v4803 = vunpack.c.l.b16 %v4579
        %v4804 = vunpack.c.l.b16 %v4580
        %v4805 = vunpack.c.l.b16 %v4581
        %v4806 = vunpack.c.l.b16 %v4582
        %v4807 = vunpack.c.l.b16 %v4583
        %v4808 = vunpack.c.l.b16 %v4584
        %v4809 = vunpack.c.l.b16 %v4585
        %v4810 = vunpack.c.l.b16 %v4586
        %v4811 = vunpack.c.l.b16 %v4587
        %v4812 = vunpack.c.l.b16 %v4588
        %v4813 = vunpack.c.l.b16 %v4589
        %v4814 = vunpack.c.l.b16 %v4590
        %v4815 = vunpack.c.l.b16 %v4591
        %v4816 = vunpack.c.l.b16 %v4592
        %v4817 = vunpack.c.l.b16 %v4593
        %v4818 = vunpack.c.l.b16 %v4594
        %v4819 = vunpack.c.l.b16 %v4595
        %v4820 = vpack.c.b16 %v4773, %v4772
        %v4821 = vpack.c.b16 %v4775, %v4774
        %v4822 = vpack.c.b16 %v4777, %v4776
        %v4823 = vpack.c.b16 %v4779, %v4778
        %v4824 = vpack.c.b16 %v4781, %v4780
        %v4825 = vpack.c.b16 %v4783, %v4782
        %v4826 = vpack.c.b16 %v4785, %v4784
        %v4827 = vpack.c.b16 %v4787, %v4786
        %v4828 = vpack.c.b16 %v4789, %v4788
        %v4829 = vpack.c.b16 %v4791, %v4790
        %v4830 = vpack.c.b16 %v4793, %v4792
        %v4831 = vpack.c.b16 %v4795, %v4794
        %v4832 = vpack.c.b16 %v4797, %v4796
        %v4833 = vpack.c.b16 %v4799, %v4798
        %v4834 = vpack.c.b16 %v4801, %v4800
        %v4835 = vpack.c.b16 %v4803, %v4802
        %v4836 = vpack.c.b16 %v4805, %v4804
        %v4837 = vpack.c.b16 %v4807, %v4806
        %v4838 = vpack.c.b16 %v4809, %v4808
        %v4839 = vpack.c.b16 %v4811, %v4810
        %v4840 = vpack.c.b16 %v4813, %v4812
        %v4841 = vpack.c.b16 %v4815, %v4814
        %v4842 = vpack.c.b16 %v4817, %v4816
        %v4843 = vpack.c.b16 %v4819, %v4818
        %4868 = vmatpush.bf16.msra.mxu0 %v4827
        %4869 = vmatpush.bf16.msra.mxu0 %v4826
        %4870 = vmatpush.bf16.msra.mxu0 %v4825
        %4871 = vmatpush.bf16.msra.mxu0 %v4824
        %4872 = vmatpush.bf16.msra.mxu0 %v4823
        %4873 = vmatpush.bf16.msra.mxu0 %v4822
        %4874 = vmatpush.bf16.msra.mxu0 %v4821
        %4875 = vmatpush.bf16.msra.mxu0 %v4820
        %4876 = vmatmul.bf16.gmra.mxu0 %v4676
        %v4877 = vpop.f32.mrf.mxu0
        %v4878 = vadd.f32 0.0, %v4877
        %v4879 = vpop.f32.mrf.mxu0
        %v4880 = vadd.f32 0.0, %v4879
        %4881 = vmatmul.bf16.gmra.mxu0 %v4679
        %v4882 = vpop.f32.mrf.mxu0
        %v4883 = vadd.f32 0.0, %v4882
        %v4884 = vpop.f32.mrf.mxu0
        %v4885 = vadd.f32 0.0, %v4884
        %4886 = vmatmul.bf16.gmra.mxu0 %v4682
        %v4887 = vpop.f32.mrf.mxu0
        %v4888 = vadd.f32 0.0, %v4887
        %v4889 = vpop.f32.mrf.mxu0
        %v4890 = vadd.f32 0.0, %v4889
        %4891 = vmatmul.bf16.gmra.mxu0 %v4685
        %v4892 = vpop.f32.mrf.mxu0
        %v4893 = vadd.f32 0.0, %v4892
        %v4894 = vpop.f32.mrf.mxu0
        %v4895 = vadd.f32 0.0, %v4894
        %4896 = vmatmul.bf16.gmra.mxu0 %v4688
        %v4897 = vpop.f32.mrf.mxu0
        %v4898 = vadd.f32 0.0, %v4897
        %v4899 = vpop.f32.mrf.mxu0
        %v4900 = vadd.f32 0.0, %v4899
        %4901 = vmatmul.bf16.gmra.mxu0 %v4691
        %v4902 = vpop.f32.mrf.mxu0
        %v4903 = vadd.f32 0.0, %v4902
        %v4904 = vpop.f32.mrf.mxu0
        %v4905 = vadd.f32 0.0, %v4904
        %4906 = vmatmul.bf16.gmra.mxu0 %v4694
        %v4907 = vpop.f32.mrf.mxu0
        %v4908 = vadd.f32 0.0, %v4907
        %v4909 = vpop.f32.mrf.mxu0
        %v4910 = vadd.f32 0.0, %v4909
        %4911 = vmatmul.bf16.gmra.mxu0 %v4697
        %v4912 = vpop.f32.mrf.mxu0
        %v4913 = vadd.f32 0.0, %v4912
        %v4914 = vpop.f32.mrf.mxu0
        %v4915 = vadd.f32 0.0, %v4914
        %4916 = vdwg.mxu0
        %4917 = vmatpush.bf16.msra.mxu0 %v4835
        %4918 = vmatpush.bf16.msra.mxu0 %v4834
        %4919 = vmatpush.bf16.msra.mxu0 %v4833
        %4920 = vmatpush.bf16.msra.mxu0 %v4832
        %4921 = vmatpush.bf16.msra.mxu0 %v4831
        %4922 = vmatpush.bf16.msra.mxu0 %v4830
        %4923 = vmatpush.bf16.msra.mxu0 %v4829
        %4924 = vmatpush.bf16.msra.mxu0 %v4828
        %4925 = vmatmul.bf16.gmra.mxu0 %v4677
        %v4926 = vpop.f32.mrf.mxu0
        %v4927 = vadd.f32 %v4878, %v4926
        %v4928 = vpop.f32.mrf.mxu0
        %v4929 = vadd.f32 %v4880, %v4928
        %4930 = vmatmul.bf16.gmra.mxu0 %v4680
        %v4931 = vpop.f32.mrf.mxu0
        %v4932 = vadd.f32 %v4883, %v4931
        %v4933 = vpop.f32.mrf.mxu0
        %v4934 = vadd.f32 %v4885, %v4933
        %4935 = vmatmul.bf16.gmra.mxu0 %v4683
        %v4936 = vpop.f32.mrf.mxu0
        %v4937 = vadd.f32 %v4888, %v4936
        %v4938 = vpop.f32.mrf.mxu0
        %v4939 = vadd.f32 %v4890, %v4938
        %4940 = vmatmul.bf16.gmra.mxu0 %v4686
        %v4941 = vpop.f32.mrf.mxu0
        %v4942 = vadd.f32 %v4893, %v4941
        %v4943 = vpop.f32.mrf.mxu0
        %v4944 = vadd.f32 %v4895, %v4943
        %4945 = vmatmul.bf16.gmra.mxu0 %v4689
        %v4946 = vpop.f32.mrf.mxu0
        %v4947 = vadd.f32 %v4898, %v4946
        %v4948 = vpop.f32.mrf.mxu0
        %v4949 = vadd.f32 %v4900, %v4948
        %4950 = vmatmul.bf16.gmra.mxu0 %v4692
        %v4951 = vpop.f32.mrf.mxu0
        %v4952 = vadd.f32 %v4903, %v4951
        %v4953 = vpop.f32.mrf.mxu0
        %v4954 = vadd.f32 %v4905, %v4953
        %4955 = vmatmul.bf16.gmra.mxu0 %v4695
        %v4956 = vpop.f32.mrf.mxu0
        %v4957 = vadd.f32 %v4908, %v4956
        %v4958 = vpop.f32.mrf.mxu0
        %v4959 = vadd.f32 %v4910, %v4958
        %4960 = vmatmul.bf16.gmra.mxu0 %v4698
        %v4961 = vpop.f32.mrf.mxu0
        %v4962 = vadd.f32 %v4913, %v4961
        %v4963 = vpop.f32.mrf.mxu0
        %v4964 = vadd.f32 %v4915, %v4963
        %4965 = vdwg.mxu0
        %4966 = vmatpush.bf16.msra.mxu0 %v4843
        %4967 = vmatpush.bf16.msra.mxu0 %v4842
        %4968 = vmatpush.bf16.msra.mxu0 %v4841
        %4969 = vmatpush.bf16.msra.mxu0 %v4840
        %4970 = vmatpush.bf16.msra.mxu0 %v4839
        %4971 = vmatpush.bf16.msra.mxu0 %v4838
        %4972 = vmatpush.bf16.msra.mxu0 %v4837
        %4973 = vmatpush.bf16.msra.mxu0 %v4836
        %4974 = vmatmul.bf16.gmra.mxu0 %v4678
        %v4975 = vpop.f32.mrf.mxu0
        %v4976 = vadd.f32 %v4927, %v4975
        %v4977 = vpop.f32.mrf.mxu0
        %v4978 = vadd.f32 %v4929, %v4977
        %4979 = vmatmul.bf16.gmra.mxu0 %v4681
        %v4980 = vpop.f32.mrf.mxu0
        %v4981 = vadd.f32 %v4932, %v4980
        %v4982 = vpop.f32.mrf.mxu0
        %v4983 = vadd.f32 %v4934, %v4982
        %4984 = vmatmul.bf16.gmra.mxu0 %v4684
        %v4985 = vpop.f32.mrf.mxu0
        %v4986 = vadd.f32 %v4937, %v4985
        %v4987 = vpop.f32.mrf.mxu0
        %v4988 = vadd.f32 %v4939, %v4987
        %4989 = vmatmul.bf16.gmra.mxu0 %v4687
        %v4990 = vpop.f32.mrf.mxu0
        %v4991 = vadd.f32 %v4942, %v4990
        %v4992 = vpop.f32.mrf.mxu0
        %v4993 = vadd.f32 %v4944, %v4992
        %4994 = vmatmul.bf16.gmra.mxu0 %v4690
        %v4995 = vpop.f32.mrf.mxu0
        %v4996 = vadd.f32 %v4947, %v4995
        %v4997 = vpop.f32.mrf.mxu0
        %v4998 = vadd.f32 %v4949, %v4997
        %4999 = vmatmul.bf16.gmra.mxu0 %v4693
        %v5000 = vpop.f32.mrf.mxu0
        %v5001 = vadd.f32 %v4952, %v5000
        %v5002 = vpop.f32.mrf.mxu0
        %v5003 = vadd.f32 %v4954, %v5002
        %5004 = vmatmul.bf16.gmra.mxu0 %v4696
        %v5005 = vpop.f32.mrf.mxu0
        %v5006 = vadd.f32 %v4957, %v5005
        %v5007 = vpop.f32.mrf.mxu0
        %v5008 = vadd.f32 %v4959, %v5007
        %5009 = vmatmul.bf16.gmra.mxu0 %v4699
        %v5010 = vpop.f32.mrf.mxu0
        %v5011 = vadd.f32 %v4962, %v5010
        %v5012 = vpop.f32.mrf.mxu0
        %v5013 = vadd.f32 %v4964, %v5012
        %5014 = vdwg.mxu0
        %v5047 = vunpack.c.l.b16 %v4436
        %v5048 = vunpack.c.h.b16 %v4436
        %v5049 = vunpack.c.l.b16 %v4437
        %v5050 = vunpack.c.l.b16 %v4438
        %v5051 = vunpack.c.h.b16 %v4438
        %v5052 = vunpack.c.l.b16 %v4439
        %v5053 = vunpack.c.l.b16 %v4440
        %v5054 = vunpack.c.h.b16 %v4440
        %v5055 = vunpack.c.l.b16 %v4441
        %v5056 = vunpack.c.l.b16 %v4442
        %v5057 = vunpack.c.h.b16 %v4442
        %v5058 = vunpack.c.l.b16 %v4443
        %v5059 = vunpack.c.l.b16 %v4444
        %v5060 = vunpack.c.h.b16 %v4444
        %v5061 = vunpack.c.l.b16 %v4445
        %v5062 = vunpack.c.l.b16 %v4446
        %v5063 = vunpack.c.h.b16 %v4446
        %v5064 = vunpack.c.l.b16 %v4447
        %v5065 = vunpack.c.l.b16 %v4448
        %v5066 = vunpack.c.h.b16 %v4448
        %v5067 = vunpack.c.l.b16 %v4449
        %v5068 = vunpack.c.l.b16 %v4450
        %v5069 = vunpack.c.h.b16 %v4450
        %v5070 = vunpack.c.l.b16 %v4451
        %v5071 = vunpack.c.l.b16 %v4452
        %v5072 = vunpack.c.h.b16 %v4452
        %v5073 = vunpack.c.l.b16 %v4453
        %v5074 = vunpack.c.l.b16 %v4454
        %v5075 = vunpack.c.h.b16 %v4454
        %v5076 = vunpack.c.l.b16 %v4455
        %v5077 = vunpack.c.l.b16 %v4456
        %v5078 = vunpack.c.h.b16 %v4456
        %v5079 = vunpack.c.l.b16 %v4457
        %v5080 = vunpack.c.l.b16 %v4458
        %v5081 = vunpack.c.h.b16 %v4458
        %v5082 = vunpack.c.l.b16 %v4459
        %v5083 = vunpack.c.l.b16 %v4460
        %v5084 = vunpack.c.h.b16 %v4460
        %v5085 = vunpack.c.l.b16 %v4461
        %v5086 = vunpack.c.l.b16 %v4462
        %v5087 = vunpack.c.h.b16 %v4462
        %v5088 = vunpack.c.l.b16 %v4463
        %v5089 = vunpack.c.l.b16 %v4464
        %v5090 = vunpack.c.h.b16 %v4464
        %v5091 = vunpack.c.l.b16 %v4465
        %v5092 = vunpack.c.l.b16 %v4466
        %v5093 = vunpack.c.h.b16 %v4466
        %v5094 = vunpack.c.l.b16 %v4467
        %v5095 = vpack.c.b16 %v5050, %v5047
        %v5096 = vpack.c.b16 %v5051, %v5048
        %v5097 = vpack.c.b16 %v5052, %v5049
        %v5098 = vpack.c.b16 %v5056, %v5053
        %v5099 = vpack.c.b16 %v5057, %v5054
        %v5100 = vpack.c.b16 %v5058, %v5055
        %v5101 = vpack.c.b16 %v5062, %v5059
        %v5102 = vpack.c.b16 %v5063, %v5060
        %v5103 = vpack.c.b16 %v5064, %v5061
        %v5104 = vpack.c.b16 %v5068, %v5065
        %v5105 = vpack.c.b16 %v5069, %v5066
        %v5106 = vpack.c.b16 %v5070, %v5067
        %v5107 = vpack.c.b16 %v5074, %v5071
        %v5108 = vpack.c.b16 %v5075, %v5072
        %v5109 = vpack.c.b16 %v5076, %v5073
        %v5110 = vpack.c.b16 %v5080, %v5077
        %v5111 = vpack.c.b16 %v5081, %v5078
        %v5112 = vpack.c.b16 %v5082, %v5079
        %v5113 = vpack.c.b16 %v5086, %v5083
        %v5114 = vpack.c.b16 %v5087, %v5084
        %v5115 = vpack.c.b16 %v5088, %v5085
        %v5116 = vpack.c.b16 %v5092, %v5089
        %v5117 = vpack.c.b16 %v5093, %v5090
        %v5118 = vpack.c.b16 %v5094, %v5091
        %v5191 = vunpack.c.l.b16 %v4468
        %v5192 = vunpack.c.l.b16 %v4469
        %v5193 = vunpack.c.l.b16 %v4470
        %v5194 = vunpack.c.l.b16 %v4471
        %v5195 = vunpack.c.l.b16 %v4472
        %v5196 = vunpack.c.l.b16 %v4473
        %v5197 = vunpack.c.l.b16 %v4474
        %v5198 = vunpack.c.l.b16 %v4475
        %v5199 = vunpack.c.l.b16 %v4476
        %v5200 = vunpack.c.l.b16 %v4477
        %v5201 = vunpack.c.l.b16 %v4478
        %v5202 = vunpack.c.l.b16 %v4479
        %v5203 = vunpack.c.l.b16 %v4480
        %v5204 = vunpack.c.l.b16 %v4481
        %v5205 = vunpack.c.l.b16 %v4482
        %v5206 = vunpack.c.l.b16 %v4483
        %v5207 = vunpack.c.l.b16 %v4484
        %v5208 = vunpack.c.l.b16 %v4485
        %v5209 = vunpack.c.l.b16 %v4486
        %v5210 = vunpack.c.l.b16 %v4487
        %v5211 = vunpack.c.l.b16 %v4488
        %v5212 = vunpack.c.l.b16 %v4489
        %v5213 = vunpack.c.l.b16 %v4490
        %v5214 = vunpack.c.l.b16 %v4491
        %v5215 = vunpack.c.l.b16 %v4492
        %v5216 = vunpack.c.l.b16 %v4493
        %v5217 = vunpack.c.l.b16 %v4494
        %v5218 = vunpack.c.l.b16 %v4495
        %v5219 = vunpack.c.l.b16 %v4496
        %v5220 = vunpack.c.l.b16 %v4497
        %v5221 = vunpack.c.l.b16 %v4498
        %v5222 = vunpack.c.l.b16 %v4499
        %v5223 = vunpack.c.l.b16 %v4500
        %v5224 = vunpack.c.l.b16 %v4501
        %v5225 = vunpack.c.l.b16 %v4502
        %v5226 = vunpack.c.l.b16 %v4503
        %v5227 = vunpack.c.l.b16 %v4504
        %v5228 = vunpack.c.l.b16 %v4505
        %v5229 = vunpack.c.l.b16 %v4506
        %v5230 = vunpack.c.l.b16 %v4507
        %v5231 = vunpack.c.l.b16 %v4508
        %v5232 = vunpack.c.l.b16 %v4509
        %v5233 = vunpack.c.l.b16 %v4510
        %v5234 = vunpack.c.l.b16 %v4511
        %v5235 = vunpack.c.l.b16 %v4512
        %v5236 = vunpack.c.l.b16 %v4513
        %v5237 = vunpack.c.l.b16 %v4514
        %v5238 = vunpack.c.l.b16 %v4515
        %v5239 = vpack.c.b16 %v5192, %v5191
        %v5240 = vpack.c.b16 %v5194, %v5193
        %v5241 = vpack.c.b16 %v5196, %v5195
        %v5242 = vpack.c.b16 %v5198, %v5197
        %v5243 = vpack.c.b16 %v5200, %v5199
        %v5244 = vpack.c.b16 %v5202, %v5201
        %v5245 = vpack.c.b16 %v5204, %v5203
        %v5246 = vpack.c.b16 %v5206, %v5205
        %v5247 = vpack.c.b16 %v5208, %v5207
        %v5248 = vpack.c.b16 %v5210, %v5209
        %v5249 = vpack.c.b16 %v5212, %v5211
        %v5250 = vpack.c.b16 %v5214, %v5213
        %v5251 = vpack.c.b16 %v5216, %v5215
        %v5252 = vpack.c.b16 %v5218, %v5217
        %v5253 = vpack.c.b16 %v5220, %v5219
        %v5254 = vpack.c.b16 %v5222, %v5221
        %v5255 = vpack.c.b16 %v5224, %v5223
        %v5256 = vpack.c.b16 %v5226, %v5225
        %v5257 = vpack.c.b16 %v5228, %v5227
        %v5258 = vpack.c.b16 %v5230, %v5229
        %v5259 = vpack.c.b16 %v5232, %v5231
        %v5260 = vpack.c.b16 %v5234, %v5233
        %v5261 = vpack.c.b16 %v5236, %v5235
        %v5262 = vpack.c.b16 %v5238, %v5237
        %5287 = vmatpush.bf16.msra.mxu0 %v5246
        %5288 = vmatpush.bf16.msra.mxu0 %v5245
        %5289 = vmatpush.bf16.msra.mxu0 %v5244
        %5290 = vmatpush.bf16.msra.mxu0 %v5243
        %5291 = vmatpush.bf16.msra.mxu0 %v5242
        %5292 = vmatpush.bf16.msra.mxu0 %v5241
        %5293 = vmatpush.bf16.msra.mxu0 %v5240
        %5294 = vmatpush.bf16.msra.mxu0 %v5239
        %5295 = vmatmul.bf16.gmra.mxu0 %v5095
        %v5296 = vpop.f32.mrf.mxu0
        %v5297 = vadd.f32 %v4976, %v5296
        %v5298 = vpop.f32.mrf.mxu0
        %v5299 = vadd.f32 %v4978, %v5298
        %5300 = vmatmul.bf16.gmra.mxu0 %v5098
        %v5301 = vpop.f32.mrf.mxu0
        %v5302 = vadd.f32 %v4981, %v5301
        %v5303 = vpop.f32.mrf.mxu0
        %v5304 = vadd.f32 %v4983, %v5303
        %5305 = vmatmul.bf16.gmra.mxu0 %v5101
        %v5306 = vpop.f32.mrf.mxu0
        %v5307 = vadd.f32 %v4986, %v5306
        %v5308 = vpop.f32.mrf.mxu0
        %v5309 = vadd.f32 %v4988, %v5308
        %5310 = vmatmul.bf16.gmra.mxu0 %v5104
        %v5311 = vpop.f32.mrf.mxu0
        %v5312 = vadd.f32 %v4991, %v5311
        %v5313 = vpop.f32.mrf.mxu0
        %v5314 = vadd.f32 %v4993, %v5313
        %5315 = vmatmul.bf16.gmra.mxu0 %v5107
        %v5316 = vpop.f32.mrf.mxu0
        %v5317 = vadd.f32 %v4996, %v5316
        %v5318 = vpop.f32.mrf.mxu0
        %v5319 = vadd.f32 %v4998, %v5318
        %5320 = vmatmul.bf16.gmra.mxu0 %v5110
        %v5321 = vpop.f32.mrf.mxu0
        %v5322 = vadd.f32 %v5001, %v5321
        %v5323 = vpop.f32.mrf.mxu0
        %v5324 = vadd.f32 %v5003, %v5323
        %5325 = vmatmul.bf16.gmra.mxu0 %v5113
        %v5326 = vpop.f32.mrf.mxu0
        %v5327 = vadd.f32 %v5006, %v5326
        %v5328 = vpop.f32.mrf.mxu0
        %v5329 = vadd.f32 %v5008, %v5328
        %5330 = vmatmul.bf16.gmra.mxu0 %v5116
        %v5331 = vpop.f32.mrf.mxu0
        %v5332 = vadd.f32 %v5011, %v5331
        %v5333 = vpop.f32.mrf.mxu0
        %v5334 = vadd.f32 %v5013, %v5333
        %5335 = vdwg.mxu0
        %5336 = vmatpush.bf16.msra.mxu0 %v5254
        %5337 = vmatpush.bf16.msra.mxu0 %v5253
        %5338 = vmatpush.bf16.msra.mxu0 %v5252
        %5339 = vmatpush.bf16.msra.mxu0 %v5251
        %5340 = vmatpush.bf16.msra.mxu0 %v5250
        %5341 = vmatpush.bf16.msra.mxu0 %v5249
        %5342 = vmatpush.bf16.msra.mxu0 %v5248
        %5343 = vmatpush.bf16.msra.mxu0 %v5247
        %5344 = vmatmul.bf16.gmra.mxu0 %v5096
        %v5345 = vpop.f32.mrf.mxu0
        %v5346 = vadd.f32 %v5297, %v5345
        %v5347 = vpop.f32.mrf.mxu0
        %v5348 = vadd.f32 %v5299, %v5347
        %5349 = vmatmul.bf16.gmra.mxu0 %v5099
        %v5350 = vpop.f32.mrf.mxu0
        %v5351 = vadd.f32 %v5302, %v5350
        %v5352 = vpop.f32.mrf.mxu0
        %v5353 = vadd.f32 %v5304, %v5352
        %5354 = vmatmul.bf16.gmra.mxu0 %v5102
        %v5355 = vpop.f32.mrf.mxu0
        %v5356 = vadd.f32 %v5307, %v5355
        %v5357 = vpop.f32.mrf.mxu0
        %v5358 = vadd.f32 %v5309, %v5357
        %5359 = vmatmul.bf16.gmra.mxu0 %v5105
        %v5360 = vpop.f32.mrf.mxu0
        %v5361 = vadd.f32 %v5312, %v5360
        %v5362 = vpop.f32.mrf.mxu0
        %v5363 = vadd.f32 %v5314, %v5362
        %5364 = vmatmul.bf16.gmra.mxu0 %v5108
        %v5365 = vpop.f32.mrf.mxu0
        %v5366 = vadd.f32 %v5317, %v5365
        %v5367 = vpop.f32.mrf.mxu0
        %v5368 = vadd.f32 %v5319, %v5367
        %5369 = vmatmul.bf16.gmra.mxu0 %v5111
        %v5370 = vpop.f32.mrf.mxu0
        %v5371 = vadd.f32 %v5322, %v5370
        %v5372 = vpop.f32.mrf.mxu0
        %v5373 = vadd.f32 %v5324, %v5372
        %5374 = vmatmul.bf16.gmra.mxu0 %v5114
        %v5375 = vpop.f32.mrf.mxu0
        %v5376 = vadd.f32 %v5327, %v5375
        %v5377 = vpop.f32.mrf.mxu0
        %v5378 = vadd.f32 %v5329, %v5377
        %5379 = vmatmul.bf16.gmra.mxu0 %v5117
        %v5380 = vpop.f32.mrf.mxu0
        %v5381 = vadd.f32 %v5332, %v5380
        %v5382 = vpop.f32.mrf.mxu0
        %v5383 = vadd.f32 %v5334, %v5382
        %5384 = vdwg.mxu0
        %5385 = vmatpush.bf16.msra.mxu0 %v5262
        %5386 = vmatpush.bf16.msra.mxu0 %v5261
        %5387 = vmatpush.bf16.msra.mxu0 %v5260
        %5388 = vmatpush.bf16.msra.mxu0 %v5259
        %5389 = vmatpush.bf16.msra.mxu0 %v5258
        %5390 = vmatpush.bf16.msra.mxu0 %v5257
        %5391 = vmatpush.bf16.msra.mxu0 %v5256
        %5392 = vmatpush.bf16.msra.mxu0 %v5255
        %5393 = vmatmul.bf16.gmra.mxu0 %v5097
        %v5394 = vpop.f32.mrf.mxu0
        %v5395 = vadd.f32 %v5346, %v5394
        %v5396 = vpop.f32.mrf.mxu0
        %v5397 = vadd.f32 %v5348, %v5396
        %5398 = vmatmul.bf16.gmra.mxu0 %v5100
        %v5399 = vpop.f32.mrf.mxu0
        %v5400 = vadd.f32 %v5351, %v5399
        %v5401 = vpop.f32.mrf.mxu0
        %v5402 = vadd.f32 %v5353, %v5401
        %5403 = vmatmul.bf16.gmra.mxu0 %v5103
        %v5404 = vpop.f32.mrf.mxu0
        %v5405 = vadd.f32 %v5356, %v5404
        %v5406 = vpop.f32.mrf.mxu0
        %v5407 = vadd.f32 %v5358, %v5406
        %5408 = vmatmul.bf16.gmra.mxu0 %v5106
        %v5409 = vpop.f32.mrf.mxu0
        %v5410 = vadd.f32 %v5361, %v5409
        %v5411 = vpop.f32.mrf.mxu0
        %v5412 = vadd.f32 %v5363, %v5411
        %5413 = vmatmul.bf16.gmra.mxu0 %v5109
        %v5414 = vpop.f32.mrf.mxu0
        %v5415 = vadd.f32 %v5366, %v5414
        %v5416 = vpop.f32.mrf.mxu0
        %v5417 = vadd.f32 %v5368, %v5416
        %5418 = vmatmul.bf16.gmra.mxu0 %v5112
        %v5419 = vpop.f32.mrf.mxu0
        %v5420 = vadd.f32 %v5371, %v5419
        %v5421 = vpop.f32.mrf.mxu0
        %v5422 = vadd.f32 %v5373, %v5421
        %5423 = vmatmul.bf16.gmra.mxu0 %v5115
        %v5424 = vpop.f32.mrf.mxu0
        %v5425 = vadd.f32 %v5376, %v5424
        %v5426 = vpop.f32.mrf.mxu0
        %v5427 = vadd.f32 %v5378, %v5426
        %5428 = vmatmul.bf16.gmra.mxu0 %v5118
        %v5429 = vpop.f32.mrf.mxu0
        %v5430 = vadd.f32 %v5381, %v5429
        %v5431 = vpop.f32.mrf.mxu0
        %v5432 = vadd.f32 %v5383, %v5431
        %5433 = vdwg.mxu0
        %s5434 = scalar_lea.vmem [#allocation2], 264
        %v5435 = vld [vmem:[%s5434] sm:$0xff]
        %v5436 = vld [vmem:[%s5434 + $0x8] sm:$0xf]
        %v5437 = vld [vmem:[%s5434 + $0xc] sm:$0xff]
        %v5438 = vld [vmem:[%s5434 + $0x14] sm:$0xf]
        %v5439 = vld [vmem:[%s5434 + $0x18] sm:$0xff]
        %v5440 = vld [vmem:[%s5434 + $0x20] sm:$0xf]
        %v5441 = vld [vmem:[%s5434 + $0x24] sm:$0xff]
        %v5442 = vld [vmem:[%s5434 + $0x2c] sm:$0xf]
        %v5443 = vld [vmem:[%s5434 + $0x30] sm:$0xff]
        %v5444 = vld [vmem:[%s5434 + $0x38] sm:$0xf]
        %v5445 = vld [vmem:[%s5434 + $0x3c] sm:$0xff]
        %v5446 = vld [vmem:[%s5434 + $0x44] sm:$0xf]
        %v5447 = vld [vmem:[%s5434 + $0x48] sm:$0xff]
        %v5448 = vld [vmem:[%s5434 + $0x50] sm:$0xf]
        %v5449 = vld [vmem:[%s5434 + $0x54] sm:$0xff]
        %v5450 = vld [vmem:[%s5434 + $0x5c] sm:$0xf]
        %v5451 = vld [vmem:[%s5434 + $0x78] sm:$0xff]
        %v5452 = vld [vmem:[%s5434 + $0x80] sm:$0xf]
        %v5453 = vld [vmem:[%s5434 + $0x84] sm:$0xff]
        %v5454 = vld [vmem:[%s5434 + $0x8c] sm:$0xf]
        %v5455 = vld [vmem:[%s5434 + $0x90] sm:$0xff]
        %v5456 = vld [vmem:[%s5434 + $0x98] sm:$0xf]
        %v5457 = vld [vmem:[%s5434 + $0x9c] sm:$0xff]
        %v5458 = vld [vmem:[%s5434 + $0xa4] sm:$0xf]
        %v5459 = vld [vmem:[%s5434 + $0xa8] sm:$0xff]
        %v5460 = vld [vmem:[%s5434 + $0xb0] sm:$0xf]
        %v5461 = vld [vmem:[%s5434 + $0xb4] sm:$0xff]
        %v5462 = vld [vmem:[%s5434 + $0xbc] sm:$0xf]
        %v5463 = vld [vmem:[%s5434 + $0xc0] sm:$0xff]
        %v5464 = vld [vmem:[%s5434 + $0xc8] sm:$0xf]
        %v5465 = vld [vmem:[%s5434 + $0xcc] sm:$0xff]
        %v5466 = vld [vmem:[%s5434 + $0xd4] sm:$0xf]
        %v5467 = vld [vmem:[%s1676] sm:$0xf]
        %v5468 = vld [vmem:[%s1676 + $0x4] sm:$0xf]
        %v5469 = vld [vmem:[%s1676 + $0x8] sm:$0xf]
        %v5470 = vld [vmem:[%s1676 + $0xc] sm:$0xf]
        %v5471 = vld [vmem:[%s1676 + $0x10] sm:$0xf]
        %v5472 = vld [vmem:[%s1676 + $0x14] sm:$0xf]
        %v5473 = vld [vmem:[%s1676 + $0x18] sm:$0xf]
        %v5474 = vld [vmem:[%s1676 + $0x1c] sm:$0xf]
        %v5475 = vld [vmem:[%s1676 + $0x20] sm:$0xf]
        %v5476 = vld [vmem:[%s1676 + $0x24] sm:$0xf]
        %v5477 = vld [vmem:[%s1676 + $0x28] sm:$0xf]
        %v5478 = vld [vmem:[%s1676 + $0x2c] sm:$0xf]
        %v5479 = vld [vmem:[%s1676 + $0x30] sm:$0xf]
        %v5480 = vld [vmem:[%s1676 + $0x34] sm:$0xf]
        %v5481 = vld [vmem:[%s1676 + $0x38] sm:$0xf]
        %v5482 = vld [vmem:[%s1676 + $0x3c] sm:$0xf]
        %v5483 = vld [vmem:[%s1676 + $0x40] sm:$0xf]
        %v5484 = vld [vmem:[%s1676 + $0x44] sm:$0xf]
        %v5485 = vld [vmem:[%s1676 + $0x48] sm:$0xf]
        %v5486 = vld [vmem:[%s1676 + $0x4c] sm:$0xf]
        %v5487 = vld [vmem:[%s1676 + $0x50] sm:$0xf]
        %v5488 = vld [vmem:[%s1676 + $0x54] sm:$0xf]
        %v5489 = vld [vmem:[%s1676 + $0x58] sm:$0xf]
        %v5490 = vld [vmem:[%s1676 + $0x5c] sm:$0xf]
        %v5491 = vld [vmem:[%s1676 + $0x60] sm:$0xf]
        %v5492 = vld [vmem:[%s1676 + $0x64] sm:$0xf]
        %v5493 = vld [vmem:[%s1676 + $0x68] sm:$0xf]
        %v5494 = vld [vmem:[%s1676 + $0x6c] sm:$0xf]
        %v5495 = vld [vmem:[%s1676 + $0x70] sm:$0xf]
        %v5496 = vld [vmem:[%s1676 + $0x74] sm:$0xf]
        %v5497 = vld [vmem:[%s1676 + $0x78] sm:$0xf]
        %v5498 = vld [vmem:[%s1676 + $0x7c] sm:$0xf]
        %v5499 = vld [vmem:[%s1676 + $0x80] sm:$0xf]
        %v5500 = vld [vmem:[%s1676 + $0x84] sm:$0xf]
        %v5501 = vld [vmem:[%s1676 + $0x88] sm:$0xf]
        %v5502 = vld [vmem:[%s1676 + $0x8c] sm:$0xf]
        %v5503 = vld [vmem:[%s1676 + $0x90] sm:$0xf]
        %v5504 = vld [vmem:[%s1676 + $0x94] sm:$0xf]
        %v5505 = vld [vmem:[%s1676 + $0x98] sm:$0xf]
        %v5506 = vld [vmem:[%s1676 + $0x9c] sm:$0xf]
        %v5507 = vld [vmem:[%s1676 + $0xa0] sm:$0xf]
        %v5508 = vld [vmem:[%s1676 + $0xa4] sm:$0xf]
        %v5509 = vld [vmem:[%s1676 + $0xa8] sm:$0xf]
        %v5510 = vld [vmem:[%s1676 + $0xac] sm:$0xf]
        %v5511 = vld [vmem:[%s1676 + $0xb0] sm:$0xf]
        %v5512 = vld [vmem:[%s1676 + $0xb4] sm:$0xf]
        %v5513 = vld [vmem:[%s1676 + $0xb8] sm:$0xf]
        %v5514 = vld [vmem:[%s1676 + $0xbc] sm:$0xf]
        %v5547 = vunpack.c.l.b16 %v5435
        %v5548 = vunpack.c.h.b16 %v5435
        %v5549 = vunpack.c.l.b16 %v5436
        %v5550 = vunpack.c.l.b16 %v5437
        %v5551 = vunpack.c.h.b16 %v5437
        %v5552 = vunpack.c.l.b16 %v5438
        %v5553 = vunpack.c.l.b16 %v5439
        %v5554 = vunpack.c.h.b16 %v5439
        %v5555 = vunpack.c.l.b16 %v5440
        %v5556 = vunpack.c.l.b16 %v5441
        %v5557 = vunpack.c.h.b16 %v5441
        %v5558 = vunpack.c.l.b16 %v5442
        %v5559 = vunpack.c.l.b16 %v5443
        %v5560 = vunpack.c.h.b16 %v5443
        %v5561 = vunpack.c.l.b16 %v5444
        %v5562 = vunpack.c.l.b16 %v5445
        %v5563 = vunpack.c.h.b16 %v5445
        %v5564 = vunpack.c.l.b16 %v5446
        %v5565 = vunpack.c.l.b16 %v5447
        %v5566 = vunpack.c.h.b16 %v5447
        %v5567 = vunpack.c.l.b16 %v5448
        %v5568 = vunpack.c.l.b16 %v5449
        %v5569 = vunpack.c.h.b16 %v5449
        %v5570 = vunpack.c.l.b16 %v5450
        %v5571 = vunpack.c.l.b16 %v5451
        %v5572 = vunpack.c.h.b16 %v5451
        %v5573 = vunpack.c.l.b16 %v5452
        %v5574 = vunpack.c.l.b16 %v5453
        %v5575 = vunpack.c.h.b16 %v5453
        %v5576 = vunpack.c.l.b16 %v5454
        %v5577 = vunpack.c.l.b16 %v5455
        %v5578 = vunpack.c.h.b16 %v5455
        %v5579 = vunpack.c.l.b16 %v5456
        %v5580 = vunpack.c.l.b16 %v5457
        %v5581 = vunpack.c.h.b16 %v5457
        %v5582 = vunpack.c.l.b16 %v5458
        %v5583 = vunpack.c.l.b16 %v5459
        %v5584 = vunpack.c.h.b16 %v5459
        %v5585 = vunpack.c.l.b16 %v5460
        %v5586 = vunpack.c.l.b16 %v5461
        %v5587 = vunpack.c.h.b16 %v5461
        %v5588 = vunpack.c.l.b16 %v5462
        %v5589 = vunpack.c.l.b16 %v5463
        %v5590 = vunpack.c.h.b16 %v5463
        %v5591 = vunpack.c.l.b16 %v5464
        %v5592 = vunpack.c.l.b16 %v5465
        %v5593 = vunpack.c.h.b16 %v5465
        %v5594 = vunpack.c.l.b16 %v5466
        %v5595 = vpack.c.b16 %v5550, %v5547
        %v5596 = vpack.c.b16 %v5551, %v5548
        %v5597 = vpack.c.b16 %v5552, %v5549
        %v5598 = vpack.c.b16 %v5556, %v5553
        %v5599 = vpack.c.b16 %v5557, %v5554
        %v5600 = vpack.c.b16 %v5558, %v5555
        %v5601 = vpack.c.b16 %v5562, %v5559
        %v5602 = vpack.c.b16 %v5563, %v5560
        %v5603 = vpack.c.b16 %v5564, %v5561
        %v5604 = vpack.c.b16 %v5568, %v5565
        %v5605 = vpack.c.b16 %v5569, %v5566
        %v5606 = vpack.c.b16 %v5570, %v5567
        %v5607 = vpack.c.b16 %v5574, %v5571
        %v5608 = vpack.c.b16 %v5575, %v5572
        %v5609 = vpack.c.b16 %v5576, %v5573
        %v5610 = vpack.c.b16 %v5580, %v5577
        %v5611 = vpack.c.b16 %v5581, %v5578
        %v5612 = vpack.c.b16 %v5582, %v5579
        %v5613 = vpack.c.b16 %v5586, %v5583
        %v5614 = vpack.c.b16 %v5587, %v5584
        %v5615 = vpack.c.b16 %v5588, %v5585
        %v5616 = vpack.c.b16 %v5592, %v5589
        %v5617 = vpack.c.b16 %v5593, %v5590
        %v5618 = vpack.c.b16 %v5594, %v5591
        %v5691 = vunpack.c.l.b16 %v5467
        %v5692 = vunpack.c.l.b16 %v5468
        %v5693 = vunpack.c.l.b16 %v5469
        %v5694 = vunpack.c.l.b16 %v5470
        %v5695 = vunpack.c.l.b16 %v5471
        %v5696 = vunpack.c.l.b16 %v5472
        %v5697 = vunpack.c.l.b16 %v5473
        %v5698 = vunpack.c.l.b16 %v5474
        %v5699 = vunpack.c.l.b16 %v5475
        %v5700 = vunpack.c.l.b16 %v5476
        %v5701 = vunpack.c.l.b16 %v5477
        %v5702 = vunpack.c.l.b16 %v5478
        %v5703 = vunpack.c.l.b16 %v5479
        %v5704 = vunpack.c.l.b16 %v5480
        %v5705 = vunpack.c.l.b16 %v5481
        %v5706 = vunpack.c.l.b16 %v5482
        %v5707 = vunpack.c.l.b16 %v5483
        %v5708 = vunpack.c.l.b16 %v5484
        %v5709 = vunpack.c.l.b16 %v5485
        %v5710 = vunpack.c.l.b16 %v5486
        %v5711 = vunpack.c.l.b16 %v5487
        %v5712 = vunpack.c.l.b16 %v5488
        %v5713 = vunpack.c.l.b16 %v5489
        %v5714 = vunpack.c.l.b16 %v5490
        %v5715 = vunpack.c.l.b16 %v5491
        %v5716 = vunpack.c.l.b16 %v5492
        %v5717 = vunpack.c.l.b16 %v5493
        %v5718 = vunpack.c.l.b16 %v5494
        %v5719 = vunpack.c.l.b16 %v5495
        %v5720 = vunpack.c.l.b16 %v5496
        %v5721 = vunpack.c.l.b16 %v5497
        %v5722 = vunpack.c.l.b16 %v5498
        %v5723 = vunpack.c.l.b16 %v5499
        %v5724 = vunpack.c.l.b16 %v5500
        %v5725 = vunpack.c.l.b16 %v5501
        %v5726 = vunpack.c.l.b16 %v5502
        %v5727 = vunpack.c.l.b16 %v5503
        %v5728 = vunpack.c.l.b16 %v5504
        %v5729 = vunpack.c.l.b16 %v5505
        %v5730 = vunpack.c.l.b16 %v5506
        %v5731 = vunpack.c.l.b16 %v5507
        %v5732 = vunpack.c.l.b16 %v5508
        %v5733 = vunpack.c.l.b16 %v5509
        %v5734 = vunpack.c.l.b16 %v5510
        %v5735 = vunpack.c.l.b16 %v5511
        %v5736 = vunpack.c.l.b16 %v5512
        %v5737 = vunpack.c.l.b16 %v5513
        %v5738 = vunpack.c.l.b16 %v5514
        %v5739 = vpack.c.b16 %v5692, %v5691
        %v5740 = vpack.c.b16 %v5694, %v5693
        %v5741 = vpack.c.b16 %v5696, %v5695
        %v5742 = vpack.c.b16 %v5698, %v5697
        %v5743 = vpack.c.b16 %v5700, %v5699
        %v5744 = vpack.c.b16 %v5702, %v5701
        %v5745 = vpack.c.b16 %v5704, %v5703
        %v5746 = vpack.c.b16 %v5706, %v5705
        %v5747 = vpack.c.b16 %v5708, %v5707
        %v5748 = vpack.c.b16 %v5710, %v5709
        %v5749 = vpack.c.b16 %v5712, %v5711
        %v5750 = vpack.c.b16 %v5714, %v5713
        %v5751 = vpack.c.b16 %v5716, %v5715
        %v5752 = vpack.c.b16 %v5718, %v5717
        %v5753 = vpack.c.b16 %v5720, %v5719
        %v5754 = vpack.c.b16 %v5722, %v5721
        %v5755 = vpack.c.b16 %v5724, %v5723
        %v5756 = vpack.c.b16 %v5726, %v5725
        %v5757 = vpack.c.b16 %v5728, %v5727
        %v5758 = vpack.c.b16 %v5730, %v5729
        %v5759 = vpack.c.b16 %v5732, %v5731
        %v5760 = vpack.c.b16 %v5734, %v5733
        %v5761 = vpack.c.b16 %v5736, %v5735
        %v5762 = vpack.c.b16 %v5738, %v5737
        %5787 = vmatpush.bf16.msra.mxu0 %v5746
        %5788 = vmatpush.bf16.msra.mxu0 %v5745
        %5789 = vmatpush.bf16.msra.mxu0 %v5744
        %5790 = vmatpush.bf16.msra.mxu0 %v5743
        %5791 = vmatpush.bf16.msra.mxu0 %v5742
        %5792 = vmatpush.bf16.msra.mxu0 %v5741
        %5793 = vmatpush.bf16.msra.mxu0 %v5740
        %5794 = vmatpush.bf16.msra.mxu0 %v5739
        %5795 = vmatmul.bf16.gmra.mxu0 %v5595
        %v5796 = vpop.f32.mrf.mxu0
        %v5797 = vadd.f32 0.0, %v5796
        %v5798 = vpop.f32.mrf.mxu0
        %v5799 = vadd.f32 0.0, %v5798
        %5800 = vmatmul.bf16.gmra.mxu0 %v5598
        %v5801 = vpop.f32.mrf.mxu0
        %v5802 = vadd.f32 0.0, %v5801
        %v5803 = vpop.f32.mrf.mxu0
        %v5804 = vadd.f32 0.0, %v5803
        %5805 = vmatmul.bf16.gmra.mxu0 %v5601
        %v5806 = vpop.f32.mrf.mxu0
        %v5807 = vadd.f32 0.0, %v5806
        %v5808 = vpop.f32.mrf.mxu0
        %v5809 = vadd.f32 0.0, %v5808
        %5810 = vmatmul.bf16.gmra.mxu0 %v5604
        %v5811 = vpop.f32.mrf.mxu0
        %v5812 = vadd.f32 0.0, %v5811
        %v5813 = vpop.f32.mrf.mxu0
        %v5814 = vadd.f32 0.0, %v5813
        %5815 = vmatmul.bf16.gmra.mxu0 %v5607
        %v5816 = vpop.f32.mrf.mxu0
        %v5817 = vadd.f32 0.0, %v5816
        %v5818 = vpop.f32.mrf.mxu0
        %v5819 = vadd.f32 0.0, %v5818
        %5820 = vmatmul.bf16.gmra.mxu0 %v5610
        %v5821 = vpop.f32.mrf.mxu0
        %v5822 = vadd.f32 0.0, %v5821
        %v5823 = vpop.f32.mrf.mxu0
        %v5824 = vadd.f32 0.0, %v5823
        %5825 = vmatmul.bf16.gmra.mxu0 %v5613
        %v5826 = vpop.f32.mrf.mxu0
        %v5827 = vadd.f32 0.0, %v5826
        %v5828 = vpop.f32.mrf.mxu0
        %v5829 = vadd.f32 0.0, %v5828
        %5830 = vmatmul.bf16.gmra.mxu0 %v5616
        %v5831 = vpop.f32.mrf.mxu0
        %v5832 = vadd.f32 0.0, %v5831
        %v5833 = vpop.f32.mrf.mxu0
        %v5834 = vadd.f32 0.0, %v5833
        %5835 = vdwg.mxu0
        %5836 = vmatpush.bf16.msra.mxu0 %v5754
        %5837 = vmatpush.bf16.msra.mxu0 %v5753
        %5838 = vmatpush.bf16.msra.mxu0 %v5752
        %5839 = vmatpush.bf16.msra.mxu0 %v5751
        %5840 = vmatpush.bf16.msra.mxu0 %v5750
        %5841 = vmatpush.bf16.msra.mxu0 %v5749
        %5842 = vmatpush.bf16.msra.mxu0 %v5748
        %5843 = vmatpush.bf16.msra.mxu0 %v5747
        %5844 = vmatmul.bf16.gmra.mxu0 %v5596
        %v5845 = vpop.f32.mrf.mxu0
        %v5846 = vadd.f32 %v5797, %v5845
        %v5847 = vpop.f32.mrf.mxu0
        %v5848 = vadd.f32 %v5799, %v5847
        %5849 = vmatmul.bf16.gmra.mxu0 %v5599
        %v5850 = vpop.f32.mrf.mxu0
        %v5851 = vadd.f32 %v5802, %v5850
        %v5852 = vpop.f32.mrf.mxu0
        %v5853 = vadd.f32 %v5804, %v5852
        %5854 = vmatmul.bf16.gmra.mxu0 %v5602
        %v5855 = vpop.f32.mrf.mxu0
        %v5856 = vadd.f32 %v5807, %v5855
        %v5857 = vpop.f32.mrf.mxu0
        %v5858 = vadd.f32 %v5809, %v5857
        %5859 = vmatmul.bf16.gmra.mxu0 %v5605
        %v5860 = vpop.f32.mrf.mxu0
        %v5861 = vadd.f32 %v5812, %v5860
        %v5862 = vpop.f32.mrf.mxu0
        %v5863 = vadd.f32 %v5814, %v5862
        %5864 = vmatmul.bf16.gmra.mxu0 %v5608
        %v5865 = vpop.f32.mrf.mxu0
        %v5866 = vadd.f32 %v5817, %v5865
        %v5867 = vpop.f32.mrf.mxu0
        %v5868 = vadd.f32 %v5819, %v5867
        %5869 = vmatmul.bf16.gmra.mxu0 %v5611
        %v5870 = vpop.f32.mrf.mxu0
        %v5871 = vadd.f32 %v5822, %v5870
        %v5872 = vpop.f32.mrf.mxu0
        %v5873 = vadd.f32 %v5824, %v5872
        %5874 = vmatmul.bf16.gmra.mxu0 %v5614
        %v5875 = vpop.f32.mrf.mxu0
        %v5876 = vadd.f32 %v5827, %v5875
        %v5877 = vpop.f32.mrf.mxu0
        %v5878 = vadd.f32 %v5829, %v5877
        %5879 = vmatmul.bf16.gmra.mxu0 %v5617
        %v5880 = vpop.f32.mrf.mxu0
        %v5881 = vadd.f32 %v5832, %v5880
        %v5882 = vpop.f32.mrf.mxu0
        %v5883 = vadd.f32 %v5834, %v5882
        %5884 = vdwg.mxu0
        %5885 = vmatpush.bf16.msra.mxu0 %v5762
        %5886 = vmatpush.bf16.msra.mxu0 %v5761
        %5887 = vmatpush.bf16.msra.mxu0 %v5760
        %5888 = vmatpush.bf16.msra.mxu0 %v5759
        %5889 = vmatpush.bf16.msra.mxu0 %v5758
        %5890 = vmatpush.bf16.msra.mxu0 %v5757
        %5891 = vmatpush.bf16.msra.mxu0 %v5756
        %5892 = vmatpush.bf16.msra.mxu0 %v5755
        %5893 = vmatmul.bf16.gmra.mxu0 %v5597
        %v5894 = vpop.f32.mrf.mxu0
        %v5895 = vadd.f32 %v5846, %v5894
        %v5896 = vpop.f32.mrf.mxu0
        %v5897 = vadd.f32 %v5848, %v5896
        %5898 = vmatmul.bf16.gmra.mxu0 %v5600
        %v5899 = vpop.f32.mrf.mxu0
        %v5900 = vadd.f32 %v5851, %v5899
        %v5901 = vpop.f32.mrf.mxu0
        %v5902 = vadd.f32 %v5853, %v5901
        %5903 = vmatmul.bf16.gmra.mxu0 %v5603
        %v5904 = vpop.f32.mrf.mxu0
        %v5905 = vadd.f32 %v5856, %v5904
        %v5906 = vpop.f32.mrf.mxu0
        %v5907 = vadd.f32 %v5858, %v5906
        %5908 = vmatmul.bf16.gmra.mxu0 %v5606
        %v5909 = vpop.f32.mrf.mxu0
        %v5910 = vadd.f32 %v5861, %v5909
        %v5911 = vpop.f32.mrf.mxu0
        %v5912 = vadd.f32 %v5863, %v5911
        %5913 = vmatmul.bf16.gmra.mxu0 %v5609
        %v5914 = vpop.f32.mrf.mxu0
        %v5915 = vadd.f32 %v5866, %v5914
        %v5916 = vpop.f32.mrf.mxu0
        %v5917 = vadd.f32 %v5868, %v5916
        %5918 = vmatmul.bf16.gmra.mxu0 %v5612
        %v5919 = vpop.f32.mrf.mxu0
        %v5920 = vadd.f32 %v5871, %v5919
        %v5921 = vpop.f32.mrf.mxu0
        %v5922 = vadd.f32 %v5873, %v5921
        %5923 = vmatmul.bf16.gmra.mxu0 %v5615
        %v5924 = vpop.f32.mrf.mxu0
        %v5925 = vadd.f32 %v5876, %v5924
        %v5926 = vpop.f32.mrf.mxu0
        %v5927 = vadd.f32 %v5878, %v5926
        %5928 = vmatmul.bf16.gmra.mxu0 %v5618
        %v5929 = vpop.f32.mrf.mxu0
        %v5930 = vadd.f32 %v5881, %v5929
        %v5931 = vpop.f32.mrf.mxu0
        %v5932 = vadd.f32 %v5883, %v5931
        %5933 = vdwg.mxu0
        %v5934 = vadd.f32 %v5395, %v5895
        %v5935 = vadd.f32 %v5397, %v5897
        %v5936 = vadd.f32 %v5400, %v5900
        %v5937 = vadd.f32 %v5402, %v5902
        %v5938 = vadd.f32 %v5405, %v5905
        %v5939 = vadd.f32 %v5407, %v5907
        %v5940 = vadd.f32 %v5410, %v5910
        %v5941 = vadd.f32 %v5412, %v5912
        %v5942 = vadd.f32 %v5415, %v5915
        %v5943 = vadd.f32 %v5417, %v5917
        %v5944 = vadd.f32 %v5420, %v5920
        %v5945 = vadd.f32 %v5422, %v5922
        %v5946 = vadd.f32 %v5425, %v5925
        %v5947 = vadd.f32 %v5427, %v5927
        %v5948 = vadd.f32 %v5430, %v5930
        %v5949 = vadd.f32 %v5432, %v5932
        %v5950 = vadd.f32 %v5934, %v2161
        %v5951 = vadd.f32 %v5935, %v2161
        %v5952 = vadd.f32 %v5936, %v2161
        %v5953 = vadd.f32 %v5937, %v2161
        %v5954 = vadd.f32 %v5938, %v2161
        %v5955 = vadd.f32 %v5939, %v2161
        %v5956 = vadd.f32 %v5940, %v2161
        %v5957 = vadd.f32 %v5941, %v2161
        %v5958 = vadd.f32 %v5942, %v2161
        %v5959 = vadd.f32 %v5943, %v2161
        %v5960 = vadd.f32 %v5944, %v2161
        %v5961 = vadd.f32 %v5945, %v2161
        %v5962 = vadd.f32 %v5946, %v2161
        %v5963 = vadd.f32 %v5947, %v2161
        %v5964 = vadd.f32 %v5948, %v2161
        %v5965 = vadd.f32 %v5949, %v2161
        %v5966 = vmax.f32 %v5950, 0.0
        %v5967 = vmax.f32 %v5951, 0.0
        %v5968 = vmax.f32 %v5952, 0.0
        %v5969 = vmax.f32 %v5953, 0.0
        %v5970 = vmax.f32 %v5954, 0.0
        %v5971 = vmax.f32 %v5955, 0.0
        %v5972 = vmax.f32 %v5956, 0.0
        %v5973 = vmax.f32 %v5957, 0.0
        %v5974 = vmax.f32 %v5958, 0.0
        %v5975 = vmax.f32 %v5959, 0.0
        %v5976 = vmax.f32 %v5960, 0.0
        %v5977 = vmax.f32 %v5961, 0.0
        %v5978 = vmax.f32 %v5962, 0.0
        %v5979 = vmax.f32 %v5963, 0.0
        %v5980 = vmax.f32 %v5964, 0.0
        %v5981 = vmax.f32 %v5965, 0.0
        %v5982 = vpack.c.bf16 %v5966, %v5966
        %v5983 = vpack.c.bf16 %v5967, %v5967
        %v5984 = vpack.c.bf16 %v5968, %v5968
        %v5985 = vpack.c.bf16 %v5969, %v5969
        %v5986 = vpack.c.bf16 %v5970, %v5970
        %v5987 = vpack.c.bf16 %v5971, %v5971
        %v5988 = vpack.c.bf16 %v5972, %v5972
        %v5989 = vpack.c.bf16 %v5973, %v5973
        %v5990 = vpack.c.bf16 %v5974, %v5974
        %v5991 = vpack.c.bf16 %v5975, %v5975
        %v5992 = vpack.c.bf16 %v5976, %v5976
        %v5993 = vpack.c.bf16 %v5977, %v5977
        %v5994 = vpack.c.bf16 %v5978, %v5978
        %v5995 = vpack.c.bf16 %v5979, %v5979
        %v5996 = vpack.c.bf16 %v5980, %v5980
        %v5997 = vpack.c.bf16 %v5981, %v5981
        %v6014 = vunpack.c.l.b16 %v5982
        %v6015 = vunpack.c.l.b16 %v5983
        %v6016 = vunpack.c.l.b16 %v5984
        %v6017 = vunpack.c.l.b16 %v5985
        %v6018 = vunpack.c.l.b16 %v5986
        %v6019 = vunpack.c.l.b16 %v5987
        %v6020 = vunpack.c.l.b16 %v5988
        %v6021 = vunpack.c.l.b16 %v5989
        %v6022 = vunpack.c.l.b16 %v5990
        %v6023 = vunpack.c.l.b16 %v5991
        %v6024 = vunpack.c.l.b16 %v5992
        %v6025 = vunpack.c.l.b16 %v5993
        %v6026 = vunpack.c.l.b16 %v5994
        %v6027 = vunpack.c.l.b16 %v5995
        %v6028 = vunpack.c.l.b16 %v5996
        %v6029 = vunpack.c.l.b16 %v5997
        %v6030 = vpack.c.b16 %v6014, %v6014
        %v6031 = vpack.c.b16 %v6015, %v6015
        %v6032 = vpack.c.b16 %v6016, %v6016
        %v6033 = vpack.c.b16 %v6017, %v6017
        %v6034 = vpack.c.b16 %v6018, %v6018
        %v6035 = vpack.c.b16 %v6019, %v6019
        %v6036 = vpack.c.b16 %v6020, %v6020
        %v6037 = vpack.c.b16 %v6021, %v6021
        %v6038 = vpack.c.b16 %v6022, %v6022
        %v6039 = vpack.c.b16 %v6023, %v6023
        %v6040 = vpack.c.b16 %v6024, %v6024
        %v6041 = vpack.c.b16 %v6025, %v6025
        %v6042 = vpack.c.b16 %v6026, %v6026
        %v6043 = vpack.c.b16 %v6027, %v6027
        %v6044 = vpack.c.b16 %v6028, %v6028
        %v6045 = vpack.c.b16 %v6029, %v6029
        %v6047 = vshrl.u32 %v6030, 16
        %v6049 = vrot.slane %v6047, 7
        %v6050 = vshll.u32 %v6030, 16
        %v6052 = vor.u32 %v6049, %v6050
        %v6054 = vshrl.u32 %v6031, 16
        %v6056 = vrot.slane %v6054, 7
        %v6057 = vshll.u32 %v6031, 16
        %v6059 = vor.u32 %v6056, %v6057
        %v6061 = vshrl.u32 %v6032, 16
        %v6063 = vrot.slane %v6061, 7
        %v6064 = vshll.u32 %v6032, 16
        %v6066 = vor.u32 %v6063, %v6064
        %v6068 = vshrl.u32 %v6033, 16
        %v6070 = vrot.slane %v6068, 7
        %v6071 = vshll.u32 %v6033, 16
        %v6073 = vor.u32 %v6070, %v6071
        %v6075 = vshrl.u32 %v6034, 16
        %v6077 = vrot.slane %v6075, 7
        %v6078 = vshll.u32 %v6034, 16
        %v6080 = vor.u32 %v6077, %v6078
        %v6082 = vshrl.u32 %v6035, 16
        %v6084 = vrot.slane %v6082, 7
        %v6085 = vshll.u32 %v6035, 16
        %v6087 = vor.u32 %v6084, %v6085
        %v6089 = vshrl.u32 %v6036, 16
        %v6091 = vrot.slane %v6089, 7
        %v6092 = vshll.u32 %v6036, 16
        %v6094 = vor.u32 %v6091, %v6092
        %v6096 = vshrl.u32 %v6037, 16
        %v6098 = vrot.slane %v6096, 7
        %v6099 = vshll.u32 %v6037, 16
        %v6101 = vor.u32 %v6098, %v6099
        %v6103 = vshrl.u32 %v6038, 16
        %v6105 = vrot.slane %v6103, 7
        %v6106 = vshll.u32 %v6038, 16
        %v6108 = vor.u32 %v6105, %v6106
        %v6110 = vshrl.u32 %v6039, 16
        %v6112 = vrot.slane %v6110, 7
        %v6113 = vshll.u32 %v6039, 16
        %v6115 = vor.u32 %v6112, %v6113
        %v6117 = vshrl.u32 %v6040, 16
        %v6119 = vrot.slane %v6117, 7
        %v6120 = vshll.u32 %v6040, 16
        %v6122 = vor.u32 %v6119, %v6120
        %v6124 = vshrl.u32 %v6041, 16
        %v6126 = vrot.slane %v6124, 7
        %v6127 = vshll.u32 %v6041, 16
        %v6129 = vor.u32 %v6126, %v6127
        %v6131 = vshrl.u32 %v6042, 16
        %v6133 = vrot.slane %v6131, 7
        %v6134 = vshll.u32 %v6042, 16
        %v6136 = vor.u32 %v6133, %v6134
        %v6138 = vshrl.u32 %v6043, 16
        %v6140 = vrot.slane %v6138, 7
        %v6141 = vshll.u32 %v6043, 16
        %v6143 = vor.u32 %v6140, %v6141
        %v6145 = vshrl.u32 %v6044, 16
        %v6147 = vrot.slane %v6145, 7
        %v6148 = vshll.u32 %v6044, 16
        %v6150 = vor.u32 %v6147, %v6148
        %v6152 = vshrl.u32 %v6045, 16
        %v6154 = vrot.slane %v6152, 7
        %v6155 = vshll.u32 %v6045, 16
        %v6157 = vor.u32 %v6154, %v6155
        %v6174 = vsel %vm511, 0, %v6052
        %v6175 = vsel %vm511, 0, %v6059
        %v6176 = vsel %vm511, 0, %v6066
        %v6177 = vsel %vm511, 0, %v6073
        %v6178 = vsel %vm511, 0, %v6080
        %v6179 = vsel %vm511, 0, %v6087
        %v6180 = vsel %vm511, 0, %v6094
        %v6181 = vsel %vm511, 0, %v6101
        %v6182 = vsel %vm511, 0, %v6108
        %v6183 = vsel %vm511, 0, %v6115
        %v6184 = vsel %vm511, 0, %v6122
        %v6185 = vsel %vm511, 0, %v6129
        %v6186 = vsel %vm511, 0, %v6136
        %v6187 = vsel %vm511, 0, %v6143
        %v6188 = vsel %vm511, 0, %v6150
        %v6189 = vsel %vm511, 0, %v6157
        %v6190 = vrot.slane %v6050, 1
        %v6191 = vor.u32 %v6047, %v6190
        %v6192 = vrot.slane %v6057, 1
        %v6193 = vor.u32 %v6054, %v6192
        %v6194 = vrot.slane %v6064, 1
        %v6195 = vor.u32 %v6061, %v6194
        %v6196 = vrot.slane %v6071, 1
        %v6197 = vor.u32 %v6068, %v6196
        %v6198 = vrot.slane %v6078, 1
        %v6199 = vor.u32 %v6075, %v6198
        %v6200 = vrot.slane %v6085, 1
        %v6201 = vor.u32 %v6082, %v6200
        %v6202 = vrot.slane %v6092, 1
        %v6203 = vor.u32 %v6089, %v6202
        %v6204 = vrot.slane %v6099, 1
        %v6205 = vor.u32 %v6096, %v6204
        %v6206 = vrot.slane %v6106, 1
        %v6207 = vor.u32 %v6103, %v6206
        %v6208 = vrot.slane %v6113, 1
        %v6209 = vor.u32 %v6110, %v6208
        %v6210 = vrot.slane %v6120, 1
        %v6211 = vor.u32 %v6117, %v6210
        %v6212 = vrot.slane %v6127, 1
        %v6213 = vor.u32 %v6124, %v6212
        %v6214 = vrot.slane %v6134, 1
        %v6215 = vor.u32 %v6131, %v6214
        %v6216 = vrot.slane %v6141, 1
        %v6217 = vor.u32 %v6138, %v6216
        %v6218 = vrot.slane %v6148, 1
        %v6219 = vor.u32 %v6145, %v6218
        %v6220 = vrot.slane %v6155, 1
        %v6221 = vor.u32 %v6152, %v6220
        %v6238 = vsel %vm578, %v6191, 0
        %v6239 = vsel %vm578, %v6193, 0
        %v6240 = vsel %vm578, %v6195, 0
        %v6241 = vsel %vm578, %v6197, 0
        %v6242 = vsel %vm578, %v6199, 0
        %v6243 = vsel %vm578, %v6201, 0
        %v6244 = vsel %vm578, %v6203, 0
        %v6245 = vsel %vm578, %v6205, 0
        %v6246 = vsel %vm578, %v6207, 0
        %v6247 = vsel %vm578, %v6209, 0
        %v6248 = vsel %vm578, %v6211, 0
        %v6249 = vsel %vm578, %v6213, 0
        %v6250 = vsel %vm578, %v6215, 0
        %v6251 = vsel %vm578, %v6217, 0
        %v6252 = vsel %vm578, %v6219, 0
        %v6253 = vsel %vm578, %v6221, 0
        %6254 = vst [vmem:[%s4386] sm:$0xf] %v6174
        %6255 = vst [vmem:[%s4386 + $0xc] sm:$0xf] %v6175
        %6256 = vst [vmem:[%s4386 + $0x18] sm:$0xf] %v6176
        %6257 = vst [vmem:[%s4386 + $0x24] sm:$0xf] %v6177
        %6258 = vst [vmem:[%s4386 + $0x30] sm:$0xf] %v6178
        %6259 = vst [vmem:[%s4386 + $0x3c] sm:$0xf] %v6179
        %6260 = vst [vmem:[%s4386 + $0x48] sm:$0xf] %v6180
        %6261 = vst [vmem:[%s4386 + $0x54] sm:$0xf] %v6181
        %6262 = vst [vmem:[%s4386 + $0x78] sm:$0xf] %v6182
        %6263 = vst [vmem:[%s4386 + $0x84] sm:$0xf] %v6183
        %6264 = vst [vmem:[%s4386 + $0x90] sm:$0xf] %v6184
        %6265 = vst [vmem:[%s4386 + $0x9c] sm:$0xf] %v6185
        %6266 = vst [vmem:[%s4386 + $0xa8] sm:$0xf] %v6186
        %6267 = vst [vmem:[%s4386 + $0xb4] sm:$0xf] %v6187
        %6268 = vst [vmem:[%s4386 + $0xc0] sm:$0xf] %v6188
        %6269 = vst [vmem:[%s4386 + $0xcc] sm:$0xf] %v6189
        %6270 = vst [vmem:[%s4386 + $0x4] sm:$0xf] %v5982
        %6271 = vst [vmem:[%s4386 + $0x10] sm:$0xf] %v5983
        %6272 = vst [vmem:[%s4386 + $0x1c] sm:$0xf] %v5984
        %6273 = vst [vmem:[%s4386 + $0x28] sm:$0xf] %v5985
        %6274 = vst [vmem:[%s4386 + $0x34] sm:$0xf] %v5986
        %6275 = vst [vmem:[%s4386 + $0x40] sm:$0xf] %v5987
        %6276 = vst [vmem:[%s4386 + $0x4c] sm:$0xf] %v5988
        %6277 = vst [vmem:[%s4386 + $0x58] sm:$0xf] %v5989
        %6278 = vst [vmem:[%s4386 + $0x7c] sm:$0xf] %v5990
        %6279 = vst [vmem:[%s4386 + $0x88] sm:$0xf] %v5991
        %6280 = vst [vmem:[%s4386 + $0x94] sm:$0xf] %v5992
        %6281 = vst [vmem:[%s4386 + $0xa0] sm:$0xf] %v5993
        %6282 = vst [vmem:[%s4386 + $0xac] sm:$0xf] %v5994
        %6283 = vst [vmem:[%s4386 + $0xb8] sm:$0xf] %v5995
        %6284 = vst [vmem:[%s4386 + $0xc4] sm:$0xf] %v5996
        %6285 = vst [vmem:[%s4386 + $0xd0] sm:$0xf] %v5997
        %6286 = vst [vmem:[%s4386 + $0x8] sm:$0xf] %v6238
        %6287 = vst [vmem:[%s4386 + $0x14] sm:$0xf] %v6239
        %6288 = vst [vmem:[%s4386 + $0x20] sm:$0xf] %v6240
        %6289 = vst [vmem:[%s4386 + $0x2c] sm:$0xf] %v6241
        %6290 = vst [vmem:[%s4386 + $0x38] sm:$0xf] %v6242
        %6291 = vst [vmem:[%s4386 + $0x44] sm:$0xf] %v6243
        %6292 = vst [vmem:[%s4386 + $0x50] sm:$0xf] %v6244
        %6293 = vst [vmem:[%s4386 + $0x5c] sm:$0xf] %v6245
        %6294 = vst [vmem:[%s4386 + $0x80] sm:$0xf] %v6246
        %6295 = vst [vmem:[%s4386 + $0x8c] sm:$0xf] %v6247
        %6296 = vst [vmem:[%s4386 + $0x98] sm:$0xf] %v6248
        %6297 = vst [vmem:[%s4386 + $0xa4] sm:$0xf] %v6249
        %6298 = vst [vmem:[%s4386 + $0xb0] sm:$0xf] %v6250
        %6299 = vst [vmem:[%s4386 + $0xbc] sm:$0xf] %v6251
        %6300 = vst [vmem:[%s4386 + $0xc8] sm:$0xf] %v6252
        %6301 = vst [vmem:[%s4386 + $0xd4] sm:$0xf] %v6253
        %v6302 = vld [vmem:[%s4097] sm:$0xff]
        %v6303 = vld [vmem:[%s4097 + $0x8] sm:$0xff]
        %v6304 = vld [vmem:[%s4097 + $0x10] sm:$0xff]
        %v6305 = vld [vmem:[%s4097 + $0x18] sm:$0xff]
        %v6306 = vld [vmem:[%s4097 + $0x20] sm:$0xff]
        %v6307 = vld [vmem:[%s4097 + $0x28] sm:$0xff]
        %v6308 = vld [vmem:[%s4097 + $0x30] sm:$0xff]
        %v6309 = vld [vmem:[%s4097 + $0x38] sm:$0xff]
        %v6310 = vld [vmem:[%s4097 + $0x40] sm:$0xff]
        %v6311 = vld [vmem:[%s4097 + $0x48] sm:$0xff]
        %v6312 = vld [vmem:[%s4097 + $0x50] sm:$0xff]
        %v6313 = vld [vmem:[%s4097 + $0x58] sm:$0xff]
        %v6314 = vld [vmem:[%s4097 + $0x60] sm:$0xff]
        %v6315 = vld [vmem:[%s4097 + $0x68] sm:$0xff]
        %v6316 = vld [vmem:[%s4097 + $0x70] sm:$0xff]
        %v6317 = vld [vmem:[%s4097 + $0x78] sm:$0xff]
        %v6318 = vld [vmem:[%s4435] sm:$0xff]
        %v6319 = vld [vmem:[%s4435 + $0x8] sm:$0xf]
        %v6320 = vld [vmem:[%s4435 + $0xc] sm:$0xff]
        %v6321 = vld [vmem:[%s4435 + $0x14] sm:$0xf]
        %v6322 = vld [vmem:[%s4435 + $0x18] sm:$0xff]
        %v6323 = vld [vmem:[%s4435 + $0x20] sm:$0xf]
        %v6324 = vld [vmem:[%s4435 + $0x24] sm:$0xff]
        %v6325 = vld [vmem:[%s4435 + $0x2c] sm:$0xf]
        %v6326 = vld [vmem:[%s4435 + $0x30] sm:$0xff]
        %v6327 = vld [vmem:[%s4435 + $0x38] sm:$0xf]
        %v6328 = vld [vmem:[%s4435 + $0x3c] sm:$0xff]
        %v6329 = vld [vmem:[%s4435 + $0x44] sm:$0xf]
        %v6330 = vld [vmem:[%s4435 + $0x48] sm:$0xff]
        %v6331 = vld [vmem:[%s4435 + $0x50] sm:$0xf]
        %v6332 = vld [vmem:[%s4435 + $0x54] sm:$0xff]
        %v6333 = vld [vmem:[%s4435 + $0x5c] sm:$0xf]
        %v6334 = vld [vmem:[%s4435 + $0x78] sm:$0xff]
        %v6335 = vld [vmem:[%s4435 + $0x80] sm:$0xf]
        %v6336 = vld [vmem:[%s4435 + $0x84] sm:$0xff]
        %v6337 = vld [vmem:[%s4435 + $0x8c] sm:$0xf]
        %v6338 = vld [vmem:[%s4435 + $0x90] sm:$0xff]
        %v6339 = vld [vmem:[%s4435 + $0x98] sm:$0xf]
        %v6340 = vld [vmem:[%s4435 + $0x9c] sm:$0xff]
        %v6341 = vld [vmem:[%s4435 + $0xa4] sm:$0xf]
        %v6342 = vld [vmem:[%s4435 + $0xa8] sm:$0xff]
        %v6343 = vld [vmem:[%s4435 + $0xb0] sm:$0xf]
        %v6344 = vld [vmem:[%s4435 + $0xb4] sm:$0xff]
        %v6345 = vld [vmem:[%s4435 + $0xbc] sm:$0xf]
        %v6346 = vld [vmem:[%s4435 + $0xc0] sm:$0xff]
        %v6347 = vld [vmem:[%s4435 + $0xc8] sm:$0xf]
        %v6348 = vld [vmem:[%s4435 + $0xcc] sm:$0xff]
        %v6349 = vld [vmem:[%s4435 + $0xd4] sm:$0xf]
        %v6350 = vld [vmem:[#allocation8] sm:$0xf]
        %v6351 = vld [vmem:[#allocation8 + $0x4] sm:$0xf]
        %v6352 = vld [vmem:[#allocation8 + $0x8] sm:$0xf]
        %v6353 = vld [vmem:[#allocation8 + $0xc] sm:$0xf]
        %v6354 = vld [vmem:[#allocation8 + $0x10] sm:$0xf]
        %v6355 = vld [vmem:[#allocation8 + $0x14] sm:$0xf]
        %v6356 = vld [vmem:[#allocation8 + $0x18] sm:$0xf]
        %v6357 = vld [vmem:[#allocation8 + $0x1c] sm:$0xf]
        %v6358 = vld [vmem:[#allocation8 + $0x20] sm:$0xf]
        %v6359 = vld [vmem:[#allocation8 + $0x24] sm:$0xf]
        %v6360 = vld [vmem:[#allocation8 + $0x28] sm:$0xf]
        %v6361 = vld [vmem:[#allocation8 + $0x2c] sm:$0xf]
        %v6362 = vld [vmem:[#allocation8 + $0x30] sm:$0xf]
        %v6363 = vld [vmem:[#allocation8 + $0x34] sm:$0xf]
        %v6364 = vld [vmem:[#allocation8 + $0x38] sm:$0xf]
        %v6365 = vld [vmem:[#allocation8 + $0x3c] sm:$0xf]
        %v6366 = vld [vmem:[#allocation8 + $0x40] sm:$0xf]
        %v6367 = vld [vmem:[#allocation8 + $0x44] sm:$0xf]
        %v6368 = vld [vmem:[#allocation8 + $0x48] sm:$0xf]
        %v6369 = vld [vmem:[#allocation8 + $0x4c] sm:$0xf]
        %v6370 = vld [vmem:[#allocation8 + $0x50] sm:$0xf]
        %v6371 = vld [vmem:[#allocation8 + $0x54] sm:$0xf]
        %v6372 = vld [vmem:[#allocation8 + $0x58] sm:$0xf]
        %v6373 = vld [vmem:[#allocation8 + $0x5c] sm:$0xf]
        %v6374 = vld [vmem:[#allocation8 + $0x60] sm:$0xf]
        %v6375 = vld [vmem:[#allocation8 + $0x64] sm:$0xf]
        %v6376 = vld [vmem:[#allocation8 + $0x68] sm:$0xf]
        %v6377 = vld [vmem:[#allocation8 + $0x6c] sm:$0xf]
        %v6378 = vld [vmem:[#allocation8 + $0x70] sm:$0xf]
        %v6379 = vld [vmem:[#allocation8 + $0x74] sm:$0xf]
        %v6380 = vld [vmem:[#allocation8 + $0x78] sm:$0xf]
        %v6381 = vld [vmem:[#allocation8 + $0x7c] sm:$0xf]
        %v6382 = vld [vmem:[#allocation8 + $0x80] sm:$0xf]
        %v6383 = vld [vmem:[#allocation8 + $0x84] sm:$0xf]
        %v6384 = vld [vmem:[#allocation8 + $0x88] sm:$0xf]
        %v6385 = vld [vmem:[#allocation8 + $0x8c] sm:$0xf]
        %v6386 = vld [vmem:[#allocation8 + $0x90] sm:$0xf]
        %v6387 = vld [vmem:[#allocation8 + $0x94] sm:$0xf]
        %v6388 = vld [vmem:[#allocation8 + $0x98] sm:$0xf]
        %v6389 = vld [vmem:[#allocation8 + $0x9c] sm:$0xf]
        %v6390 = vld [vmem:[#allocation8 + $0xa0] sm:$0xf]
        %v6391 = vld [vmem:[#allocation8 + $0xa4] sm:$0xf]
        %v6392 = vld [vmem:[#allocation8 + $0xa8] sm:$0xf]
        %v6393 = vld [vmem:[#allocation8 + $0xac] sm:$0xf]
        %v6394 = vld [vmem:[#allocation8 + $0xb0] sm:$0xf]
        %v6395 = vld [vmem:[#allocation8 + $0xb4] sm:$0xf]
        %v6396 = vld [vmem:[#allocation8 + $0xb8] sm:$0xf]
        %v6397 = vld [vmem:[#allocation8 + $0xbc] sm:$0xf]
        %v6398 = vld [vmem:[%s4386] sm:$0xff]
        %v6399 = vld [vmem:[%s4386 + $0x8] sm:$0xf]
        %v6400 = vld [vmem:[%s4386 + $0xc] sm:$0xff]
        %v6401 = vld [vmem:[%s4386 + $0x14] sm:$0xf]
        %v6402 = vld [vmem:[%s4386 + $0x18] sm:$0xff]
        %v6403 = vld [vmem:[%s4386 + $0x20] sm:$0xf]
        %v6404 = vld [vmem:[%s4386 + $0x24] sm:$0xff]
        %v6405 = vld [vmem:[%s4386 + $0x2c] sm:$0xf]
        %v6406 = vld [vmem:[%s4386 + $0x30] sm:$0xff]
        %v6407 = vld [vmem:[%s4386 + $0x38] sm:$0xf]
        %v6408 = vld [vmem:[%s4386 + $0x3c] sm:$0xff]
        %v6409 = vld [vmem:[%s4386 + $0x44] sm:$0xf]
        %v6410 = vld [vmem:[%s4386 + $0x48] sm:$0xff]
        %v6411 = vld [vmem:[%s4386 + $0x50] sm:$0xf]
        %v6412 = vld [vmem:[%s4386 + $0x54] sm:$0xff]
        %v6413 = vld [vmem:[%s4386 + $0x5c] sm:$0xf]
        %v6414 = vld [vmem:[%s4386 + $0x78] sm:$0xff]
        %v6415 = vld [vmem:[%s4386 + $0x80] sm:$0xf]
        %v6416 = vld [vmem:[%s4386 + $0x84] sm:$0xff]
        %v6417 = vld [vmem:[%s4386 + $0x8c] sm:$0xf]
        %v6418 = vld [vmem:[%s4386 + $0x90] sm:$0xff]
        %v6419 = vld [vmem:[%s4386 + $0x98] sm:$0xf]
        %v6420 = vld [vmem:[%s4386 + $0x9c] sm:$0xff]
        %v6421 = vld [vmem:[%s4386 + $0xa4] sm:$0xf]
        %v6422 = vld [vmem:[%s4386 + $0xa8] sm:$0xff]
        %v6423 = vld [vmem:[%s4386 + $0xb0] sm:$0xf]
        %v6424 = vld [vmem:[%s4386 + $0xb4] sm:$0xff]
        %v6425 = vld [vmem:[%s4386 + $0xbc] sm:$0xf]
        %v6426 = vld [vmem:[%s4386 + $0xc0] sm:$0xff]
        %v6427 = vld [vmem:[%s4386 + $0xc8] sm:$0xf]
        %v6428 = vld [vmem:[%s4386 + $0xcc] sm:$0xff]
        %v6429 = vld [vmem:[%s4386 + $0xd4] sm:$0xf]
        %v6430 = vld [vmem:[%s2643] sm:$0xf]
        %v6431 = vld [vmem:[%s2643 + $0x4] sm:$0xf]
        %v6432 = vld [vmem:[%s2643 + $0x8] sm:$0xf]
        %v6433 = vld [vmem:[%s2643 + $0xc] sm:$0xf]
        %v6434 = vld [vmem:[%s2643 + $0x10] sm:$0xf]
        %v6435 = vld [vmem:[%s2643 + $0x14] sm:$0xf]
        %v6436 = vld [vmem:[%s2643 + $0x18] sm:$0xf]
        %v6437 = vld [vmem:[%s2643 + $0x1c] sm:$0xf]
        %v6438 = vld [vmem:[%s2643 + $0x20] sm:$0xf]
        %v6439 = vld [vmem:[%s2643 + $0x24] sm:$0xf]
        %v6440 = vld [vmem:[%s2643 + $0x28] sm:$0xf]
        %v6441 = vld [vmem:[%s2643 + $0x2c] sm:$0xf]
        %v6442 = vld [vmem:[%s2643 + $0x30] sm:$0xf]
        %v6443 = vld [vmem:[%s2643 + $0x34] sm:$0xf]
        %v6444 = vld [vmem:[%s2643 + $0x38] sm:$0xf]
        %v6445 = vld [vmem:[%s2643 + $0x3c] sm:$0xf]
        %v6446 = vld [vmem:[%s2643 + $0x40] sm:$0xf]
        %v6447 = vld [vmem:[%s2643 + $0x44] sm:$0xf]
        %v6448 = vld [vmem:[%s2643 + $0x48] sm:$0xf]
        %v6449 = vld [vmem:[%s2643 + $0x4c] sm:$0xf]
        %v6450 = vld [vmem:[%s2643 + $0x50] sm:$0xf]
        %v6451 = vld [vmem:[%s2643 + $0x54] sm:$0xf]
        %v6452 = vld [vmem:[%s2643 + $0x58] sm:$0xf]
        %v6453 = vld [vmem:[%s2643 + $0x5c] sm:$0xf]
        %v6454 = vld [vmem:[%s2643 + $0x60] sm:$0xf]
        %v6455 = vld [vmem:[%s2643 + $0x64] sm:$0xf]
        %v6456 = vld [vmem:[%s2643 + $0x68] sm:$0xf]
        %v6457 = vld [vmem:[%s2643 + $0x6c] sm:$0xf]
        %v6458 = vld [vmem:[%s2643 + $0x70] sm:$0xf]
        %v6459 = vld [vmem:[%s2643 + $0x74] sm:$0xf]
        %v6460 = vld [vmem:[%s2643 + $0x78] sm:$0xf]
        %v6461 = vld [vmem:[%s2643 + $0x7c] sm:$0xf]
        %v6462 = vld [vmem:[%s2643 + $0x80] sm:$0xf]
        %v6463 = vld [vmem:[%s2643 + $0x84] sm:$0xf]
        %v6464 = vld [vmem:[%s2643 + $0x88] sm:$0xf]
        %v6465 = vld [vmem:[%s2643 + $0x8c] sm:$0xf]
        %v6466 = vld [vmem:[%s2643 + $0x90] sm:$0xf]
        %v6467 = vld [vmem:[%s2643 + $0x94] sm:$0xf]
        %v6468 = vld [vmem:[%s2643 + $0x98] sm:$0xf]
        %v6469 = vld [vmem:[%s2643 + $0x9c] sm:$0xf]
        %v6470 = vld [vmem:[%s2643 + $0xa0] sm:$0xf]
        %v6471 = vld [vmem:[%s2643 + $0xa4] sm:$0xf]
        %v6472 = vld [vmem:[%s2643 + $0xa8] sm:$0xf]
        %v6473 = vld [vmem:[%s2643 + $0xac] sm:$0xf]
        %v6474 = vld [vmem:[%s2643 + $0xb0] sm:$0xf]
        %v6475 = vld [vmem:[%s2643 + $0xb4] sm:$0xf]
        %v6476 = vld [vmem:[%s2643 + $0xb8] sm:$0xf]
        %v6477 = vld [vmem:[%s2643 + $0xbc] sm:$0xf]
        %v6510 = vunpack.c.l.b16 %v6398
        %v6511 = vunpack.c.h.b16 %v6398
        %v6512 = vunpack.c.l.b16 %v6399
        %v6513 = vunpack.c.l.b16 %v6400
        %v6514 = vunpack.c.h.b16 %v6400
        %v6515 = vunpack.c.l.b16 %v6401
        %v6516 = vunpack.c.l.b16 %v6402
        %v6517 = vunpack.c.h.b16 %v6402
        %v6518 = vunpack.c.l.b16 %v6403
        %v6519 = vunpack.c.l.b16 %v6404
        %v6520 = vunpack.c.h.b16 %v6404
        %v6521 = vunpack.c.l.b16 %v6405
        %v6522 = vunpack.c.l.b16 %v6406
        %v6523 = vunpack.c.h.b16 %v6406
        %v6524 = vunpack.c.l.b16 %v6407
        %v6525 = vunpack.c.l.b16 %v6408
        %v6526 = vunpack.c.h.b16 %v6408
        %v6527 = vunpack.c.l.b16 %v6409
        %v6528 = vunpack.c.l.b16 %v6410
        %v6529 = vunpack.c.h.b16 %v6410
        %v6530 = vunpack.c.l.b16 %v6411
        %v6531 = vunpack.c.l.b16 %v6412
        %v6532 = vunpack.c.h.b16 %v6412
        %v6533 = vunpack.c.l.b16 %v6413
        %v6534 = vunpack.c.l.b16 %v6414
        %v6535 = vunpack.c.h.b16 %v6414
        %v6536 = vunpack.c.l.b16 %v6415
        %v6537 = vunpack.c.l.b16 %v6416
        %v6538 = vunpack.c.h.b16 %v6416
        %v6539 = vunpack.c.l.b16 %v6417
        %v6540 = vunpack.c.l.b16 %v6418
        %v6541 = vunpack.c.h.b16 %v6418
        %v6542 = vunpack.c.l.b16 %v6419
        %v6543 = vunpack.c.l.b16 %v6420
        %v6544 = vunpack.c.h.b16 %v6420
        %v6545 = vunpack.c.l.b16 %v6421
        %v6546 = vunpack.c.l.b16 %v6422
        %v6547 = vunpack.c.h.b16 %v6422
        %v6548 = vunpack.c.l.b16 %v6423
        %v6549 = vunpack.c.l.b16 %v6424
        %v6550 = vunpack.c.h.b16 %v6424
        %v6551 = vunpack.c.l.b16 %v6425
        %v6552 = vunpack.c.l.b16 %v6426
        %v6553 = vunpack.c.h.b16 %v6426
        %v6554 = vunpack.c.l.b16 %v6427
        %v6555 = vunpack.c.l.b16 %v6428
        %v6556 = vunpack.c.h.b16 %v6428
        %v6557 = vunpack.c.l.b16 %v6429
        %v6558 = vpack.c.b16 %v6513, %v6510
        %v6559 = vpack.c.b16 %v6514, %v6511
        %v6560 = vpack.c.b16 %v6515, %v6512
        %v6561 = vpack.c.b16 %v6519, %v6516
        %v6562 = vpack.c.b16 %v6520, %v6517
        %v6563 = vpack.c.b16 %v6521, %v6518
        %v6564 = vpack.c.b16 %v6525, %v6522
        %v6565 = vpack.c.b16 %v6526, %v6523
        %v6566 = vpack.c.b16 %v6527, %v6524
        %v6567 = vpack.c.b16 %v6531, %v6528
        %v6568 = vpack.c.b16 %v6532, %v6529
        %v6569 = vpack.c.b16 %v6533, %v6530
        %v6570 = vpack.c.b16 %v6537, %v6534
        %v6571 = vpack.c.b16 %v6538, %v6535
        %v6572 = vpack.c.b16 %v6539, %v6536
        %v6573 = vpack.c.b16 %v6543, %v6540
        %v6574 = vpack.c.b16 %v6544, %v6541
        %v6575 = vpack.c.b16 %v6545, %v6542
        %v6576 = vpack.c.b16 %v6549, %v6546
        %v6577 = vpack.c.b16 %v6550, %v6547
        %v6578 = vpack.c.b16 %v6551, %v6548
        %v6579 = vpack.c.b16 %v6555, %v6552
        %v6580 = vpack.c.b16 %v6556, %v6553
        %v6581 = vpack.c.b16 %v6557, %v6554
        %v6654 = vunpack.c.l.b16 %v6430
        %v6655 = vunpack.c.l.b16 %v6431
        %v6656 = vunpack.c.l.b16 %v6432
        %v6657 = vunpack.c.l.b16 %v6433
        %v6658 = vunpack.c.l.b16 %v6434
        %v6659 = vunpack.c.l.b16 %v6435
        %v6660 = vunpack.c.l.b16 %v6436
        %v6661 = vunpack.c.l.b16 %v6437
        %v6662 = vunpack.c.l.b16 %v6438
        %v6663 = vunpack.c.l.b16 %v6439
        %v6664 = vunpack.c.l.b16 %v6440
        %v6665 = vunpack.c.l.b16 %v6441
        %v6666 = vunpack.c.l.b16 %v6442
        %v6667 = vunpack.c.l.b16 %v6443
        %v6668 = vunpack.c.l.b16 %v6444
        %v6669 = vunpack.c.l.b16 %v6445
        %v6670 = vunpack.c.l.b16 %v6446
        %v6671 = vunpack.c.l.b16 %v6447
        %v6672 = vunpack.c.l.b16 %v6448
        %v6673 = vunpack.c.l.b16 %v6449
        %v6674 = vunpack.c.l.b16 %v6450
        %v6675 = vunpack.c.l.b16 %v6451
        %v6676 = vunpack.c.l.b16 %v6452
        %v6677 = vunpack.c.l.b16 %v6453
        %v6678 = vunpack.c.l.b16 %v6454
        %v6679 = vunpack.c.l.b16 %v6455
        %v6680 = vunpack.c.l.b16 %v6456
        %v6681 = vunpack.c.l.b16 %v6457
        %v6682 = vunpack.c.l.b16 %v6458
        %v6683 = vunpack.c.l.b16 %v6459
        %v6684 = vunpack.c.l.b16 %v6460
        %v6685 = vunpack.c.l.b16 %v6461
        %v6686 = vunpack.c.l.b16 %v6462
        %v6687 = vunpack.c.l.b16 %v6463
        %v6688 = vunpack.c.l.b16 %v6464
        %v6689 = vunpack.c.l.b16 %v6465
        %v6690 = vunpack.c.l.b16 %v6466
        %v6691 = vunpack.c.l.b16 %v6467
        %v6692 = vunpack.c.l.b16 %v6468
        %v6693 = vunpack.c.l.b16 %v6469
        %v6694 = vunpack.c.l.b16 %v6470
        %v6695 = vunpack.c.l.b16 %v6471
        %v6696 = vunpack.c.l.b16 %v6472
        %v6697 = vunpack.c.l.b16 %v6473
        %v6698 = vunpack.c.l.b16 %v6474
        %v6699 = vunpack.c.l.b16 %v6475
        %v6700 = vunpack.c.l.b16 %v6476
        %v6701 = vunpack.c.l.b16 %v6477
        %v6702 = vpack.c.b16 %v6655, %v6654
        %v6703 = vpack.c.b16 %v6657, %v6656
        %v6704 = vpack.c.b16 %v6659, %v6658
        %v6705 = vpack.c.b16 %v6661, %v6660
        %v6706 = vpack.c.b16 %v6663, %v6662
        %v6707 = vpack.c.b16 %v6665, %v6664
        %v6708 = vpack.c.b16 %v6667, %v6666
        %v6709 = vpack.c.b16 %v6669, %v6668
        %v6710 = vpack.c.b16 %v6671, %v6670
        %v6711 = vpack.c.b16 %v6673, %v6672
        %v6712 = vpack.c.b16 %v6675, %v6674
        %v6713 = vpack.c.b16 %v6677, %v6676
        %v6714 = vpack.c.b16 %v6679, %v6678
        %v6715 = vpack.c.b16 %v6681, %v6680
        %v6716 = vpack.c.b16 %v6683, %v6682
        %v6717 = vpack.c.b16 %v6685, %v6684
        %v6718 = vpack.c.b16 %v6687, %v6686
        %v6719 = vpack.c.b16 %v6689, %v6688
        %v6720 = vpack.c.b16 %v6691, %v6690
        %v6721 = vpack.c.b16 %v6693, %v6692
        %v6722 = vpack.c.b16 %v6695, %v6694
        %v6723 = vpack.c.b16 %v6697, %v6696
        %v6724 = vpack.c.b16 %v6699, %v6698
        %v6725 = vpack.c.b16 %v6701, %v6700
        %6750 = vmatpush.bf16.msra.mxu0 %v6709
        %6751 = vmatpush.bf16.msra.mxu0 %v6708
        %6752 = vmatpush.bf16.msra.mxu0 %v6707
        %6753 = vmatpush.bf16.msra.mxu0 %v6706
        %6754 = vmatpush.bf16.msra.mxu0 %v6705
        %6755 = vmatpush.bf16.msra.mxu0 %v6704
        %6756 = vmatpush.bf16.msra.mxu0 %v6703
        %6757 = vmatpush.bf16.msra.mxu0 %v6702
        %6758 = vmatmul.bf16.gmra.mxu0 %v6558
        %v6759 = vpop.f32.mrf.mxu0
        %v6760 = vadd.f32 0.0, %v6759
        %v6761 = vpop.f32.mrf.mxu0
        %v6762 = vadd.f32 0.0, %v6761
        %6763 = vmatmul.bf16.gmra.mxu0 %v6561
        %v6764 = vpop.f32.mrf.mxu0
        %v6765 = vadd.f32 0.0, %v6764
        %v6766 = vpop.f32.mrf.mxu0
        %v6767 = vadd.f32 0.0, %v6766
        %6768 = vmatmul.bf16.gmra.mxu0 %v6564
        %v6769 = vpop.f32.mrf.mxu0
        %v6770 = vadd.f32 0.0, %v6769
        %v6771 = vpop.f32.mrf.mxu0
        %v6772 = vadd.f32 0.0, %v6771
        %6773 = vmatmul.bf16.gmra.mxu0 %v6567
        %v6774 = vpop.f32.mrf.mxu0
        %v6775 = vadd.f32 0.0, %v6774
        %v6776 = vpop.f32.mrf.mxu0
        %v6777 = vadd.f32 0.0, %v6776
        %6778 = vmatmul.bf16.gmra.mxu0 %v6570
        %v6779 = vpop.f32.mrf.mxu0
        %v6780 = vadd.f32 0.0, %v6779
        %v6781 = vpop.f32.mrf.mxu0
        %v6782 = vadd.f32 0.0, %v6781
        %6783 = vmatmul.bf16.gmra.mxu0 %v6573
        %v6784 = vpop.f32.mrf.mxu0
        %v6785 = vadd.f32 0.0, %v6784
        %v6786 = vpop.f32.mrf.mxu0
        %v6787 = vadd.f32 0.0, %v6786
        %6788 = vmatmul.bf16.gmra.mxu0 %v6576
        %v6789 = vpop.f32.mrf.mxu0
        %v6790 = vadd.f32 0.0, %v6789
        %v6791 = vpop.f32.mrf.mxu0
        %v6792 = vadd.f32 0.0, %v6791
        %6793 = vmatmul.bf16.gmra.mxu0 %v6579
        %v6794 = vpop.f32.mrf.mxu0
        %v6795 = vadd.f32 0.0, %v6794
        %v6796 = vpop.f32.mrf.mxu0
        %v6797 = vadd.f32 0.0, %v6796
        %6798 = vdwg.mxu0
        %6799 = vmatpush.bf16.msra.mxu0 %v6717
        %6800 = vmatpush.bf16.msra.mxu0 %v6716
        %6801 = vmatpush.bf16.msra.mxu0 %v6715
        %6802 = vmatpush.bf16.msra.mxu0 %v6714
        %6803 = vmatpush.bf16.msra.mxu0 %v6713
        %6804 = vmatpush.bf16.msra.mxu0 %v6712
        %6805 = vmatpush.bf16.msra.mxu0 %v6711
        %6806 = vmatpush.bf16.msra.mxu0 %v6710
        %6807 = vmatmul.bf16.gmra.mxu0 %v6559
        %v6808 = vpop.f32.mrf.mxu0
        %v6809 = vadd.f32 %v6760, %v6808
        %v6810 = vpop.f32.mrf.mxu0
        %v6811 = vadd.f32 %v6762, %v6810
        %6812 = vmatmul.bf16.gmra.mxu0 %v6562
        %v6813 = vpop.f32.mrf.mxu0
        %v6814 = vadd.f32 %v6765, %v6813
        %v6815 = vpop.f32.mrf.mxu0
        %v6816 = vadd.f32 %v6767, %v6815
        %6817 = vmatmul.bf16.gmra.mxu0 %v6565
        %v6818 = vpop.f32.mrf.mxu0
        %v6819 = vadd.f32 %v6770, %v6818
        %v6820 = vpop.f32.mrf.mxu0
        %v6821 = vadd.f32 %v6772, %v6820
        %6822 = vmatmul.bf16.gmra.mxu0 %v6568
        %v6823 = vpop.f32.mrf.mxu0
        %v6824 = vadd.f32 %v6775, %v6823
        %v6825 = vpop.f32.mrf.mxu0
        %v6826 = vadd.f32 %v6777, %v6825
        %6827 = vmatmul.bf16.gmra.mxu0 %v6571
        %v6828 = vpop.f32.mrf.mxu0
        %v6829 = vadd.f32 %v6780, %v6828
        %v6830 = vpop.f32.mrf.mxu0
        %v6831 = vadd.f32 %v6782, %v6830
        %6832 = vmatmul.bf16.gmra.mxu0 %v6574
        %v6833 = vpop.f32.mrf.mxu0
        %v6834 = vadd.f32 %v6785, %v6833
        %v6835 = vpop.f32.mrf.mxu0
        %v6836 = vadd.f32 %v6787, %v6835
        %6837 = vmatmul.bf16.gmra.mxu0 %v6577
        %v6838 = vpop.f32.mrf.mxu0
        %v6839 = vadd.f32 %v6790, %v6838
        %v6840 = vpop.f32.mrf.mxu0
        %v6841 = vadd.f32 %v6792, %v6840
        %6842 = vmatmul.bf16.gmra.mxu0 %v6580
        %v6843 = vpop.f32.mrf.mxu0
        %v6844 = vadd.f32 %v6795, %v6843
        %v6845 = vpop.f32.mrf.mxu0
        %v6846 = vadd.f32 %v6797, %v6845
        %6847 = vdwg.mxu0
        %6848 = vmatpush.bf16.msra.mxu0 %v6725
        %6849 = vmatpush.bf16.msra.mxu0 %v6724
        %6850 = vmatpush.bf16.msra.mxu0 %v6723
        %6851 = vmatpush.bf16.msra.mxu0 %v6722
        %6852 = vmatpush.bf16.msra.mxu0 %v6721
        %6853 = vmatpush.bf16.msra.mxu0 %v6720
        %6854 = vmatpush.bf16.msra.mxu0 %v6719
        %6855 = vmatpush.bf16.msra.mxu0 %v6718
        %6856 = vmatmul.bf16.gmra.mxu0 %v6560
        %v6857 = vpop.f32.mrf.mxu0
        %v6858 = vadd.f32 %v6809, %v6857
        %v6859 = vpop.f32.mrf.mxu0
        %v6860 = vadd.f32 %v6811, %v6859
        %6861 = vmatmul.bf16.gmra.mxu0 %v6563
        %v6862 = vpop.f32.mrf.mxu0
        %v6863 = vadd.f32 %v6814, %v6862
        %v6864 = vpop.f32.mrf.mxu0
        %v6865 = vadd.f32 %v6816, %v6864
        %6866 = vmatmul.bf16.gmra.mxu0 %v6566
        %v6867 = vpop.f32.mrf.mxu0
        %v6868 = vadd.f32 %v6819, %v6867
        %v6869 = vpop.f32.mrf.mxu0
        %v6870 = vadd.f32 %v6821, %v6869
        %6871 = vmatmul.bf16.gmra.mxu0 %v6569
        %v6872 = vpop.f32.mrf.mxu0
        %v6873 = vadd.f32 %v6824, %v6872
        %v6874 = vpop.f32.mrf.mxu0
        %v6875 = vadd.f32 %v6826, %v6874
        %6876 = vmatmul.bf16.gmra.mxu0 %v6572
        %v6877 = vpop.f32.mrf.mxu0
        %v6878 = vadd.f32 %v6829, %v6877
        %v6879 = vpop.f32.mrf.mxu0
        %v6880 = vadd.f32 %v6831, %v6879
        %6881 = vmatmul.bf16.gmra.mxu0 %v6575
        %v6882 = vpop.f32.mrf.mxu0
        %v6883 = vadd.f32 %v6834, %v6882
        %v6884 = vpop.f32.mrf.mxu0
        %v6885 = vadd.f32 %v6836, %v6884
        %6886 = vmatmul.bf16.gmra.mxu0 %v6578
        %v6887 = vpop.f32.mrf.mxu0
        %v6888 = vadd.f32 %v6839, %v6887
        %v6889 = vpop.f32.mrf.mxu0
        %v6890 = vadd.f32 %v6841, %v6889
        %6891 = vmatmul.bf16.gmra.mxu0 %v6581
        %v6892 = vpop.f32.mrf.mxu0
        %v6893 = vadd.f32 %v6844, %v6892
        %v6894 = vpop.f32.mrf.mxu0
        %v6895 = vadd.f32 %v6846, %v6894
        %6896 = vdwg.mxu0
        %v6929 = vunpack.c.l.b16 %v6318
        %v6930 = vunpack.c.h.b16 %v6318
        %v6931 = vunpack.c.l.b16 %v6319
        %v6932 = vunpack.c.l.b16 %v6320
        %v6933 = vunpack.c.h.b16 %v6320
        %v6934 = vunpack.c.l.b16 %v6321
        %v6935 = vunpack.c.l.b16 %v6322
        %v6936 = vunpack.c.h.b16 %v6322
        %v6937 = vunpack.c.l.b16 %v6323
        %v6938 = vunpack.c.l.b16 %v6324
        %v6939 = vunpack.c.h.b16 %v6324
        %v6940 = vunpack.c.l.b16 %v6325
        %v6941 = vunpack.c.l.b16 %v6326
        %v6942 = vunpack.c.h.b16 %v6326
        %v6943 = vunpack.c.l.b16 %v6327
        %v6944 = vunpack.c.l.b16 %v6328
        %v6945 = vunpack.c.h.b16 %v6328
        %v6946 = vunpack.c.l.b16 %v6329
        %v6947 = vunpack.c.l.b16 %v6330
        %v6948 = vunpack.c.h.b16 %v6330
        %v6949 = vunpack.c.l.b16 %v6331
        %v6950 = vunpack.c.l.b16 %v6332
        %v6951 = vunpack.c.h.b16 %v6332
        %v6952 = vunpack.c.l.b16 %v6333
        %v6953 = vunpack.c.l.b16 %v6334
        %v6954 = vunpack.c.h.b16 %v6334
        %v6955 = vunpack.c.l.b16 %v6335
        %v6956 = vunpack.c.l.b16 %v6336
        %v6957 = vunpack.c.h.b16 %v6336
        %v6958 = vunpack.c.l.b16 %v6337
        %v6959 = vunpack.c.l.b16 %v6338
        %v6960 = vunpack.c.h.b16 %v6338
        %v6961 = vunpack.c.l.b16 %v6339
        %v6962 = vunpack.c.l.b16 %v6340
        %v6963 = vunpack.c.h.b16 %v6340
        %v6964 = vunpack.c.l.b16 %v6341
        %v6965 = vunpack.c.l.b16 %v6342
        %v6966 = vunpack.c.h.b16 %v6342
        %v6967 = vunpack.c.l.b16 %v6343
        %v6968 = vunpack.c.l.b16 %v6344
        %v6969 = vunpack.c.h.b16 %v6344
        %v6970 = vunpack.c.l.b16 %v6345
        %v6971 = vunpack.c.l.b16 %v6346
        %v6972 = vunpack.c.h.b16 %v6346
        %v6973 = vunpack.c.l.b16 %v6347
        %v6974 = vunpack.c.l.b16 %v6348
        %v6975 = vunpack.c.h.b16 %v6348
        %v6976 = vunpack.c.l.b16 %v6349
        %v6977 = vpack.c.b16 %v6932, %v6929
        %v6978 = vpack.c.b16 %v6933, %v6930
        %v6979 = vpack.c.b16 %v6934, %v6931
        %v6980 = vpack.c.b16 %v6938, %v6935
        %v6981 = vpack.c.b16 %v6939, %v6936
        %v6982 = vpack.c.b16 %v6940, %v6937
        %v6983 = vpack.c.b16 %v6944, %v6941
        %v6984 = vpack.c.b16 %v6945, %v6942
        %v6985 = vpack.c.b16 %v6946, %v6943
        %v6986 = vpack.c.b16 %v6950, %v6947
        %v6987 = vpack.c.b16 %v6951, %v6948
        %v6988 = vpack.c.b16 %v6952, %v6949
        %v6989 = vpack.c.b16 %v6956, %v6953
        %v6990 = vpack.c.b16 %v6957, %v6954
        %v6991 = vpack.c.b16 %v6958, %v6955
        %v6992 = vpack.c.b16 %v6962, %v6959
        %v6993 = vpack.c.b16 %v6963, %v6960
        %v6994 = vpack.c.b16 %v6964, %v6961
        %v6995 = vpack.c.b16 %v6968, %v6965
        %v6996 = vpack.c.b16 %v6969, %v6966
        %v6997 = vpack.c.b16 %v6970, %v6967
        %v6998 = vpack.c.b16 %v6974, %v6971
        %v6999 = vpack.c.b16 %v6975, %v6972
        %v7000 = vpack.c.b16 %v6976, %v6973
        %v7073 = vunpack.c.l.b16 %v6350
        %v7074 = vunpack.c.l.b16 %v6351
        %v7075 = vunpack.c.l.b16 %v6352
        %v7076 = vunpack.c.l.b16 %v6353
        %v7077 = vunpack.c.l.b16 %v6354
        %v7078 = vunpack.c.l.b16 %v6355
        %v7079 = vunpack.c.l.b16 %v6356
        %v7080 = vunpack.c.l.b16 %v6357
        %v7081 = vunpack.c.l.b16 %v6358
        %v7082 = vunpack.c.l.b16 %v6359
        %v7083 = vunpack.c.l.b16 %v6360
        %v7084 = vunpack.c.l.b16 %v6361
        %v7085 = vunpack.c.l.b16 %v6362
        %v7086 = vunpack.c.l.b16 %v6363
        %v7087 = vunpack.c.l.b16 %v6364
        %v7088 = vunpack.c.l.b16 %v6365
        %v7089 = vunpack.c.l.b16 %v6366
        %v7090 = vunpack.c.l.b16 %v6367
        %v7091 = vunpack.c.l.b16 %v6368
        %v7092 = vunpack.c.l.b16 %v6369
        %v7093 = vunpack.c.l.b16 %v6370
        %v7094 = vunpack.c.l.b16 %v6371
        %v7095 = vunpack.c.l.b16 %v6372
        %v7096 = vunpack.c.l.b16 %v6373
        %v7097 = vunpack.c.l.b16 %v6374
        %v7098 = vunpack.c.l.b16 %v6375
        %v7099 = vunpack.c.l.b16 %v6376
        %v7100 = vunpack.c.l.b16 %v6377
        %v7101 = vunpack.c.l.b16 %v6378
        %v7102 = vunpack.c.l.b16 %v6379
        %v7103 = vunpack.c.l.b16 %v6380
        %v7104 = vunpack.c.l.b16 %v6381
        %v7105 = vunpack.c.l.b16 %v6382
        %v7106 = vunpack.c.l.b16 %v6383
        %v7107 = vunpack.c.l.b16 %v6384
        %v7108 = vunpack.c.l.b16 %v6385
        %v7109 = vunpack.c.l.b16 %v6386
        %v7110 = vunpack.c.l.b16 %v6387
        %v7111 = vunpack.c.l.b16 %v6388
        %v7112 = vunpack.c.l.b16 %v6389
        %v7113 = vunpack.c.l.b16 %v6390
        %v7114 = vunpack.c.l.b16 %v6391
        %v7115 = vunpack.c.l.b16 %v6392
        %v7116 = vunpack.c.l.b16 %v6393
        %v7117 = vunpack.c.l.b16 %v6394
        %v7118 = vunpack.c.l.b16 %v6395
        %v7119 = vunpack.c.l.b16 %v6396
        %v7120 = vunpack.c.l.b16 %v6397
        %v7121 = vpack.c.b16 %v7074, %v7073
        %v7122 = vpack.c.b16 %v7076, %v7075
        %v7123 = vpack.c.b16 %v7078, %v7077
        %v7124 = vpack.c.b16 %v7080, %v7079
        %v7125 = vpack.c.b16 %v7082, %v7081
        %v7126 = vpack.c.b16 %v7084, %v7083
        %v7127 = vpack.c.b16 %v7086, %v7085
        %v7128 = vpack.c.b16 %v7088, %v7087
        %v7129 = vpack.c.b16 %v7090, %v7089
        %v7130 = vpack.c.b16 %v7092, %v7091
        %v7131 = vpack.c.b16 %v7094, %v7093
        %v7132 = vpack.c.b16 %v7096, %v7095
        %v7133 = vpack.c.b16 %v7098, %v7097
        %v7134 = vpack.c.b16 %v7100, %v7099
        %v7135 = vpack.c.b16 %v7102, %v7101
        %v7136 = vpack.c.b16 %v7104, %v7103
        %v7137 = vpack.c.b16 %v7106, %v7105
        %v7138 = vpack.c.b16 %v7108, %v7107
        %v7139 = vpack.c.b16 %v7110, %v7109
        %v7140 = vpack.c.b16 %v7112, %v7111
        %v7141 = vpack.c.b16 %v7114, %v7113
        %v7142 = vpack.c.b16 %v7116, %v7115
        %v7143 = vpack.c.b16 %v7118, %v7117
        %v7144 = vpack.c.b16 %v7120, %v7119
        %7169 = vmatpush.bf16.msra.mxu0 %v7128
        %7170 = vmatpush.bf16.msra.mxu0 %v7127
        %7171 = vmatpush.bf16.msra.mxu0 %v7126
        %7172 = vmatpush.bf16.msra.mxu0 %v7125
        %7173 = vmatpush.bf16.msra.mxu0 %v7124
        %7174 = vmatpush.bf16.msra.mxu0 %v7123
        %7175 = vmatpush.bf16.msra.mxu0 %v7122
        %7176 = vmatpush.bf16.msra.mxu0 %v7121
        %7177 = vmatmul.bf16.gmra.mxu0 %v6977
        %v7178 = vpop.f32.mrf.mxu0
        %v7179 = vadd.f32 %v6858, %v7178
        %v7180 = vpop.f32.mrf.mxu0
        %v7181 = vadd.f32 %v6860, %v7180
        %7182 = vmatmul.bf16.gmra.mxu0 %v6980
        %v7183 = vpop.f32.mrf.mxu0
        %v7184 = vadd.f32 %v6863, %v7183
        %v7185 = vpop.f32.mrf.mxu0
        %v7186 = vadd.f32 %v6865, %v7185
        %7187 = vmatmul.bf16.gmra.mxu0 %v6983
        %v7188 = vpop.f32.mrf.mxu0
        %v7189 = vadd.f32 %v6868, %v7188
        %v7190 = vpop.f32.mrf.mxu0
        %v7191 = vadd.f32 %v6870, %v7190
        %7192 = vmatmul.bf16.gmra.mxu0 %v6986
        %v7193 = vpop.f32.mrf.mxu0
        %v7194 = vadd.f32 %v6873, %v7193
        %v7195 = vpop.f32.mrf.mxu0
        %v7196 = vadd.f32 %v6875, %v7195
        %7197 = vmatmul.bf16.gmra.mxu0 %v6989
        %v7198 = vpop.f32.mrf.mxu0
        %v7199 = vadd.f32 %v6878, %v7198
        %v7200 = vpop.f32.mrf.mxu0
        %v7201 = vadd.f32 %v6880, %v7200
        %7202 = vmatmul.bf16.gmra.mxu0 %v6992
        %v7203 = vpop.f32.mrf.mxu0
        %v7204 = vadd.f32 %v6883, %v7203
        %v7205 = vpop.f32.mrf.mxu0
        %v7206 = vadd.f32 %v6885, %v7205
        %7207 = vmatmul.bf16.gmra.mxu0 %v6995
        %v7208 = vpop.f32.mrf.mxu0
        %v7209 = vadd.f32 %v6888, %v7208
        %v7210 = vpop.f32.mrf.mxu0
        %v7211 = vadd.f32 %v6890, %v7210
        %7212 = vmatmul.bf16.gmra.mxu0 %v6998
        %v7213 = vpop.f32.mrf.mxu0
        %v7214 = vadd.f32 %v6893, %v7213
        %v7215 = vpop.f32.mrf.mxu0
        %v7216 = vadd.f32 %v6895, %v7215
        %7217 = vdwg.mxu0
        %7218 = vmatpush.bf16.msra.mxu0 %v7136
        %7219 = vmatpush.bf16.msra.mxu0 %v7135
        %7220 = vmatpush.bf16.msra.mxu0 %v7134
        %7221 = vmatpush.bf16.msra.mxu0 %v7133
        %7222 = vmatpush.bf16.msra.mxu0 %v7132
        %7223 = vmatpush.bf16.msra.mxu0 %v7131
        %7224 = vmatpush.bf16.msra.mxu0 %v7130
        %7225 = vmatpush.bf16.msra.mxu0 %v7129
        %7226 = vmatmul.bf16.gmra.mxu0 %v6978
        %v7227 = vpop.f32.mrf.mxu0
        %v7228 = vadd.f32 %v7179, %v7227
        %v7229 = vpop.f32.mrf.mxu0
        %v7230 = vadd.f32 %v7181, %v7229
        %7231 = vmatmul.bf16.gmra.mxu0 %v6981
        %v7232 = vpop.f32.mrf.mxu0
        %v7233 = vadd.f32 %v7184, %v7232
        %v7234 = vpop.f32.mrf.mxu0
        %v7235 = vadd.f32 %v7186, %v7234
        %7236 = vmatmul.bf16.gmra.mxu0 %v6984
        %v7237 = vpop.f32.mrf.mxu0
        %v7238 = vadd.f32 %v7189, %v7237
        %v7239 = vpop.f32.mrf.mxu0
        %v7240 = vadd.f32 %v7191, %v7239
        %7241 = vmatmul.bf16.gmra.mxu0 %v6987
        %v7242 = vpop.f32.mrf.mxu0
        %v7243 = vadd.f32 %v7194, %v7242
        %v7244 = vpop.f32.mrf.mxu0
        %v7245 = vadd.f32 %v7196, %v7244
        %7246 = vmatmul.bf16.gmra.mxu0 %v6990
        %v7247 = vpop.f32.mrf.mxu0
        %v7248 = vadd.f32 %v7199, %v7247
        %v7249 = vpop.f32.mrf.mxu0
        %v7250 = vadd.f32 %v7201, %v7249
        %7251 = vmatmul.bf16.gmra.mxu0 %v6993
        %v7252 = vpop.f32.mrf.mxu0
        %v7253 = vadd.f32 %v7204, %v7252
        %v7254 = vpop.f32.mrf.mxu0
        %v7255 = vadd.f32 %v7206, %v7254
        %7256 = vmatmul.bf16.gmra.mxu0 %v6996
        %v7257 = vpop.f32.mrf.mxu0
        %v7258 = vadd.f32 %v7209, %v7257
        %v7259 = vpop.f32.mrf.mxu0
        %v7260 = vadd.f32 %v7211, %v7259
        %7261 = vmatmul.bf16.gmra.mxu0 %v6999
        %v7262 = vpop.f32.mrf.mxu0
        %v7263 = vadd.f32 %v7214, %v7262
        %v7264 = vpop.f32.mrf.mxu0
        %v7265 = vadd.f32 %v7216, %v7264
        %7266 = vdwg.mxu0
        %7267 = vmatpush.bf16.msra.mxu0 %v7144
        %7268 = vmatpush.bf16.msra.mxu0 %v7143
        %7269 = vmatpush.bf16.msra.mxu0 %v7142
        %7270 = vmatpush.bf16.msra.mxu0 %v7141
        %7271 = vmatpush.bf16.msra.mxu0 %v7140
        %7272 = vmatpush.bf16.msra.mxu0 %v7139
        %7273 = vmatpush.bf16.msra.mxu0 %v7138
        %7274 = vmatpush.bf16.msra.mxu0 %v7137
        %7275 = vmatmul.bf16.gmra.mxu0 %v6979
        %v7276 = vpop.f32.mrf.mxu0
        %v7277 = vadd.f32 %v7228, %v7276
        %v7278 = vpop.f32.mrf.mxu0
        %v7279 = vadd.f32 %v7230, %v7278
        %7280 = vmatmul.bf16.gmra.mxu0 %v6982
        %v7281 = vpop.f32.mrf.mxu0
        %v7282 = vadd.f32 %v7233, %v7281
        %v7283 = vpop.f32.mrf.mxu0
        %v7284 = vadd.f32 %v7235, %v7283
        %7285 = vmatmul.bf16.gmra.mxu0 %v6985
        %v7286 = vpop.f32.mrf.mxu0
        %v7287 = vadd.f32 %v7238, %v7286
        %v7288 = vpop.f32.mrf.mxu0
        %v7289 = vadd.f32 %v7240, %v7288
        %7290 = vmatmul.bf16.gmra.mxu0 %v6988
        %v7291 = vpop.f32.mrf.mxu0
        %v7292 = vadd.f32 %v7243, %v7291
        %v7293 = vpop.f32.mrf.mxu0
        %v7294 = vadd.f32 %v7245, %v7293
        %7295 = vmatmul.bf16.gmra.mxu0 %v6991
        %v7296 = vpop.f32.mrf.mxu0
        %v7297 = vadd.f32 %v7248, %v7296
        %v7298 = vpop.f32.mrf.mxu0
        %v7299 = vadd.f32 %v7250, %v7298
        %7300 = vmatmul.bf16.gmra.mxu0 %v6994
        %v7301 = vpop.f32.mrf.mxu0
        %v7302 = vadd.f32 %v7253, %v7301
        %v7303 = vpop.f32.mrf.mxu0
        %v7304 = vadd.f32 %v7255, %v7303
        %7305 = vmatmul.bf16.gmra.mxu0 %v6997
        %v7306 = vpop.f32.mrf.mxu0
        %v7307 = vadd.f32 %v7258, %v7306
        %v7308 = vpop.f32.mrf.mxu0
        %v7309 = vadd.f32 %v7260, %v7308
        %7310 = vmatmul.bf16.gmra.mxu0 %v7000
        %v7311 = vpop.f32.mrf.mxu0
        %v7312 = vadd.f32 %v7263, %v7311
        %v7313 = vpop.f32.mrf.mxu0
        %v7314 = vadd.f32 %v7265, %v7313
        %7315 = vdwg.mxu0
        %v7316 = vld [vmem:[%s5434] sm:$0xff]
        %v7317 = vld [vmem:[%s5434 + $0x8] sm:$0xf]
        %v7318 = vld [vmem:[%s5434 + $0xc] sm:$0xff]
        %v7319 = vld [vmem:[%s5434 + $0x14] sm:$0xf]
        %v7320 = vld [vmem:[%s5434 + $0x18] sm:$0xff]
        %v7321 = vld [vmem:[%s5434 + $0x20] sm:$0xf]
        %v7322 = vld [vmem:[%s5434 + $0x24] sm:$0xff]
        %v7323 = vld [vmem:[%s5434 + $0x2c] sm:$0xf]
        %v7324 = vld [vmem:[%s5434 + $0x30] sm:$0xff]
        %v7325 = vld [vmem:[%s5434 + $0x38] sm:$0xf]
        %v7326 = vld [vmem:[%s5434 + $0x3c] sm:$0xff]
        %v7327 = vld [vmem:[%s5434 + $0x44] sm:$0xf]
        %v7328 = vld [vmem:[%s5434 + $0x48] sm:$0xff]
        %v7329 = vld [vmem:[%s5434 + $0x50] sm:$0xf]
        %v7330 = vld [vmem:[%s5434 + $0x54] sm:$0xff]
        %v7331 = vld [vmem:[%s5434 + $0x5c] sm:$0xf]
        %v7332 = vld [vmem:[%s5434 + $0x78] sm:$0xff]
        %v7333 = vld [vmem:[%s5434 + $0x80] sm:$0xf]
        %v7334 = vld [vmem:[%s5434 + $0x84] sm:$0xff]
        %v7335 = vld [vmem:[%s5434 + $0x8c] sm:$0xf]
        %v7336 = vld [vmem:[%s5434 + $0x90] sm:$0xff]
        %v7337 = vld [vmem:[%s5434 + $0x98] sm:$0xf]
        %v7338 = vld [vmem:[%s5434 + $0x9c] sm:$0xff]
        %v7339 = vld [vmem:[%s5434 + $0xa4] sm:$0xf]
        %v7340 = vld [vmem:[%s5434 + $0xa8] sm:$0xff]
        %v7341 = vld [vmem:[%s5434 + $0xb0] sm:$0xf]
        %v7342 = vld [vmem:[%s5434 + $0xb4] sm:$0xff]
        %v7343 = vld [vmem:[%s5434 + $0xbc] sm:$0xf]
        %v7344 = vld [vmem:[%s5434 + $0xc0] sm:$0xff]
        %v7345 = vld [vmem:[%s5434 + $0xc8] sm:$0xf]
        %v7346 = vld [vmem:[%s5434 + $0xcc] sm:$0xff]
        %v7347 = vld [vmem:[%s5434 + $0xd4] sm:$0xf]
        %v7348 = vld [vmem:[%s3562] sm:$0xf]
        %v7349 = vld [vmem:[%s3562 + $0x4] sm:$0xf]
        %v7350 = vld [vmem:[%s3562 + $0x8] sm:$0xf]
        %v7351 = vld [vmem:[%s3562 + $0xc] sm:$0xf]
        %v7352 = vld [vmem:[%s3562 + $0x10] sm:$0xf]
        %v7353 = vld [vmem:[%s3562 + $0x14] sm:$0xf]
        %v7354 = vld [vmem:[%s3562 + $0x18] sm:$0xf]
        %v7355 = vld [vmem:[%s3562 + $0x1c] sm:$0xf]
        %v7356 = vld [vmem:[%s3562 + $0x20] sm:$0xf]
        %v7357 = vld [vmem:[%s3562 + $0x24] sm:$0xf]
        %v7358 = vld [vmem:[%s3562 + $0x28] sm:$0xf]
        %v7359 = vld [vmem:[%s3562 + $0x2c] sm:$0xf]
        %v7360 = vld [vmem:[%s3562 + $0x30] sm:$0xf]
        %v7361 = vld [vmem:[%s3562 + $0x34] sm:$0xf]
        %v7362 = vld [vmem:[%s3562 + $0x38] sm:$0xf]
        %v7363 = vld [vmem:[%s3562 + $0x3c] sm:$0xf]
        %v7364 = vld [vmem:[%s3562 + $0x40] sm:$0xf]
        %v7365 = vld [vmem:[%s3562 + $0x44] sm:$0xf]
        %v7366 = vld [vmem:[%s3562 + $0x48] sm:$0xf]
        %v7367 = vld [vmem:[%s3562 + $0x4c] sm:$0xf]
        %v7368 = vld [vmem:[%s3562 + $0x50] sm:$0xf]
        %v7369 = vld [vmem:[%s3562 + $0x54] sm:$0xf]
        %v7370 = vld [vmem:[%s3562 + $0x58] sm:$0xf]
        %v7371 = vld [vmem:[%s3562 + $0x5c] sm:$0xf]
        %v7372 = vld [vmem:[%s3562 + $0x60] sm:$0xf]
        %v7373 = vld [vmem:[%s3562 + $0x64] sm:$0xf]
        %v7374 = vld [vmem:[%s3562 + $0x68] sm:$0xf]
        %v7375 = vld [vmem:[%s3562 + $0x6c] sm:$0xf]
        %v7376 = vld [vmem:[%s3562 + $0x70] sm:$0xf]
        %v7377 = vld [vmem:[%s3562 + $0x74] sm:$0xf]
        %v7378 = vld [vmem:[%s3562 + $0x78] sm:$0xf]
        %v7379 = vld [vmem:[%s3562 + $0x7c] sm:$0xf]
        %v7380 = vld [vmem:[%s3562 + $0x80] sm:$0xf]
        %v7381 = vld [vmem:[%s3562 + $0x84] sm:$0xf]
        %v7382 = vld [vmem:[%s3562 + $0x88] sm:$0xf]
        %v7383 = vld [vmem:[%s3562 + $0x8c] sm:$0xf]
        %v7384 = vld [vmem:[%s3562 + $0x90] sm:$0xf]
        %v7385 = vld [vmem:[%s3562 + $0x94] sm:$0xf]
        %v7386 = vld [vmem:[%s3562 + $0x98] sm:$0xf]
        %v7387 = vld [vmem:[%s3562 + $0x9c] sm:$0xf]
        %v7388 = vld [vmem:[%s3562 + $0xa0] sm:$0xf]
        %v7389 = vld [vmem:[%s3562 + $0xa4] sm:$0xf]
        %v7390 = vld [vmem:[%s3562 + $0xa8] sm:$0xf]
        %v7391 = vld [vmem:[%s3562 + $0xac] sm:$0xf]
        %v7392 = vld [vmem:[%s3562 + $0xb0] sm:$0xf]
        %v7393 = vld [vmem:[%s3562 + $0xb4] sm:$0xf]
        %v7394 = vld [vmem:[%s3562 + $0xb8] sm:$0xf]
        %v7395 = vld [vmem:[%s3562 + $0xbc] sm:$0xf]
        %v7428 = vunpack.c.l.b16 %v7316
        %v7429 = vunpack.c.h.b16 %v7316
        %v7430 = vunpack.c.l.b16 %v7317
        %v7431 = vunpack.c.l.b16 %v7318
        %v7432 = vunpack.c.h.b16 %v7318
        %v7433 = vunpack.c.l.b16 %v7319
        %v7434 = vunpack.c.l.b16 %v7320
        %v7435 = vunpack.c.h.b16 %v7320
        %v7436 = vunpack.c.l.b16 %v7321
        %v7437 = vunpack.c.l.b16 %v7322
        %v7438 = vunpack.c.h.b16 %v7322
        %v7439 = vunpack.c.l.b16 %v7323
        %v7440 = vunpack.c.l.b16 %v7324
        %v7441 = vunpack.c.h.b16 %v7324
        %v7442 = vunpack.c.l.b16 %v7325
        %v7443 = vunpack.c.l.b16 %v7326
        %v7444 = vunpack.c.h.b16 %v7326
        %v7445 = vunpack.c.l.b16 %v7327
        %v7446 = vunpack.c.l.b16 %v7328
        %v7447 = vunpack.c.h.b16 %v7328
        %v7448 = vunpack.c.l.b16 %v7329
        %v7449 = vunpack.c.l.b16 %v7330
        %v7450 = vunpack.c.h.b16 %v7330
        %v7451 = vunpack.c.l.b16 %v7331
        %v7452 = vunpack.c.l.b16 %v7332
        %v7453 = vunpack.c.h.b16 %v7332
        %v7454 = vunpack.c.l.b16 %v7333
        %v7455 = vunpack.c.l.b16 %v7334
        %v7456 = vunpack.c.h.b16 %v7334
        %v7457 = vunpack.c.l.b16 %v7335
        %v7458 = vunpack.c.l.b16 %v7336
        %v7459 = vunpack.c.h.b16 %v7336
        %v7460 = vunpack.c.l.b16 %v7337
        %v7461 = vunpack.c.l.b16 %v7338
        %v7462 = vunpack.c.h.b16 %v7338
        %v7463 = vunpack.c.l.b16 %v7339
        %v7464 = vunpack.c.l.b16 %v7340
        %v7465 = vunpack.c.h.b16 %v7340
        %v7466 = vunpack.c.l.b16 %v7341
        %v7467 = vunpack.c.l.b16 %v7342
        %v7468 = vunpack.c.h.b16 %v7342
        %v7469 = vunpack.c.l.b16 %v7343
        %v7470 = vunpack.c.l.b16 %v7344
        %v7471 = vunpack.c.h.b16 %v7344
        %v7472 = vunpack.c.l.b16 %v7345
        %v7473 = vunpack.c.l.b16 %v7346
        %v7474 = vunpack.c.h.b16 %v7346
        %v7475 = vunpack.c.l.b16 %v7347
        %v7476 = vpack.c.b16 %v7431, %v7428
        %v7477 = vpack.c.b16 %v7432, %v7429
        %v7478 = vpack.c.b16 %v7433, %v7430
        %v7479 = vpack.c.b16 %v7437, %v7434
        %v7480 = vpack.c.b16 %v7438, %v7435
        %v7481 = vpack.c.b16 %v7439, %v7436
        %v7482 = vpack.c.b16 %v7443, %v7440
        %v7483 = vpack.c.b16 %v7444, %v7441
        %v7484 = vpack.c.b16 %v7445, %v7442
        %v7485 = vpack.c.b16 %v7449, %v7446
        %v7486 = vpack.c.b16 %v7450, %v7447
        %v7487 = vpack.c.b16 %v7451, %v7448
        %v7488 = vpack.c.b16 %v7455, %v7452
        %v7489 = vpack.c.b16 %v7456, %v7453
        %v7490 = vpack.c.b16 %v7457, %v7454
        %v7491 = vpack.c.b16 %v7461, %v7458
        %v7492 = vpack.c.b16 %v7462, %v7459
        %v7493 = vpack.c.b16 %v7463, %v7460
        %v7494 = vpack.c.b16 %v7467, %v7464
        %v7495 = vpack.c.b16 %v7468, %v7465
        %v7496 = vpack.c.b16 %v7469, %v7466
        %v7497 = vpack.c.b16 %v7473, %v7470
        %v7498 = vpack.c.b16 %v7474, %v7471
        %v7499 = vpack.c.b16 %v7475, %v7472
        %v7572 = vunpack.c.l.b16 %v7348
        %v7573 = vunpack.c.l.b16 %v7349
        %v7574 = vunpack.c.l.b16 %v7350
        %v7575 = vunpack.c.l.b16 %v7351
        %v7576 = vunpack.c.l.b16 %v7352
        %v7577 = vunpack.c.l.b16 %v7353
        %v7578 = vunpack.c.l.b16 %v7354
        %v7579 = vunpack.c.l.b16 %v7355
        %v7580 = vunpack.c.l.b16 %v7356
        %v7581 = vunpack.c.l.b16 %v7357
        %v7582 = vunpack.c.l.b16 %v7358
        %v7583 = vunpack.c.l.b16 %v7359
        %v7584 = vunpack.c.l.b16 %v7360
        %v7585 = vunpack.c.l.b16 %v7361
        %v7586 = vunpack.c.l.b16 %v7362
        %v7587 = vunpack.c.l.b16 %v7363
        %v7588 = vunpack.c.l.b16 %v7364
        %v7589 = vunpack.c.l.b16 %v7365
        %v7590 = vunpack.c.l.b16 %v7366
        %v7591 = vunpack.c.l.b16 %v7367
        %v7592 = vunpack.c.l.b16 %v7368
        %v7593 = vunpack.c.l.b16 %v7369
        %v7594 = vunpack.c.l.b16 %v7370
        %v7595 = vunpack.c.l.b16 %v7371
        %v7596 = vunpack.c.l.b16 %v7372
        %v7597 = vunpack.c.l.b16 %v7373
        %v7598 = vunpack.c.l.b16 %v7374
        %v7599 = vunpack.c.l.b16 %v7375
        %v7600 = vunpack.c.l.b16 %v7376
        %v7601 = vunpack.c.l.b16 %v7377
        %v7602 = vunpack.c.l.b16 %v7378
        %v7603 = vunpack.c.l.b16 %v7379
        %v7604 = vunpack.c.l.b16 %v7380
        %v7605 = vunpack.c.l.b16 %v7381
        %v7606 = vunpack.c.l.b16 %v7382
        %v7607 = vunpack.c.l.b16 %v7383
        %v7608 = vunpack.c.l.b16 %v7384
        %v7609 = vunpack.c.l.b16 %v7385
        %v7610 = vunpack.c.l.b16 %v7386
        %v7611 = vunpack.c.l.b16 %v7387
        %v7612 = vunpack.c.l.b16 %v7388
        %v7613 = vunpack.c.l.b16 %v7389
        %v7614 = vunpack.c.l.b16 %v7390
        %v7615 = vunpack.c.l.b16 %v7391
        %v7616 = vunpack.c.l.b16 %v7392
        %v7617 = vunpack.c.l.b16 %v7393
        %v7618 = vunpack.c.l.b16 %v7394
        %v7619 = vunpack.c.l.b16 %v7395
        %v7620 = vpack.c.b16 %v7573, %v7572
        %v7621 = vpack.c.b16 %v7575, %v7574
        %v7622 = vpack.c.b16 %v7577, %v7576
        %v7623 = vpack.c.b16 %v7579, %v7578
        %v7624 = vpack.c.b16 %v7581, %v7580
        %v7625 = vpack.c.b16 %v7583, %v7582
        %v7626 = vpack.c.b16 %v7585, %v7584
        %v7627 = vpack.c.b16 %v7587, %v7586
        %v7628 = vpack.c.b16 %v7589, %v7588
        %v7629 = vpack.c.b16 %v7591, %v7590
        %v7630 = vpack.c.b16 %v7593, %v7592
        %v7631 = vpack.c.b16 %v7595, %v7594
        %v7632 = vpack.c.b16 %v7597, %v7596
        %v7633 = vpack.c.b16 %v7599, %v7598
        %v7634 = vpack.c.b16 %v7601, %v7600
        %v7635 = vpack.c.b16 %v7603, %v7602
        %v7636 = vpack.c.b16 %v7605, %v7604
        %v7637 = vpack.c.b16 %v7607, %v7606
        %v7638 = vpack.c.b16 %v7609, %v7608
        %v7639 = vpack.c.b16 %v7611, %v7610
        %v7640 = vpack.c.b16 %v7613, %v7612
        %v7641 = vpack.c.b16 %v7615, %v7614
        %v7642 = vpack.c.b16 %v7617, %v7616
        %v7643 = vpack.c.b16 %v7619, %v7618
        %7668 = vmatpush.bf16.msra.mxu0 %v7627
        %7669 = vmatpush.bf16.msra.mxu0 %v7626
        %7670 = vmatpush.bf16.msra.mxu0 %v7625
        %7671 = vmatpush.bf16.msra.mxu0 %v7624
        %7672 = vmatpush.bf16.msra.mxu0 %v7623
        %7673 = vmatpush.bf16.msra.mxu0 %v7622
        %7674 = vmatpush.bf16.msra.mxu0 %v7621
        %7675 = vmatpush.bf16.msra.mxu0 %v7620
        %7676 = vmatmul.bf16.gmra.mxu0 %v7476
        %v7677 = vpop.f32.mrf.mxu0
        %v7678 = vadd.f32 0.0, %v7677
        %v7679 = vpop.f32.mrf.mxu0
        %v7680 = vadd.f32 0.0, %v7679
        %7681 = vmatmul.bf16.gmra.mxu0 %v7479
        %v7682 = vpop.f32.mrf.mxu0
        %v7683 = vadd.f32 0.0, %v7682
        %v7684 = vpop.f32.mrf.mxu0
        %v7685 = vadd.f32 0.0, %v7684
        %7686 = vmatmul.bf16.gmra.mxu0 %v7482
        %v7687 = vpop.f32.mrf.mxu0
        %v7688 = vadd.f32 0.0, %v7687
        %v7689 = vpop.f32.mrf.mxu0
        %v7690 = vadd.f32 0.0, %v7689
        %7691 = vmatmul.bf16.gmra.mxu0 %v7485
        %v7692 = vpop.f32.mrf.mxu0
        %v7693 = vadd.f32 0.0, %v7692
        %v7694 = vpop.f32.mrf.mxu0
        %v7695 = vadd.f32 0.0, %v7694
        %7696 = vmatmul.bf16.gmra.mxu0 %v7488
        %v7697 = vpop.f32.mrf.mxu0
        %v7698 = vadd.f32 0.0, %v7697
        %v7699 = vpop.f32.mrf.mxu0
        %v7700 = vadd.f32 0.0, %v7699
        %7701 = vmatmul.bf16.gmra.mxu0 %v7491
        %v7702 = vpop.f32.mrf.mxu0
        %v7703 = vadd.f32 0.0, %v7702
        %v7704 = vpop.f32.mrf.mxu0
        %v7705 = vadd.f32 0.0, %v7704
        %7706 = vmatmul.bf16.gmra.mxu0 %v7494
        %v7707 = vpop.f32.mrf.mxu0
        %v7708 = vadd.f32 0.0, %v7707
        %v7709 = vpop.f32.mrf.mxu0
        %v7710 = vadd.f32 0.0, %v7709
        %7711 = vmatmul.bf16.gmra.mxu0 %v7497
        %v7712 = vpop.f32.mrf.mxu0
        %v7713 = vadd.f32 0.0, %v7712
        %v7714 = vpop.f32.mrf.mxu0
        %v7715 = vadd.f32 0.0, %v7714
        %7716 = vdwg.mxu0
        %7717 = vmatpush.bf16.msra.mxu0 %v7635
        %7718 = vmatpush.bf16.msra.mxu0 %v7634
        %7719 = vmatpush.bf16.msra.mxu0 %v7633
        %7720 = vmatpush.bf16.msra.mxu0 %v7632
        %7721 = vmatpush.bf16.msra.mxu0 %v7631
        %7722 = vmatpush.bf16.msra.mxu0 %v7630
        %7723 = vmatpush.bf16.msra.mxu0 %v7629
        %7724 = vmatpush.bf16.msra.mxu0 %v7628
        %7725 = vmatmul.bf16.gmra.mxu0 %v7477
        %v7726 = vpop.f32.mrf.mxu0
        %v7727 = vadd.f32 %v7678, %v7726
        %v7728 = vpop.f32.mrf.mxu0
        %v7729 = vadd.f32 %v7680, %v7728
        %7730 = vmatmul.bf16.gmra.mxu0 %v7480
        %v7731 = vpop.f32.mrf.mxu0
        %v7732 = vadd.f32 %v7683, %v7731
        %v7733 = vpop.f32.mrf.mxu0
        %v7734 = vadd.f32 %v7685, %v7733
        %7735 = vmatmul.bf16.gmra.mxu0 %v7483
        %v7736 = vpop.f32.mrf.mxu0
        %v7737 = vadd.f32 %v7688, %v7736
        %v7738 = vpop.f32.mrf.mxu0
        %v7739 = vadd.f32 %v7690, %v7738
        %7740 = vmatmul.bf16.gmra.mxu0 %v7486
        %v7741 = vpop.f32.mrf.mxu0
        %v7742 = vadd.f32 %v7693, %v7741
        %v7743 = vpop.f32.mrf.mxu0
        %v7744 = vadd.f32 %v7695, %v7743
        %7745 = vmatmul.bf16.gmra.mxu0 %v7489
        %v7746 = vpop.f32.mrf.mxu0
        %v7747 = vadd.f32 %v7698, %v7746
        %v7748 = vpop.f32.mrf.mxu0
        %v7749 = vadd.f32 %v7700, %v7748
        %7750 = vmatmul.bf16.gmra.mxu0 %v7492
        %v7751 = vpop.f32.mrf.mxu0
        %v7752 = vadd.f32 %v7703, %v7751
        %v7753 = vpop.f32.mrf.mxu0
        %v7754 = vadd.f32 %v7705, %v7753
        %7755 = vmatmul.bf16.gmra.mxu0 %v7495
        %v7756 = vpop.f32.mrf.mxu0
        %v7757 = vadd.f32 %v7708, %v7756
        %v7758 = vpop.f32.mrf.mxu0
        %v7759 = vadd.f32 %v7710, %v7758
        %7760 = vmatmul.bf16.gmra.mxu0 %v7498
        %v7761 = vpop.f32.mrf.mxu0
        %v7762 = vadd.f32 %v7713, %v7761
        %v7763 = vpop.f32.mrf.mxu0
        %v7764 = vadd.f32 %v7715, %v7763
        %7765 = vdwg.mxu0
        %7766 = vmatpush.bf16.msra.mxu0 %v7643
        %7767 = vmatpush.bf16.msra.mxu0 %v7642
        %7768 = vmatpush.bf16.msra.mxu0 %v7641
        %7769 = vmatpush.bf16.msra.mxu0 %v7640
        %7770 = vmatpush.bf16.msra.mxu0 %v7639
        %7771 = vmatpush.bf16.msra.mxu0 %v7638
        %7772 = vmatpush.bf16.msra.mxu0 %v7637
        %7773 = vmatpush.bf16.msra.mxu0 %v7636
        %7774 = vmatmul.bf16.gmra.mxu0 %v7478
        %v7775 = vpop.f32.mrf.mxu0
        %v7776 = vadd.f32 %v7727, %v7775
        %v7777 = vpop.f32.mrf.mxu0
        %v7778 = vadd.f32 %v7729, %v7777
        %7779 = vmatmul.bf16.gmra.mxu0 %v7481
        %v7780 = vpop.f32.mrf.mxu0
        %v7781 = vadd.f32 %v7732, %v7780
        %v7782 = vpop.f32.mrf.mxu0
        %v7783 = vadd.f32 %v7734, %v7782
        %7784 = vmatmul.bf16.gmra.mxu0 %v7484
        %v7785 = vpop.f32.mrf.mxu0
        %v7786 = vadd.f32 %v7737, %v7785
        %v7787 = vpop.f32.mrf.mxu0
        %v7788 = vadd.f32 %v7739, %v7787
        %7789 = vmatmul.bf16.gmra.mxu0 %v7487
        %v7790 = vpop.f32.mrf.mxu0
        %v7791 = vadd.f32 %v7742, %v7790
        %v7792 = vpop.f32.mrf.mxu0
        %v7793 = vadd.f32 %v7744, %v7792
        %7794 = vmatmul.bf16.gmra.mxu0 %v7490
        %v7795 = vpop.f32.mrf.mxu0
        %v7796 = vadd.f32 %v7747, %v7795
        %v7797 = vpop.f32.mrf.mxu0
        %v7798 = vadd.f32 %v7749, %v7797
        %7799 = vmatmul.bf16.gmra.mxu0 %v7493
        %v7800 = vpop.f32.mrf.mxu0
        %v7801 = vadd.f32 %v7752, %v7800
        %v7802 = vpop.f32.mrf.mxu0
        %v7803 = vadd.f32 %v7754, %v7802
        %7804 = vmatmul.bf16.gmra.mxu0 %v7496
        %v7805 = vpop.f32.mrf.mxu0
        %v7806 = vadd.f32 %v7757, %v7805
        %v7807 = vpop.f32.mrf.mxu0
        %v7808 = vadd.f32 %v7759, %v7807
        %7809 = vmatmul.bf16.gmra.mxu0 %v7499
        %v7810 = vpop.f32.mrf.mxu0
        %v7811 = vadd.f32 %v7762, %v7810
        %v7812 = vpop.f32.mrf.mxu0
        %v7813 = vadd.f32 %v7764, %v7812
        %7814 = vdwg.mxu0
        %v7815 = vadd.f32 %v7277, %v7776
        %v7816 = vadd.f32 %v7279, %v7778
        %v7817 = vadd.f32 %v7282, %v7781
        %v7818 = vadd.f32 %v7284, %v7783
        %v7819 = vadd.f32 %v7287, %v7786
        %v7820 = vadd.f32 %v7289, %v7788
        %v7821 = vadd.f32 %v7292, %v7791
        %v7822 = vadd.f32 %v7294, %v7793
        %v7823 = vadd.f32 %v7297, %v7796
        %v7824 = vadd.f32 %v7299, %v7798
        %v7825 = vadd.f32 %v7302, %v7801
        %v7826 = vadd.f32 %v7304, %v7803
        %v7827 = vadd.f32 %v7307, %v7806
        %v7828 = vadd.f32 %v7309, %v7808
        %v7829 = vadd.f32 %v7312, %v7811
        %v7830 = vadd.f32 %v7314, %v7813
        %v7831 = vadd.f32 %v7815, %v4047
        %v7832 = vadd.f32 %v7816, %v4047
        %v7833 = vadd.f32 %v7817, %v4047
        %v7834 = vadd.f32 %v7818, %v4047
        %v7835 = vadd.f32 %v7819, %v4047
        %v7836 = vadd.f32 %v7820, %v4047
        %v7837 = vadd.f32 %v7821, %v4047
        %v7838 = vadd.f32 %v7822, %v4047
        %v7839 = vadd.f32 %v7823, %v4047
        %v7840 = vadd.f32 %v7824, %v4047
        %v7841 = vadd.f32 %v7825, %v4047
        %v7842 = vadd.f32 %v7826, %v4047
        %v7843 = vadd.f32 %v7827, %v4047
        %v7844 = vadd.f32 %v7828, %v4047
        %v7845 = vadd.f32 %v7829, %v4047
        %v7846 = vadd.f32 %v7830, %v4047
        %v7847 = vadd.f32 %v7831, %v6302
        %v7848 = vadd.f32 %v7832, %v6303
        %v7849 = vadd.f32 %v7833, %v6304
        %v7850 = vadd.f32 %v7834, %v6305
        %v7851 = vadd.f32 %v7835, %v6306
        %v7852 = vadd.f32 %v7836, %v6307
        %v7853 = vadd.f32 %v7837, %v6308
        %v7854 = vadd.f32 %v7838, %v6309
        %v7855 = vadd.f32 %v7839, %v6310
        %v7856 = vadd.f32 %v7840, %v6311
        %v7857 = vadd.f32 %v7841, %v6312
        %v7858 = vadd.f32 %v7842, %v6313
        %v7859 = vadd.f32 %v7843, %v6314
        %v7860 = vadd.f32 %v7844, %v6315
        %v7861 = vadd.f32 %v7845, %v6316
        %v7862 = vadd.f32 %v7846, %v6317
        %s7863 = scalar_lea.vmem %s278, 128 [#allocation9]
        %7864 = vst [vmem:[%s7863] sm:$0xff] %v7847
        %7865 = vst [vmem:[%s7863 + $0x8] sm:$0xff] %v7848
        %7866 = vst [vmem:[%s7863 + $0x10] sm:$0xff] %v7849
        %7867 = vst [vmem:[%s7863 + $0x18] sm:$0xff] %v7850
        %7868 = vst [vmem:[%s7863 + $0x20] sm:$0xff] %v7851
        %7869 = vst [vmem:[%s7863 + $0x28] sm:$0xff] %v7852
        %7870 = vst [vmem:[%s7863 + $0x30] sm:$0xff] %v7853
        %7871 = vst [vmem:[%s7863 + $0x38] sm:$0xff] %v7854
        %7872 = vst [vmem:[%s7863 + $0x40] sm:$0xff] %v7855
        %7873 = vst [vmem:[%s7863 + $0x48] sm:$0xff] %v7856
        %7874 = vst [vmem:[%s7863 + $0x50] sm:$0xff] %v7857
        %7875 = vst [vmem:[%s7863 + $0x58] sm:$0xff] %v7858
        %7876 = vst [vmem:[%s7863 + $0x60] sm:$0xff] %v7859
        %7877 = vst [vmem:[%s7863 + $0x68] sm:$0xff] %v7860
        %7878 = vst [vmem:[%s7863 + $0x70] sm:$0xff] %v7861
        %7879 = vst [vmem:[%s7863 + $0x78] sm:$0xff] %v7862
        %s7880 = sand.u32 %s141, 1
        %s7881 = scalar_lea.sflag [#allocation5], %s7880
        %s7882 = sand.u32 %s141, 1
        %s7883 = smul.addr %s7882, 256
        %s7884 = scalar_lea.vmem [#allocation9], %s7883
        // Predicated region
        $region53: #{tpu_custom_call.1} parent=39 // pred_check
          %p7885 = pneg %p151
        $region54: #{tpu_custom_call.1} parent=39 // pred_check_branch
          %7887 = sbr.rel (%p7885) target = $region56
        $region55: #{tpu_custom_call.1} parent=39 // pred_region
          %s7888 = smul.u32 4, %s23
          %7890 = vsyncadd %s7881, 0
          %s7891 = smul.addr %s7888, 8
          %s7892 = smul.addr %s7891, 8
          %s7893 = scalar_lea.hbm %s5, %s7892
          %s7894 = sshll.u32 %s7884, 4
          %s7895 = int_to_ptr.vmem [resolvable:$true] %s7894
          %s7896 = sshll.u32 %s7893, 4
          %s7897 = int_to_ptr.hbm [resolvable:$true] %s7896
          %7902 = dma.vmem_to_hbm [thread:$0]  %s7895, 4096, %s7897, %s7881, 128, 128, 8
        $region56: #{tpu_custom_call.1} parent=39 // pred_fallthru
          _
      $region40: #{tpu_custom_call.1} parent=5 // pred_fallthru
        _
      %p7903 = scmp.le.s32.totalorder 2, %s18
      // Predicated region
      $region57: #{tpu_custom_call.1} parent=5 // pred_check
        %p7904 = pneg %p7903
      $region58: #{tpu_custom_call.1} parent=5 // pred_check_branch
        %7906 = sbr.rel (%p7904) target = $region60
      $region59: #{tpu_custom_call.1} parent=5 // pred_region
        %s7907 = ssub.s32 %s18, 2
        // Predicated region
        $region61: #{tpu_custom_call.1} parent=59 // pred_check
          %p7908 = pneg %p157
        $region62: #{tpu_custom_call.1} parent=59 // pred_check_branch
          %7910 = sbr.rel (%p7908) target = $region64
        $region63: #{tpu_custom_call.1} parent=59 // pred_region
          %s7911 = sand.u32 %s142, 1
          %s7912 = scalar_lea.sflag [#allocation5], %s7911
          %s7913 = sand.u32 %s142, 1
          %s7914 = smul.addr %s7913, 256
          %s7915 = scalar_lea.vmem [#allocation9], %s7914
          %7917 = dma.done %s7912, 4096
        $region64: #{tpu_custom_call.1} parent=59 // pred_fallthru
          _
      $region60: #{tpu_custom_call.1} parent=5 // pred_fallthru
        _
    $region6: #{tpu_custom_call.1} parent=1 // loop_footer
      %s22 = sadd.s32 1, %s18
    $region7: #{tpu_custom_call.1} parent=1 // loop_footer_branch
      %17 = sbr.rel target = $region3
    $region8: #{tpu_custom_call.1} parent=1 // loop_exit
      _
    %7918 = vsyncpa [#allocation4], 1
    %s7919 = scalar_lea.sflag [#allocation4], 1
    %7920 = vsyncpa %s7919, 1
    %7921 = vsyncpa [#allocation7], 1
    %7922 = vsyncpa [#allocation5], 1
    %s7923 = scalar_lea.sflag [#allocation5], 1
    %7924 = vsyncpa %s7923, 1

</llo_original>
